<compile_context>
chip_gen: v6e
topology: v6e:2x2x1
jax: 0.10.0
libtpu: 0.0.40
codegen_flags: <defaults>
</compile_context>

<pallas_src>
import functools

import jax
import jax.numpy as jnp
from jax import lax
from jax.experimental import pallas as pl
from jax.experimental.pallas import tpu as pltpu


_STATIC_UNROLL_MAX_T = 16     # fully unroll the per-tile recurrence up to this Tt
_MAX_T_TILE = 128             # cap on timesteps per grid step


def _round_up(x, m):
    return (x + m - 1) // m * m


def _fused_ae_kernel(x_ref, wih_e_ref, whh_e_ref, b_e_ref,
                     w_d_ref, b_d_ref,
                     out_ref,
                     h_e, c_e, h_d, c_d, *maybe_gx,
                     static_unroll):
    """Fused encoder+decoder LSTM over one T-tile.

    x_ref     : (Tt, Bp, Ip)        time-major, padded input tile (bf16)
    wih_e_ref : (Ip, 4*Hep)         encoder W_ih^T (gate-lane-aligned, zero padded, bf16)
    whh_e_ref : (Hep, 4*Hep)        encoder W_hh^T (bf16)
    b_e_ref   : (1, 4*Hep)          encoder bias_ih + bias_hh (f32)
    w_d_ref   : (Hep+Hdp, 4*Hdp)    decoder vstack(W_ih^T, W_hh^T) (bf16)
    b_d_ref   : (1, 4*Hdp)          decoder bias_ih + bias_hh (f32)
    out_ref   : (Tt, Bp, Hdp)       decoder hidden states (f32)
    h_e..c_d  : (Bp, H*p)           persistent state across grid steps (VMEM scratch)
    maybe_gx  : optional (Tt, Bp, 4*Hep) scratch for the hoisted projection
                (only allocated when the tile is too long to fully unroll)
    """
    Tt, Bp, Ip = x_ref.shape
    Hep = whh_e_ref.shape[0]
    Hdp = w_d_ref.shape[1] // 4

    # Zero initial state on the first grid step only (PyTorch default h0=c0=0).
    @pl.when(pl.program_id(0) == 0)
    def _():
        h_e[...] = jnp.zeros_like(h_e)
        c_e[...] = jnp.zeros_like(c_e)
        h_d[...] = jnp.zeros_like(h_d)
        c_d[...] = jnp.zeros_like(c_d)

    # ---- Hoisted encoder input projection: one big MXU matmul per tile ----
    x_flat = x_ref[...].reshape(Tt * Bp, Ip)
    gx = jnp.dot(x_flat, wih_e_ref[...], preferred_element_type=jnp.float32)
    gx = gx + b_e_ref[...]                       # fold encoder bias in once

    # Hoist decoder bias broadcast out of the recurrent loop.
    b_dec = b_d_ref[...]
    mm_dtype = whh_e_ref.dtype                   # bf16 MXU operands, f32 accumulate

    def lstm_cell(gates, c, H):
        # PyTorch gate order: i, f, g, o.  H is a lane multiple of 128 so every
        # slice below is lane-aligned (free).
        i = jax.nn.sigmoid(gates[:, 0 * H:1 * H])
        f = jax.nn.sigmoid(gates[:, 1 * H:2 * H])
        g = jnp.tanh(gates[:, 2 * H:3 * H])
        o = jax.nn.sigmoid(gates[:, 3 * H:4 * H])
        c_new = f * c + i * g
        h_new = o * jnp.tanh(c_new)
        return h_new, c_new

    def step(gx_t, he, ce, hd, cd):
        # --- encoder: only the (Bp, Hep) @ (Hep, 4Hep) recurrent matmul remains ---
        g_e = gx_t + jnp.dot(he.astype(mm_dtype), whh_e_ref[...],
                             preferred_element_type=jnp.float32)
        he, ce = lstm_cell(g_e, ce, Hep)

        # --- decoder: single merged K=(Hep+Hdp) matmul on [h_enc_t, h_dec_{t-1}] ---
        lhs_d = jnp.concatenate([he, hd], axis=-1).astype(mm_dtype)
        g_d = jnp.dot(lhs_d, w_d_ref[...],
                      preferred_element_type=jnp.float32) + b_dec
        hd, cd = lstm_cell(g_d, cd, Hdp)
        return he, ce, hd, cd

    # State lives in vregs for the whole tile; VMEM scratch only touched at the
    # tile boundaries (persistence across grid steps).
    he = h_e[...]
    ce = c_e[...]
    hd = h_d[...]
    cd = c_d[...]

    if static_unroll:
        # Fully-unrolled recurrence: keep the hoisted projection in-register and
        # slice it with static (sublane-aligned) row windows.
        for t in range(Tt):
            gx_t = gx[t * Bp:(t + 1) * Bp, :]
            he, ce, hd, cd = step(gx_t, he, ce, hd, cd)
            out_ref[t] = hd.astype(out_ref.dtype)
    else:
        gx_scr, = maybe_gx
        gx_scr[...] = gx.reshape(Tt, Bp, 4 * Hep)

        def body(t, carry):
            he, ce, hd, cd = carry
            he, ce, hd, cd = step(gx_scr[t], he, ce, hd, cd)
            out_ref[t] = hd.astype(out_ref.dtype)
            return he, ce, hd, cd

        he, ce, hd, cd = lax.fori_loop(0, Tt, body, (he, ce, hd, cd), unroll=4)

    h_e[...] = he
    c_e[...] = ce
    h_d[...] = hd
    c_d[...] = cd


def _pad_lstm_params(w_ih, w_hh, b_ih, b_hh, in_pad, h_pad):
    """Transpose PyTorch-shaped LSTM params and pad to lane/gate-aligned layout.

    w_ih: (4H, I), w_hh: (4H, H), b_*: (4H,).
    Returns wih_p (in_pad, 4*h_pad), whh_p (h_pad, 4*h_pad), bias_p (1, 4*h_pad),
    with gate k occupying lane columns [k*h_pad, k*h_pad + H) and zeros elsewhere
    (so padded hidden lanes stay exactly zero through the recurrence).
    """
    w_ih = jnp.asarray(w_ih, jnp.float32)
    w_hh = jnp.asarray(w_hh, jnp.float32)
    H = w_hh.shape[1]
    I = w_ih.shape[1]
    wih_t = w_ih.T            # (I, 4H)
    whh_t = w_hh.T            # (H, 4H)
    bias = jnp.asarray(b_ih, jnp.float32) + jnp.asarray(b_hh, jnp.float32)  # (4H,)

    def place_gate_cols(w, rows_in, rows_pad):
        out = jnp.zeros((rows_pad, 4 * h_pad), jnp.float32)
        for k in range(4):
            out = out.at[:rows_in, k * h_pad:k * h_pad + H].set(
                w[:, k * H:(k + 1) * H])
        return out

    wih_p = place_gate_cols(wih_t, I, in_pad)
    whh_p = place_gate_cols(whh_t, H, h_pad)
    b_p = jnp.zeros((1, 4 * h_pad), jnp.float32)
    for k in range(4):
        b_p = b_p.at[0, k * h_pad:k * h_pad + H].set(bias[k * H:(k + 1) * H])
    return wih_p, whh_p, b_p


@functools.partial(jax.jit, static_argnames=("matmul_dtype",))
def autoencoder_forward(x_bt, enc_params, dec_params, *, matmul_dtype=jnp.bfloat16):
    """Full Autoencoder.forward.  x_bt: (B, T, input_size), batch-first f32."""
    B, T, I = x_bt.shape
    He = enc_params["w_hh"].shape[1]          # encoder hidden size
    Hd = dec_params["w_hh"].shape[1]          # decoder hidden size (== input_size)

    # Padded sizes: lanes -> multiples of 128, sublanes (batch) -> multiples of 8.
    Bp = _round_up(B, 8)
    Ip = _round_up(I, 128)
    Hep = _round_up(He, 128)
    Hdp = _round_up(Hd, 128)

    # T-tile: fully unroll short sequences; otherwise large tiles (<=128) to
    # amortize the ~0.35us per-grid-step overhead.
    if T <= _STATIC_UNROLL_MAX_T:
        Tt = T
    else:
        Tt = min(_MAX_T_TILE, _round_up(T, 8))
    Tp = _round_up(T, Tt)
    static_unroll = Tt <= _STATIC_UNROLL_MAX_T

    # Time-major, zero-padded, bf16 input (MXU-native operands, f32 accumulate).
    x_tm = jnp.transpose(x_bt.astype(jnp.float32), (1, 0, 2))        # (T, B, I)
    x_p = jnp.zeros((Tp, Bp, Ip), matmul_dtype).at[:T, :B, :I].set(
        x_tm.astype(matmul_dtype))

    wih_e, whh_e, b_e = _pad_lstm_params(
        enc_params["w_ih"], enc_params["w_hh"],
        enc_params["b_ih"], enc_params["b_hh"], Ip, Hep)
    wih_d, whh_d, b_d = _pad_lstm_params(
        dec_params["w_ih"], dec_params["w_hh"],
        dec_params["b_ih"], dec_params["b_hh"], Hep, Hdp)

    # Merged decoder weight: [h_enc_t, h_dec_{t-1}] @ vstack(W_ih^T, W_hh^T).
    w_d = jnp.concatenate([wih_d, whh_d], axis=0)                    # (Hep+Hdp, 4*Hdp)

    wih_e = wih_e.astype(matmul_dtype)
    whh_e = whh_e.astype(matmul_dtype)
    w_d = w_d.astype(matmul_dtype)

    scratch_shapes = [
        pltpu.VMEM((Bp, Hep), jnp.float32),          # h_enc
        pltpu.VMEM((Bp, Hep), jnp.float32),          # c_enc
        pltpu.VMEM((Bp, Hdp), jnp.float32),          # h_dec
        pltpu.VMEM((Bp, Hdp), jnp.float32),          # c_dec
    ]
    if not static_unroll:
        scratch_shapes.append(pltpu.VMEM((Tt, Bp, 4 * Hep), jnp.float32))  # hoisted x@W_ih

    grid = (Tp // Tt,)
    y_p = pl.pallas_call(
        functools.partial(_fused_ae_kernel, static_unroll=static_unroll),
        out_shape=jax.ShapeDtypeStruct((Tp, Bp, Hdp), jnp.float32),
        grid_spec=pltpu.PrefetchScalarGridSpec(
            num_scalar_prefetch=0,
            grid=grid,
            in_specs=[
                pl.BlockSpec((Tt, Bp, Ip), lambda t: (t, 0, 0)),
                pl.BlockSpec((Ip, 4 * Hep), lambda t: (0, 0)),
                pl.BlockSpec((Hep, 4 * Hep), lambda t: (0, 0)),
                pl.BlockSpec((1, 4 * Hep), lambda t: (0, 0)),
                pl.BlockSpec((Hep + Hdp, 4 * Hdp), lambda t: (0, 0)),
                pl.BlockSpec((1, 4 * Hdp), lambda t: (0, 0)),
            ],
            out_specs=pl.BlockSpec((Tt, Bp, Hdp), lambda t: (t, 0, 0)),
            scratch_shapes=scratch_shapes),
        compiler_params=pltpu.CompilerParams(
            # Sequential recurrence over T.
            dimension_semantics=("arbitrary",),
            vmem_limit_bytes=32 * 1024 * 1024,
        ),
    )(x_p, wih_e, whh_e, b_e, w_d, b_d)

    # Strip padding, back to batch-first (B, T, input_size).
    y = y_p[:T, :B, :Hd]
    return jnp.transpose(y, (1, 0, 2))


def init_lstm_params(key, input_size, hidden_size):
    """Deterministic synthetic LSTM params (PyTorch shapes, uniform(+-1/sqrt(H)))."""
    k1, k2, k3, k4 = jax.random.split(key, 4)
    bound = 1.0 / jnp.sqrt(jnp.float32(hidden_size))
    w_ih = jax.random.uniform(k1, (4 * hidden_size, input_size), jnp.float32, -bound, bound)
    w_hh = jax.random.uniform(k2, (4 * hidden_size, hidden_size), jnp.float32, -bound, bound)
    b_ih = jax.random.uniform(k3, (4 * hidden_size,), jnp.float32, -bound, bound)
    b_hh = jax.random.uniform(k4, (4 * hidden_size,), jnp.float32, -bound, bound)
    return dict(w_ih=w_ih, w_hh=w_hh, b_ih=b_ih, b_hh=b_hh)


# ------------------------- pure-JAX reference ----------------------------------
def _lstm_layer_ref(x_tm, p):
    T, B, _ = x_tm.shape
    H = p["w_hh"].shape[1]
    wih_t, whh_t = p["w_ih"].T, p["w_hh"].T
    bias = p["b_ih"] + p["b_hh"]

    def step(carry, x_t):
        h, c = carry
        gates = x_t @ wih_t + h @ whh_t + bias
        i = jax.nn.sigmoid(gates[:, 0 * H:1 * H])
        f = jax.nn.sigmoid(gates[:, 1 * H:2 * H])
        g = jnp.tanh(gates[:, 2 * H:3 * H])
        o = jax.nn.sigmoid(gates[:, 3 * H:4 * H])
        c = f * c + i * g
        h = o * jnp.tanh(c)
        return (h, c), h

    h0 = jnp.zeros((B, H), jnp.float32)
    c0 = jnp.zeros((B, H), jnp.float32)
    _, hs = lax.scan(step, (h0, c0), x_tm)
    return hs


def autoencoder_ref(x_bt, enc_params, dec_params):
    x_tm = jnp.transpose(x_bt, (1, 0, 2))
    h_tm = _lstm_layer_ref(x_tm, enc_params)
    y_tm = _lstm_layer_ref(h_tm, dec_params)
    return jnp.transpose(y_tm, (1, 0, 2))


if __name__ == "__main__":
    # Small shapes consistent with the module: sequences (B, T, input_size).
    B, T = 2, 8
    input_size = 16
    hidden_size = 8

    key = jax.random.PRNGKey(0)
    kx, ke, kd = jax.random.split(key, 3)

    x = jax.random.normal(kx, (B, T, input_size), jnp.float32)
    enc_params = init_lstm_params(ke, input_size, hidden_size)   # LSTM(input -> hidden)
    dec_params = init_lstm_params(kd, hidden_size, input_size)   # LSTM(hidden -> input)

    y = autoencoder_forward(x, enc_params, dec_params)
    y = jax.block_until_ready(y)

    y_ref = autoencoder_ref(x, enc_params, dec_params)
    assert y.shape == (B, T, input_size)
    # bf16 MXU operands with f32 accumulation -> relaxed tolerance vs f32 reference.
    err = float(jnp.max(jnp.abs(y - y_ref)))
    assert jnp.allclose(y, y_ref, atol=5e-2, rtol=5e-2), (
        f"Pallas LSTM mismatch vs JAX reference (max abs err {err})")

    print("KERNEL_OK")
</pallas_src>

<mosaic_0001>
module attributes {stable_mosaic.version = 11 : i64} {
  func.func @_fused_ae_kernel(%arg0: i32, %arg1: memref<8x8x128xbf16, #tpu.memory_space<vmem>>, %arg2: memref<128x512xbf16, #tpu.memory_space<vmem>>, %arg3: memref<128x512xbf16, #tpu.memory_space<vmem>>, %arg4: memref<1x512xf32, #tpu.memory_space<vmem>>, %arg5: memref<256x512xbf16, #tpu.memory_space<vmem>>, %arg6: memref<1x512xf32, #tpu.memory_space<vmem>>, %arg7: memref<8x8x128xf32, #tpu.memory_space<vmem>>, %arg8: memref<8x128xf32, #tpu.memory_space<vmem>>, %arg9: memref<8x128xf32, #tpu.memory_space<vmem>>, %arg10: memref<8x128xf32, #tpu.memory_space<vmem>>, %arg11: memref<8x128xf32, #tpu.memory_space<vmem>>) attributes {dimension_semantics = [#tpu.dimension_semantics<arbitrary>], iteration_bounds = array<i64: 1>, scalar_prefetch = 0 : i64, scratch_operands = 4 : i64, tpu.core_type = #tpu.core_type<tc>, window_params = [{transform_indices = @transform_0, window_bounds = array<i64: 8, 8, 128>}, {pipeline_mode = #tpu.pipeline_mode<synchronous>, transform_indices = @transform_1, window_bounds = array<i64: 128, 512>}, {pipeline_mode = #tpu.pipeline_mode<synchronous>, transform_indices = @transform_2, window_bounds = array<i64: 128, 512>}, {pipeline_mode = #tpu.pipeline_mode<synchronous>, transform_indices = @transform_3, window_bounds = array<i64: 1, 512>}, {pipeline_mode = #tpu.pipeline_mode<synchronous>, transform_indices = @transform_4, window_bounds = array<i64: 256, 512>}, {pipeline_mode = #tpu.pipeline_mode<synchronous>, transform_indices = @transform_5, window_bounds = array<i64: 1, 512>}, {transform_indices = @transform_6, window_bounds = array<i64: 8, 8, 128>}]} {
    %c0_i32 = arith.constant 0 : i32
    %0 = arith.cmpi eq, %arg0, %c0_i32 : i32
    %1 = arith.extui %0 : i1 to i32
    %c0_i32_0 = arith.constant 0 : i32
    %2 = arith.cmpi ne, %1, %c0_i32_0 : i32
    scf.if %2 {
      %cst_138 = arith.constant 0.000000e+00 : f32
      %531 = vector.broadcast %cst_138 : f32 to vector<8x128xf32>
      %c0_139 = arith.constant 0 : index
      %c0_140 = arith.constant 0 : index
      %532 = vector.load %arg8[%c0_139, %c0_140] : memref<8x128xf32, #tpu.memory_space<vmem>>, vector<8x128xf32>
      tpu.vector_store %arg8[%c0_139, %c0_140], %531 {strides = array<i32>} : memref<8x128xf32, #tpu.memory_space<vmem>>, vector<8x128xf32>,
      %cst_141 = arith.constant 0.000000e+00 : f32
      %533 = vector.broadcast %cst_141 : f32 to vector<8x128xf32>
      %c0_142 = arith.constant 0 : index
      %c0_143 = arith.constant 0 : index
      %534 = vector.load %arg9[%c0_142, %c0_143] : memref<8x128xf32, #tpu.memory_space<vmem>>, vector<8x128xf32>
      tpu.vector_store %arg9[%c0_142, %c0_143], %533 {strides = array<i32>} : memref<8x128xf32, #tpu.memory_space<vmem>>, vector<8x128xf32>,
      %cst_144 = arith.constant 0.000000e+00 : f32
      %535 = vector.broadcast %cst_144 : f32 to vector<8x128xf32>
      %c0_145 = arith.constant 0 : index
      %c0_146 = arith.constant 0 : index
      %536 = vector.load %arg10[%c0_145, %c0_146] : memref<8x128xf32, #tpu.memory_space<vmem>>, vector<8x128xf32>
      tpu.vector_store %arg10[%c0_145, %c0_146], %535 {strides = array<i32>} : memref<8x128xf32, #tpu.memory_space<vmem>>, vector<8x128xf32>,
      %cst_147 = arith.constant 0.000000e+00 : f32
      %537 = vector.broadcast %cst_147 : f32 to vector<8x128xf32>
      %c0_148 = arith.constant 0 : index
      %c0_149 = arith.constant 0 : index
      %538 = vector.load %arg11[%c0_148, %c0_149] : memref<8x128xf32, #tpu.memory_space<vmem>>, vector<8x128xf32>
      tpu.vector_store %arg11[%c0_148, %c0_149], %537 {strides = array<i32>} : memref<8x128xf32, #tpu.memory_space<vmem>>, vector<8x128xf32>,
    } else {
    }
    %c0 = arith.constant 0 : index
    %c0_1 = arith.constant 0 : index
    %c0_2 = arith.constant 0 : index
    %3 = vector.load %arg1[%c0, %c0_1, %c0_2] : memref<8x8x128xbf16, #tpu.memory_space<vmem>>, vector<8x8x128xbf16>
    %4 = vector.shape_cast %3 : vector<8x8x128xbf16> to vector<64x128xbf16>
    %c0_3 = arith.constant 0 : index
    %c0_4 = arith.constant 0 : index
    %5 = vector.load %arg2[%c0_3, %c0_4] : memref<128x512xbf16, #tpu.memory_space<vmem>>, vector<128x512xbf16>
    %cst = arith.constant dense<0.000000e+00> : vector<64x512xf32>
    %6 = tpu.matmul %4, %5, %cst {dimension_numbers = #tpu.dot_dimension_numbers<[1], [0], [0], [1], [0, 0, 1, 1], [], []>} : vector<64x128xbf16>, vector<128x512xbf16>, vector<64x512xf32> -> vector<64x512xf32>
    %c0_5 = arith.constant 0 : index
    %c0_6 = arith.constant 0 : index
    %7 = vector.load %arg4[%c0_5, %c0_6] : memref<1x512xf32, #tpu.memory_space<vmem>>, vector<1x512xf32>
    %8 = vector.broadcast %7 : vector<1x512xf32> to vector<64x512xf32>
    %9 = arith.addf %6, %8 : vector<64x512xf32>
    %c0_7 = arith.constant 0 : index
    %c0_8 = arith.constant 0 : index
    %10 = vector.load %arg6[%c0_7, %c0_8] : memref<1x512xf32, #tpu.memory_space<vmem>>, vector<1x512xf32>
    %c0_9 = arith.constant 0 : index
    %c0_10 = arith.constant 0 : index
    %11 = vector.load %arg8[%c0_9, %c0_10] : memref<8x128xf32, #tpu.memory_space<vmem>>, vector<8x128xf32>
    %c0_11 = arith.constant 0 : index
    %c0_12 = arith.constant 0 : index
    %12 = vector.load %arg9[%c0_11, %c0_12] : memref<8x128xf32, #tpu.memory_space<vmem>>, vector<8x128xf32>
    %c0_13 = arith.constant 0 : index
    %c0_14 = arith.constant 0 : index
    %13 = vector.load %arg10[%c0_13, %c0_14] : memref<8x128xf32, #tpu.memory_space<vmem>>, vector<8x128xf32>
    %c0_15 = arith.constant 0 : index
    %c0_16 = arith.constant 0 : index
    %14 = vector.load %arg11[%c0_15, %c0_16] : memref<8x128xf32, #tpu.memory_space<vmem>>, vector<8x128xf32>
    %15 = vector.extract_strided_slice %9 {offsets = [0, 0], sizes = [8, 512], strides = [1, 1]} : vector<64x512xf32> to vector<8x512xf32>
    %16 = arith.truncf %11 : vector<8x128xf32> to vector<8x128xbf16>
    %c0_17 = arith.constant 0 : index
    %c0_18 = arith.constant 0 : index
    %17 = vector.load %arg3[%c0_17, %c0_18] : memref<128x512xbf16, #tpu.memory_space<vmem>>, vector<128x512xbf16>
    %cst_19 = arith.constant dense<0.000000e+00> : vector<8x512xf32>
    %18 = tpu.matmul %16, %17, %cst_19 {dimension_numbers = #tpu.dot_dimension_numbers<[1], [0], [0], [1], [0, 0, 1, 1], [], []>} : vector<8x128xbf16>, vector<128x512xbf16>, vector<8x512xf32> -> vector<8x512xf32>
    %19 = arith.addf %15, %18 : vector<8x512xf32>
    %20 = vector.extract_strided_slice %19 {offsets = [0, 0], sizes = [8, 128], strides = [1, 1]} : vector<8x512xf32> to vector<8x128xf32>
    %21 = arith.negf %20 : vector<8x128xf32>
    %22 = math.exp %21 : vector<8x128xf32>
    %cst_20 = arith.constant 1.000000e+00 : f32
    %23 = vector.broadcast %cst_20 : f32 to vector<8x128xf32>
    %24 = arith.addf %23, %22 : vector<8x128xf32>
    %25 = arith.divf %23, %24 : vector<8x128xf32>
    %26 = vector.extract_strided_slice %19 {offsets = [0, 128], sizes = [8, 128], strides = [1, 1]} : vector<8x512xf32> to vector<8x128xf32>
    %27 = arith.negf %26 : vector<8x128xf32>
    %28 = math.exp %27 : vector<8x128xf32>
    %cst_21 = arith.constant 1.000000e+00 : f32
    %29 = vector.broadcast %cst_21 : f32 to vector<8x128xf32>
    %30 = arith.addf %29, %28 : vector<8x128xf32>
    %31 = arith.divf %29, %30 : vector<8x128xf32>
    %32 = vector.extract_strided_slice %19 {offsets = [0, 256], sizes = [8, 128], strides = [1, 1]} : vector<8x512xf32> to vector<8x128xf32>
    %33 = math.tanh %32 : vector<8x128xf32>
    %34 = vector.extract_strided_slice %19 {offsets = [0, 384], sizes = [8, 128], strides = [1, 1]} : vector<8x512xf32> to vector<8x128xf32>
    %35 = arith.negf %34 : vector<8x128xf32>
    %36 = math.exp %35 : vector<8x128xf32>
    %cst_22 = arith.constant 1.000000e+00 : f32
    %37 = vector.broadcast %cst_22 : f32 to vector<8x128xf32>
    %38 = arith.addf %37, %36 : vector<8x128xf32>
    %39 = arith.divf %37, %38 : vector<8x128xf32>
    %40 = arith.mulf %31, %12 : vector<8x128xf32>
    %41 = arith.mulf %25, %33 : vector<8x128xf32>
    %42 = arith.addf %40, %41 : vector<8x128xf32>
    %43 = math.tanh %42 : vector<8x128xf32>
    %44 = arith.mulf %39, %43 : vector<8x128xf32>
    %45 = tpu.concatenate %44, %13 in 1 : vector<8x128xf32>, vector<8x128xf32> -> vector<8x256xf32>
    %46 = arith.truncf %45 : vector<8x256xf32> to vector<8x256xbf16>
    %c0_23 = arith.constant 0 : index
    %c0_24 = arith.constant 0 : index
    %47 = vector.load %arg5[%c0_23, %c0_24] : memref<256x512xbf16, #tpu.memory_space<vmem>>, vector<256x512xbf16>
    %cst_25 = arith.constant dense<0.000000e+00> : vector<8x512xf32>
    %48 = tpu.matmul %46, %47, %cst_25 {dimension_numbers = #tpu.dot_dimension_numbers<[1], [0], [0], [1], [0, 0, 1, 1], [], []>} : vector<8x256xbf16>, vector<256x512xbf16>, vector<8x512xf32> -> vector<8x512xf32>
    %49 = vector.broadcast %10 : vector<1x512xf32> to vector<8x512xf32>
    %50 = arith.addf %48, %49 : vector<8x512xf32>
    %51 = vector.extract_strided_slice %50 {offsets = [0, 0], sizes = [8, 128], strides = [1, 1]} : vector<8x512xf32> to vector<8x128xf32>
    %52 = arith.negf %51 : vector<8x128xf32>
    %53 = math.exp %52 : vector<8x128xf32>
    %cst_26 = arith.constant 1.000000e+00 : f32
    %54 = vector.broadcast %cst_26 : f32 to vector<8x128xf32>
    %55 = arith.addf %54, %53 : vector<8x128xf32>
    %56 = arith.divf %54, %55 : vector<8x128xf32>
    %57 = vector.extract_strided_slice %50 {offsets = [0, 128], sizes = [8, 128], strides = [1, 1]} : vector<8x512xf32> to vector<8x128xf32>
    %58 = arith.negf %57 : vector<8x128xf32>
    %59 = math.exp %58 : vector<8x128xf32>
    %cst_27 = arith.constant 1.000000e+00 : f32
    %60 = vector.broadcast %cst_27 : f32 to vector<8x128xf32>
    %61 = arith.addf %60, %59 : vector<8x128xf32>
    %62 = arith.divf %60, %61 : vector<8x128xf32>
    %63 = vector.extract_strided_slice %50 {offsets = [0, 256], sizes = [8, 128], strides = [1, 1]} : vector<8x512xf32> to vector<8x128xf32>
    %64 = math.tanh %63 : vector<8x128xf32>
    %65 = vector.extract_strided_slice %50 {offsets = [0, 384], sizes = [8, 128], strides = [1, 1]} : vector<8x512xf32> to vector<8x128xf32>
    %66 = arith.negf %65 : vector<8x128xf32>
    %67 = math.exp %66 : vector<8x128xf32>
    %cst_28 = arith.constant 1.000000e+00 : f32
    %68 = vector.broadcast %cst_28 : f32 to vector<8x128xf32>
    %69 = arith.addf %68, %67 : vector<8x128xf32>
    %70 = arith.divf %68, %69 : vector<8x128xf32>
    %71 = arith.mulf %62, %14 : vector<8x128xf32>
    %72 = arith.mulf %56, %64 : vector<8x128xf32>
    %73 = arith.addf %71, %72 : vector<8x128xf32>
    %74 = math.tanh %73 : vector<8x128xf32>
    %75 = arith.mulf %70, %74 : vector<8x128xf32>
    %c0_29 = arith.constant 0 : index
    %c0_30 = arith.constant 0 : index
    %c0_31 = arith.constant 0 : index
    %76 = vector.load %arg7[%c0_29, %c0_30, %c0_31] : memref<8x8x128xf32, #tpu.memory_space<vmem>>, vector<1x8x128xf32>
    %77 = vector.shape_cast %76 : vector<1x8x128xf32> to vector<8x128xf32>
    %78 = vector.shape_cast %75 : vector<8x128xf32> to vector<1x8x128xf32>
    tpu.vector_store %arg7[%c0_29, %c0_30, %c0_31], %78 {strides = array<i32>} : memref<8x8x128xf32, #tpu.memory_space<vmem>>, vector<1x8x128xf32>,
    %79 = vector.extract_strided_slice %9 {offsets = [8, 0], sizes = [8, 512], strides = [1, 1]} : vector<64x512xf32> to vector<8x512xf32>
    %80 = arith.truncf %44 : vector<8x128xf32> to vector<8x128xbf16>
    %c0_32 = arith.constant 0 : index
    %c0_33 = arith.constant 0 : index
    %81 = vector.load %arg3[%c0_32, %c0_33] : memref<128x512xbf16, #tpu.memory_space<vmem>>, vector<128x512xbf16>
    %cst_34 = arith.constant dense<0.000000e+00> : vector<8x512xf32>
    %82 = tpu.matmul %80, %81, %cst_34 {dimension_numbers = #tpu.dot_dimension_numbers<[1], [0], [0], [1], [0, 0, 1, 1], [], []>} : vector<8x128xbf16>, vector<128x512xbf16>, vector<8x512xf32> -> vector<8x512xf32>
    %83 = arith.addf %79, %82 : vector<8x512xf32>
    %84 = vector.extract_strided_slice %83 {offsets = [0, 0], sizes = [8, 128], strides = [1, 1]} : vector<8x512xf32> to vector<8x128xf32>
    %85 = arith.negf %84 : vector<8x128xf32>
    %86 = math.exp %85 : vector<8x128xf32>
    %cst_35 = arith.constant 1.000000e+00 : f32
    %87 = vector.broadcast %cst_35 : f32 to vector<8x128xf32>
    %88 = arith.addf %87, %86 : vector<8x128xf32>
    %89 = arith.divf %87, %88 : vector<8x128xf32>
    %90 = vector.extract_strided_slice %83 {offsets = [0, 128], sizes = [8, 128], strides = [1, 1]} : vector<8x512xf32> to vector<8x128xf32>
    %91 = arith.negf %90 : vector<8x128xf32>
    %92 = math.exp %91 : vector<8x128xf32>
    %cst_36 = arith.constant 1.000000e+00 : f32
    %93 = vector.broadcast %cst_36 : f32 to vector<8x128xf32>
    %94 = arith.addf %93, %92 : vector<8x128xf32>
    %95 = arith.divf %93, %94 : vector<8x128xf32>
    %96 = vector.extract_strided_slice %83 {offsets = [0, 256], sizes = [8, 128], strides = [1, 1]} : vector<8x512xf32> to vector<8x128xf32>
    %97 = math.tanh %96 : vector<8x128xf32>
    %98 = vector.extract_strided_slice %83 {offsets = [0, 384], sizes = [8, 128], strides = [1, 1]} : vector<8x512xf32> to vector<8x128xf32>
    %99 = arith.negf %98 : vector<8x128xf32>
    %100 = math.exp %99 : vector<8x128xf32>
    %cst_37 = arith.constant 1.000000e+00 : f32
    %101 = vector.broadcast %cst_37 : f32 to vector<8x128xf32>
    %102 = arith.addf %101, %100 : vector<8x128xf32>
    %103 = arith.divf %101, %102 : vector<8x128xf32>
    %104 = arith.mulf %95, %42 : vector<8x128xf32>
    %105 = arith.mulf %89, %97 : vector<8x128xf32>
    %106 = arith.addf %104, %105 : vector<8x128xf32>
    %107 = math.tanh %106 : vector<8x128xf32>
    %108 = arith.mulf %103, %107 : vector<8x128xf32>
    %109 = tpu.concatenate %108, %75 in 1 : vector<8x128xf32>, vector<8x128xf32> -> vector<8x256xf32>
    %110 = arith.truncf %109 : vector<8x256xf32> to vector<8x256xbf16>
    %c0_38 = arith.constant 0 : index
    %c0_39 = arith.constant 0 : index
    %111 = vector.load %arg5[%c0_38, %c0_39] : memref<256x512xbf16, #tpu.memory_space<vmem>>, vector<256x512xbf16>
    %cst_40 = arith.constant dense<0.000000e+00> : vector<8x512xf32>
    %112 = tpu.matmul %110, %111, %cst_40 {dimension_numbers = #tpu.dot_dimension_numbers<[1], [0], [0], [1], [0, 0, 1, 1], [], []>} : vector<8x256xbf16>, vector<256x512xbf16>, vector<8x512xf32> -> vector<8x512xf32>
    %113 = vector.broadcast %10 : vector<1x512xf32> to vector<8x512xf32>
    %114 = arith.addf %112, %113 : vector<8x512xf32>
    %115 = vector.extract_strided_slice %114 {offsets = [0, 0], sizes = [8, 128], strides = [1, 1]} : vector<8x512xf32> to vector<8x128xf32>
    %116 = arith.negf %115 : vector<8x128xf32>
    %117 = math.exp %116 : vector<8x128xf32>
    %cst_41 = arith.constant 1.000000e+00 : f32
    %118 = vector.broadcast %cst_41 : f32 to vector<8x128xf32>
    %119 = arith.addf %118, %117 : vector<8x128xf32>
    %120 = arith.divf %118, %119 : vector<8x128xf32>
    %121 = vector.extract_strided_slice %114 {offsets = [0, 128], sizes = [8, 128], strides = [1, 1]} : vector<8x512xf32> to vector<8x128xf32>
    %122 = arith.negf %121 : vector<8x128xf32>
    %123 = math.exp %122 : vector<8x128xf32>
    %cst_42 = arith.constant 1.000000e+00 : f32
    %124 = vector.broadcast %cst_42 : f32 to vector<8x128xf32>
    %125 = arith.addf %124, %123 : vector<8x128xf32>
    %126 = arith.divf %124, %125 : vector<8x128xf32>
    %127 = vector.extract_strided_slice %114 {offsets = [0, 256], sizes = [8, 128], strides = [1, 1]} : vector<8x512xf32> to vector<8x128xf32>
    %128 = math.tanh %127 : vector<8x128xf32>
    %129 = vector.extract_strided_slice %114 {offsets = [0, 384], sizes = [8, 128], strides = [1, 1]} : vector<8x512xf32> to vector<8x128xf32>
    %130 = arith.negf %129 : vector<8x128xf32>
    %131 = math.exp %130 : vector<8x128xf32>
    %cst_43 = arith.constant 1.000000e+00 : f32
    %132 = vector.broadcast %cst_43 : f32 to vector<8x128xf32>
    %133 = arith.addf %132, %131 : vector<8x128xf32>
    %134 = arith.divf %132, %133 : vector<8x128xf32>
    %135 = arith.mulf %126, %73 : vector<8x128xf32>
    %136 = arith.mulf %120, %128 : vector<8x128xf32>
    %137 = arith.addf %135, %136 : vector<8x128xf32>
    %138 = math.tanh %137 : vector<8x128xf32>
    %139 = arith.mulf %134, %138 : vector<8x128xf32>
    %c1 = arith.constant 1 : index
    %c0_44 = arith.constant 0 : index
    %c0_45 = arith.constant 0 : index
    %140 = vector.load %arg7[%c1, %c0_44, %c0_45] : memref<8x8x128xf32, #tpu.memory_space<vmem>>, vector<1x8x128xf32>
    %141 = vector.shape_cast %140 : vector<1x8x128xf32> to vector<8x128xf32>
    %142 = vector.shape_cast %139 : vector<8x128xf32> to vector<1x8x128xf32>
    tpu.vector_store %arg7[%c1, %c0_44, %c0_45], %142 {strides = array<i32>} : memref<8x8x128xf32, #tpu.memory_space<vmem>>, vector<1x8x128xf32>,
    %143 = vector.extract_strided_slice %9 {offsets = [16, 0], sizes = [8, 512], strides = [1, 1]} : vector<64x512xf32> to vector<8x512xf32>
    %144 = arith.truncf %108 : vector<8x128xf32> to vector<8x128xbf16>
    %c0_46 = arith.constant 0 : index
    %c0_47 = arith.constant 0 : index
    %145 = vector.load %arg3[%c0_46, %c0_47] : memref<128x512xbf16, #tpu.memory_space<vmem>>, vector<128x512xbf16>
    %cst_48 = arith.constant dense<0.000000e+00> : vector<8x512xf32>
    %146 = tpu.matmul %144, %145, %cst_48 {dimension_numbers = #tpu.dot_dimension_numbers<[1], [0], [0], [1], [0, 0, 1, 1], [], []>} : vector<8x128xbf16>, vector<128x512xbf16>, vector<8x512xf32> -> vector<8x512xf32>
    %147 = arith.addf %143, %146 : vector<8x512xf32>
    %148 = vector.extract_strided_slice %147 {offsets = [0, 0], sizes = [8, 128], strides = [1, 1]} : vector<8x512xf32> to vector<8x128xf32>
    %149 = arith.negf %148 : vector<8x128xf32>
    %150 = math.exp %149 : vector<8x128xf32>
    %cst_49 = arith.constant 1.000000e+00 : f32
    %151 = vector.broadcast %cst_49 : f32 to vector<8x128xf32>
    %152 = arith.addf %151, %150 : vector<8x128xf32>
    %153 = arith.divf %151, %152 : vector<8x128xf32>
    %154 = vector.extract_strided_slice %147 {offsets = [0, 128], sizes = [8, 128], strides = [1, 1]} : vector<8x512xf32> to vector<8x128xf32>
    %155 = arith.negf %154 : vector<8x128xf32>
    %156 = math.exp %155 : vector<8x128xf32>
    %cst_50 = arith.constant 1.000000e+00 : f32
    %157 = vector.broadcast %cst_50 : f32 to vector<8x128xf32>
    %158 = arith.addf %157, %156 : vector<8x128xf32>
    %159 = arith.divf %157, %158 : vector<8x128xf32>
    %160 = vector.extract_strided_slice %147 {offsets = [0, 256], sizes = [8, 128], strides = [1, 1]} : vector<8x512xf32> to vector<8x128xf32>
    %161 = math.tanh %160 : vector<8x128xf32>
    %162 = vector.extract_strided_slice %147 {offsets = [0, 384], sizes = [8, 128], strides = [1, 1]} : vector<8x512xf32> to vector<8x128xf32>
    %163 = arith.negf %162 : vector<8x128xf32>
    %164 = math.exp %163 : vector<8x128xf32>
    %cst_51 = arith.constant 1.000000e+00 : f32
    %165 = vector.broadcast %cst_51 : f32 to vector<8x128xf32>
    %166 = arith.addf %165, %164 : vector<8x128xf32>
    %167 = arith.divf %165, %166 : vector<8x128xf32>
    %168 = arith.mulf %159, %106 : vector<8x128xf32>
    %169 = arith.mulf %153, %161 : vector<8x128xf32>
    %170 = arith.addf %168, %169 : vector<8x128xf32>
    %171 = math.tanh %170 : vector<8x128xf32>
    %172 = arith.mulf %167, %171 : vector<8x128xf32>
    %173 = tpu.concatenate %172, %139 in 1 : vector<8x128xf32>, vector<8x128xf32> -> vector<8x256xf32>
    %174 = arith.truncf %173 : vector<8x256xf32> to vector<8x256xbf16>
    %c0_52 = arith.constant 0 : index
    %c0_53 = arith.constant 0 : index
    %175 = vector.load %arg5[%c0_52, %c0_53] : memref<256x512xbf16, #tpu.memory_space<vmem>>, vector<256x512xbf16>
    %cst_54 = arith.constant dense<0.000000e+00> : vector<8x512xf32>
    %176 = tpu.matmul %174, %175, %cst_54 {dimension_numbers = #tpu.dot_dimension_numbers<[1], [0], [0], [1], [0, 0, 1, 1], [], []>} : vector<8x256xbf16>, vector<256x512xbf16>, vector<8x512xf32> -> vector<8x512xf32>
    %177 = vector.broadcast %10 : vector<1x512xf32> to vector<8x512xf32>
    %178 = arith.addf %176, %177 : vector<8x512xf32>
    %179 = vector.extract_strided_slice %178 {offsets = [0, 0], sizes = [8, 128], strides = [1, 1]} : vector<8x512xf32> to vector<8x128xf32>
    %180 = arith.negf %179 : vector<8x128xf32>
    %181 = math.exp %180 : vector<8x128xf32>
    %cst_55 = arith.constant 1.000000e+00 : f32
    %182 = vector.broadcast %cst_55 : f32 to vector<8x128xf32>
    %183 = arith.addf %182, %181 : vector<8x128xf32>
    %184 = arith.divf %182, %183 : vector<8x128xf32>
    %185 = vector.extract_strided_slice %178 {offsets = [0, 128], sizes = [8, 128], strides = [1, 1]} : vector<8x512xf32> to vector<8x128xf32>
    %186 = arith.negf %185 : vector<8x128xf32>
    %187 = math.exp %186 : vector<8x128xf32>
    %cst_56 = arith.constant 1.000000e+00 : f32
    %188 = vector.broadcast %cst_56 : f32 to vector<8x128xf32>
    %189 = arith.addf %188, %187 : vector<8x128xf32>
    %190 = arith.divf %188, %189 : vector<8x128xf32>
    %191 = vector.extract_strided_slice %178 {offsets = [0, 256], sizes = [8, 128], strides = [1, 1]} : vector<8x512xf32> to vector<8x128xf32>
    %192 = math.tanh %191 : vector<8x128xf32>
    %193 = vector.extract_strided_slice %178 {offsets = [0, 384], sizes = [8, 128], strides = [1, 1]} : vector<8x512xf32> to vector<8x128xf32>
    %194 = arith.negf %193 : vector<8x128xf32>
    %195 = math.exp %194 : vector<8x128xf32>
    %cst_57 = arith.constant 1.000000e+00 : f32
    %196 = vector.broadcast %cst_57 : f32 to vector<8x128xf32>
    %197 = arith.addf %196, %195 : vector<8x128xf32>
    %198 = arith.divf %196, %197 : vector<8x128xf32>
    %199 = arith.mulf %190, %137 : vector<8x128xf32>
    %200 = arith.mulf %184, %192 : vector<8x128xf32>
    %201 = arith.addf %199, %200 : vector<8x128xf32>
    %202 = math.tanh %201 : vector<8x128xf32>
    %203 = arith.mulf %198, %202 : vector<8x128xf32>
    %c2 = arith.constant 2 : index
    %c0_58 = arith.constant 0 : index
    %c0_59 = arith.constant 0 : index
    %204 = vector.load %arg7[%c2, %c0_58, %c0_59] : memref<8x8x128xf32, #tpu.memory_space<vmem>>, vector<1x8x128xf32>
    %205 = vector.shape_cast %204 : vector<1x8x128xf32> to vector<8x128xf32>
    %206 = vector.shape_cast %203 : vector<8x128xf32> to vector<1x8x128xf32>
    tpu.vector_store %arg7[%c2, %c0_58, %c0_59], %206 {strides = array<i32>} : memref<8x8x128xf32, #tpu.memory_space<vmem>>, vector<1x8x128xf32>,
    %207 = vector.extract_strided_slice %9 {offsets = [24, 0], sizes = [8, 512], strides = [1, 1]} : vector<64x512xf32> to vector<8x512xf32>
    %208 = arith.truncf %172 : vector<8x128xf32> to vector<8x128xbf16>
    %c0_60 = arith.constant 0 : index
    %c0_61 = arith.constant 0 : index
    %209 = vector.load %arg3[%c0_60, %c0_61] : memref<128x512xbf16, #tpu.memory_space<vmem>>, vector<128x512xbf16>
    %cst_62 = arith.constant dense<0.000000e+00> : vector<8x512xf32>
    %210 = tpu.matmul %208, %209, %cst_62 {dimension_numbers = #tpu.dot_dimension_numbers<[1], [0], [0], [1], [0, 0, 1, 1], [], []>} : vector<8x128xbf16>, vector<128x512xbf16>, vector<8x512xf32> -> vector<8x512xf32>
    %211 = arith.addf %207, %210 : vector<8x512xf32>
    %212 = vector.extract_strided_slice %211 {offsets = [0, 0], sizes = [8, 128], strides = [1, 1]} : vector<8x512xf32> to vector<8x128xf32>
    %213 = arith.negf %212 : vector<8x128xf32>
    %214 = math.exp %213 : vector<8x128xf32>
    %cst_63 = arith.constant 1.000000e+00 : f32
    %215 = vector.broadcast %cst_63 : f32 to vector<8x128xf32>
    %216 = arith.addf %215, %214 : vector<8x128xf32>
    %217 = arith.divf %215, %216 : vector<8x128xf32>
    %218 = vector.extract_strided_slice %211 {offsets = [0, 128], sizes = [8, 128], strides = [1, 1]} : vector<8x512xf32> to vector<8x128xf32>
    %219 = arith.negf %218 : vector<8x128xf32>
    %220 = math.exp %219 : vector<8x128xf32>
    %cst_64 = arith.constant 1.000000e+00 : f32
    %221 = vector.broadcast %cst_64 : f32 to vector<8x128xf32>
    %222 = arith.addf %221, %220 : vector<8x128xf32>
    %223 = arith.divf %221, %222 : vector<8x128xf32>
    %224 = vector.extract_strided_slice %211 {offsets = [0, 256], sizes = [8, 128], strides = [1, 1]} : vector<8x512xf32> to vector<8x128xf32>
    %225 = math.tanh %224 : vector<8x128xf32>
    %226 = vector.extract_strided_slice %211 {offsets = [0, 384], sizes = [8, 128], strides = [1, 1]} : vector<8x512xf32> to vector<8x128xf32>
    %227 = arith.negf %226 : vector<8x128xf32>
    %228 = math.exp %227 : vector<8x128xf32>
    %cst_65 = arith.constant 1.000000e+00 : f32
    %229 = vector.broadcast %cst_65 : f32 to vector<8x128xf32>
    %230 = arith.addf %229, %228 : vector<8x128xf32>
    %231 = arith.divf %229, %230 : vector<8x128xf32>
    %232 = arith.mulf %223, %170 : vector<8x128xf32>
    %233 = arith.mulf %217, %225 : vector<8x128xf32>
    %234 = arith.addf %232, %233 : vector<8x128xf32>
    %235 = math.tanh %234 : vector<8x128xf32>
    %236 = arith.mulf %231, %235 : vector<8x128xf32>
    %237 = tpu.concatenate %236, %203 in 1 : vector<8x128xf32>, vector<8x128xf32> -> vector<8x256xf32>
    %238 = arith.truncf %237 : vector<8x256xf32> to vector<8x256xbf16>
    %c0_66 = arith.constant 0 : index
    %c0_67 = arith.constant 0 : index
    %239 = vector.load %arg5[%c0_66, %c0_67] : memref<256x512xbf16, #tpu.memory_space<vmem>>, vector<256x512xbf16>
    %cst_68 = arith.constant dense<0.000000e+00> : vector<8x512xf32>
    %240 = tpu.matmul %238, %239, %cst_68 {dimension_numbers = #tpu.dot_dimension_numbers<[1], [0], [0], [1], [0, 0, 1, 1], [], []>} : vector<8x256xbf16>, vector<256x512xbf16>, vector<8x512xf32> -> vector<8x512xf32>
    %241 = vector.broadcast %10 : vector<1x512xf32> to vector<8x512xf32>
    %242 = arith.addf %240, %241 : vector<8x512xf32>
    %243 = vector.extract_strided_slice %242 {offsets = [0, 0], sizes = [8, 128], strides = [1, 1]} : vector<8x512xf32> to vector<8x128xf32>
    %244 = arith.negf %243 : vector<8x128xf32>
    %245 = math.exp %244 : vector<8x128xf32>
    %cst_69 = arith.constant 1.000000e+00 : f32
    %246 = vector.broadcast %cst_69 : f32 to vector<8x128xf32>
    %247 = arith.addf %246, %245 : vector<8x128xf32>
    %248 = arith.divf %246, %247 : vector<8x128xf32>
    %249 = vector.extract_strided_slice %242 {offsets = [0, 128], sizes = [8, 128], strides = [1, 1]} : vector<8x512xf32> to vector<8x128xf32>
    %250 = arith.negf %249 : vector<8x128xf32>
    %251 = math.exp %250 : vector<8x128xf32>
    %cst_70 = arith.constant 1.000000e+00 : f32
    %252 = vector.broadcast %cst_70 : f32 to vector<8x128xf32>
    %253 = arith.addf %252, %251 : vector<8x128xf32>
    %254 = arith.divf %252, %253 : vector<8x128xf32>
    %255 = vector.extract_strided_slice %242 {offsets = [0, 256], sizes = [8, 128], strides = [1, 1]} : vector<8x512xf32> to vector<8x128xf32>
    %256 = math.tanh %255 : vector<8x128xf32>
    %257 = vector.extract_strided_slice %242 {offsets = [0, 384], sizes = [8, 128], strides = [1, 1]} : vector<8x512xf32> to vector<8x128xf32>
    %258 = arith.negf %257 : vector<8x128xf32>
    %259 = math.exp %258 : vector<8x128xf32>
    %cst_71 = arith.constant 1.000000e+00 : f32
    %260 = vector.broadcast %cst_71 : f32 to vector<8x128xf32>
    %261 = arith.addf %260, %259 : vector<8x128xf32>
    %262 = arith.divf %260, %261 : vector<8x128xf32>
    %263 = arith.mulf %254, %201 : vector<8x128xf32>
    %264 = arith.mulf %248, %256 : vector<8x128xf32>
    %265 = arith.addf %263, %264 : vector<8x128xf32>
    %266 = math.tanh %265 : vector<8x128xf32>
    %267 = arith.mulf %262, %266 : vector<8x128xf32>
    %c3 = arith.constant 3 : index
    %c0_72 = arith.constant 0 : index
    %c0_73 = arith.constant 0 : index
    %268 = vector.load %arg7[%c3, %c0_72, %c0_73] : memref<8x8x128xf32, #tpu.memory_space<vmem>>, vector<1x8x128xf32>
    %269 = vector.shape_cast %268 : vector<1x8x128xf32> to vector<8x128xf32>
    %270 = vector.shape_cast %267 : vector<8x128xf32> to vector<1x8x128xf32>
    tpu.vector_store %arg7[%c3, %c0_72, %c0_73], %270 {strides = array<i32>} : memref<8x8x128xf32, #tpu.memory_space<vmem>>, vector<1x8x128xf32>,
    %271 = vector.extract_strided_slice %9 {offsets = [32, 0], sizes = [8, 512], strides = [1, 1]} : vector<64x512xf32> to vector<8x512xf32>
    %272 = arith.truncf %236 : vector<8x128xf32> to vector<8x128xbf16>
    %c0_74 = arith.constant 0 : index
    %c0_75 = arith.constant 0 : index
    %273 = vector.load %arg3[%c0_74, %c0_75] : memref<128x512xbf16, #tpu.memory_space<vmem>>, vector<128x512xbf16>
    %cst_76 = arith.constant dense<0.000000e+00> : vector<8x512xf32>
    %274 = tpu.matmul %272, %273, %cst_76 {dimension_numbers = #tpu.dot_dimension_numbers<[1], [0], [0], [1], [0, 0, 1, 1], [], []>} : vector<8x128xbf16>, vector<128x512xbf16>, vector<8x512xf32> -> vector<8x512xf32>
    %275 = arith.addf %271, %274 : vector<8x512xf32>
    %276 = vector.extract_strided_slice %275 {offsets = [0, 0], sizes = [8, 128], strides = [1, 1]} : vector<8x512xf32> to vector<8x128xf32>
    %277 = arith.negf %276 : vector<8x128xf32>
    %278 = math.exp %277 : vector<8x128xf32>
    %cst_77 = arith.constant 1.000000e+00 : f32
    %279 = vector.broadcast %cst_77 : f32 to vector<8x128xf32>
    %280 = arith.addf %279, %278 : vector<8x128xf32>
    %281 = arith.divf %279, %280 : vector<8x128xf32>
    %282 = vector.extract_strided_slice %275 {offsets = [0, 128], sizes = [8, 128], strides = [1, 1]} : vector<8x512xf32> to vector<8x128xf32>
    %283 = arith.negf %282 : vector<8x128xf32>
    %284 = math.exp %283 : vector<8x128xf32>
    %cst_78 = arith.constant 1.000000e+00 : f32
    %285 = vector.broadcast %cst_78 : f32 to vector<8x128xf32>
    %286 = arith.addf %285, %284 : vector<8x128xf32>
    %287 = arith.divf %285, %286 : vector<8x128xf32>
    %288 = vector.extract_strided_slice %275 {offsets = [0, 256], sizes = [8, 128], strides = [1, 1]} : vector<8x512xf32> to vector<8x128xf32>
    %289 = math.tanh %288 : vector<8x128xf32>
    %290 = vector.extract_strided_slice %275 {offsets = [0, 384], sizes = [8, 128], strides = [1, 1]} : vector<8x512xf32> to vector<8x128xf32>
    %291 = arith.negf %290 : vector<8x128xf32>
    %292 = math.exp %291 : vector<8x128xf32>
    %cst_79 = arith.constant 1.000000e+00 : f32
    %293 = vector.broadcast %cst_79 : f32 to vector<8x128xf32>
    %294 = arith.addf %293, %292 : vector<8x128xf32>
    %295 = arith.divf %293, %294 : vector<8x128xf32>
    %296 = arith.mulf %287, %234 : vector<8x128xf32>
    %297 = arith.mulf %281, %289 : vector<8x128xf32>
    %298 = arith.addf %296, %297 : vector<8x128xf32>
    %299 = math.tanh %298 : vector<8x128xf32>
    %300 = arith.mulf %295, %299 : vector<8x128xf32>
    %301 = tpu.concatenate %300, %267 in 1 : vector<8x128xf32>, vector<8x128xf32> -> vector<8x256xf32>
    %302 = arith.truncf %301 : vector<8x256xf32> to vector<8x256xbf16>
    %c0_80 = arith.constant 0 : index
    %c0_81 = arith.constant 0 : index
    %303 = vector.load %arg5[%c0_80, %c0_81] : memref<256x512xbf16, #tpu.memory_space<vmem>>, vector<256x512xbf16>
    %cst_82 = arith.constant dense<0.000000e+00> : vector<8x512xf32>
    %304 = tpu.matmul %302, %303, %cst_82 {dimension_numbers = #tpu.dot_dimension_numbers<[1], [0], [0], [1], [0, 0, 1, 1], [], []>} : vector<8x256xbf16>, vector<256x512xbf16>, vector<8x512xf32> -> vector<8x512xf32>
    %305 = vector.broadcast %10 : vector<1x512xf32> to vector<8x512xf32>
    %306 = arith.addf %304, %305 : vector<8x512xf32>
    %307 = vector.extract_strided_slice %306 {offsets = [0, 0], sizes = [8, 128], strides = [1, 1]} : vector<8x512xf32> to vector<8x128xf32>
    %308 = arith.negf %307 : vector<8x128xf32>
    %309 = math.exp %308 : vector<8x128xf32>
    %cst_83 = arith.constant 1.000000e+00 : f32
    %310 = vector.broadcast %cst_83 : f32 to vector<8x128xf32>
    %311 = arith.addf %310, %309 : vector<8x128xf32>
    %312 = arith.divf %310, %311 : vector<8x128xf32>
    %313 = vector.extract_strided_slice %306 {offsets = [0, 128], sizes = [8, 128], strides = [1, 1]} : vector<8x512xf32> to vector<8x128xf32>
    %314 = arith.negf %313 : vector<8x128xf32>
    %315 = math.exp %314 : vector<8x128xf32>
    %cst_84 = arith.constant 1.000000e+00 : f32
    %316 = vector.broadcast %cst_84 : f32 to vector<8x128xf32>
    %317 = arith.addf %316, %315 : vector<8x128xf32>
    %318 = arith.divf %316, %317 : vector<8x128xf32>
    %319 = vector.extract_strided_slice %306 {offsets = [0, 256], sizes = [8, 128], strides = [1, 1]} : vector<8x512xf32> to vector<8x128xf32>
    %320 = math.tanh %319 : vector<8x128xf32>
    %321 = vector.extract_strided_slice %306 {offsets = [0, 384], sizes = [8, 128], strides = [1, 1]} : vector<8x512xf32> to vector<8x128xf32>
    %322 = arith.negf %321 : vector<8x128xf32>
    %323 = math.exp %322 : vector<8x128xf32>
    %cst_85 = arith.constant 1.000000e+00 : f32
    %324 = vector.broadcast %cst_85 : f32 to vector<8x128xf32>
    %325 = arith.addf %324, %323 : vector<8x128xf32>
    %326 = arith.divf %324, %325 : vector<8x128xf32>
    %327 = arith.mulf %318, %265 : vector<8x128xf32>
    %328 = arith.mulf %312, %320 : vector<8x128xf32>
    %329 = arith.addf %327, %328 : vector<8x128xf32>
    %330 = math.tanh %329 : vector<8x128xf32>
    %331 = arith.mulf %326, %330 : vector<8x128xf32>
    %c4 = arith.constant 4 : index
    %c0_86 = arith.constant 0 : index
    %c0_87 = arith.constant 0 : index
    %332 = vector.load %arg7[%c4, %c0_86, %c0_87] : memref<8x8x128xf32, #tpu.memory_space<vmem>>, vector<1x8x128xf32>
    %333 = vector.shape_cast %332 : vector<1x8x128xf32> to vector<8x128xf32>
    %334 = vector.shape_cast %331 : vector<8x128xf32> to vector<1x8x128xf32>
    tpu.vector_store %arg7[%c4, %c0_86, %c0_87], %334 {strides = array<i32>} : memref<8x8x128xf32, #tpu.memory_space<vmem>>, vector<1x8x128xf32>,
    %335 = vector.extract_strided_slice %9 {offsets = [40, 0], sizes = [8, 512], strides = [1, 1]} : vector<64x512xf32> to vector<8x512xf32>
    %336 = arith.truncf %300 : vector<8x128xf32> to vector<8x128xbf16>
    %c0_88 = arith.constant 0 : index
    %c0_89 = arith.constant 0 : index
    %337 = vector.load %arg3[%c0_88, %c0_89] : memref<128x512xbf16, #tpu.memory_space<vmem>>, vector<128x512xbf16>
    %cst_90 = arith.constant dense<0.000000e+00> : vector<8x512xf32>
    %338 = tpu.matmul %336, %337, %cst_90 {dimension_numbers = #tpu.dot_dimension_numbers<[1], [0], [0], [1], [0, 0, 1, 1], [], []>} : vector<8x128xbf16>, vector<128x512xbf16>, vector<8x512xf32> -> vector<8x512xf32>
    %339 = arith.addf %335, %338 : vector<8x512xf32>
    %340 = vector.extract_strided_slice %339 {offsets = [0, 0], sizes = [8, 128], strides = [1, 1]} : vector<8x512xf32> to vector<8x128xf32>
    %341 = arith.negf %340 : vector<8x128xf32>
    %342 = math.exp %341 : vector<8x128xf32>
    %cst_91 = arith.constant 1.000000e+00 : f32
    %343 = vector.broadcast %cst_91 : f32 to vector<8x128xf32>
    %344 = arith.addf %343, %342 : vector<8x128xf32>
    %345 = arith.divf %343, %344 : vector<8x128xf32>
    %346 = vector.extract_strided_slice %339 {offsets = [0, 128], sizes = [8, 128], strides = [1, 1]} : vector<8x512xf32> to vector<8x128xf32>
    %347 = arith.negf %346 : vector<8x128xf32>
    %348 = math.exp %347 : vector<8x128xf32>
    %cst_92 = arith.constant 1.000000e+00 : f32
    %349 = vector.broadcast %cst_92 : f32 to vector<8x128xf32>
    %350 = arith.addf %349, %348 : vector<8x128xf32>
    %351 = arith.divf %349, %350 : vector<8x128xf32>
    %352 = vector.extract_strided_slice %339 {offsets = [0, 256], sizes = [8, 128], strides = [1, 1]} : vector<8x512xf32> to vector<8x128xf32>
    %353 = math.tanh %352 : vector<8x128xf32>
    %354 = vector.extract_strided_slice %339 {offsets = [0, 384], sizes = [8, 128], strides = [1, 1]} : vector<8x512xf32> to vector<8x128xf32>
    %355 = arith.negf %354 : vector<8x128xf32>
    %356 = math.exp %355 : vector<8x128xf32>
    %cst_93 = arith.constant 1.000000e+00 : f32
    %357 = vector.broadcast %cst_93 : f32 to vector<8x128xf32>
    %358 = arith.addf %357, %356 : vector<8x128xf32>
    %359 = arith.divf %357, %358 : vector<8x128xf32>
    %360 = arith.mulf %351, %298 : vector<8x128xf32>
    %361 = arith.mulf %345, %353 : vector<8x128xf32>
    %362 = arith.addf %360, %361 : vector<8x128xf32>
    %363 = math.tanh %362 : vector<8x128xf32>
    %364 = arith.mulf %359, %363 : vector<8x128xf32>
    %365 = tpu.concatenate %364, %331 in 1 : vector<8x128xf32>, vector<8x128xf32> -> vector<8x256xf32>
    %366 = arith.truncf %365 : vector<8x256xf32> to vector<8x256xbf16>
    %c0_94 = arith.constant 0 : index
    %c0_95 = arith.constant 0 : index
    %367 = vector.load %arg5[%c0_94, %c0_95] : memref<256x512xbf16, #tpu.memory_space<vmem>>, vector<256x512xbf16>
    %cst_96 = arith.constant dense<0.000000e+00> : vector<8x512xf32>
    %368 = tpu.matmul %366, %367, %cst_96 {dimension_numbers = #tpu.dot_dimension_numbers<[1], [0], [0], [1], [0, 0, 1, 1], [], []>} : vector<8x256xbf16>, vector<256x512xbf16>, vector<8x512xf32> -> vector<8x512xf32>
    %369 = vector.broadcast %10 : vector<1x512xf32> to vector<8x512xf32>
    %370 = arith.addf %368, %369 : vector<8x512xf32>
    %371 = vector.extract_strided_slice %370 {offsets = [0, 0], sizes = [8, 128], strides = [1, 1]} : vector<8x512xf32> to vector<8x128xf32>
    %372 = arith.negf %371 : vector<8x128xf32>
    %373 = math.exp %372 : vector<8x128xf32>
    %cst_97 = arith.constant 1.000000e+00 : f32
    %374 = vector.broadcast %cst_97 : f32 to vector<8x128xf32>
    %375 = arith.addf %374, %373 : vector<8x128xf32>
    %376 = arith.divf %374, %375 : vector<8x128xf32>
    %377 = vector.extract_strided_slice %370 {offsets = [0, 128], sizes = [8, 128], strides = [1, 1]} : vector<8x512xf32> to vector<8x128xf32>
    %378 = arith.negf %377 : vector<8x128xf32>
    %379 = math.exp %378 : vector<8x128xf32>
    %cst_98 = arith.constant 1.000000e+00 : f32
    %380 = vector.broadcast %cst_98 : f32 to vector<8x128xf32>
    %381 = arith.addf %380, %379 : vector<8x128xf32>
    %382 = arith.divf %380, %381 : vector<8x128xf32>
    %383 = vector.extract_strided_slice %370 {offsets = [0, 256], sizes = [8, 128], strides = [1, 1]} : vector<8x512xf32> to vector<8x128xf32>
    %384 = math.tanh %383 : vector<8x128xf32>
    %385 = vector.extract_strided_slice %370 {offsets = [0, 384], sizes = [8, 128], strides = [1, 1]} : vector<8x512xf32> to vector<8x128xf32>
    %386 = arith.negf %385 : vector<8x128xf32>
    %387 = math.exp %386 : vector<8x128xf32>
    %cst_99 = arith.constant 1.000000e+00 : f32
    %388 = vector.broadcast %cst_99 : f32 to vector<8x128xf32>
    %389 = arith.addf %388, %387 : vector<8x128xf32>
    %390 = arith.divf %388, %389 : vector<8x128xf32>
    %391 = arith.mulf %382, %329 : vector<8x128xf32>
    %392 = arith.mulf %376, %384 : vector<8x128xf32>
    %393 = arith.addf %391, %392 : vector<8x128xf32>
    %394 = math.tanh %393 : vector<8x128xf32>
    %395 = arith.mulf %390, %394 : vector<8x128xf32>
    %c5 = arith.constant 5 : index
    %c0_100 = arith.constant 0 : index
    %c0_101 = arith.constant 0 : index
    %396 = vector.load %arg7[%c5, %c0_100, %c0_101] : memref<8x8x128xf32, #tpu.memory_space<vmem>>, vector<1x8x128xf32>
    %397 = vector.shape_cast %396 : vector<1x8x128xf32> to vector<8x128xf32>
    %398 = vector.shape_cast %395 : vector<8x128xf32> to vector<1x8x128xf32>
    tpu.vector_store %arg7[%c5, %c0_100, %c0_101], %398 {strides = array<i32>} : memref<8x8x128xf32, #tpu.memory_space<vmem>>, vector<1x8x128xf32>,
    %399 = vector.extract_strided_slice %9 {offsets = [48, 0], sizes = [8, 512], strides = [1, 1]} : vector<64x512xf32> to vector<8x512xf32>
    %400 = arith.truncf %364 : vector<8x128xf32> to vector<8x128xbf16>
    %c0_102 = arith.constant 0 : index
    %c0_103 = arith.constant 0 : index
    %401 = vector.load %arg3[%c0_102, %c0_103] : memref<128x512xbf16, #tpu.memory_space<vmem>>, vector<128x512xbf16>
    %cst_104 = arith.constant dense<0.000000e+00> : vector<8x512xf32>
    %402 = tpu.matmul %400, %401, %cst_104 {dimension_numbers = #tpu.dot_dimension_numbers<[1], [0], [0], [1], [0, 0, 1, 1], [], []>} : vector<8x128xbf16>, vector<128x512xbf16>, vector<8x512xf32> -> vector<8x512xf32>
    %403 = arith.addf %399, %402 : vector<8x512xf32>
    %404 = vector.extract_strided_slice %403 {offsets = [0, 0], sizes = [8, 128], strides = [1, 1]} : vector<8x512xf32> to vector<8x128xf32>
    %405 = arith.negf %404 : vector<8x128xf32>
    %406 = math.exp %405 : vector<8x128xf32>
    %cst_105 = arith.constant 1.000000e+00 : f32
    %407 = vector.broadcast %cst_105 : f32 to vector<8x128xf32>
    %408 = arith.addf %407, %406 : vector<8x128xf32>
    %409 = arith.divf %407, %408 : vector<8x128xf32>
    %410 = vector.extract_strided_slice %403 {offsets = [0, 128], sizes = [8, 128], strides = [1, 1]} : vector<8x512xf32> to vector<8x128xf32>
    %411 = arith.negf %410 : vector<8x128xf32>
    %412 = math.exp %411 : vector<8x128xf32>
    %cst_106 = arith.constant 1.000000e+00 : f32
    %413 = vector.broadcast %cst_106 : f32 to vector<8x128xf32>
    %414 = arith.addf %413, %412 : vector<8x128xf32>
    %415 = arith.divf %413, %414 : vector<8x128xf32>
    %416 = vector.extract_strided_slice %403 {offsets = [0, 256], sizes = [8, 128], strides = [1, 1]} : vector<8x512xf32> to vector<8x128xf32>
    %417 = math.tanh %416 : vector<8x128xf32>
    %418 = vector.extract_strided_slice %403 {offsets = [0, 384], sizes = [8, 128], strides = [1, 1]} : vector<8x512xf32> to vector<8x128xf32>
    %419 = arith.negf %418 : vector<8x128xf32>
    %420 = math.exp %419 : vector<8x128xf32>
    %cst_107 = arith.constant 1.000000e+00 : f32
    %421 = vector.broadcast %cst_107 : f32 to vector<8x128xf32>
    %422 = arith.addf %421, %420 : vector<8x128xf32>
    %423 = arith.divf %421, %422 : vector<8x128xf32>
    %424 = arith.mulf %415, %362 : vector<8x128xf32>
    %425 = arith.mulf %409, %417 : vector<8x128xf32>
    %426 = arith.addf %424, %425 : vector<8x128xf32>
    %427 = math.tanh %426 : vector<8x128xf32>
    %428 = arith.mulf %423, %427 : vector<8x128xf32>
    %429 = tpu.concatenate %428, %395 in 1 : vector<8x128xf32>, vector<8x128xf32> -> vector<8x256xf32>
    %430 = arith.truncf %429 : vector<8x256xf32> to vector<8x256xbf16>
    %c0_108 = arith.constant 0 : index
    %c0_109 = arith.constant 0 : index
    %431 = vector.load %arg5[%c0_108, %c0_109] : memref<256x512xbf16, #tpu.memory_space<vmem>>, vector<256x512xbf16>
    %cst_110 = arith.constant dense<0.000000e+00> : vector<8x512xf32>
    %432 = tpu.matmul %430, %431, %cst_110 {dimension_numbers = #tpu.dot_dimension_numbers<[1], [0], [0], [1], [0, 0, 1, 1], [], []>} : vector<8x256xbf16>, vector<256x512xbf16>, vector<8x512xf32> -> vector<8x512xf32>
    %433 = vector.broadcast %10 : vector<1x512xf32> to vector<8x512xf32>
    %434 = arith.addf %432, %433 : vector<8x512xf32>
    %435 = vector.extract_strided_slice %434 {offsets = [0, 0], sizes = [8, 128], strides = [1, 1]} : vector<8x512xf32> to vector<8x128xf32>
    %436 = arith.negf %435 : vector<8x128xf32>
    %437 = math.exp %436 : vector<8x128xf32>
    %cst_111 = arith.constant 1.000000e+00 : f32
    %438 = vector.broadcast %cst_111 : f32 to vector<8x128xf32>
    %439 = arith.addf %438, %437 : vector<8x128xf32>
    %440 = arith.divf %438, %439 : vector<8x128xf32>
    %441 = vector.extract_strided_slice %434 {offsets = [0, 128], sizes = [8, 128], strides = [1, 1]} : vector<8x512xf32> to vector<8x128xf32>
    %442 = arith.negf %441 : vector<8x128xf32>
    %443 = math.exp %442 : vector<8x128xf32>
    %cst_112 = arith.constant 1.000000e+00 : f32
    %444 = vector.broadcast %cst_112 : f32 to vector<8x128xf32>
    %445 = arith.addf %444, %443 : vector<8x128xf32>
    %446 = arith.divf %444, %445 : vector<8x128xf32>
    %447 = vector.extract_strided_slice %434 {offsets = [0, 256], sizes = [8, 128], strides = [1, 1]} : vector<8x512xf32> to vector<8x128xf32>
    %448 = math.tanh %447 : vector<8x128xf32>
    %449 = vector.extract_strided_slice %434 {offsets = [0, 384], sizes = [8, 128], strides = [1, 1]} : vector<8x512xf32> to vector<8x128xf32>
    %450 = arith.negf %449 : vector<8x128xf32>
    %451 = math.exp %450 : vector<8x128xf32>
    %cst_113 = arith.constant 1.000000e+00 : f32
    %452 = vector.broadcast %cst_113 : f32 to vector<8x128xf32>
    %453 = arith.addf %452, %451 : vector<8x128xf32>
    %454 = arith.divf %452, %453 : vector<8x128xf32>
    %455 = arith.mulf %446, %393 : vector<8x128xf32>
    %456 = arith.mulf %440, %448 : vector<8x128xf32>
    %457 = arith.addf %455, %456 : vector<8x128xf32>
    %458 = math.tanh %457 : vector<8x128xf32>
    %459 = arith.mulf %454, %458 : vector<8x128xf32>
    %c6 = arith.constant 6 : index
    %c0_114 = arith.constant 0 : index
    %c0_115 = arith.constant 0 : index
    %460 = vector.load %arg7[%c6, %c0_114, %c0_115] : memref<8x8x128xf32, #tpu.memory_space<vmem>>, vector<1x8x128xf32>
    %461 = vector.shape_cast %460 : vector<1x8x128xf32> to vector<8x128xf32>
    %462 = vector.shape_cast %459 : vector<8x128xf32> to vector<1x8x128xf32>
    tpu.vector_store %arg7[%c6, %c0_114, %c0_115], %462 {strides = array<i32>} : memref<8x8x128xf32, #tpu.memory_space<vmem>>, vector<1x8x128xf32>,
    %463 = vector.extract_strided_slice %9 {offsets = [56, 0], sizes = [8, 512], strides = [1, 1]} : vector<64x512xf32> to vector<8x512xf32>
    %464 = arith.truncf %428 : vector<8x128xf32> to vector<8x128xbf16>
    %c0_116 = arith.constant 0 : index
    %c0_117 = arith.constant 0 : index
    %465 = vector.load %arg3[%c0_116, %c0_117] : memref<128x512xbf16, #tpu.memory_space<vmem>>, vector<128x512xbf16>
    %cst_118 = arith.constant dense<0.000000e+00> : vector<8x512xf32>
    %466 = tpu.matmul %464, %465, %cst_118 {dimension_numbers = #tpu.dot_dimension_numbers<[1], [0], [0], [1], [0, 0, 1, 1], [], []>} : vector<8x128xbf16>, vector<128x512xbf16>, vector<8x512xf32> -> vector<8x512xf32>
    %467 = arith.addf %463, %466 : vector<8x512xf32>
    %468 = vector.extract_strided_slice %467 {offsets = [0, 0], sizes = [8, 128], strides = [1, 1]} : vector<8x512xf32> to vector<8x128xf32>
    %469 = arith.negf %468 : vector<8x128xf32>
    %470 = math.exp %469 : vector<8x128xf32>
    %cst_119 = arith.constant 1.000000e+00 : f32
    %471 = vector.broadcast %cst_119 : f32 to vector<8x128xf32>
    %472 = arith.addf %471, %470 : vector<8x128xf32>
    %473 = arith.divf %471, %472 : vector<8x128xf32>
    %474 = vector.extract_strided_slice %467 {offsets = [0, 128], sizes = [8, 128], strides = [1, 1]} : vector<8x512xf32> to vector<8x128xf32>
    %475 = arith.negf %474 : vector<8x128xf32>
    %476 = math.exp %475 : vector<8x128xf32>
    %cst_120 = arith.constant 1.000000e+00 : f32
    %477 = vector.broadcast %cst_120 : f32 to vector<8x128xf32>
    %478 = arith.addf %477, %476 : vector<8x128xf32>
    %479 = arith.divf %477, %478 : vector<8x128xf32>
    %480 = vector.extract_strided_slice %467 {offsets = [0, 256], sizes = [8, 128], strides = [1, 1]} : vector<8x512xf32> to vector<8x128xf32>
    %481 = math.tanh %480 : vector<8x128xf32>
    %482 = vector.extract_strided_slice %467 {offsets = [0, 384], sizes = [8, 128], strides = [1, 1]} : vector<8x512xf32> to vector<8x128xf32>
    %483 = arith.negf %482 : vector<8x128xf32>
    %484 = math.exp %483 : vector<8x128xf32>
    %cst_121 = arith.constant 1.000000e+00 : f32
    %485 = vector.broadcast %cst_121 : f32 to vector<8x128xf32>
    %486 = arith.addf %485, %484 : vector<8x128xf32>
    %487 = arith.divf %485, %486 : vector<8x128xf32>
    %488 = arith.mulf %479, %426 : vector<8x128xf32>
    %489 = arith.mulf %473, %481 : vector<8x128xf32>
    %490 = arith.addf %488, %489 : vector<8x128xf32>
    %491 = math.tanh %490 : vector<8x128xf32>
    %492 = arith.mulf %487, %491 : vector<8x128xf32>
    %493 = tpu.concatenate %492, %459 in 1 : vector<8x128xf32>, vector<8x128xf32> -> vector<8x256xf32>
    %494 = arith.truncf %493 : vector<8x256xf32> to vector<8x256xbf16>
    %c0_122 = arith.constant 0 : index
    %c0_123 = arith.constant 0 : index
    %495 = vector.load %arg5[%c0_122, %c0_123] : memref<256x512xbf16, #tpu.memory_space<vmem>>, vector<256x512xbf16>
    %cst_124 = arith.constant dense<0.000000e+00> : vector<8x512xf32>
    %496 = tpu.matmul %494, %495, %cst_124 {dimension_numbers = #tpu.dot_dimension_numbers<[1], [0], [0], [1], [0, 0, 1, 1], [], []>} : vector<8x256xbf16>, vector<256x512xbf16>, vector<8x512xf32> -> vector<8x512xf32>
    %497 = vector.broadcast %10 : vector<1x512xf32> to vector<8x512xf32>
    %498 = arith.addf %496, %497 : vector<8x512xf32>
    %499 = vector.extract_strided_slice %498 {offsets = [0, 0], sizes = [8, 128], strides = [1, 1]} : vector<8x512xf32> to vector<8x128xf32>
    %500 = arith.negf %499 : vector<8x128xf32>
    %501 = math.exp %500 : vector<8x128xf32>
    %cst_125 = arith.constant 1.000000e+00 : f32
    %502 = vector.broadcast %cst_125 : f32 to vector<8x128xf32>
    %503 = arith.addf %502, %501 : vector<8x128xf32>
    %504 = arith.divf %502, %503 : vector<8x128xf32>
    %505 = vector.extract_strided_slice %498 {offsets = [0, 128], sizes = [8, 128], strides = [1, 1]} : vector<8x512xf32> to vector<8x128xf32>
    %506 = arith.negf %505 : vector<8x128xf32>
    %507 = math.exp %506 : vector<8x128xf32>
    %cst_126 = arith.constant 1.000000e+00 : f32
    %508 = vector.broadcast %cst_126 : f32 to vector<8x128xf32>
    %509 = arith.addf %508, %507 : vector<8x128xf32>
    %510 = arith.divf %508, %509 : vector<8x128xf32>
    %511 = vector.extract_strided_slice %498 {offsets = [0, 256], sizes = [8, 128], strides = [1, 1]} : vector<8x512xf32> to vector<8x128xf32>
    %512 = math.tanh %511 : vector<8x128xf32>
    %513 = vector.extract_strided_slice %498 {offsets = [0, 384], sizes = [8, 128], strides = [1, 1]} : vector<8x512xf32> to vector<8x128xf32>
    %514 = arith.negf %513 : vector<8x128xf32>
    %515 = math.exp %514 : vector<8x128xf32>
    %cst_127 = arith.constant 1.000000e+00 : f32
    %516 = vector.broadcast %cst_127 : f32 to vector<8x128xf32>
    %517 = arith.addf %516, %515 : vector<8x128xf32>
    %518 = arith.divf %516, %517 : vector<8x128xf32>
    %519 = arith.mulf %510, %457 : vector<8x128xf32>
    %520 = arith.mulf %504, %512 : vector<8x128xf32>
    %521 = arith.addf %519, %520 : vector<8x128xf32>
    %522 = math.tanh %521 : vector<8x128xf32>
    %523 = arith.mulf %518, %522 : vector<8x128xf32>
    %c7 = arith.constant 7 : index
    %c0_128 = arith.constant 0 : index
    %c0_129 = arith.constant 0 : index
    %524 = vector.load %arg7[%c7, %c0_128, %c0_129] : memref<8x8x128xf32, #tpu.memory_space<vmem>>, vector<1x8x128xf32>
    %525 = vector.shape_cast %524 : vector<1x8x128xf32> to vector<8x128xf32>
    %526 = vector.shape_cast %523 : vector<8x128xf32> to vector<1x8x128xf32>
    tpu.vector_store %arg7[%c7, %c0_128, %c0_129], %526 {strides = array<i32>} : memref<8x8x128xf32, #tpu.memory_space<vmem>>, vector<1x8x128xf32>,
    %c0_130 = arith.constant 0 : index
    %c0_131 = arith.constant 0 : index
    %527 = vector.load %arg8[%c0_130, %c0_131] : memref<8x128xf32, #tpu.memory_space<vmem>>, vector<8x128xf32>
    tpu.vector_store %arg8[%c0_130, %c0_131], %492 {strides = array<i32>} : memref<8x128xf32, #tpu.memory_space<vmem>>, vector<8x128xf32>,
    %c0_132 = arith.constant 0 : index
    %c0_133 = arith.constant 0 : index
    %528 = vector.load %arg9[%c0_132, %c0_133] : memref<8x128xf32, #tpu.memory_space<vmem>>, vector<8x128xf32>
    tpu.vector_store %arg9[%c0_132, %c0_133], %490 {strides = array<i32>} : memref<8x128xf32, #tpu.memory_space<vmem>>, vector<8x128xf32>,
    %c0_134 = arith.constant 0 : index
    %c0_135 = arith.constant 0 : index
    %529 = vector.load %arg10[%c0_134, %c0_135] : memref<8x128xf32, #tpu.memory_space<vmem>>, vector<8x128xf32>
    tpu.vector_store %arg10[%c0_134, %c0_135], %523 {strides = array<i32>} : memref<8x128xf32, #tpu.memory_space<vmem>>, vector<8x128xf32>,
    %c0_136 = arith.constant 0 : index
    %c0_137 = arith.constant 0 : index
    %530 = vector.load %arg11[%c0_136, %c0_137] : memref<8x128xf32, #tpu.memory_space<vmem>>, vector<8x128xf32>
    tpu.vector_store %arg11[%c0_136, %c0_137], %521 {strides = array<i32>} : memref<8x128xf32, #tpu.memory_space<vmem>>, vector<8x128xf32>,
    return
  }
  func.func @transform_0(%arg0: i32) -> (i32, i32, i32) {
    %c0_i32 = arith.constant 0 : i32
    %c0_i32_0 = arith.constant 0 : i32
    %c0_i32_1 = arith.constant 0 : i32
    return %arg0, %c0_i32, %c0_i32_0 : i32, i32, i32
  }
  func.func @transform_1(%arg0: i32) -> (i32, i32) {
    %c0_i32 = arith.constant 0 : i32
    %c0_i32_0 = arith.constant 0 : i32
    %c0_i32_1 = arith.constant 0 : i32
    return %c0_i32, %c0_i32_0 : i32, i32
  }
  func.func @transform_2(%arg0: i32) -> (i32, i32) {
    %c0_i32 = arith.constant 0 : i32
    %c0_i32_0 = arith.constant 0 : i32
    %c0_i32_1 = arith.constant 0 : i32
    return %c0_i32, %c0_i32_0 : i32, i32
  }
  func.func @transform_3(%arg0: i32) -> (i32, i32) {
    %c0_i32 = arith.constant 0 : i32
    %c0_i32_0 = arith.constant 0 : i32
    %c0_i32_1 = arith.constant 0 : i32
    return %c0_i32, %c0_i32_0 : i32, i32
  }
  func.func @transform_4(%arg0: i32) -> (i32, i32) {
    %c0_i32 = arith.constant 0 : i32
    %c0_i32_0 = arith.constant 0 : i32
    %c0_i32_1 = arith.constant 0 : i32
    return %c0_i32, %c0_i32_0 : i32, i32
  }
  func.func @transform_5(%arg0: i32) -> (i32, i32) {
    %c0_i32 = arith.constant 0 : i32
    %c0_i32_0 = arith.constant 0 : i32
    %c0_i32_1 = arith.constant 0 : i32
    return %c0_i32, %c0_i32_0 : i32, i32
  }
  func.func @transform_6(%arg0: i32) -> (i32, i32, i32) {
    %c0_i32 = arith.constant 0 : i32
    %c0_i32_0 = arith.constant 0 : i32
    %c0_i32_1 = arith.constant 0 : i32
    return %arg0, %c0_i32, %c0_i32_0 : i32, i32, i32
  }
}

</mosaic_0001>

<llo_original>
// kernel: autoencoder_forward.1
$region0: #{autoencoder_forward.1}
  #allocation0 [shape = 'u32[]', space=smem, size = 0x4, offset = 0x4, fixed_abs, tag = 'smem constant byte address 0x4 - core index']
  #allocation1 [shape = 'u32[144,128]{1,0:T(1,128)}', space=vmem, size = 0x12000, scoped, tag = 'internal scratch']
  #allocation2 [shape = 'f32[8,128]{1,0:T(8,128)}', space=vmem, size = 0x1000, scoped, tag = 'scratch operand']
  #allocation3 [shape = 'f32[8,128]{1,0:T(8,128)}', space=vmem, size = 0x1000, scoped, tag = 'scratch operand']
  #allocation4 [shape = 'f32[8,128]{1,0:T(8,128)}', space=vmem, size = 0x1000, scoped, tag = 'scratch operand']
  #allocation5 [shape = 'f32[8,128]{1,0:T(8,128)}', space=vmem, size = 0x1000, scoped, tag = 'scratch operand']
  %s0 = inlined_call_operand.vmem [shape: bf16[8,8,128], index: 0, kind: input, shape index: {}]
  %s1 = inlined_call_operand.vmem [shape: bf16[128,512], index: 1, kind: input, shape index: {}]
  %s2 = inlined_call_operand.vmem [shape: bf16[128,512], index: 2, kind: input, shape index: {}]
  %s3 = inlined_call_operand.vmem [shape: f32[1,512], index: 3, kind: input, shape index: {}]
  %s4 = inlined_call_operand.vmem [shape: bf16[256,512], index: 4, kind: input, shape index: {}]
  %s5 = inlined_call_operand.vmem [shape: f32[1,512], index: 5, kind: input, shape index: {}]
  %s6 = inlined_call_operand.vmem [shape: f32[8,8,128], index: 6, kind: output, shape index: {}]
  %s7 = sld [smem:[#allocation0]]
  $region38: #{autoencoder_forward.1} parent=0
    _
  %s9 = ssub.s32 1, %s7
  %s10 = scalar_select 0, %s9, %s7
  // Predicated region
  $region2: #{autoencoder_forward.1} parent=0 // pred_check
    _
  $region3: #{autoencoder_forward.1} parent=0 // pred_check_branch
    %12 = sbr.rel (0) target = $region5
  $region4: #{autoencoder_forward.1} parent=0 // pred_region
    _
  $region5: #{autoencoder_forward.1} parent=0 // pred_fallthru
    _
  // Predicated region
  $region6: #{autoencoder_forward.1} parent=0 // pred_check
    _
  $region7: #{autoencoder_forward.1} parent=0 // pred_check_branch
    %14 = sbr.rel (0) target = $region9
  $region8: #{autoencoder_forward.1} parent=0 // pred_region
    _
  $region9: #{autoencoder_forward.1} parent=0 // pred_fallthru
    _
  // Predicated region
  $region10: #{autoencoder_forward.1} parent=0 // pred_check
    _
  $region11: #{autoencoder_forward.1} parent=0 // pred_check_branch
    %16 = sbr.rel (0) target = $region13
  $region12: #{autoencoder_forward.1} parent=0 // pred_region
    _
  $region13: #{autoencoder_forward.1} parent=0 // pred_fallthru
    _
  // Predicated region
  $region14: #{autoencoder_forward.1} parent=0 // pred_check
    _
  $region15: #{autoencoder_forward.1} parent=0 // pred_check_branch
    %18 = sbr.rel (0) target = $region17
  $region16: #{autoencoder_forward.1} parent=0 // pred_region
    _
  $region17: #{autoencoder_forward.1} parent=0 // pred_fallthru
    _
  // Predicated region
  $region18: #{autoencoder_forward.1} parent=0 // pred_check
    _
  $region19: #{autoencoder_forward.1} parent=0 // pred_check_branch
    %20 = sbr.rel (0) target = $region21
  $region20: #{autoencoder_forward.1} parent=0 // pred_region
    _
  $region21: #{autoencoder_forward.1} parent=0 // pred_fallthru
    _
  // Predicated region
  $region22: #{autoencoder_forward.1} parent=0 // pred_check
    _
  $region23: #{autoencoder_forward.1} parent=0 // pred_check_branch
    %22 = sbr.rel (0) target = $region25
  $region24: #{autoencoder_forward.1} parent=0 // pred_region
    _
  $region25: #{autoencoder_forward.1} parent=0 // pred_fallthru
    _
  %p24 = scmp.eq.s32.totalorder 0, 0
  // Predicated region
  $region26: #{autoencoder_forward.1} parent=0 // pred_check
    %p25 = pneg %p24
  $region27: #{autoencoder_forward.1} parent=0 // pred_check_branch
    %27 = sbr.rel (%p25) target = $region29
  $region28: #{autoencoder_forward.1} parent=0 // pred_region
    %28 = vst [vmem:[#allocation2] sm:$0xff] 0.0
    %29 = vst [vmem:[#allocation3] sm:$0xff] 0.0
    %30 = vst [vmem:[#allocation4] sm:$0xff] 0.0
    %31 = vst [vmem:[#allocation5] sm:$0xff] 0.0
  $region29: #{autoencoder_forward.1} parent=0 // pred_fallthru
    _
  %v32 = vld [vmem:[%s0] sm:$0xf]
  %v33 = vld [vmem:[%s0 + $0x4] sm:$0xf]
  %v34 = vld [vmem:[%s0 + $0x8] sm:$0xf]
  %v35 = vld [vmem:[%s0 + $0xc] sm:$0xf]
  %v36 = vld [vmem:[%s0 + $0x10] sm:$0xf]
  %v37 = vld [vmem:[%s0 + $0x14] sm:$0xf]
  %v38 = vld [vmem:[%s0 + $0x18] sm:$0xf]
  %v39 = vld [vmem:[%s0 + $0x1c] sm:$0xf]
  %v40 = vld [vmem:[%s1] sm:$0xff]
  %v41 = vld [vmem:[%s1 + $0x8] sm:$0xff]
  %v42 = vld [vmem:[%s1 + $0x10] sm:$0xff]
  %v43 = vld [vmem:[%s1 + $0x18] sm:$0xff]
  %v44 = vld [vmem:[%s1 + $0x20] sm:$0xff]
  %v45 = vld [vmem:[%s1 + $0x28] sm:$0xff]
  %v46 = vld [vmem:[%s1 + $0x30] sm:$0xff]
  %v47 = vld [vmem:[%s1 + $0x38] sm:$0xff]
  %v48 = vld [vmem:[%s1 + $0x40] sm:$0xff]
  %v49 = vld [vmem:[%s1 + $0x48] sm:$0xff]
  %v50 = vld [vmem:[%s1 + $0x50] sm:$0xff]
  %v51 = vld [vmem:[%s1 + $0x58] sm:$0xff]
  %v52 = vld [vmem:[%s1 + $0x60] sm:$0xff]
  %v53 = vld [vmem:[%s1 + $0x68] sm:$0xff]
  %v54 = vld [vmem:[%s1 + $0x70] sm:$0xff]
  %v55 = vld [vmem:[%s1 + $0x78] sm:$0xff]
  %v56 = vld [vmem:[%s1 + $0x80] sm:$0xff]
  %v57 = vld [vmem:[%s1 + $0x88] sm:$0xff]
  %v58 = vld [vmem:[%s1 + $0x90] sm:$0xff]
  %v59 = vld [vmem:[%s1 + $0x98] sm:$0xff]
  %v60 = vld [vmem:[%s1 + $0xa0] sm:$0xff]
  %v61 = vld [vmem:[%s1 + $0xa8] sm:$0xff]
  %v62 = vld [vmem:[%s1 + $0xb0] sm:$0xff]
  %v63 = vld [vmem:[%s1 + $0xb8] sm:$0xff]
  %v64 = vld [vmem:[%s1 + $0xc0] sm:$0xff]
  %v65 = vld [vmem:[%s1 + $0xc8] sm:$0xff]
  %v66 = vld [vmem:[%s1 + $0xd0] sm:$0xff]
  %v67 = vld [vmem:[%s1 + $0xd8] sm:$0xff]
  %v68 = vld [vmem:[%s1 + $0xe0] sm:$0xff]
  %v69 = vld [vmem:[%s1 + $0xe8] sm:$0xff]
  %v70 = vld [vmem:[%s1 + $0xf0] sm:$0xff]
  %v71 = vld [vmem:[%s1 + $0xf8] sm:$0xff]
  %v72 = vld [vmem:[%s3] sm:$0xf]
  %v74 = vlaneseq
  %v75 = vshrl.u32 %v74, 7
  %v76 = vsub.s32 0, %v75
  %v77 = vrot.slane %v72, %v76
  %v78 = vlaneseq
  %v79 = vshrl.u32 %v78, 7
  %v80 = vsub.s32 1, %v79
  %v81 = vrot.slane %v72, %v80
  %v82 = vlaneseq
  %v83 = vshrl.u32 %v82, 7
  %v84 = vsub.s32 2, %v83
  %v85 = vrot.slane %v72, %v84
  %v86 = vlaneseq
  %v87 = vshrl.u32 %v86, 7
  %v88 = vsub.s32 3, %v87
  %v89 = vrot.slane %v72, %v88
  %v102 = vunpack.c.l.b16 %v32
  %v103 = vunpack.c.l.b16 %v33
  %v104 = vunpack.c.l.b16 %v34
  %v105 = vunpack.c.l.b16 %v35
  %v106 = vunpack.c.l.b16 %v36
  %v107 = vunpack.c.l.b16 %v37
  %v108 = vunpack.c.l.b16 %v38
  %v109 = vunpack.c.l.b16 %v39
  %v110 = vpack.c.b16 %v103, %v102
  %v111 = vpack.c.b16 %v105, %v104
  %v112 = vpack.c.b16 %v107, %v106
  %v113 = vpack.c.b16 %v109, %v108
  %v150 = vunpack.c.l.b16 %v40
  %v151 = vunpack.c.h.b16 %v40
  %v152 = vunpack.c.l.b16 %v41
  %v153 = vunpack.c.h.b16 %v41
  %v154 = vunpack.c.l.b16 %v42
  %v155 = vunpack.c.h.b16 %v42
  %v156 = vunpack.c.l.b16 %v43
  %v157 = vunpack.c.h.b16 %v43
  %v158 = vunpack.c.l.b16 %v44
  %v159 = vunpack.c.h.b16 %v44
  %v160 = vunpack.c.l.b16 %v45
  %v161 = vunpack.c.h.b16 %v45
  %v162 = vunpack.c.l.b16 %v46
  %v163 = vunpack.c.h.b16 %v46
  %v164 = vunpack.c.l.b16 %v47
  %v165 = vunpack.c.h.b16 %v47
  %v166 = vunpack.c.l.b16 %v48
  %v167 = vunpack.c.h.b16 %v48
  %v168 = vunpack.c.l.b16 %v49
  %v169 = vunpack.c.h.b16 %v49
  %v170 = vunpack.c.l.b16 %v50
  %v171 = vunpack.c.h.b16 %v50
  %v172 = vunpack.c.l.b16 %v51
  %v173 = vunpack.c.h.b16 %v51
  %v174 = vunpack.c.l.b16 %v52
  %v175 = vunpack.c.h.b16 %v52
  %v176 = vunpack.c.l.b16 %v53
  %v177 = vunpack.c.h.b16 %v53
  %v178 = vunpack.c.l.b16 %v54
  %v179 = vunpack.c.h.b16 %v54
  %v180 = vunpack.c.l.b16 %v55
  %v181 = vunpack.c.h.b16 %v55
  %v182 = vunpack.c.l.b16 %v56
  %v183 = vunpack.c.h.b16 %v56
  %v184 = vunpack.c.l.b16 %v57
  %v185 = vunpack.c.h.b16 %v57
  %v186 = vunpack.c.l.b16 %v58
  %v187 = vunpack.c.h.b16 %v58
  %v188 = vunpack.c.l.b16 %v59
  %v189 = vunpack.c.h.b16 %v59
  %v190 = vunpack.c.l.b16 %v60
  %v191 = vunpack.c.h.b16 %v60
  %v192 = vunpack.c.l.b16 %v61
  %v193 = vunpack.c.h.b16 %v61
  %v194 = vunpack.c.l.b16 %v62
  %v195 = vunpack.c.h.b16 %v62
  %v196 = vunpack.c.l.b16 %v63
  %v197 = vunpack.c.h.b16 %v63
  %v198 = vunpack.c.l.b16 %v64
  %v199 = vunpack.c.h.b16 %v64
  %v200 = vunpack.c.l.b16 %v65
  %v201 = vunpack.c.h.b16 %v65
  %v202 = vunpack.c.l.b16 %v66
  %v203 = vunpack.c.h.b16 %v66
  %v204 = vunpack.c.l.b16 %v67
  %v205 = vunpack.c.h.b16 %v67
  %v206 = vunpack.c.l.b16 %v68
  %v207 = vunpack.c.h.b16 %v68
  %v208 = vunpack.c.l.b16 %v69
  %v209 = vunpack.c.h.b16 %v69
  %v210 = vunpack.c.l.b16 %v70
  %v211 = vunpack.c.h.b16 %v70
  %v212 = vunpack.c.l.b16 %v71
  %v213 = vunpack.c.h.b16 %v71
  %v214 = vpack.c.b16 %v154, %v150
  %v215 = vpack.c.b16 %v155, %v151
  %v216 = vpack.c.b16 %v156, %v152
  %v217 = vpack.c.b16 %v157, %v153
  %v218 = vpack.c.b16 %v162, %v158
  %v219 = vpack.c.b16 %v163, %v159
  %v220 = vpack.c.b16 %v164, %v160
  %v221 = vpack.c.b16 %v165, %v161
  %v222 = vpack.c.b16 %v170, %v166
  %v223 = vpack.c.b16 %v171, %v167
  %v224 = vpack.c.b16 %v172, %v168
  %v225 = vpack.c.b16 %v173, %v169
  %v226 = vpack.c.b16 %v178, %v174
  %v227 = vpack.c.b16 %v179, %v175
  %v228 = vpack.c.b16 %v180, %v176
  %v229 = vpack.c.b16 %v181, %v177
  %v230 = vpack.c.b16 %v186, %v182
  %v231 = vpack.c.b16 %v187, %v183
  %v232 = vpack.c.b16 %v188, %v184
  %v233 = vpack.c.b16 %v189, %v185
  %v234 = vpack.c.b16 %v194, %v190
  %v235 = vpack.c.b16 %v195, %v191
  %v236 = vpack.c.b16 %v196, %v192
  %v237 = vpack.c.b16 %v197, %v193
  %v238 = vpack.c.b16 %v202, %v198
  %v239 = vpack.c.b16 %v203, %v199
  %v240 = vpack.c.b16 %v204, %v200
  %v241 = vpack.c.b16 %v205, %v201
  %v242 = vpack.c.b16 %v210, %v206
  %v243 = vpack.c.b16 %v211, %v207
  %v244 = vpack.c.b16 %v212, %v208
  %v245 = vpack.c.b16 %v213, %v209
  %278 = vmatprep.subr.bf16.mxu0 %v243
  %279 = vmatpush1.bf16.msra.mxu0 %v242
  %280 = vmatprep.subr.bf16.mxu0 %v239
  %281 = vmatpush1.bf16.msra.mxu0 %v238
  %282 = vmatprep.subr.bf16.mxu0 %v235
  %283 = vmatpush1.bf16.msra.mxu0 %v234
  %284 = vmatprep.subr.bf16.mxu0 %v231
  %285 = vmatpush1.bf16.msra.mxu0 %v230
  %286 = vmatprep.subr.bf16.mxu0 %v227
  %287 = vmatpush1.bf16.msra.mxu0 %v226
  %288 = vmatprep.subr.bf16.mxu0 %v223
  %289 = vmatpush1.bf16.msra.mxu0 %v222
  %290 = vmatprep.subr.bf16.mxu0 %v219
  %291 = vmatpush1.bf16.msra.mxu0 %v218
  %292 = vmatprep.subr.bf16.mxu0 %v215
  %293 = vmatpush1.bf16.msra.mxu0 %v214
  %294 = vmatprep.subr.bf16.mxu0 0
  %295 = vmatpush2.bf16.msra.mxu0 0
  %296 = vmatprep.subr.bf16.mxu0 0
  %297 = vmatpush2.bf16.msra.mxu0 0
  %298 = vmatprep.subr.bf16.mxu0 0
  %299 = vmatpush2.bf16.msra.mxu0 0
  %300 = vmatprep.subr.bf16.mxu0 0
  %301 = vmatpush2.bf16.msra.mxu0 0
  %302 = vmatprep.subr.bf16.mxu0 0
  %303 = vmatpush2.bf16.msra.mxu0 0
  %304 = vmatprep.subr.bf16.mxu0 0
  %305 = vmatpush2.bf16.msra.mxu0 0
  %306 = vmatprep.subr.bf16.mxu0 0
  %307 = vmatpush2.bf16.msra.mxu0 0
  %308 = vmatprep.subr.bf16.mxu0 0
  %309 = vmatpush2.bf16.msra.mxu0 0
  %310 = vmatprep.mubr.bf16.mxu0 0
  %311 = vmatmul.mubr.bf16.gmra.mxu0 %v110
  %v312 = vpop.f32.mrf.mxu0
  %v313 = vadd.f32 %v77, %v312
  %v314 = vpop.f32.mrf.mxu0
  %v315 = vadd.f32 %v81, %v314
  %v316 = vpop.f32.mrf.mxu0
  %v317 = vadd.f32 %v77, %v316
  %v318 = vpop.f32.mrf.mxu0
  %v319 = vadd.f32 %v81, %v318
  %320 = vmatprep.mubr.bf16.mxu0 0
  %321 = vmatmul.mubr.bf16.gmra.mxu0 %v111
  %v322 = vpop.f32.mrf.mxu0
  %v323 = vadd.f32 %v77, %v322
  %v324 = vpop.f32.mrf.mxu0
  %v325 = vadd.f32 %v81, %v324
  %v326 = vpop.f32.mrf.mxu0
  %v327 = vadd.f32 %v77, %v326
  %v328 = vpop.f32.mrf.mxu0
  %v329 = vadd.f32 %v81, %v328
  %330 = vmatprep.mubr.bf16.mxu0 0
  %331 = vmatmul.mubr.bf16.gmra.mxu0 %v112
  %v332 = vpop.f32.mrf.mxu0
  %v333 = vadd.f32 %v77, %v332
  %v334 = vpop.f32.mrf.mxu0
  %v335 = vadd.f32 %v81, %v334
  %v336 = vpop.f32.mrf.mxu0
  %v337 = vadd.f32 %v77, %v336
  %v338 = vpop.f32.mrf.mxu0
  %v339 = vadd.f32 %v81, %v338
  %340 = vmatprep.mubr.bf16.mxu0 0
  %341 = vmatmul.mubr.bf16.gmra.mxu0 %v113
  %v342 = vpop.f32.mrf.mxu0
  %v343 = vadd.f32 %v77, %v342
  %v344 = vpop.f32.mrf.mxu0
  %v345 = vadd.f32 %v81, %v344
  %v346 = vpop.f32.mrf.mxu0
  %v347 = vadd.f32 %v77, %v346
  %v348 = vpop.f32.mrf.mxu0
  %v349 = vadd.f32 %v81, %v348
  %350 = vdwg.mxu0
  %351 = vmatprep.subr.bf16.mxu0 %v245
  %352 = vmatpush1.bf16.msra.mxu0 %v244
  %353 = vmatprep.subr.bf16.mxu0 %v241
  %354 = vmatpush1.bf16.msra.mxu0 %v240
  %355 = vmatprep.subr.bf16.mxu0 %v237
  %356 = vmatpush1.bf16.msra.mxu0 %v236
  %357 = vmatprep.subr.bf16.mxu0 %v233
  %358 = vmatpush1.bf16.msra.mxu0 %v232
  %359 = vmatprep.subr.bf16.mxu0 %v229
  %360 = vmatpush1.bf16.msra.mxu0 %v228
  %361 = vmatprep.subr.bf16.mxu0 %v225
  %362 = vmatpush1.bf16.msra.mxu0 %v224
  %363 = vmatprep.subr.bf16.mxu0 %v221
  %364 = vmatpush1.bf16.msra.mxu0 %v220
  %365 = vmatprep.subr.bf16.mxu0 %v217
  %366 = vmatpush1.bf16.msra.mxu0 %v216
  %367 = vmatprep.subr.bf16.mxu0 0
  %368 = vmatpush2.bf16.msra.mxu0 0
  %369 = vmatprep.subr.bf16.mxu0 0
  %370 = vmatpush2.bf16.msra.mxu0 0
  %371 = vmatprep.subr.bf16.mxu0 0
  %372 = vmatpush2.bf16.msra.mxu0 0
  %373 = vmatprep.subr.bf16.mxu0 0
  %374 = vmatpush2.bf16.msra.mxu0 0
  %375 = vmatprep.subr.bf16.mxu0 0
  %376 = vmatpush2.bf16.msra.mxu0 0
  %377 = vmatprep.subr.bf16.mxu0 0
  %378 = vmatpush2.bf16.msra.mxu0 0
  %379 = vmatprep.subr.bf16.mxu0 0
  %380 = vmatpush2.bf16.msra.mxu0 0
  %381 = vmatprep.subr.bf16.mxu0 0
  %382 = vmatpush2.bf16.msra.mxu0 0
  %383 = vmatprep.mubr.bf16.mxu0 0
  %384 = vmatmul.mubr.bf16.gmra.mxu0 %v110
  %v385 = vpop.f32.mrf.mxu0
  %v386 = vadd.f32 %v85, %v385
  %v387 = vpop.f32.mrf.mxu0
  %v388 = vadd.f32 %v89, %v387
  %v389 = vpop.f32.mrf.mxu0
  %v390 = vadd.f32 %v85, %v389
  %v391 = vpop.f32.mrf.mxu0
  %v392 = vadd.f32 %v89, %v391
  %393 = vmatprep.mubr.bf16.mxu0 0
  %394 = vmatmul.mubr.bf16.gmra.mxu0 %v111
  %v395 = vpop.f32.mrf.mxu0
  %v396 = vadd.f32 %v85, %v395
  %v397 = vpop.f32.mrf.mxu0
  %v398 = vadd.f32 %v89, %v397
  %v399 = vpop.f32.mrf.mxu0
  %v400 = vadd.f32 %v85, %v399
  %v401 = vpop.f32.mrf.mxu0
  %v402 = vadd.f32 %v89, %v401
  %403 = vmatprep.mubr.bf16.mxu0 0
  %404 = vmatmul.mubr.bf16.gmra.mxu0 %v112
  %v405 = vpop.f32.mrf.mxu0
  %v406 = vadd.f32 %v85, %v405
  %v407 = vpop.f32.mrf.mxu0
  %v408 = vadd.f32 %v89, %v407
  %v409 = vpop.f32.mrf.mxu0
  %v410 = vadd.f32 %v85, %v409
  %v411 = vpop.f32.mrf.mxu0
  %v412 = vadd.f32 %v89, %v411
  %413 = vmatprep.mubr.bf16.mxu0 0
  %414 = vmatmul.mubr.bf16.gmra.mxu0 %v113
  %v415 = vpop.f32.mrf.mxu0
  %v416 = vadd.f32 %v85, %v415
  %v417 = vpop.f32.mrf.mxu0
  %v418 = vadd.f32 %v89, %v417
  %v419 = vpop.f32.mrf.mxu0
  %v420 = vadd.f32 %v85, %v419
  %v421 = vpop.f32.mrf.mxu0
  %v422 = vadd.f32 %v89, %v421
  %423 = vdwg.mxu0
  %v424 = vld [vmem:[%s5] sm:$0xf]
  %v425 = vld [vmem:[#allocation2] sm:$0xff]
  %v426 = vld [vmem:[#allocation3] sm:$0xff]
  %v427 = vld [vmem:[#allocation4] sm:$0xff]
  %v428 = vld [vmem:[#allocation5] sm:$0xff]
  %v429 = vpack.c.bf16 %v425, %v425
  %v430 = vld [vmem:[%s2] sm:$0xff]
  %v431 = vld [vmem:[%s2 + $0x8] sm:$0xff]
  %v432 = vld [vmem:[%s2 + $0x10] sm:$0xff]
  %v433 = vld [vmem:[%s2 + $0x18] sm:$0xff]
  %v434 = vld [vmem:[%s2 + $0x20] sm:$0xff]
  %v435 = vld [vmem:[%s2 + $0x28] sm:$0xff]
  %v436 = vld [vmem:[%s2 + $0x30] sm:$0xff]
  %v437 = vld [vmem:[%s2 + $0x38] sm:$0xff]
  %v438 = vld [vmem:[%s2 + $0x40] sm:$0xff]
  %v439 = vld [vmem:[%s2 + $0x48] sm:$0xff]
  %v440 = vld [vmem:[%s2 + $0x50] sm:$0xff]
  %v441 = vld [vmem:[%s2 + $0x58] sm:$0xff]
  %v442 = vld [vmem:[%s2 + $0x60] sm:$0xff]
  %v443 = vld [vmem:[%s2 + $0x68] sm:$0xff]
  %v444 = vld [vmem:[%s2 + $0x70] sm:$0xff]
  %v445 = vld [vmem:[%s2 + $0x78] sm:$0xff]
  %v446 = vld [vmem:[%s2 + $0x80] sm:$0xff]
  %v447 = vld [vmem:[%s2 + $0x88] sm:$0xff]
  %v448 = vld [vmem:[%s2 + $0x90] sm:$0xff]
  %v449 = vld [vmem:[%s2 + $0x98] sm:$0xff]
  %v450 = vld [vmem:[%s2 + $0xa0] sm:$0xff]
  %v451 = vld [vmem:[%s2 + $0xa8] sm:$0xff]
  %v452 = vld [vmem:[%s2 + $0xb0] sm:$0xff]
  %v453 = vld [vmem:[%s2 + $0xb8] sm:$0xff]
  %v454 = vld [vmem:[%s2 + $0xc0] sm:$0xff]
  %v455 = vld [vmem:[%s2 + $0xc8] sm:$0xff]
  %v456 = vld [vmem:[%s2 + $0xd0] sm:$0xff]
  %v457 = vld [vmem:[%s2 + $0xd8] sm:$0xff]
  %v458 = vld [vmem:[%s2 + $0xe0] sm:$0xff]
  %v459 = vld [vmem:[%s2 + $0xe8] sm:$0xff]
  %v460 = vld [vmem:[%s2 + $0xf0] sm:$0xff]
  %v461 = vld [vmem:[%s2 + $0xf8] sm:$0xff]
  %v494 = vunpack.c.l.b16 %v430
  %v495 = vunpack.c.h.b16 %v430
  %v496 = vunpack.c.l.b16 %v431
  %v497 = vunpack.c.h.b16 %v431
  %v498 = vunpack.c.l.b16 %v432
  %v499 = vunpack.c.h.b16 %v432
  %v500 = vunpack.c.l.b16 %v433
  %v501 = vunpack.c.h.b16 %v433
  %v502 = vunpack.c.l.b16 %v434
  %v503 = vunpack.c.h.b16 %v434
  %v504 = vunpack.c.l.b16 %v435
  %v505 = vunpack.c.h.b16 %v435
  %v506 = vunpack.c.l.b16 %v436
  %v507 = vunpack.c.h.b16 %v436
  %v508 = vunpack.c.l.b16 %v437
  %v509 = vunpack.c.h.b16 %v437
  %v510 = vunpack.c.l.b16 %v438
  %v511 = vunpack.c.h.b16 %v438
  %v512 = vunpack.c.l.b16 %v439
  %v513 = vunpack.c.h.b16 %v439
  %v514 = vunpack.c.l.b16 %v440
  %v515 = vunpack.c.h.b16 %v440
  %v516 = vunpack.c.l.b16 %v441
  %v517 = vunpack.c.h.b16 %v441
  %v518 = vunpack.c.l.b16 %v442
  %v519 = vunpack.c.h.b16 %v442
  %v520 = vunpack.c.l.b16 %v443
  %v521 = vunpack.c.h.b16 %v443
  %v522 = vunpack.c.l.b16 %v444
  %v523 = vunpack.c.h.b16 %v444
  %v524 = vunpack.c.l.b16 %v445
  %v525 = vunpack.c.h.b16 %v445
  %v526 = vunpack.c.l.b16 %v446
  %v527 = vunpack.c.h.b16 %v446
  %v528 = vunpack.c.l.b16 %v447
  %v529 = vunpack.c.h.b16 %v447
  %v530 = vunpack.c.l.b16 %v448
  %v531 = vunpack.c.h.b16 %v448
  %v532 = vunpack.c.l.b16 %v449
  %v533 = vunpack.c.h.b16 %v449
  %v534 = vunpack.c.l.b16 %v450
  %v535 = vunpack.c.h.b16 %v450
  %v536 = vunpack.c.l.b16 %v451
  %v537 = vunpack.c.h.b16 %v451
  %v538 = vunpack.c.l.b16 %v452
  %v539 = vunpack.c.h.b16 %v452
  %v540 = vunpack.c.l.b16 %v453
  %v541 = vunpack.c.h.b16 %v453
  %v542 = vunpack.c.l.b16 %v454
  %v543 = vunpack.c.h.b16 %v454
  %v544 = vunpack.c.l.b16 %v455
  %v545 = vunpack.c.h.b16 %v455
  %v546 = vunpack.c.l.b16 %v456
  %v547 = vunpack.c.h.b16 %v456
  %v548 = vunpack.c.l.b16 %v457
  %v549 = vunpack.c.h.b16 %v457
  %v550 = vunpack.c.l.b16 %v458
  %v551 = vunpack.c.h.b16 %v458
  %v552 = vunpack.c.l.b16 %v459
  %v553 = vunpack.c.h.b16 %v459
  %v554 = vunpack.c.l.b16 %v460
  %v555 = vunpack.c.h.b16 %v460
  %v556 = vunpack.c.l.b16 %v461
  %v557 = vunpack.c.h.b16 %v461
  %v558 = vpack.c.b16 %v498, %v494
  %v559 = vpack.c.b16 %v499, %v495
  %v560 = vpack.c.b16 %v500, %v496
  %v561 = vpack.c.b16 %v501, %v497
  %v562 = vpack.c.b16 %v506, %v502
  %v563 = vpack.c.b16 %v507, %v503
  %v564 = vpack.c.b16 %v508, %v504
  %v565 = vpack.c.b16 %v509, %v505
  %v566 = vpack.c.b16 %v514, %v510
  %v567 = vpack.c.b16 %v515, %v511
  %v568 = vpack.c.b16 %v516, %v512
  %v569 = vpack.c.b16 %v517, %v513
  %v570 = vpack.c.b16 %v522, %v518
  %v571 = vpack.c.b16 %v523, %v519
  %v572 = vpack.c.b16 %v524, %v520
  %v573 = vpack.c.b16 %v525, %v521
  %v574 = vpack.c.b16 %v530, %v526
  %v575 = vpack.c.b16 %v531, %v527
  %v576 = vpack.c.b16 %v532, %v528
  %v577 = vpack.c.b16 %v533, %v529
  %v578 = vpack.c.b16 %v538, %v534
  %v579 = vpack.c.b16 %v539, %v535
  %v580 = vpack.c.b16 %v540, %v536
  %v581 = vpack.c.b16 %v541, %v537
  %v582 = vpack.c.b16 %v546, %v542
  %v583 = vpack.c.b16 %v547, %v543
  %v584 = vpack.c.b16 %v548, %v544
  %v585 = vpack.c.b16 %v549, %v545
  %v586 = vpack.c.b16 %v554, %v550
  %v587 = vpack.c.b16 %v555, %v551
  %v588 = vpack.c.b16 %v556, %v552
  %v589 = vpack.c.b16 %v557, %v553
  %622 = vmatprep.subr.bf16.mxu0 %v587
  %623 = vmatpush1.bf16.msra.mxu0 %v586
  %624 = vmatprep.subr.bf16.mxu0 %v583
  %625 = vmatpush1.bf16.msra.mxu0 %v582
  %626 = vmatprep.subr.bf16.mxu0 %v579
  %627 = vmatpush1.bf16.msra.mxu0 %v578
  %628 = vmatprep.subr.bf16.mxu0 %v575
  %629 = vmatpush1.bf16.msra.mxu0 %v574
  %630 = vmatprep.subr.bf16.mxu0 %v571
  %631 = vmatpush1.bf16.msra.mxu0 %v570
  %632 = vmatprep.subr.bf16.mxu0 %v567
  %633 = vmatpush1.bf16.msra.mxu0 %v566
  %634 = vmatprep.subr.bf16.mxu0 %v563
  %635 = vmatpush1.bf16.msra.mxu0 %v562
  %636 = vmatprep.subr.bf16.mxu0 %v559
  %637 = vmatpush1.bf16.msra.mxu0 %v558
  %638 = vmatprep.subr.bf16.mxu0 0
  %639 = vmatpush2.bf16.msra.mxu0 0
  %640 = vmatprep.subr.bf16.mxu0 0
  %641 = vmatpush2.bf16.msra.mxu0 0
  %642 = vmatprep.subr.bf16.mxu0 0
  %643 = vmatpush2.bf16.msra.mxu0 0
  %644 = vmatprep.subr.bf16.mxu0 0
  %645 = vmatpush2.bf16.msra.mxu0 0
  %646 = vmatprep.subr.bf16.mxu0 0
  %647 = vmatpush2.bf16.msra.mxu0 0
  %648 = vmatprep.subr.bf16.mxu0 0
  %649 = vmatpush2.bf16.msra.mxu0 0
  %650 = vmatprep.subr.bf16.mxu0 0
  %651 = vmatpush2.bf16.msra.mxu0 0
  %652 = vmatprep.subr.bf16.mxu0 0
  %653 = vmatpush2.bf16.msra.mxu0 0
  %654 = vmatprep.mubr.bf16.mxu0 0
  %655 = vmatmul.mubr.bf16.gmra.mxu0 %v429
  %v656 = vpop.f32.mrf.mxu0
  %v657 = vadd.f32 0.0, %v656
  %v658 = vpop.f32.mrf.mxu0
  %v659 = vadd.f32 0.0, %v658
  %v660 = vpop.f32.mrf.mxu0
  %v661 = vpop.f32.mrf.mxu0
  %662 = vdwg.mxu0
  %663 = vmatprep.subr.bf16.mxu0 %v589
  %664 = vmatpush1.bf16.msra.mxu0 %v588
  %665 = vmatprep.subr.bf16.mxu0 %v585
  %666 = vmatpush1.bf16.msra.mxu0 %v584
  %667 = vmatprep.subr.bf16.mxu0 %v581
  %668 = vmatpush1.bf16.msra.mxu0 %v580
  %669 = vmatprep.subr.bf16.mxu0 %v577
  %670 = vmatpush1.bf16.msra.mxu0 %v576
  %671 = vmatprep.subr.bf16.mxu0 %v573
  %672 = vmatpush1.bf16.msra.mxu0 %v572
  %673 = vmatprep.subr.bf16.mxu0 %v569
  %674 = vmatpush1.bf16.msra.mxu0 %v568
  %675 = vmatprep.subr.bf16.mxu0 %v565
  %676 = vmatpush1.bf16.msra.mxu0 %v564
  %677 = vmatprep.subr.bf16.mxu0 %v561
  %678 = vmatpush1.bf16.msra.mxu0 %v560
  %679 = vmatprep.subr.bf16.mxu0 0
  %680 = vmatpush2.bf16.msra.mxu0 0
  %681 = vmatprep.subr.bf16.mxu0 0
  %682 = vmatpush2.bf16.msra.mxu0 0
  %683 = vmatprep.subr.bf16.mxu0 0
  %684 = vmatpush2.bf16.msra.mxu0 0
  %685 = vmatprep.subr.bf16.mxu0 0
  %686 = vmatpush2.bf16.msra.mxu0 0
  %687 = vmatprep.subr.bf16.mxu0 0
  %688 = vmatpush2.bf16.msra.mxu0 0
  %689 = vmatprep.subr.bf16.mxu0 0
  %690 = vmatpush2.bf16.msra.mxu0 0
  %691 = vmatprep.subr.bf16.mxu0 0
  %692 = vmatpush2.bf16.msra.mxu0 0
  %693 = vmatprep.subr.bf16.mxu0 0
  %694 = vmatpush2.bf16.msra.mxu0 0
  %695 = vmatprep.mubr.bf16.mxu0 0
  %696 = vmatmul.mubr.bf16.gmra.mxu0 %v429
  %v697 = vpop.f32.mrf.mxu0
  %v698 = vadd.f32 0.0, %v697
  %v699 = vpop.f32.mrf.mxu0
  %v700 = vadd.f32 0.0, %v699
  %v701 = vpop.f32.mrf.mxu0
  %v702 = vpop.f32.mrf.mxu0
  %703 = vdwg.mxu0
  %v704 = vadd.f32 %v313, %v657
  %v705 = vadd.f32 %v315, %v659
  %v706 = vadd.f32 %v386, %v698
  %v707 = vadd.f32 %v388, %v700
  %v708 = vxor.u32 %v704, 2147483648
  %v709 = vmul.f32 %v708, 1.442695
  %v710 = vpow.pop %v709
  %v711 = vadd.f32 %v710, 1.0
  %v712 = vrcp.pop %v711
  %v713 = vmul.f32 1.0, %v712
  %v714 = vxor.u32 %v705, 2147483648
  %v715 = vmul.f32 %v714, 1.442695
  %v716 = vpow.pop %v715
  %v717 = vadd.f32 %v716, 1.0
  %v718 = vrcp.pop %v717
  %v719 = vmul.f32 1.0, %v718
  %v720 = vtanh.pop %v706
  %v721 = vxor.u32 %v707, 2147483648
  %v722 = vmul.f32 %v721, 1.442695
  %v723 = vpow.pop %v722
  %v724 = vadd.f32 %v723, 1.0
  %v725 = vrcp.pop %v724
  %v726 = vmul.f32 1.0, %v725
  %v727 = vmul.f32 %v719, %v426
  %v728 = vmul.f32 %v713, %v720
  %v729 = vadd.f32 %v727, %v728
  %v730 = vtanh.pop %v729
  %v731 = vmul.f32 %v726, %v730
  %v732 = vpack.c.bf16 %v731, %v731
  %v733 = vpack.c.bf16 %v427, %v427
  %v734 = vld [vmem:[%s4] sm:$0xff]
  %v735 = vld [vmem:[%s4 + $0x8] sm:$0xff]
  %v736 = vld [vmem:[%s4 + $0x10] sm:$0xff]
  %v737 = vld [vmem:[%s4 + $0x18] sm:$0xff]
  %v738 = vld [vmem:[%s4 + $0x20] sm:$0xff]
  %v739 = vld [vmem:[%s4 + $0x28] sm:$0xff]
  %v740 = vld [vmem:[%s4 + $0x30] sm:$0xff]
  %v741 = vld [vmem:[%s4 + $0x38] sm:$0xff]
  %v742 = vld [vmem:[%s4 + $0x40] sm:$0xff]
  %v743 = vld [vmem:[%s4 + $0x48] sm:$0xff]
  %v744 = vld [vmem:[%s4 + $0x50] sm:$0xff]
  %v745 = vld [vmem:[%s4 + $0x58] sm:$0xff]
  %v746 = vld [vmem:[%s4 + $0x60] sm:$0xff]
  %v747 = vld [vmem:[%s4 + $0x68] sm:$0xff]
  %v748 = vld [vmem:[%s4 + $0x70] sm:$0xff]
  %v749 = vld [vmem:[%s4 + $0x78] sm:$0xff]
  %v750 = vld [vmem:[%s4 + $0x80] sm:$0xff]
  %v751 = vld [vmem:[%s4 + $0x88] sm:$0xff]
  %v752 = vld [vmem:[%s4 + $0x90] sm:$0xff]
  %v753 = vld [vmem:[%s4 + $0x98] sm:$0xff]
  %v754 = vld [vmem:[%s4 + $0xa0] sm:$0xff]
  %v755 = vld [vmem:[%s4 + $0xa8] sm:$0xff]
  %v756 = vld [vmem:[%s4 + $0xb0] sm:$0xff]
  %v757 = vld [vmem:[%s4 + $0xb8] sm:$0xff]
  %v758 = vld [vmem:[%s4 + $0xc0] sm:$0xff]
  %v759 = vld [vmem:[%s4 + $0xc8] sm:$0xff]
  %v760 = vld [vmem:[%s4 + $0xd0] sm:$0xff]
  %v761 = vld [vmem:[%s4 + $0xd8] sm:$0xff]
  %v762 = vld [vmem:[%s4 + $0xe0] sm:$0xff]
  %v763 = vld [vmem:[%s4 + $0xe8] sm:$0xff]
  %v764 = vld [vmem:[%s4 + $0xf0] sm:$0xff]
  %v765 = vld [vmem:[%s4 + $0xf8] sm:$0xff]
  %v766 = vld [vmem:[%s4 + $0x100] sm:$0xff]
  %v767 = vld [vmem:[%s4 + $0x108] sm:$0xff]
  %v768 = vld [vmem:[%s4 + $0x110] sm:$0xff]
  %v769 = vld [vmem:[%s4 + $0x118] sm:$0xff]
  %v770 = vld [vmem:[%s4 + $0x120] sm:$0xff]
  %v771 = vld [vmem:[%s4 + $0x128] sm:$0xff]
  %v772 = vld [vmem:[%s4 + $0x130] sm:$0xff]
  %v773 = vld [vmem:[%s4 + $0x138] sm:$0xff]
  %v774 = vld [vmem:[%s4 + $0x140] sm:$0xff]
  %v775 = vld [vmem:[%s4 + $0x148] sm:$0xff]
  %v776 = vld [vmem:[%s4 + $0x150] sm:$0xff]
  %v777 = vld [vmem:[%s4 + $0x158] sm:$0xff]
  %v778 = vld [vmem:[%s4 + $0x160] sm:$0xff]
  %v779 = vld [vmem:[%s4 + $0x168] sm:$0xff]
  %v780 = vld [vmem:[%s4 + $0x170] sm:$0xff]
  %v781 = vld [vmem:[%s4 + $0x178] sm:$0xff]
  %v782 = vld [vmem:[%s4 + $0x180] sm:$0xff]
  %v783 = vld [vmem:[%s4 + $0x188] sm:$0xff]
  %v784 = vld [vmem:[%s4 + $0x190] sm:$0xff]
  %v785 = vld [vmem:[%s4 + $0x198] sm:$0xff]
  %v786 = vld [vmem:[%s4 + $0x1a0] sm:$0xff]
  %v787 = vld [vmem:[%s4 + $0x1a8] sm:$0xff]
  %v788 = vld [vmem:[%s4 + $0x1b0] sm:$0xff]
  %v789 = vld [vmem:[%s4 + $0x1b8] sm:$0xff]
  %v790 = vld [vmem:[%s4 + $0x1c0] sm:$0xff]
  %v791 = vld [vmem:[%s4 + $0x1c8] sm:$0xff]
  %v792 = vld [vmem:[%s4 + $0x1d0] sm:$0xff]
  %v793 = vld [vmem:[%s4 + $0x1d8] sm:$0xff]
  %v794 = vld [vmem:[%s4 + $0x1e0] sm:$0xff]
  %v795 = vld [vmem:[%s4 + $0x1e8] sm:$0xff]
  %v796 = vld [vmem:[%s4 + $0x1f0] sm:$0xff]
  %v797 = vld [vmem:[%s4 + $0x1f8] sm:$0xff]
  %v799 = vlaneseq
  %v800 = vshrl.u32 %v799, 7
  %v801 = vsub.s32 0, %v800
  %v802 = vrot.slane %v424, %v801
  %v803 = vlaneseq
  %v804 = vshrl.u32 %v803, 7
  %v805 = vsub.s32 1, %v804
  %v806 = vrot.slane %v424, %v805
  %v807 = vlaneseq
  %v808 = vshrl.u32 %v807, 7
  %v809 = vsub.s32 2, %v808
  %v810 = vrot.slane %v424, %v809
  %v811 = vlaneseq
  %v812 = vshrl.u32 %v811, 7
  %v813 = vsub.s32 3, %v812
  %v814 = vrot.slane %v424, %v813
  %v883 = vunpack.c.l.b16 %v734
  %v884 = vunpack.c.h.b16 %v734
  %v885 = vunpack.c.l.b16 %v735
  %v886 = vunpack.c.h.b16 %v735
  %v887 = vunpack.c.l.b16 %v736
  %v888 = vunpack.c.h.b16 %v736
  %v889 = vunpack.c.l.b16 %v737
  %v890 = vunpack.c.h.b16 %v737
  %v891 = vunpack.c.l.b16 %v738
  %v892 = vunpack.c.h.b16 %v738
  %v893 = vunpack.c.l.b16 %v739
  %v894 = vunpack.c.h.b16 %v739
  %v895 = vunpack.c.l.b16 %v740
  %v896 = vunpack.c.h.b16 %v740
  %v897 = vunpack.c.l.b16 %v741
  %v898 = vunpack.c.h.b16 %v741
  %v899 = vunpack.c.l.b16 %v742
  %v900 = vunpack.c.h.b16 %v742
  %v901 = vunpack.c.l.b16 %v743
  %v902 = vunpack.c.h.b16 %v743
  %v903 = vunpack.c.l.b16 %v744
  %v904 = vunpack.c.h.b16 %v744
  %v905 = vunpack.c.l.b16 %v745
  %v906 = vunpack.c.h.b16 %v745
  %v907 = vunpack.c.l.b16 %v746
  %v908 = vunpack.c.h.b16 %v746
  %v909 = vunpack.c.l.b16 %v747
  %v910 = vunpack.c.h.b16 %v747
  %v911 = vunpack.c.l.b16 %v748
  %v912 = vunpack.c.h.b16 %v748
  %v913 = vunpack.c.l.b16 %v749
  %v914 = vunpack.c.h.b16 %v749
  %v915 = vunpack.c.l.b16 %v750
  %v916 = vunpack.c.h.b16 %v750
  %v917 = vunpack.c.l.b16 %v751
  %v918 = vunpack.c.h.b16 %v751
  %v919 = vunpack.c.l.b16 %v752
  %v920 = vunpack.c.h.b16 %v752
  %v921 = vunpack.c.l.b16 %v753
  %v922 = vunpack.c.h.b16 %v753
  %v923 = vunpack.c.l.b16 %v754
  %v924 = vunpack.c.h.b16 %v754
  %v925 = vunpack.c.l.b16 %v755
  %v926 = vunpack.c.h.b16 %v755
  %v927 = vunpack.c.l.b16 %v756
  %v928 = vunpack.c.h.b16 %v756
  %v929 = vunpack.c.l.b16 %v757
  %v930 = vunpack.c.h.b16 %v757
  %v931 = vunpack.c.l.b16 %v758
  %v932 = vunpack.c.h.b16 %v758
  %v933 = vunpack.c.l.b16 %v759
  %v934 = vunpack.c.h.b16 %v759
  %v935 = vunpack.c.l.b16 %v760
  %v936 = vunpack.c.h.b16 %v760
  %v937 = vunpack.c.l.b16 %v761
  %v938 = vunpack.c.h.b16 %v761
  %v939 = vunpack.c.l.b16 %v762
  %v940 = vunpack.c.h.b16 %v762
  %v941 = vunpack.c.l.b16 %v763
  %v942 = vunpack.c.h.b16 %v763
  %v943 = vunpack.c.l.b16 %v764
  %v944 = vunpack.c.h.b16 %v764
  %v945 = vunpack.c.l.b16 %v765
  %v946 = vunpack.c.h.b16 %v765
  %v947 = vunpack.c.l.b16 %v766
  %v948 = vunpack.c.h.b16 %v766
  %v949 = vunpack.c.l.b16 %v767
  %v950 = vunpack.c.h.b16 %v767
  %v951 = vunpack.c.l.b16 %v768
  %v952 = vunpack.c.h.b16 %v768
  %v953 = vunpack.c.l.b16 %v769
  %v954 = vunpack.c.h.b16 %v769
  %v955 = vunpack.c.l.b16 %v770
  %v956 = vunpack.c.h.b16 %v770
  %v957 = vunpack.c.l.b16 %v771
  %v958 = vunpack.c.h.b16 %v771
  %v959 = vunpack.c.l.b16 %v772
  %v960 = vunpack.c.h.b16 %v772
  %v961 = vunpack.c.l.b16 %v773
  %v962 = vunpack.c.h.b16 %v773
  %v963 = vunpack.c.l.b16 %v774
  %v964 = vunpack.c.h.b16 %v774
  %v965 = vunpack.c.l.b16 %v775
  %v966 = vunpack.c.h.b16 %v775
  %v967 = vunpack.c.l.b16 %v776
  %v968 = vunpack.c.h.b16 %v776
  %v969 = vunpack.c.l.b16 %v777
  %v970 = vunpack.c.h.b16 %v777
  %v971 = vunpack.c.l.b16 %v778
  %v972 = vunpack.c.h.b16 %v778
  %v973 = vunpack.c.l.b16 %v779
  %v974 = vunpack.c.h.b16 %v779
  %v975 = vunpack.c.l.b16 %v780
  %v976 = vunpack.c.h.b16 %v780
  %v977 = vunpack.c.l.b16 %v781
  %v978 = vunpack.c.h.b16 %v781
  %v979 = vunpack.c.l.b16 %v782
  %v980 = vunpack.c.h.b16 %v782
  %v981 = vunpack.c.l.b16 %v783
  %v982 = vunpack.c.h.b16 %v783
  %v983 = vunpack.c.l.b16 %v784
  %v984 = vunpack.c.h.b16 %v784
  %v985 = vunpack.c.l.b16 %v785
  %v986 = vunpack.c.h.b16 %v785
  %v987 = vunpack.c.l.b16 %v786
  %v988 = vunpack.c.h.b16 %v786
  %v989 = vunpack.c.l.b16 %v787
  %v990 = vunpack.c.h.b16 %v787
  %v991 = vunpack.c.l.b16 %v788
  %v992 = vunpack.c.h.b16 %v788
  %v993 = vunpack.c.l.b16 %v789
  %v994 = vunpack.c.h.b16 %v789
  %v995 = vunpack.c.l.b16 %v790
  %v996 = vunpack.c.h.b16 %v790
  %v997 = vunpack.c.l.b16 %v791
  %v998 = vunpack.c.h.b16 %v791
  %v999 = vunpack.c.l.b16 %v792
  %v1000 = vunpack.c.h.b16 %v792
  %v1001 = vunpack.c.l.b16 %v793
  %v1002 = vunpack.c.h.b16 %v793
  %v1003 = vunpack.c.l.b16 %v794
  %v1004 = vunpack.c.h.b16 %v794
  %v1005 = vunpack.c.l.b16 %v795
  %v1006 = vunpack.c.h.b16 %v795
  %v1007 = vunpack.c.l.b16 %v796
  %v1008 = vunpack.c.h.b16 %v796
  %v1009 = vunpack.c.l.b16 %v797
  %v1010 = vunpack.c.h.b16 %v797
  %v1011 = vpack.c.b16 %v887, %v883
  %v1012 = vpack.c.b16 %v888, %v884
  %v1013 = vpack.c.b16 %v889, %v885
  %v1014 = vpack.c.b16 %v890, %v886
  %v1015 = vpack.c.b16 %v895, %v891
  %v1016 = vpack.c.b16 %v896, %v892
  %v1017 = vpack.c.b16 %v897, %v893
  %v1018 = vpack.c.b16 %v898, %v894
  %v1019 = vpack.c.b16 %v903, %v899
  %v1020 = vpack.c.b16 %v904, %v900
  %v1021 = vpack.c.b16 %v905, %v901
  %v1022 = vpack.c.b16 %v906, %v902
  %v1023 = vpack.c.b16 %v911, %v907
  %v1024 = vpack.c.b16 %v912, %v908
  %v1025 = vpack.c.b16 %v913, %v909
  %v1026 = vpack.c.b16 %v914, %v910
  %v1027 = vpack.c.b16 %v919, %v915
  %v1028 = vpack.c.b16 %v920, %v916
  %v1029 = vpack.c.b16 %v921, %v917
  %v1030 = vpack.c.b16 %v922, %v918
  %v1031 = vpack.c.b16 %v927, %v923
  %v1032 = vpack.c.b16 %v928, %v924
  %v1033 = vpack.c.b16 %v929, %v925
  %v1034 = vpack.c.b16 %v930, %v926
  %v1035 = vpack.c.b16 %v935, %v931
  %v1036 = vpack.c.b16 %v936, %v932
  %v1037 = vpack.c.b16 %v937, %v933
  %v1038 = vpack.c.b16 %v938, %v934
  %v1039 = vpack.c.b16 %v943, %v939
  %v1040 = vpack.c.b16 %v944, %v940
  %v1041 = vpack.c.b16 %v945, %v941
  %v1042 = vpack.c.b16 %v946, %v942
  %v1043 = vpack.c.b16 %v951, %v947
  %v1044 = vpack.c.b16 %v952, %v948
  %v1045 = vpack.c.b16 %v953, %v949
  %v1046 = vpack.c.b16 %v954, %v950
  %v1047 = vpack.c.b16 %v959, %v955
  %v1048 = vpack.c.b16 %v960, %v956
  %v1049 = vpack.c.b16 %v961, %v957
  %v1050 = vpack.c.b16 %v962, %v958
  %v1051 = vpack.c.b16 %v967, %v963
  %v1052 = vpack.c.b16 %v968, %v964
  %v1053 = vpack.c.b16 %v969, %v965
  %v1054 = vpack.c.b16 %v970, %v966
  %v1055 = vpack.c.b16 %v975, %v971
  %v1056 = vpack.c.b16 %v976, %v972
  %v1057 = vpack.c.b16 %v977, %v973
  %v1058 = vpack.c.b16 %v978, %v974
  %v1059 = vpack.c.b16 %v983, %v979
  %v1060 = vpack.c.b16 %v984, %v980
  %v1061 = vpack.c.b16 %v985, %v981
  %v1062 = vpack.c.b16 %v986, %v982
  %v1063 = vpack.c.b16 %v991, %v987
  %v1064 = vpack.c.b16 %v992, %v988
  %v1065 = vpack.c.b16 %v993, %v989
  %v1066 = vpack.c.b16 %v994, %v990
  %v1067 = vpack.c.b16 %v999, %v995
  %v1068 = vpack.c.b16 %v1000, %v996
  %v1069 = vpack.c.b16 %v1001, %v997
  %v1070 = vpack.c.b16 %v1002, %v998
  %v1071 = vpack.c.b16 %v1007, %v1003
  %v1072 = vpack.c.b16 %v1008, %v1004
  %v1073 = vpack.c.b16 %v1009, %v1005
  %v1074 = vpack.c.b16 %v1010, %v1006
  %1139 = vmatprep.subr.bf16.mxu0 %v1040
  %1140 = vmatpush1.bf16.msra.mxu0 %v1039
  %1141 = vmatprep.subr.bf16.mxu0 %v1036
  %1142 = vmatpush1.bf16.msra.mxu0 %v1035
  %1143 = vmatprep.subr.bf16.mxu0 %v1032
  %1144 = vmatpush1.bf16.msra.mxu0 %v1031
  %1145 = vmatprep.subr.bf16.mxu0 %v1028
  %1146 = vmatpush1.bf16.msra.mxu0 %v1027
  %1147 = vmatprep.subr.bf16.mxu0 %v1024
  %1148 = vmatpush1.bf16.msra.mxu0 %v1023
  %1149 = vmatprep.subr.bf16.mxu0 %v1020
  %1150 = vmatpush1.bf16.msra.mxu0 %v1019
  %1151 = vmatprep.subr.bf16.mxu0 %v1016
  %1152 = vmatpush1.bf16.msra.mxu0 %v1015
  %1153 = vmatprep.subr.bf16.mxu0 %v1012
  %1154 = vmatpush1.bf16.msra.mxu0 %v1011
  %1155 = vmatprep.subr.bf16.mxu0 %v1072
  %1156 = vmatpush2.bf16.msra.mxu0 %v1071
  %1157 = vmatprep.subr.bf16.mxu0 %v1068
  %1158 = vmatpush2.bf16.msra.mxu0 %v1067
  %1159 = vmatprep.subr.bf16.mxu0 %v1064
  %1160 = vmatpush2.bf16.msra.mxu0 %v1063
  %1161 = vmatprep.subr.bf16.mxu0 %v1060
  %1162 = vmatpush2.bf16.msra.mxu0 %v1059
  %1163 = vmatprep.subr.bf16.mxu0 %v1056
  %1164 = vmatpush2.bf16.msra.mxu0 %v1055
  %1165 = vmatprep.subr.bf16.mxu0 %v1052
  %1166 = vmatpush2.bf16.msra.mxu0 %v1051
  %1167 = vmatprep.subr.bf16.mxu0 %v1048
  %1168 = vmatpush2.bf16.msra.mxu0 %v1047
  %1169 = vmatprep.subr.bf16.mxu0 %v1044
  %1170 = vmatpush2.bf16.msra.mxu0 %v1043
  %1171 = vmatprep.mubr.bf16.mxu0 %v733
  %1172 = vmatmul.mubr.bf16.gmra.mxu0 %v732
  %v1173 = vpop.f32.mrf.mxu0
  %v1174 = vadd.f32 %v802, %v1173
  %v1175 = vpop.f32.mrf.mxu0
  %v1176 = vadd.f32 %v806, %v1175
  %v1177 = vpop.f32.mrf.mxu0
  %v1178 = vpop.f32.mrf.mxu0
  %1179 = vdwg.mxu0
  %1180 = vmatprep.subr.bf16.mxu0 %v1042
  %1181 = vmatpush1.bf16.msra.mxu0 %v1041
  %1182 = vmatprep.subr.bf16.mxu0 %v1038
  %1183 = vmatpush1.bf16.msra.mxu0 %v1037
  %1184 = vmatprep.subr.bf16.mxu0 %v1034
  %1185 = vmatpush1.bf16.msra.mxu0 %v1033
  %1186 = vmatprep.subr.bf16.mxu0 %v1030
  %1187 = vmatpush1.bf16.msra.mxu0 %v1029
  %1188 = vmatprep.subr.bf16.mxu0 %v1026
  %1189 = vmatpush1.bf16.msra.mxu0 %v1025
  %1190 = vmatprep.subr.bf16.mxu0 %v1022
  %1191 = vmatpush1.bf16.msra.mxu0 %v1021
  %1192 = vmatprep.subr.bf16.mxu0 %v1018
  %1193 = vmatpush1.bf16.msra.mxu0 %v1017
  %1194 = vmatprep.subr.bf16.mxu0 %v1014
  %1195 = vmatpush1.bf16.msra.mxu0 %v1013
  %1196 = vmatprep.subr.bf16.mxu0 %v1074
  %1197 = vmatpush2.bf16.msra.mxu0 %v1073
  %1198 = vmatprep.subr.bf16.mxu0 %v1070
  %1199 = vmatpush2.bf16.msra.mxu0 %v1069
  %1200 = vmatprep.subr.bf16.mxu0 %v1066
  %1201 = vmatpush2.bf16.msra.mxu0 %v1065
  %1202 = vmatprep.subr.bf16.mxu0 %v1062
  %1203 = vmatpush2.bf16.msra.mxu0 %v1061
  %1204 = vmatprep.subr.bf16.mxu0 %v1058
  %1205 = vmatpush2.bf16.msra.mxu0 %v1057
  %1206 = vmatprep.subr.bf16.mxu0 %v1054
  %1207 = vmatpush2.bf16.msra.mxu0 %v1053
  %1208 = vmatprep.subr.bf16.mxu0 %v1050
  %1209 = vmatpush2.bf16.msra.mxu0 %v1049
  %1210 = vmatprep.subr.bf16.mxu0 %v1046
  %1211 = vmatpush2.bf16.msra.mxu0 %v1045
  %1212 = vmatprep.mubr.bf16.mxu0 %v733
  %1213 = vmatmul.mubr.bf16.gmra.mxu0 %v732
  %v1214 = vpop.f32.mrf.mxu0
  %v1215 = vadd.f32 %v810, %v1214
  %v1216 = vpop.f32.mrf.mxu0
  %v1217 = vadd.f32 %v814, %v1216
  %v1218 = vpop.f32.mrf.mxu0
  %v1219 = vpop.f32.mrf.mxu0
  %1220 = vdwg.mxu0
  %v1221 = vxor.u32 %v1174, 2147483648
  %v1222 = vmul.f32 %v1221, 1.442695
  %v1223 = vpow.pop %v1222
  %v1224 = vadd.f32 %v1223, 1.0
  %v1225 = vrcp.pop %v1224
  %v1226 = vmul.f32 1.0, %v1225
  %v1227 = vxor.u32 %v1176, 2147483648
  %v1228 = vmul.f32 %v1227, 1.442695
  %v1229 = vpow.pop %v1228
  %v1230 = vadd.f32 %v1229, 1.0
  %v1231 = vrcp.pop %v1230
  %v1232 = vmul.f32 1.0, %v1231
  %v1233 = vtanh.pop %v1215
  %v1234 = vxor.u32 %v1217, 2147483648
  %v1235 = vmul.f32 %v1234, 1.442695
  %v1236 = vpow.pop %v1235
  %v1237 = vadd.f32 %v1236, 1.0
  %v1238 = vrcp.pop %v1237
  %v1239 = vmul.f32 1.0, %v1238
  %v1240 = vmul.f32 %v1232, %v428
  %v1241 = vmul.f32 %v1226, %v1233
  %v1242 = vadd.f32 %v1240, %v1241
  %v1243 = vtanh.pop %v1242
  %v1244 = vmul.f32 %v1239, %v1243
  %1245 = vst [vmem:[%s6] sm:$0xff] %v1244
  %v1246 = vld [vmem:[%s2] sm:$0xff]
  %v1247 = vld [vmem:[%s2 + $0x8] sm:$0xff]
  %v1248 = vld [vmem:[%s2 + $0x10] sm:$0xff]
  %v1249 = vld [vmem:[%s2 + $0x18] sm:$0xff]
  %v1250 = vld [vmem:[%s2 + $0x20] sm:$0xff]
  %v1251 = vld [vmem:[%s2 + $0x28] sm:$0xff]
  %v1252 = vld [vmem:[%s2 + $0x30] sm:$0xff]
  %v1253 = vld [vmem:[%s2 + $0x38] sm:$0xff]
  %v1254 = vld [vmem:[%s2 + $0x40] sm:$0xff]
  %v1255 = vld [vmem:[%s2 + $0x48] sm:$0xff]
  %v1256 = vld [vmem:[%s2 + $0x50] sm:$0xff]
  %v1257 = vld [vmem:[%s2 + $0x58] sm:$0xff]
  %v1258 = vld [vmem:[%s2 + $0x60] sm:$0xff]
  %v1259 = vld [vmem:[%s2 + $0x68] sm:$0xff]
  %v1260 = vld [vmem:[%s2 + $0x70] sm:$0xff]
  %v1261 = vld [vmem:[%s2 + $0x78] sm:$0xff]
  %v1262 = vld [vmem:[%s2 + $0x80] sm:$0xff]
  %v1263 = vld [vmem:[%s2 + $0x88] sm:$0xff]
  %v1264 = vld [vmem:[%s2 + $0x90] sm:$0xff]
  %v1265 = vld [vmem:[%s2 + $0x98] sm:$0xff]
  %v1266 = vld [vmem:[%s2 + $0xa0] sm:$0xff]
  %v1267 = vld [vmem:[%s2 + $0xa8] sm:$0xff]
  %v1268 = vld [vmem:[%s2 + $0xb0] sm:$0xff]
  %v1269 = vld [vmem:[%s2 + $0xb8] sm:$0xff]
  %v1270 = vld [vmem:[%s2 + $0xc0] sm:$0xff]
  %v1271 = vld [vmem:[%s2 + $0xc8] sm:$0xff]
  %v1272 = vld [vmem:[%s2 + $0xd0] sm:$0xff]
  %v1273 = vld [vmem:[%s2 + $0xd8] sm:$0xff]
  %v1274 = vld [vmem:[%s2 + $0xe0] sm:$0xff]
  %v1275 = vld [vmem:[%s2 + $0xe8] sm:$0xff]
  %v1276 = vld [vmem:[%s2 + $0xf0] sm:$0xff]
  %v1277 = vld [vmem:[%s2 + $0xf8] sm:$0xff]
  %v1310 = vunpack.c.l.b16 %v1246
  %v1311 = vunpack.c.h.b16 %v1246
  %v1312 = vunpack.c.l.b16 %v1247
  %v1313 = vunpack.c.h.b16 %v1247
  %v1314 = vunpack.c.l.b16 %v1248
  %v1315 = vunpack.c.h.b16 %v1248
  %v1316 = vunpack.c.l.b16 %v1249
  %v1317 = vunpack.c.h.b16 %v1249
  %v1318 = vunpack.c.l.b16 %v1250
  %v1319 = vunpack.c.h.b16 %v1250
  %v1320 = vunpack.c.l.b16 %v1251
  %v1321 = vunpack.c.h.b16 %v1251
  %v1322 = vunpack.c.l.b16 %v1252
  %v1323 = vunpack.c.h.b16 %v1252
  %v1324 = vunpack.c.l.b16 %v1253
  %v1325 = vunpack.c.h.b16 %v1253
  %v1326 = vunpack.c.l.b16 %v1254
  %v1327 = vunpack.c.h.b16 %v1254
  %v1328 = vunpack.c.l.b16 %v1255
  %v1329 = vunpack.c.h.b16 %v1255
  %v1330 = vunpack.c.l.b16 %v1256
  %v1331 = vunpack.c.h.b16 %v1256
  %v1332 = vunpack.c.l.b16 %v1257
  %v1333 = vunpack.c.h.b16 %v1257
  %v1334 = vunpack.c.l.b16 %v1258
  %v1335 = vunpack.c.h.b16 %v1258
  %v1336 = vunpack.c.l.b16 %v1259
  %v1337 = vunpack.c.h.b16 %v1259
  %v1338 = vunpack.c.l.b16 %v1260
  %v1339 = vunpack.c.h.b16 %v1260
  %v1340 = vunpack.c.l.b16 %v1261
  %v1341 = vunpack.c.h.b16 %v1261
  %v1342 = vunpack.c.l.b16 %v1262
  %v1343 = vunpack.c.h.b16 %v1262
  %v1344 = vunpack.c.l.b16 %v1263
  %v1345 = vunpack.c.h.b16 %v1263
  %v1346 = vunpack.c.l.b16 %v1264
  %v1347 = vunpack.c.h.b16 %v1264
  %v1348 = vunpack.c.l.b16 %v1265
  %v1349 = vunpack.c.h.b16 %v1265
  %v1350 = vunpack.c.l.b16 %v1266
  %v1351 = vunpack.c.h.b16 %v1266
  %v1352 = vunpack.c.l.b16 %v1267
  %v1353 = vunpack.c.h.b16 %v1267
  %v1354 = vunpack.c.l.b16 %v1268
  %v1355 = vunpack.c.h.b16 %v1268
  %v1356 = vunpack.c.l.b16 %v1269
  %v1357 = vunpack.c.h.b16 %v1269
  %v1358 = vunpack.c.l.b16 %v1270
  %v1359 = vunpack.c.h.b16 %v1270
  %v1360 = vunpack.c.l.b16 %v1271
  %v1361 = vunpack.c.h.b16 %v1271
  %v1362 = vunpack.c.l.b16 %v1272
  %v1363 = vunpack.c.h.b16 %v1272
  %v1364 = vunpack.c.l.b16 %v1273
  %v1365 = vunpack.c.h.b16 %v1273
  %v1366 = vunpack.c.l.b16 %v1274
  %v1367 = vunpack.c.h.b16 %v1274
  %v1368 = vunpack.c.l.b16 %v1275
  %v1369 = vunpack.c.h.b16 %v1275
  %v1370 = vunpack.c.l.b16 %v1276
  %v1371 = vunpack.c.h.b16 %v1276
  %v1372 = vunpack.c.l.b16 %v1277
  %v1373 = vunpack.c.h.b16 %v1277
  %v1374 = vpack.c.b16 %v1314, %v1310
  %v1375 = vpack.c.b16 %v1315, %v1311
  %v1376 = vpack.c.b16 %v1316, %v1312
  %v1377 = vpack.c.b16 %v1317, %v1313
  %v1378 = vpack.c.b16 %v1322, %v1318
  %v1379 = vpack.c.b16 %v1323, %v1319
  %v1380 = vpack.c.b16 %v1324, %v1320
  %v1381 = vpack.c.b16 %v1325, %v1321
  %v1382 = vpack.c.b16 %v1330, %v1326
  %v1383 = vpack.c.b16 %v1331, %v1327
  %v1384 = vpack.c.b16 %v1332, %v1328
  %v1385 = vpack.c.b16 %v1333, %v1329
  %v1386 = vpack.c.b16 %v1338, %v1334
  %v1387 = vpack.c.b16 %v1339, %v1335
  %v1388 = vpack.c.b16 %v1340, %v1336
  %v1389 = vpack.c.b16 %v1341, %v1337
  %v1390 = vpack.c.b16 %v1346, %v1342
  %v1391 = vpack.c.b16 %v1347, %v1343
  %v1392 = vpack.c.b16 %v1348, %v1344
  %v1393 = vpack.c.b16 %v1349, %v1345
  %v1394 = vpack.c.b16 %v1354, %v1350
  %v1395 = vpack.c.b16 %v1355, %v1351
  %v1396 = vpack.c.b16 %v1356, %v1352
  %v1397 = vpack.c.b16 %v1357, %v1353
  %v1398 = vpack.c.b16 %v1362, %v1358
  %v1399 = vpack.c.b16 %v1363, %v1359
  %v1400 = vpack.c.b16 %v1364, %v1360
  %v1401 = vpack.c.b16 %v1365, %v1361
  %v1402 = vpack.c.b16 %v1370, %v1366
  %v1403 = vpack.c.b16 %v1371, %v1367
  %v1404 = vpack.c.b16 %v1372, %v1368
  %v1405 = vpack.c.b16 %v1373, %v1369
  %1438 = vmatprep.subr.bf16.mxu0 %v1403
  %1439 = vmatpush1.bf16.msra.mxu0 %v1402
  %1440 = vmatprep.subr.bf16.mxu0 %v1399
  %1441 = vmatpush1.bf16.msra.mxu0 %v1398
  %1442 = vmatprep.subr.bf16.mxu0 %v1395
  %1443 = vmatpush1.bf16.msra.mxu0 %v1394
  %1444 = vmatprep.subr.bf16.mxu0 %v1391
  %1445 = vmatpush1.bf16.msra.mxu0 %v1390
  %1446 = vmatprep.subr.bf16.mxu0 %v1387
  %1447 = vmatpush1.bf16.msra.mxu0 %v1386
  %1448 = vmatprep.subr.bf16.mxu0 %v1383
  %1449 = vmatpush1.bf16.msra.mxu0 %v1382
  %1450 = vmatprep.subr.bf16.mxu0 %v1379
  %1451 = vmatpush1.bf16.msra.mxu0 %v1378
  %1452 = vmatprep.subr.bf16.mxu0 %v1375
  %1453 = vmatpush1.bf16.msra.mxu0 %v1374
  %1454 = vmatprep.subr.bf16.mxu0 0
  %1455 = vmatpush2.bf16.msra.mxu0 0
  %1456 = vmatprep.subr.bf16.mxu0 0
  %1457 = vmatpush2.bf16.msra.mxu0 0
  %1458 = vmatprep.subr.bf16.mxu0 0
  %1459 = vmatpush2.bf16.msra.mxu0 0
  %1460 = vmatprep.subr.bf16.mxu0 0
  %1461 = vmatpush2.bf16.msra.mxu0 0
  %1462 = vmatprep.subr.bf16.mxu0 0
  %1463 = vmatpush2.bf16.msra.mxu0 0
  %1464 = vmatprep.subr.bf16.mxu0 0
  %1465 = vmatpush2.bf16.msra.mxu0 0
  %1466 = vmatprep.subr.bf16.mxu0 0
  %1467 = vmatpush2.bf16.msra.mxu0 0
  %1468 = vmatprep.subr.bf16.mxu0 0
  %1469 = vmatpush2.bf16.msra.mxu0 0
  %1470 = vmatprep.mubr.bf16.mxu0 0
  %1471 = vmatmul.mubr.bf16.gmra.mxu0 %v732
  %v1472 = vpop.f32.mrf.mxu0
  %v1473 = vadd.f32 0.0, %v1472
  %v1474 = vpop.f32.mrf.mxu0
  %v1475 = vadd.f32 0.0, %v1474
  %v1476 = vpop.f32.mrf.mxu0
  %v1477 = vpop.f32.mrf.mxu0
  %1478 = vdwg.mxu0
  %1479 = vmatprep.subr.bf16.mxu0 %v1405
  %1480 = vmatpush1.bf16.msra.mxu0 %v1404
  %1481 = vmatprep.subr.bf16.mxu0 %v1401
  %1482 = vmatpush1.bf16.msra.mxu0 %v1400
  %1483 = vmatprep.subr.bf16.mxu0 %v1397
  %1484 = vmatpush1.bf16.msra.mxu0 %v1396
  %1485 = vmatprep.subr.bf16.mxu0 %v1393
  %1486 = vmatpush1.bf16.msra.mxu0 %v1392
  %1487 = vmatprep.subr.bf16.mxu0 %v1389
  %1488 = vmatpush1.bf16.msra.mxu0 %v1388
  %1489 = vmatprep.subr.bf16.mxu0 %v1385
  %1490 = vmatpush1.bf16.msra.mxu0 %v1384
  %1491 = vmatprep.subr.bf16.mxu0 %v1381
  %1492 = vmatpush1.bf16.msra.mxu0 %v1380
  %1493 = vmatprep.subr.bf16.mxu0 %v1377
  %1494 = vmatpush1.bf16.msra.mxu0 %v1376
  %1495 = vmatprep.subr.bf16.mxu0 0
  %1496 = vmatpush2.bf16.msra.mxu0 0
  %1497 = vmatprep.subr.bf16.mxu0 0
  %1498 = vmatpush2.bf16.msra.mxu0 0
  %1499 = vmatprep.subr.bf16.mxu0 0
  %1500 = vmatpush2.bf16.msra.mxu0 0
  %1501 = vmatprep.subr.bf16.mxu0 0
  %1502 = vmatpush2.bf16.msra.mxu0 0
  %1503 = vmatprep.subr.bf16.mxu0 0
  %1504 = vmatpush2.bf16.msra.mxu0 0
  %1505 = vmatprep.subr.bf16.mxu0 0
  %1506 = vmatpush2.bf16.msra.mxu0 0
  %1507 = vmatprep.subr.bf16.mxu0 0
  %1508 = vmatpush2.bf16.msra.mxu0 0
  %1509 = vmatprep.subr.bf16.mxu0 0
  %1510 = vmatpush2.bf16.msra.mxu0 0
  %1511 = vmatprep.mubr.bf16.mxu0 0
  %1512 = vmatmul.mubr.bf16.gmra.mxu0 %v732
  %v1513 = vpop.f32.mrf.mxu0
  %v1514 = vadd.f32 0.0, %v1513
  %v1515 = vpop.f32.mrf.mxu0
  %v1516 = vadd.f32 0.0, %v1515
  %v1517 = vpop.f32.mrf.mxu0
  %v1518 = vpop.f32.mrf.mxu0
  %1519 = vdwg.mxu0
  %v1520 = vadd.f32 %v317, %v1473
  %v1521 = vadd.f32 %v319, %v1475
  %v1522 = vadd.f32 %v390, %v1514
  %v1523 = vadd.f32 %v392, %v1516
  %v1524 = vxor.u32 %v1520, 2147483648
  %v1525 = vmul.f32 %v1524, 1.442695
  %v1526 = vpow.pop %v1525
  %v1527 = vadd.f32 %v1526, 1.0
  %v1528 = vrcp.pop %v1527
  %v1529 = vmul.f32 1.0, %v1528
  %v1530 = vxor.u32 %v1521, 2147483648
  %v1531 = vmul.f32 %v1530, 1.442695
  %v1532 = vpow.pop %v1531
  %v1533 = vadd.f32 %v1532, 1.0
  %v1534 = vrcp.pop %v1533
  %v1535 = vmul.f32 1.0, %v1534
  %v1536 = vtanh.pop %v1522
  %v1537 = vxor.u32 %v1523, 2147483648
  %v1538 = vmul.f32 %v1537, 1.442695
  %v1539 = vpow.pop %v1538
  %v1540 = vadd.f32 %v1539, 1.0
  %v1541 = vrcp.pop %v1540
  %v1542 = vmul.f32 1.0, %v1541
  %v1543 = vmul.f32 %v1535, %v729
  %v1544 = vmul.f32 %v1529, %v1536
  %v1545 = vadd.f32 %v1543, %v1544
  %v1546 = vtanh.pop %v1545
  %v1547 = vmul.f32 %v1542, %v1546
  %v1548 = vpack.c.bf16 %v1547, %v1547
  %v1549 = vpack.c.bf16 %v1244, %v1244
  %v1550 = vld [vmem:[%s4] sm:$0xff]
  %v1551 = vld [vmem:[%s4 + $0x8] sm:$0xff]
  %v1552 = vld [vmem:[%s4 + $0x10] sm:$0xff]
  %v1553 = vld [vmem:[%s4 + $0x18] sm:$0xff]
  %v1554 = vld [vmem:[%s4 + $0x20] sm:$0xff]
  %v1555 = vld [vmem:[%s4 + $0x28] sm:$0xff]
  %v1556 = vld [vmem:[%s4 + $0x30] sm:$0xff]
  %v1557 = vld [vmem:[%s4 + $0x38] sm:$0xff]
  %v1558 = vld [vmem:[%s4 + $0x40] sm:$0xff]
  %v1559 = vld [vmem:[%s4 + $0x48] sm:$0xff]
  %v1560 = vld [vmem:[%s4 + $0x50] sm:$0xff]
  %v1561 = vld [vmem:[%s4 + $0x58] sm:$0xff]
  %v1562 = vld [vmem:[%s4 + $0x60] sm:$0xff]
  %v1563 = vld [vmem:[%s4 + $0x68] sm:$0xff]
  %v1564 = vld [vmem:[%s4 + $0x70] sm:$0xff]
  %v1565 = vld [vmem:[%s4 + $0x78] sm:$0xff]
  %v1566 = vld [vmem:[%s4 + $0x80] sm:$0xff]
  %v1567 = vld [vmem:[%s4 + $0x88] sm:$0xff]
  %v1568 = vld [vmem:[%s4 + $0x90] sm:$0xff]
  %v1569 = vld [vmem:[%s4 + $0x98] sm:$0xff]
  %v1570 = vld [vmem:[%s4 + $0xa0] sm:$0xff]
  %v1571 = vld [vmem:[%s4 + $0xa8] sm:$0xff]
  %v1572 = vld [vmem:[%s4 + $0xb0] sm:$0xff]
  %v1573 = vld [vmem:[%s4 + $0xb8] sm:$0xff]
  %v1574 = vld [vmem:[%s4 + $0xc0] sm:$0xff]
  %v1575 = vld [vmem:[%s4 + $0xc8] sm:$0xff]
  %v1576 = vld [vmem:[%s4 + $0xd0] sm:$0xff]
  %v1577 = vld [vmem:[%s4 + $0xd8] sm:$0xff]
  %v1578 = vld [vmem:[%s4 + $0xe0] sm:$0xff]
  %v1579 = vld [vmem:[%s4 + $0xe8] sm:$0xff]
  %v1580 = vld [vmem:[%s4 + $0xf0] sm:$0xff]
  %v1581 = vld [vmem:[%s4 + $0xf8] sm:$0xff]
  %v1582 = vld [vmem:[%s4 + $0x100] sm:$0xff]
  %v1583 = vld [vmem:[%s4 + $0x108] sm:$0xff]
  %v1584 = vld [vmem:[%s4 + $0x110] sm:$0xff]
  %v1585 = vld [vmem:[%s4 + $0x118] sm:$0xff]
  %v1586 = vld [vmem:[%s4 + $0x120] sm:$0xff]
  %v1587 = vld [vmem:[%s4 + $0x128] sm:$0xff]
  %v1588 = vld [vmem:[%s4 + $0x130] sm:$0xff]
  %v1589 = vld [vmem:[%s4 + $0x138] sm:$0xff]
  %v1590 = vld [vmem:[%s4 + $0x140] sm:$0xff]
  %v1591 = vld [vmem:[%s4 + $0x148] sm:$0xff]
  %v1592 = vld [vmem:[%s4 + $0x150] sm:$0xff]
  %v1593 = vld [vmem:[%s4 + $0x158] sm:$0xff]
  %v1594 = vld [vmem:[%s4 + $0x160] sm:$0xff]
  %v1595 = vld [vmem:[%s4 + $0x168] sm:$0xff]
  %v1596 = vld [vmem:[%s4 + $0x170] sm:$0xff]
  %v1597 = vld [vmem:[%s4 + $0x178] sm:$0xff]
  %v1598 = vld [vmem:[%s4 + $0x180] sm:$0xff]
  %v1599 = vld [vmem:[%s4 + $0x188] sm:$0xff]
  %v1600 = vld [vmem:[%s4 + $0x190] sm:$0xff]
  %v1601 = vld [vmem:[%s4 + $0x198] sm:$0xff]
  %v1602 = vld [vmem:[%s4 + $0x1a0] sm:$0xff]
  %v1603 = vld [vmem:[%s4 + $0x1a8] sm:$0xff]
  %v1604 = vld [vmem:[%s4 + $0x1b0] sm:$0xff]
  %v1605 = vld [vmem:[%s4 + $0x1b8] sm:$0xff]
  %v1606 = vld [vmem:[%s4 + $0x1c0] sm:$0xff]
  %v1607 = vld [vmem:[%s4 + $0x1c8] sm:$0xff]
  %v1608 = vld [vmem:[%s4 + $0x1d0] sm:$0xff]
  %v1609 = vld [vmem:[%s4 + $0x1d8] sm:$0xff]
  %v1610 = vld [vmem:[%s4 + $0x1e0] sm:$0xff]
  %v1611 = vld [vmem:[%s4 + $0x1e8] sm:$0xff]
  %v1612 = vld [vmem:[%s4 + $0x1f0] sm:$0xff]
  %v1613 = vld [vmem:[%s4 + $0x1f8] sm:$0xff]
  %v1678 = vunpack.c.l.b16 %v1550
  %v1679 = vunpack.c.h.b16 %v1550
  %v1680 = vunpack.c.l.b16 %v1551
  %v1681 = vunpack.c.h.b16 %v1551
  %v1682 = vunpack.c.l.b16 %v1552
  %v1683 = vunpack.c.h.b16 %v1552
  %v1684 = vunpack.c.l.b16 %v1553
  %v1685 = vunpack.c.h.b16 %v1553
  %v1686 = vunpack.c.l.b16 %v1554
  %v1687 = vunpack.c.h.b16 %v1554
  %v1688 = vunpack.c.l.b16 %v1555
  %v1689 = vunpack.c.h.b16 %v1555
  %v1690 = vunpack.c.l.b16 %v1556
  %v1691 = vunpack.c.h.b16 %v1556
  %v1692 = vunpack.c.l.b16 %v1557
  %v1693 = vunpack.c.h.b16 %v1557
  %v1694 = vunpack.c.l.b16 %v1558
  %v1695 = vunpack.c.h.b16 %v1558
  %v1696 = vunpack.c.l.b16 %v1559
  %v1697 = vunpack.c.h.b16 %v1559
  %v1698 = vunpack.c.l.b16 %v1560
  %v1699 = vunpack.c.h.b16 %v1560
  %v1700 = vunpack.c.l.b16 %v1561
  %v1701 = vunpack.c.h.b16 %v1561
  %v1702 = vunpack.c.l.b16 %v1562
  %v1703 = vunpack.c.h.b16 %v1562
  %v1704 = vunpack.c.l.b16 %v1563
  %v1705 = vunpack.c.h.b16 %v1563
  %v1706 = vunpack.c.l.b16 %v1564
  %v1707 = vunpack.c.h.b16 %v1564
  %v1708 = vunpack.c.l.b16 %v1565
  %v1709 = vunpack.c.h.b16 %v1565
  %v1710 = vunpack.c.l.b16 %v1566
  %v1711 = vunpack.c.h.b16 %v1566
  %v1712 = vunpack.c.l.b16 %v1567
  %v1713 = vunpack.c.h.b16 %v1567
  %v1714 = vunpack.c.l.b16 %v1568
  %v1715 = vunpack.c.h.b16 %v1568
  %v1716 = vunpack.c.l.b16 %v1569
  %v1717 = vunpack.c.h.b16 %v1569
  %v1718 = vunpack.c.l.b16 %v1570
  %v1719 = vunpack.c.h.b16 %v1570
  %v1720 = vunpack.c.l.b16 %v1571
  %v1721 = vunpack.c.h.b16 %v1571
  %v1722 = vunpack.c.l.b16 %v1572
  %v1723 = vunpack.c.h.b16 %v1572
  %v1724 = vunpack.c.l.b16 %v1573
  %v1725 = vunpack.c.h.b16 %v1573
  %v1726 = vunpack.c.l.b16 %v1574
  %v1727 = vunpack.c.h.b16 %v1574
  %v1728 = vunpack.c.l.b16 %v1575
  %v1729 = vunpack.c.h.b16 %v1575
  %v1730 = vunpack.c.l.b16 %v1576
  %v1731 = vunpack.c.h.b16 %v1576
  %v1732 = vunpack.c.l.b16 %v1577
  %v1733 = vunpack.c.h.b16 %v1577
  %v1734 = vunpack.c.l.b16 %v1578
  %v1735 = vunpack.c.h.b16 %v1578
  %v1736 = vunpack.c.l.b16 %v1579
  %v1737 = vunpack.c.h.b16 %v1579
  %v1738 = vunpack.c.l.b16 %v1580
  %v1739 = vunpack.c.h.b16 %v1580
  %v1740 = vunpack.c.l.b16 %v1581
  %v1741 = vunpack.c.h.b16 %v1581
  %v1742 = vunpack.c.l.b16 %v1582
  %v1743 = vunpack.c.h.b16 %v1582
  %v1744 = vunpack.c.l.b16 %v1583
  %v1745 = vunpack.c.h.b16 %v1583
  %v1746 = vunpack.c.l.b16 %v1584
  %v1747 = vunpack.c.h.b16 %v1584
  %v1748 = vunpack.c.l.b16 %v1585
  %v1749 = vunpack.c.h.b16 %v1585
  %v1750 = vunpack.c.l.b16 %v1586
  %v1751 = vunpack.c.h.b16 %v1586
  %v1752 = vunpack.c.l.b16 %v1587
  %v1753 = vunpack.c.h.b16 %v1587
  %v1754 = vunpack.c.l.b16 %v1588
  %v1755 = vunpack.c.h.b16 %v1588
  %v1756 = vunpack.c.l.b16 %v1589
  %v1757 = vunpack.c.h.b16 %v1589
  %v1758 = vunpack.c.l.b16 %v1590
  %v1759 = vunpack.c.h.b16 %v1590
  %v1760 = vunpack.c.l.b16 %v1591
  %v1761 = vunpack.c.h.b16 %v1591
  %v1762 = vunpack.c.l.b16 %v1592
  %v1763 = vunpack.c.h.b16 %v1592
  %v1764 = vunpack.c.l.b16 %v1593
  %v1765 = vunpack.c.h.b16 %v1593
  %v1766 = vunpack.c.l.b16 %v1594
  %v1767 = vunpack.c.h.b16 %v1594
  %v1768 = vunpack.c.l.b16 %v1595
  %v1769 = vunpack.c.h.b16 %v1595
  %v1770 = vunpack.c.l.b16 %v1596
  %v1771 = vunpack.c.h.b16 %v1596
  %v1772 = vunpack.c.l.b16 %v1597
  %v1773 = vunpack.c.h.b16 %v1597
  %v1774 = vunpack.c.l.b16 %v1598
  %v1775 = vunpack.c.h.b16 %v1598
  %v1776 = vunpack.c.l.b16 %v1599
  %v1777 = vunpack.c.h.b16 %v1599
  %v1778 = vunpack.c.l.b16 %v1600
  %v1779 = vunpack.c.h.b16 %v1600
  %v1780 = vunpack.c.l.b16 %v1601
  %v1781 = vunpack.c.h.b16 %v1601
  %v1782 = vunpack.c.l.b16 %v1602
  %v1783 = vunpack.c.h.b16 %v1602
  %v1784 = vunpack.c.l.b16 %v1603
  %v1785 = vunpack.c.h.b16 %v1603
  %v1786 = vunpack.c.l.b16 %v1604
  %v1787 = vunpack.c.h.b16 %v1604
  %v1788 = vunpack.c.l.b16 %v1605
  %v1789 = vunpack.c.h.b16 %v1605
  %v1790 = vunpack.c.l.b16 %v1606
  %v1791 = vunpack.c.h.b16 %v1606
  %v1792 = vunpack.c.l.b16 %v1607
  %v1793 = vunpack.c.h.b16 %v1607
  %v1794 = vunpack.c.l.b16 %v1608
  %v1795 = vunpack.c.h.b16 %v1608
  %v1796 = vunpack.c.l.b16 %v1609
  %v1797 = vunpack.c.h.b16 %v1609
  %v1798 = vunpack.c.l.b16 %v1610
  %v1799 = vunpack.c.h.b16 %v1610
  %v1800 = vunpack.c.l.b16 %v1611
  %v1801 = vunpack.c.h.b16 %v1611
  %v1802 = vunpack.c.l.b16 %v1612
  %v1803 = vunpack.c.h.b16 %v1612
  %v1804 = vunpack.c.l.b16 %v1613
  %v1805 = vunpack.c.h.b16 %v1613
  %v1806 = vpack.c.b16 %v1682, %v1678
  %v1807 = vpack.c.b16 %v1683, %v1679
  %v1808 = vpack.c.b16 %v1684, %v1680
  %v1809 = vpack.c.b16 %v1685, %v1681
  %v1810 = vpack.c.b16 %v1690, %v1686
  %v1811 = vpack.c.b16 %v1691, %v1687
  %v1812 = vpack.c.b16 %v1692, %v1688
  %v1813 = vpack.c.b16 %v1693, %v1689
  %v1814 = vpack.c.b16 %v1698, %v1694
  %v1815 = vpack.c.b16 %v1699, %v1695
  %v1816 = vpack.c.b16 %v1700, %v1696
  %v1817 = vpack.c.b16 %v1701, %v1697
  %v1818 = vpack.c.b16 %v1706, %v1702
  %v1819 = vpack.c.b16 %v1707, %v1703
  %v1820 = vpack.c.b16 %v1708, %v1704
  %v1821 = vpack.c.b16 %v1709, %v1705
  %v1822 = vpack.c.b16 %v1714, %v1710
  %v1823 = vpack.c.b16 %v1715, %v1711
  %v1824 = vpack.c.b16 %v1716, %v1712
  %v1825 = vpack.c.b16 %v1717, %v1713
  %v1826 = vpack.c.b16 %v1722, %v1718
  %v1827 = vpack.c.b16 %v1723, %v1719
  %v1828 = vpack.c.b16 %v1724, %v1720
  %v1829 = vpack.c.b16 %v1725, %v1721
  %v1830 = vpack.c.b16 %v1730, %v1726
  %v1831 = vpack.c.b16 %v1731, %v1727
  %v1832 = vpack.c.b16 %v1732, %v1728
  %v1833 = vpack.c.b16 %v1733, %v1729
  %v1834 = vpack.c.b16 %v1738, %v1734
  %v1835 = vpack.c.b16 %v1739, %v1735
  %v1836 = vpack.c.b16 %v1740, %v1736
  %v1837 = vpack.c.b16 %v1741, %v1737
  %v1838 = vpack.c.b16 %v1746, %v1742
  %v1839 = vpack.c.b16 %v1747, %v1743
  %v1840 = vpack.c.b16 %v1748, %v1744
  %v1841 = vpack.c.b16 %v1749, %v1745
  %v1842 = vpack.c.b16 %v1754, %v1750
  %v1843 = vpack.c.b16 %v1755, %v1751
  %v1844 = vpack.c.b16 %v1756, %v1752
  %v1845 = vpack.c.b16 %v1757, %v1753
  %v1846 = vpack.c.b16 %v1762, %v1758
  %v1847 = vpack.c.b16 %v1763, %v1759
  %v1848 = vpack.c.b16 %v1764, %v1760
  %v1849 = vpack.c.b16 %v1765, %v1761
  %v1850 = vpack.c.b16 %v1770, %v1766
  %v1851 = vpack.c.b16 %v1771, %v1767
  %v1852 = vpack.c.b16 %v1772, %v1768
  %v1853 = vpack.c.b16 %v1773, %v1769
  %v1854 = vpack.c.b16 %v1778, %v1774
  %v1855 = vpack.c.b16 %v1779, %v1775
  %v1856 = vpack.c.b16 %v1780, %v1776
  %v1857 = vpack.c.b16 %v1781, %v1777
  %v1858 = vpack.c.b16 %v1786, %v1782
  %v1859 = vpack.c.b16 %v1787, %v1783
  %v1860 = vpack.c.b16 %v1788, %v1784
  %v1861 = vpack.c.b16 %v1789, %v1785
  %v1862 = vpack.c.b16 %v1794, %v1790
  %v1863 = vpack.c.b16 %v1795, %v1791
  %v1864 = vpack.c.b16 %v1796, %v1792
  %v1865 = vpack.c.b16 %v1797, %v1793
  %v1866 = vpack.c.b16 %v1802, %v1798
  %v1867 = vpack.c.b16 %v1803, %v1799
  %v1868 = vpack.c.b16 %v1804, %v1800
  %v1869 = vpack.c.b16 %v1805, %v1801
  %1934 = vmatprep.subr.bf16.mxu0 %v1835
  %1935 = vmatpush1.bf16.msra.mxu0 %v1834
  %1936 = vmatprep.subr.bf16.mxu0 %v1831
  %1937 = vmatpush1.bf16.msra.mxu0 %v1830
  %1938 = vmatprep.subr.bf16.mxu0 %v1827
  %1939 = vmatpush1.bf16.msra.mxu0 %v1826
  %1940 = vmatprep.subr.bf16.mxu0 %v1823
  %1941 = vmatpush1.bf16.msra.mxu0 %v1822
  %1942 = vmatprep.subr.bf16.mxu0 %v1819
  %1943 = vmatpush1.bf16.msra.mxu0 %v1818
  %1944 = vmatprep.subr.bf16.mxu0 %v1815
  %1945 = vmatpush1.bf16.msra.mxu0 %v1814
  %1946 = vmatprep.subr.bf16.mxu0 %v1811
  %1947 = vmatpush1.bf16.msra.mxu0 %v1810
  %1948 = vmatprep.subr.bf16.mxu0 %v1807
  %1949 = vmatpush1.bf16.msra.mxu0 %v1806
  %1950 = vmatprep.subr.bf16.mxu0 %v1867
  %1951 = vmatpush2.bf16.msra.mxu0 %v1866
  %1952 = vmatprep.subr.bf16.mxu0 %v1863
  %1953 = vmatpush2.bf16.msra.mxu0 %v1862
  %1954 = vmatprep.subr.bf16.mxu0 %v1859
  %1955 = vmatpush2.bf16.msra.mxu0 %v1858
  %1956 = vmatprep.subr.bf16.mxu0 %v1855
  %1957 = vmatpush2.bf16.msra.mxu0 %v1854
  %1958 = vmatprep.subr.bf16.mxu0 %v1851
  %1959 = vmatpush2.bf16.msra.mxu0 %v1850
  %1960 = vmatprep.subr.bf16.mxu0 %v1847
  %1961 = vmatpush2.bf16.msra.mxu0 %v1846
  %1962 = vmatprep.subr.bf16.mxu0 %v1843
  %1963 = vmatpush2.bf16.msra.mxu0 %v1842
  %1964 = vmatprep.subr.bf16.mxu0 %v1839
  %1965 = vmatpush2.bf16.msra.mxu0 %v1838
  %1966 = vmatprep.mubr.bf16.mxu0 %v1549
  %1967 = vmatmul.mubr.bf16.gmra.mxu0 %v1548
  %v1968 = vpop.f32.mrf.mxu0
  %v1969 = vadd.f32 %v802, %v1968
  %v1970 = vpop.f32.mrf.mxu0
  %v1971 = vadd.f32 %v806, %v1970
  %v1972 = vpop.f32.mrf.mxu0
  %v1973 = vpop.f32.mrf.mxu0
  %1974 = vdwg.mxu0
  %1975 = vmatprep.subr.bf16.mxu0 %v1837
  %1976 = vmatpush1.bf16.msra.mxu0 %v1836
  %1977 = vmatprep.subr.bf16.mxu0 %v1833
  %1978 = vmatpush1.bf16.msra.mxu0 %v1832
  %1979 = vmatprep.subr.bf16.mxu0 %v1829
  %1980 = vmatpush1.bf16.msra.mxu0 %v1828
  %1981 = vmatprep.subr.bf16.mxu0 %v1825
  %1982 = vmatpush1.bf16.msra.mxu0 %v1824
  %1983 = vmatprep.subr.bf16.mxu0 %v1821
  %1984 = vmatpush1.bf16.msra.mxu0 %v1820
  %1985 = vmatprep.subr.bf16.mxu0 %v1817
  %1986 = vmatpush1.bf16.msra.mxu0 %v1816
  %1987 = vmatprep.subr.bf16.mxu0 %v1813
  %1988 = vmatpush1.bf16.msra.mxu0 %v1812
  %1989 = vmatprep.subr.bf16.mxu0 %v1809
  %1990 = vmatpush1.bf16.msra.mxu0 %v1808
  %1991 = vmatprep.subr.bf16.mxu0 %v1869
  %1992 = vmatpush2.bf16.msra.mxu0 %v1868
  %1993 = vmatprep.subr.bf16.mxu0 %v1865
  %1994 = vmatpush2.bf16.msra.mxu0 %v1864
  %1995 = vmatprep.subr.bf16.mxu0 %v1861
  %1996 = vmatpush2.bf16.msra.mxu0 %v1860
  %1997 = vmatprep.subr.bf16.mxu0 %v1857
  %1998 = vmatpush2.bf16.msra.mxu0 %v1856
  %1999 = vmatprep.subr.bf16.mxu0 %v1853
  %2000 = vmatpush2.bf16.msra.mxu0 %v1852
  %2001 = vmatprep.subr.bf16.mxu0 %v1849
  %2002 = vmatpush2.bf16.msra.mxu0 %v1848
  %2003 = vmatprep.subr.bf16.mxu0 %v1845
  %2004 = vmatpush2.bf16.msra.mxu0 %v1844
  %2005 = vmatprep.subr.bf16.mxu0 %v1841
  %2006 = vmatpush2.bf16.msra.mxu0 %v1840
  %2007 = vmatprep.mubr.bf16.mxu0 %v1549
  %2008 = vmatmul.mubr.bf16.gmra.mxu0 %v1548
  %v2009 = vpop.f32.mrf.mxu0
  %v2010 = vadd.f32 %v810, %v2009
  %v2011 = vpop.f32.mrf.mxu0
  %v2012 = vadd.f32 %v814, %v2011
  %v2013 = vpop.f32.mrf.mxu0
  %v2014 = vpop.f32.mrf.mxu0
  %2015 = vdwg.mxu0
  %v2016 = vxor.u32 %v1969, 2147483648
  %v2017 = vmul.f32 %v2016, 1.442695
  %v2018 = vpow.pop %v2017
  %v2019 = vadd.f32 %v2018, 1.0
  %v2020 = vrcp.pop %v2019
  %v2021 = vmul.f32 1.0, %v2020
  %v2022 = vxor.u32 %v1971, 2147483648
  %v2023 = vmul.f32 %v2022, 1.442695
  %v2024 = vpow.pop %v2023
  %v2025 = vadd.f32 %v2024, 1.0
  %v2026 = vrcp.pop %v2025
  %v2027 = vmul.f32 1.0, %v2026
  %v2028 = vtanh.pop %v2010
  %v2029 = vxor.u32 %v2012, 2147483648
  %v2030 = vmul.f32 %v2029, 1.442695
  %v2031 = vpow.pop %v2030
  %v2032 = vadd.f32 %v2031, 1.0
  %v2033 = vrcp.pop %v2032
  %v2034 = vmul.f32 1.0, %v2033
  %v2035 = vmul.f32 %v2027, %v1242
  %v2036 = vmul.f32 %v2021, %v2028
  %v2037 = vadd.f32 %v2035, %v2036
  %v2038 = vtanh.pop %v2037
  %v2039 = vmul.f32 %v2034, %v2038
  %s2040 = scalar_lea.vmem %s6, 8
  %2041 = vst [vmem:[%s2040] sm:$0xff] %v2039
  %v2042 = vld [vmem:[%s2] sm:$0xff]
  %v2043 = vld [vmem:[%s2 + $0x8] sm:$0xff]
  %v2044 = vld [vmem:[%s2 + $0x10] sm:$0xff]
  %v2045 = vld [vmem:[%s2 + $0x18] sm:$0xff]
  %v2046 = vld [vmem:[%s2 + $0x20] sm:$0xff]
  %v2047 = vld [vmem:[%s2 + $0x28] sm:$0xff]
  %v2048 = vld [vmem:[%s2 + $0x30] sm:$0xff]
  %v2049 = vld [vmem:[%s2 + $0x38] sm:$0xff]
  %v2050 = vld [vmem:[%s2 + $0x40] sm:$0xff]
  %v2051 = vld [vmem:[%s2 + $0x48] sm:$0xff]
  %v2052 = vld [vmem:[%s2 + $0x50] sm:$0xff]
  %v2053 = vld [vmem:[%s2 + $0x58] sm:$0xff]
  %v2054 = vld [vmem:[%s2 + $0x60] sm:$0xff]
  %v2055 = vld [vmem:[%s2 + $0x68] sm:$0xff]
  %v2056 = vld [vmem:[%s2 + $0x70] sm:$0xff]
  %v2057 = vld [vmem:[%s2 + $0x78] sm:$0xff]
  %v2058 = vld [vmem:[%s2 + $0x80] sm:$0xff]
  %v2059 = vld [vmem:[%s2 + $0x88] sm:$0xff]
  %v2060 = vld [vmem:[%s2 + $0x90] sm:$0xff]
  %v2061 = vld [vmem:[%s2 + $0x98] sm:$0xff]
  %v2062 = vld [vmem:[%s2 + $0xa0] sm:$0xff]
  %v2063 = vld [vmem:[%s2 + $0xa8] sm:$0xff]
  %v2064 = vld [vmem:[%s2 + $0xb0] sm:$0xff]
  %v2065 = vld [vmem:[%s2 + $0xb8] sm:$0xff]
  %v2066 = vld [vmem:[%s2 + $0xc0] sm:$0xff]
  %v2067 = vld [vmem:[%s2 + $0xc8] sm:$0xff]
  %v2068 = vld [vmem:[%s2 + $0xd0] sm:$0xff]
  %v2069 = vld [vmem:[%s2 + $0xd8] sm:$0xff]
  %v2070 = vld [vmem:[%s2 + $0xe0] sm:$0xff]
  %v2071 = vld [vmem:[%s2 + $0xe8] sm:$0xff]
  %v2072 = vld [vmem:[%s2 + $0xf0] sm:$0xff]
  %v2073 = vld [vmem:[%s2 + $0xf8] sm:$0xff]
  %v2106 = vunpack.c.l.b16 %v2042
  %v2107 = vunpack.c.h.b16 %v2042
  %v2108 = vunpack.c.l.b16 %v2043
  %v2109 = vunpack.c.h.b16 %v2043
  %v2110 = vunpack.c.l.b16 %v2044
  %v2111 = vunpack.c.h.b16 %v2044
  %v2112 = vunpack.c.l.b16 %v2045
  %v2113 = vunpack.c.h.b16 %v2045
  %v2114 = vunpack.c.l.b16 %v2046
  %v2115 = vunpack.c.h.b16 %v2046
  %v2116 = vunpack.c.l.b16 %v2047
  %v2117 = vunpack.c.h.b16 %v2047
  %v2118 = vunpack.c.l.b16 %v2048
  %v2119 = vunpack.c.h.b16 %v2048
  %v2120 = vunpack.c.l.b16 %v2049
  %v2121 = vunpack.c.h.b16 %v2049
  %v2122 = vunpack.c.l.b16 %v2050
  %v2123 = vunpack.c.h.b16 %v2050
  %v2124 = vunpack.c.l.b16 %v2051
  %v2125 = vunpack.c.h.b16 %v2051
  %v2126 = vunpack.c.l.b16 %v2052
  %v2127 = vunpack.c.h.b16 %v2052
  %v2128 = vunpack.c.l.b16 %v2053
  %v2129 = vunpack.c.h.b16 %v2053
  %v2130 = vunpack.c.l.b16 %v2054
  %v2131 = vunpack.c.h.b16 %v2054
  %v2132 = vunpack.c.l.b16 %v2055
  %v2133 = vunpack.c.h.b16 %v2055
  %v2134 = vunpack.c.l.b16 %v2056
  %v2135 = vunpack.c.h.b16 %v2056
  %v2136 = vunpack.c.l.b16 %v2057
  %v2137 = vunpack.c.h.b16 %v2057
  %v2138 = vunpack.c.l.b16 %v2058
  %v2139 = vunpack.c.h.b16 %v2058
  %v2140 = vunpack.c.l.b16 %v2059
  %v2141 = vunpack.c.h.b16 %v2059
  %v2142 = vunpack.c.l.b16 %v2060
  %v2143 = vunpack.c.h.b16 %v2060
  %v2144 = vunpack.c.l.b16 %v2061
  %v2145 = vunpack.c.h.b16 %v2061
  %v2146 = vunpack.c.l.b16 %v2062
  %v2147 = vunpack.c.h.b16 %v2062
  %v2148 = vunpack.c.l.b16 %v2063
  %v2149 = vunpack.c.h.b16 %v2063
  %v2150 = vunpack.c.l.b16 %v2064
  %v2151 = vunpack.c.h.b16 %v2064
  %v2152 = vunpack.c.l.b16 %v2065
  %v2153 = vunpack.c.h.b16 %v2065
  %v2154 = vunpack.c.l.b16 %v2066
  %v2155 = vunpack.c.h.b16 %v2066
  %v2156 = vunpack.c.l.b16 %v2067
  %v2157 = vunpack.c.h.b16 %v2067
  %v2158 = vunpack.c.l.b16 %v2068
  %v2159 = vunpack.c.h.b16 %v2068
  %v2160 = vunpack.c.l.b16 %v2069
  %v2161 = vunpack.c.h.b16 %v2069
  %v2162 = vunpack.c.l.b16 %v2070
  %v2163 = vunpack.c.h.b16 %v2070
  %v2164 = vunpack.c.l.b16 %v2071
  %v2165 = vunpack.c.h.b16 %v2071
  %v2166 = vunpack.c.l.b16 %v2072
  %v2167 = vunpack.c.h.b16 %v2072
  %v2168 = vunpack.c.l.b16 %v2073
  %v2169 = vunpack.c.h.b16 %v2073
  %v2170 = vpack.c.b16 %v2110, %v2106
  %v2171 = vpack.c.b16 %v2111, %v2107
  %v2172 = vpack.c.b16 %v2112, %v2108
  %v2173 = vpack.c.b16 %v2113, %v2109
  %v2174 = vpack.c.b16 %v2118, %v2114
  %v2175 = vpack.c.b16 %v2119, %v2115
  %v2176 = vpack.c.b16 %v2120, %v2116
  %v2177 = vpack.c.b16 %v2121, %v2117
  %v2178 = vpack.c.b16 %v2126, %v2122
  %v2179 = vpack.c.b16 %v2127, %v2123
  %v2180 = vpack.c.b16 %v2128, %v2124
  %v2181 = vpack.c.b16 %v2129, %v2125
  %v2182 = vpack.c.b16 %v2134, %v2130
  %v2183 = vpack.c.b16 %v2135, %v2131
  %v2184 = vpack.c.b16 %v2136, %v2132
  %v2185 = vpack.c.b16 %v2137, %v2133
  %v2186 = vpack.c.b16 %v2142, %v2138
  %v2187 = vpack.c.b16 %v2143, %v2139
  %v2188 = vpack.c.b16 %v2144, %v2140
  %v2189 = vpack.c.b16 %v2145, %v2141
  %v2190 = vpack.c.b16 %v2150, %v2146
  %v2191 = vpack.c.b16 %v2151, %v2147
  %v2192 = vpack.c.b16 %v2152, %v2148
  %v2193 = vpack.c.b16 %v2153, %v2149
  %v2194 = vpack.c.b16 %v2158, %v2154
  %v2195 = vpack.c.b16 %v2159, %v2155
  %v2196 = vpack.c.b16 %v2160, %v2156
  %v2197 = vpack.c.b16 %v2161, %v2157
  %v2198 = vpack.c.b16 %v2166, %v2162
  %v2199 = vpack.c.b16 %v2167, %v2163
  %v2200 = vpack.c.b16 %v2168, %v2164
  %v2201 = vpack.c.b16 %v2169, %v2165
  %2234 = vmatprep.subr.bf16.mxu0 %v2199
  %2235 = vmatpush1.bf16.msra.mxu0 %v2198
  %2236 = vmatprep.subr.bf16.mxu0 %v2195
  %2237 = vmatpush1.bf16.msra.mxu0 %v2194
  %2238 = vmatprep.subr.bf16.mxu0 %v2191
  %2239 = vmatpush1.bf16.msra.mxu0 %v2190
  %2240 = vmatprep.subr.bf16.mxu0 %v2187
  %2241 = vmatpush1.bf16.msra.mxu0 %v2186
  %2242 = vmatprep.subr.bf16.mxu0 %v2183
  %2243 = vmatpush1.bf16.msra.mxu0 %v2182
  %2244 = vmatprep.subr.bf16.mxu0 %v2179
  %2245 = vmatpush1.bf16.msra.mxu0 %v2178
  %2246 = vmatprep.subr.bf16.mxu0 %v2175
  %2247 = vmatpush1.bf16.msra.mxu0 %v2174
  %2248 = vmatprep.subr.bf16.mxu0 %v2171
  %2249 = vmatpush1.bf16.msra.mxu0 %v2170
  %2250 = vmatprep.subr.bf16.mxu0 0
  %2251 = vmatpush2.bf16.msra.mxu0 0
  %2252 = vmatprep.subr.bf16.mxu0 0
  %2253 = vmatpush2.bf16.msra.mxu0 0
  %2254 = vmatprep.subr.bf16.mxu0 0
  %2255 = vmatpush2.bf16.msra.mxu0 0
  %2256 = vmatprep.subr.bf16.mxu0 0
  %2257 = vmatpush2.bf16.msra.mxu0 0
  %2258 = vmatprep.subr.bf16.mxu0 0
  %2259 = vmatpush2.bf16.msra.mxu0 0
  %2260 = vmatprep.subr.bf16.mxu0 0
  %2261 = vmatpush2.bf16.msra.mxu0 0
  %2262 = vmatprep.subr.bf16.mxu0 0
  %2263 = vmatpush2.bf16.msra.mxu0 0
  %2264 = vmatprep.subr.bf16.mxu0 0
  %2265 = vmatpush2.bf16.msra.mxu0 0
  %2266 = vmatprep.mubr.bf16.mxu0 0
  %2267 = vmatmul.mubr.bf16.gmra.mxu0 %v1548
  %v2268 = vpop.f32.mrf.mxu0
  %v2269 = vadd.f32 0.0, %v2268
  %v2270 = vpop.f32.mrf.mxu0
  %v2271 = vadd.f32 0.0, %v2270
  %v2272 = vpop.f32.mrf.mxu0
  %v2273 = vpop.f32.mrf.mxu0
  %2274 = vdwg.mxu0
  %2275 = vmatprep.subr.bf16.mxu0 %v2201
  %2276 = vmatpush1.bf16.msra.mxu0 %v2200
  %2277 = vmatprep.subr.bf16.mxu0 %v2197
  %2278 = vmatpush1.bf16.msra.mxu0 %v2196
  %2279 = vmatprep.subr.bf16.mxu0 %v2193
  %2280 = vmatpush1.bf16.msra.mxu0 %v2192
  %2281 = vmatprep.subr.bf16.mxu0 %v2189
  %2282 = vmatpush1.bf16.msra.mxu0 %v2188
  %2283 = vmatprep.subr.bf16.mxu0 %v2185
  %2284 = vmatpush1.bf16.msra.mxu0 %v2184
  %2285 = vmatprep.subr.bf16.mxu0 %v2181
  %2286 = vmatpush1.bf16.msra.mxu0 %v2180
  %2287 = vmatprep.subr.bf16.mxu0 %v2177
  %2288 = vmatpush1.bf16.msra.mxu0 %v2176
  %2289 = vmatprep.subr.bf16.mxu0 %v2173
  %2290 = vmatpush1.bf16.msra.mxu0 %v2172
  %2291 = vmatprep.subr.bf16.mxu0 0
  %2292 = vmatpush2.bf16.msra.mxu0 0
  %2293 = vmatprep.subr.bf16.mxu0 0
  %2294 = vmatpush2.bf16.msra.mxu0 0
  %2295 = vmatprep.subr.bf16.mxu0 0
  %2296 = vmatpush2.bf16.msra.mxu0 0
  %2297 = vmatprep.subr.bf16.mxu0 0
  %2298 = vmatpush2.bf16.msra.mxu0 0
  %2299 = vmatprep.subr.bf16.mxu0 0
  %2300 = vmatpush2.bf16.msra.mxu0 0
  %2301 = vmatprep.subr.bf16.mxu0 0
  %2302 = vmatpush2.bf16.msra.mxu0 0
  %2303 = vmatprep.subr.bf16.mxu0 0
  %2304 = vmatpush2.bf16.msra.mxu0 0
  %2305 = vmatprep.subr.bf16.mxu0 0
  %2306 = vmatpush2.bf16.msra.mxu0 0
  %2307 = vmatprep.mubr.bf16.mxu0 0
  %2308 = vmatmul.mubr.bf16.gmra.mxu0 %v1548
  %v2309 = vpop.f32.mrf.mxu0
  %v2310 = vadd.f32 0.0, %v2309
  %v2311 = vpop.f32.mrf.mxu0
  %v2312 = vadd.f32 0.0, %v2311
  %v2313 = vpop.f32.mrf.mxu0
  %v2314 = vpop.f32.mrf.mxu0
  %2315 = vdwg.mxu0
  %v2316 = vadd.f32 %v323, %v2269
  %v2317 = vadd.f32 %v325, %v2271
  %v2318 = vadd.f32 %v396, %v2310
  %v2319 = vadd.f32 %v398, %v2312
  %v2320 = vxor.u32 %v2316, 2147483648
  %v2321 = vmul.f32 %v2320, 1.442695
  %v2322 = vpow.pop %v2321
  %v2323 = vadd.f32 %v2322, 1.0
  %v2324 = vrcp.pop %v2323
  %v2325 = vmul.f32 1.0, %v2324
  %v2326 = vxor.u32 %v2317, 2147483648
  %v2327 = vmul.f32 %v2326, 1.442695
  %v2328 = vpow.pop %v2327
  %v2329 = vadd.f32 %v2328, 1.0
  %v2330 = vrcp.pop %v2329
  %v2331 = vmul.f32 1.0, %v2330
  %v2332 = vtanh.pop %v2318
  %v2333 = vxor.u32 %v2319, 2147483648
  %v2334 = vmul.f32 %v2333, 1.442695
  %v2335 = vpow.pop %v2334
  %v2336 = vadd.f32 %v2335, 1.0
  %v2337 = vrcp.pop %v2336
  %v2338 = vmul.f32 1.0, %v2337
  %v2339 = vmul.f32 %v2331, %v1545
  %v2340 = vmul.f32 %v2325, %v2332
  %v2341 = vadd.f32 %v2339, %v2340
  %v2342 = vtanh.pop %v2341
  %v2343 = vmul.f32 %v2338, %v2342
  %v2344 = vpack.c.bf16 %v2343, %v2343
  %v2345 = vpack.c.bf16 %v2039, %v2039
  %v2346 = vld [vmem:[%s4] sm:$0xff]
  %v2347 = vld [vmem:[%s4 + $0x8] sm:$0xff]
  %v2348 = vld [vmem:[%s4 + $0x10] sm:$0xff]
  %v2349 = vld [vmem:[%s4 + $0x18] sm:$0xff]
  %v2350 = vld [vmem:[%s4 + $0x20] sm:$0xff]
  %v2351 = vld [vmem:[%s4 + $0x28] sm:$0xff]
  %v2352 = vld [vmem:[%s4 + $0x30] sm:$0xff]
  %v2353 = vld [vmem:[%s4 + $0x38] sm:$0xff]
  %v2354 = vld [vmem:[%s4 + $0x40] sm:$0xff]
  %v2355 = vld [vmem:[%s4 + $0x48] sm:$0xff]
  %v2356 = vld [vmem:[%s4 + $0x50] sm:$0xff]
  %v2357 = vld [vmem:[%s4 + $0x58] sm:$0xff]
  %v2358 = vld [vmem:[%s4 + $0x60] sm:$0xff]
  %v2359 = vld [vmem:[%s4 + $0x68] sm:$0xff]
  %v2360 = vld [vmem:[%s4 + $0x70] sm:$0xff]
  %v2361 = vld [vmem:[%s4 + $0x78] sm:$0xff]
  %v2362 = vld [vmem:[%s4 + $0x80] sm:$0xff]
  %v2363 = vld [vmem:[%s4 + $0x88] sm:$0xff]
  %v2364 = vld [vmem:[%s4 + $0x90] sm:$0xff]
  %v2365 = vld [vmem:[%s4 + $0x98] sm:$0xff]
  %v2366 = vld [vmem:[%s4 + $0xa0] sm:$0xff]
  %v2367 = vld [vmem:[%s4 + $0xa8] sm:$0xff]
  %v2368 = vld [vmem:[%s4 + $0xb0] sm:$0xff]
  %v2369 = vld [vmem:[%s4 + $0xb8] sm:$0xff]
  %v2370 = vld [vmem:[%s4 + $0xc0] sm:$0xff]
  %v2371 = vld [vmem:[%s4 + $0xc8] sm:$0xff]
  %v2372 = vld [vmem:[%s4 + $0xd0] sm:$0xff]
  %v2373 = vld [vmem:[%s4 + $0xd8] sm:$0xff]
  %v2374 = vld [vmem:[%s4 + $0xe0] sm:$0xff]
  %v2375 = vld [vmem:[%s4 + $0xe8] sm:$0xff]
  %v2376 = vld [vmem:[%s4 + $0xf0] sm:$0xff]
  %v2377 = vld [vmem:[%s4 + $0xf8] sm:$0xff]
  %v2378 = vld [vmem:[%s4 + $0x100] sm:$0xff]
  %v2379 = vld [vmem:[%s4 + $0x108] sm:$0xff]
  %v2380 = vld [vmem:[%s4 + $0x110] sm:$0xff]
  %v2381 = vld [vmem:[%s4 + $0x118] sm:$0xff]
  %v2382 = vld [vmem:[%s4 + $0x120] sm:$0xff]
  %v2383 = vld [vmem:[%s4 + $0x128] sm:$0xff]
  %v2384 = vld [vmem:[%s4 + $0x130] sm:$0xff]
  %v2385 = vld [vmem:[%s4 + $0x138] sm:$0xff]
  %v2386 = vld [vmem:[%s4 + $0x140] sm:$0xff]
  %v2387 = vld [vmem:[%s4 + $0x148] sm:$0xff]
  %v2388 = vld [vmem:[%s4 + $0x150] sm:$0xff]
  %v2389 = vld [vmem:[%s4 + $0x158] sm:$0xff]
  %v2390 = vld [vmem:[%s4 + $0x160] sm:$0xff]
  %v2391 = vld [vmem:[%s4 + $0x168] sm:$0xff]
  %v2392 = vld [vmem:[%s4 + $0x170] sm:$0xff]
  %v2393 = vld [vmem:[%s4 + $0x178] sm:$0xff]
  %v2394 = vld [vmem:[%s4 + $0x180] sm:$0xff]
  %v2395 = vld [vmem:[%s4 + $0x188] sm:$0xff]
  %v2396 = vld [vmem:[%s4 + $0x190] sm:$0xff]
  %v2397 = vld [vmem:[%s4 + $0x198] sm:$0xff]
  %v2398 = vld [vmem:[%s4 + $0x1a0] sm:$0xff]
  %v2399 = vld [vmem:[%s4 + $0x1a8] sm:$0xff]
  %v2400 = vld [vmem:[%s4 + $0x1b0] sm:$0xff]
  %v2401 = vld [vmem:[%s4 + $0x1b8] sm:$0xff]
  %v2402 = vld [vmem:[%s4 + $0x1c0] sm:$0xff]
  %v2403 = vld [vmem:[%s4 + $0x1c8] sm:$0xff]
  %v2404 = vld [vmem:[%s4 + $0x1d0] sm:$0xff]
  %v2405 = vld [vmem:[%s4 + $0x1d8] sm:$0xff]
  %v2406 = vld [vmem:[%s4 + $0x1e0] sm:$0xff]
  %v2407 = vld [vmem:[%s4 + $0x1e8] sm:$0xff]
  %v2408 = vld [vmem:[%s4 + $0x1f0] sm:$0xff]
  %v2409 = vld [vmem:[%s4 + $0x1f8] sm:$0xff]
  %v2474 = vunpack.c.l.b16 %v2346
  %v2475 = vunpack.c.h.b16 %v2346
  %v2476 = vunpack.c.l.b16 %v2347
  %v2477 = vunpack.c.h.b16 %v2347
  %v2478 = vunpack.c.l.b16 %v2348
  %v2479 = vunpack.c.h.b16 %v2348
  %v2480 = vunpack.c.l.b16 %v2349
  %v2481 = vunpack.c.h.b16 %v2349
  %v2482 = vunpack.c.l.b16 %v2350
  %v2483 = vunpack.c.h.b16 %v2350
  %v2484 = vunpack.c.l.b16 %v2351
  %v2485 = vunpack.c.h.b16 %v2351
  %v2486 = vunpack.c.l.b16 %v2352
  %v2487 = vunpack.c.h.b16 %v2352
  %v2488 = vunpack.c.l.b16 %v2353
  %v2489 = vunpack.c.h.b16 %v2353
  %v2490 = vunpack.c.l.b16 %v2354
  %v2491 = vunpack.c.h.b16 %v2354
  %v2492 = vunpack.c.l.b16 %v2355
  %v2493 = vunpack.c.h.b16 %v2355
  %v2494 = vunpack.c.l.b16 %v2356
  %v2495 = vunpack.c.h.b16 %v2356
  %v2496 = vunpack.c.l.b16 %v2357
  %v2497 = vunpack.c.h.b16 %v2357
  %v2498 = vunpack.c.l.b16 %v2358
  %v2499 = vunpack.c.h.b16 %v2358
  %v2500 = vunpack.c.l.b16 %v2359
  %v2501 = vunpack.c.h.b16 %v2359
  %v2502 = vunpack.c.l.b16 %v2360
  %v2503 = vunpack.c.h.b16 %v2360
  %v2504 = vunpack.c.l.b16 %v2361
  %v2505 = vunpack.c.h.b16 %v2361
  %v2506 = vunpack.c.l.b16 %v2362
  %v2507 = vunpack.c.h.b16 %v2362
  %v2508 = vunpack.c.l.b16 %v2363
  %v2509 = vunpack.c.h.b16 %v2363
  %v2510 = vunpack.c.l.b16 %v2364
  %v2511 = vunpack.c.h.b16 %v2364
  %v2512 = vunpack.c.l.b16 %v2365
  %v2513 = vunpack.c.h.b16 %v2365
  %v2514 = vunpack.c.l.b16 %v2366
  %v2515 = vunpack.c.h.b16 %v2366
  %v2516 = vunpack.c.l.b16 %v2367
  %v2517 = vunpack.c.h.b16 %v2367
  %v2518 = vunpack.c.l.b16 %v2368
  %v2519 = vunpack.c.h.b16 %v2368
  %v2520 = vunpack.c.l.b16 %v2369
  %v2521 = vunpack.c.h.b16 %v2369
  %v2522 = vunpack.c.l.b16 %v2370
  %v2523 = vunpack.c.h.b16 %v2370
  %v2524 = vunpack.c.l.b16 %v2371
  %v2525 = vunpack.c.h.b16 %v2371
  %v2526 = vunpack.c.l.b16 %v2372
  %v2527 = vunpack.c.h.b16 %v2372
  %v2528 = vunpack.c.l.b16 %v2373
  %v2529 = vunpack.c.h.b16 %v2373
  %v2530 = vunpack.c.l.b16 %v2374
  %v2531 = vunpack.c.h.b16 %v2374
  %v2532 = vunpack.c.l.b16 %v2375
  %v2533 = vunpack.c.h.b16 %v2375
  %v2534 = vunpack.c.l.b16 %v2376
  %v2535 = vunpack.c.h.b16 %v2376
  %v2536 = vunpack.c.l.b16 %v2377
  %v2537 = vunpack.c.h.b16 %v2377
  %v2538 = vunpack.c.l.b16 %v2378
  %v2539 = vunpack.c.h.b16 %v2378
  %v2540 = vunpack.c.l.b16 %v2379
  %v2541 = vunpack.c.h.b16 %v2379
  %v2542 = vunpack.c.l.b16 %v2380
  %v2543 = vunpack.c.h.b16 %v2380
  %v2544 = vunpack.c.l.b16 %v2381
  %v2545 = vunpack.c.h.b16 %v2381
  %v2546 = vunpack.c.l.b16 %v2382
  %v2547 = vunpack.c.h.b16 %v2382
  %v2548 = vunpack.c.l.b16 %v2383
  %v2549 = vunpack.c.h.b16 %v2383
  %v2550 = vunpack.c.l.b16 %v2384
  %v2551 = vunpack.c.h.b16 %v2384
  %v2552 = vunpack.c.l.b16 %v2385
  %v2553 = vunpack.c.h.b16 %v2385
  %v2554 = vunpack.c.l.b16 %v2386
  %v2555 = vunpack.c.h.b16 %v2386
  %v2556 = vunpack.c.l.b16 %v2387
  %v2557 = vunpack.c.h.b16 %v2387
  %v2558 = vunpack.c.l.b16 %v2388
  %v2559 = vunpack.c.h.b16 %v2388
  %v2560 = vunpack.c.l.b16 %v2389
  %v2561 = vunpack.c.h.b16 %v2389
  %v2562 = vunpack.c.l.b16 %v2390
  %v2563 = vunpack.c.h.b16 %v2390
  %v2564 = vunpack.c.l.b16 %v2391
  %v2565 = vunpack.c.h.b16 %v2391
  %v2566 = vunpack.c.l.b16 %v2392
  %v2567 = vunpack.c.h.b16 %v2392
  %v2568 = vunpack.c.l.b16 %v2393
  %v2569 = vunpack.c.h.b16 %v2393
  %v2570 = vunpack.c.l.b16 %v2394
  %v2571 = vunpack.c.h.b16 %v2394
  %v2572 = vunpack.c.l.b16 %v2395
  %v2573 = vunpack.c.h.b16 %v2395
  %v2574 = vunpack.c.l.b16 %v2396
  %v2575 = vunpack.c.h.b16 %v2396
  %v2576 = vunpack.c.l.b16 %v2397
  %v2577 = vunpack.c.h.b16 %v2397
  %v2578 = vunpack.c.l.b16 %v2398
  %v2579 = vunpack.c.h.b16 %v2398
  %v2580 = vunpack.c.l.b16 %v2399
  %v2581 = vunpack.c.h.b16 %v2399
  %v2582 = vunpack.c.l.b16 %v2400
  %v2583 = vunpack.c.h.b16 %v2400
  %v2584 = vunpack.c.l.b16 %v2401
  %v2585 = vunpack.c.h.b16 %v2401
  %v2586 = vunpack.c.l.b16 %v2402
  %v2587 = vunpack.c.h.b16 %v2402
  %v2588 = vunpack.c.l.b16 %v2403
  %v2589 = vunpack.c.h.b16 %v2403
  %v2590 = vunpack.c.l.b16 %v2404
  %v2591 = vunpack.c.h.b16 %v2404
  %v2592 = vunpack.c.l.b16 %v2405
  %v2593 = vunpack.c.h.b16 %v2405
  %v2594 = vunpack.c.l.b16 %v2406
  %v2595 = vunpack.c.h.b16 %v2406
  %v2596 = vunpack.c.l.b16 %v2407
  %v2597 = vunpack.c.h.b16 %v2407
  %v2598 = vunpack.c.l.b16 %v2408
  %v2599 = vunpack.c.h.b16 %v2408
  %v2600 = vunpack.c.l.b16 %v2409
  %v2601 = vunpack.c.h.b16 %v2409
  %v2602 = vpack.c.b16 %v2478, %v2474
  %v2603 = vpack.c.b16 %v2479, %v2475
  %v2604 = vpack.c.b16 %v2480, %v2476
  %v2605 = vpack.c.b16 %v2481, %v2477
  %v2606 = vpack.c.b16 %v2486, %v2482
  %v2607 = vpack.c.b16 %v2487, %v2483
  %v2608 = vpack.c.b16 %v2488, %v2484
  %v2609 = vpack.c.b16 %v2489, %v2485
  %v2610 = vpack.c.b16 %v2494, %v2490
  %v2611 = vpack.c.b16 %v2495, %v2491
  %v2612 = vpack.c.b16 %v2496, %v2492
  %v2613 = vpack.c.b16 %v2497, %v2493
  %v2614 = vpack.c.b16 %v2502, %v2498
  %v2615 = vpack.c.b16 %v2503, %v2499
  %v2616 = vpack.c.b16 %v2504, %v2500
  %v2617 = vpack.c.b16 %v2505, %v2501
  %v2618 = vpack.c.b16 %v2510, %v2506
  %v2619 = vpack.c.b16 %v2511, %v2507
  %v2620 = vpack.c.b16 %v2512, %v2508
  %v2621 = vpack.c.b16 %v2513, %v2509
  %v2622 = vpack.c.b16 %v2518, %v2514
  %v2623 = vpack.c.b16 %v2519, %v2515
  %v2624 = vpack.c.b16 %v2520, %v2516
  %v2625 = vpack.c.b16 %v2521, %v2517
  %v2626 = vpack.c.b16 %v2526, %v2522
  %v2627 = vpack.c.b16 %v2527, %v2523
  %v2628 = vpack.c.b16 %v2528, %v2524
  %v2629 = vpack.c.b16 %v2529, %v2525
  %v2630 = vpack.c.b16 %v2534, %v2530
  %v2631 = vpack.c.b16 %v2535, %v2531
  %v2632 = vpack.c.b16 %v2536, %v2532
  %v2633 = vpack.c.b16 %v2537, %v2533
  %v2634 = vpack.c.b16 %v2542, %v2538
  %v2635 = vpack.c.b16 %v2543, %v2539
  %v2636 = vpack.c.b16 %v2544, %v2540
  %v2637 = vpack.c.b16 %v2545, %v2541
  %v2638 = vpack.c.b16 %v2550, %v2546
  %v2639 = vpack.c.b16 %v2551, %v2547
  %v2640 = vpack.c.b16 %v2552, %v2548
  %v2641 = vpack.c.b16 %v2553, %v2549
  %v2642 = vpack.c.b16 %v2558, %v2554
  %v2643 = vpack.c.b16 %v2559, %v2555
  %v2644 = vpack.c.b16 %v2560, %v2556
  %v2645 = vpack.c.b16 %v2561, %v2557
  %v2646 = vpack.c.b16 %v2566, %v2562
  %v2647 = vpack.c.b16 %v2567, %v2563
  %v2648 = vpack.c.b16 %v2568, %v2564
  %v2649 = vpack.c.b16 %v2569, %v2565
  %v2650 = vpack.c.b16 %v2574, %v2570
  %v2651 = vpack.c.b16 %v2575, %v2571
  %v2652 = vpack.c.b16 %v2576, %v2572
  %v2653 = vpack.c.b16 %v2577, %v2573
  %v2654 = vpack.c.b16 %v2582, %v2578
  %v2655 = vpack.c.b16 %v2583, %v2579
  %v2656 = vpack.c.b16 %v2584, %v2580
  %v2657 = vpack.c.b16 %v2585, %v2581
  %v2658 = vpack.c.b16 %v2590, %v2586
  %v2659 = vpack.c.b16 %v2591, %v2587
  %v2660 = vpack.c.b16 %v2592, %v2588
  %v2661 = vpack.c.b16 %v2593, %v2589
  %v2662 = vpack.c.b16 %v2598, %v2594
  %v2663 = vpack.c.b16 %v2599, %v2595
  %v2664 = vpack.c.b16 %v2600, %v2596
  %v2665 = vpack.c.b16 %v2601, %v2597
  %2730 = vmatprep.subr.bf16.mxu0 %v2631
  %2731 = vmatpush1.bf16.msra.mxu0 %v2630
  %2732 = vmatprep.subr.bf16.mxu0 %v2627
  %2733 = vmatpush1.bf16.msra.mxu0 %v2626
  %2734 = vmatprep.subr.bf16.mxu0 %v2623
  %2735 = vmatpush1.bf16.msra.mxu0 %v2622
  %2736 = vmatprep.subr.bf16.mxu0 %v2619
  %2737 = vmatpush1.bf16.msra.mxu0 %v2618
  %2738 = vmatprep.subr.bf16.mxu0 %v2615
  %2739 = vmatpush1.bf16.msra.mxu0 %v2614
  %2740 = vmatprep.subr.bf16.mxu0 %v2611
  %2741 = vmatpush1.bf16.msra.mxu0 %v2610
  %2742 = vmatprep.subr.bf16.mxu0 %v2607
  %2743 = vmatpush1.bf16.msra.mxu0 %v2606
  %2744 = vmatprep.subr.bf16.mxu0 %v2603
  %2745 = vmatpush1.bf16.msra.mxu0 %v2602
  %2746 = vmatprep.subr.bf16.mxu0 %v2663
  %2747 = vmatpush2.bf16.msra.mxu0 %v2662
  %2748 = vmatprep.subr.bf16.mxu0 %v2659
  %2749 = vmatpush2.bf16.msra.mxu0 %v2658
  %2750 = vmatprep.subr.bf16.mxu0 %v2655
  %2751 = vmatpush2.bf16.msra.mxu0 %v2654
  %2752 = vmatprep.subr.bf16.mxu0 %v2651
  %2753 = vmatpush2.bf16.msra.mxu0 %v2650
  %2754 = vmatprep.subr.bf16.mxu0 %v2647
  %2755 = vmatpush2.bf16.msra.mxu0 %v2646
  %2756 = vmatprep.subr.bf16.mxu0 %v2643
  %2757 = vmatpush2.bf16.msra.mxu0 %v2642
  %2758 = vmatprep.subr.bf16.mxu0 %v2639
  %2759 = vmatpush2.bf16.msra.mxu0 %v2638
  %2760 = vmatprep.subr.bf16.mxu0 %v2635
  %2761 = vmatpush2.bf16.msra.mxu0 %v2634
  %2762 = vmatprep.mubr.bf16.mxu0 %v2345
  %2763 = vmatmul.mubr.bf16.gmra.mxu0 %v2344
  %v2764 = vpop.f32.mrf.mxu0
  %v2765 = vadd.f32 %v802, %v2764
  %v2766 = vpop.f32.mrf.mxu0
  %v2767 = vadd.f32 %v806, %v2766
  %v2768 = vpop.f32.mrf.mxu0
  %v2769 = vpop.f32.mrf.mxu0
  %2770 = vdwg.mxu0
  %2771 = vmatprep.subr.bf16.mxu0 %v2633
  %2772 = vmatpush1.bf16.msra.mxu0 %v2632
  %2773 = vmatprep.subr.bf16.mxu0 %v2629
  %2774 = vmatpush1.bf16.msra.mxu0 %v2628
  %2775 = vmatprep.subr.bf16.mxu0 %v2625
  %2776 = vmatpush1.bf16.msra.mxu0 %v2624
  %2777 = vmatprep.subr.bf16.mxu0 %v2621
  %2778 = vmatpush1.bf16.msra.mxu0 %v2620
  %2779 = vmatprep.subr.bf16.mxu0 %v2617
  %2780 = vmatpush1.bf16.msra.mxu0 %v2616
  %2781 = vmatprep.subr.bf16.mxu0 %v2613
  %2782 = vmatpush1.bf16.msra.mxu0 %v2612
  %2783 = vmatprep.subr.bf16.mxu0 %v2609
  %2784 = vmatpush1.bf16.msra.mxu0 %v2608
  %2785 = vmatprep.subr.bf16.mxu0 %v2605
  %2786 = vmatpush1.bf16.msra.mxu0 %v2604
  %2787 = vmatprep.subr.bf16.mxu0 %v2665
  %2788 = vmatpush2.bf16.msra.mxu0 %v2664
  %2789 = vmatprep.subr.bf16.mxu0 %v2661
  %2790 = vmatpush2.bf16.msra.mxu0 %v2660
  %2791 = vmatprep.subr.bf16.mxu0 %v2657
  %2792 = vmatpush2.bf16.msra.mxu0 %v2656
  %2793 = vmatprep.subr.bf16.mxu0 %v2653
  %2794 = vmatpush2.bf16.msra.mxu0 %v2652
  %2795 = vmatprep.subr.bf16.mxu0 %v2649
  %2796 = vmatpush2.bf16.msra.mxu0 %v2648
  %2797 = vmatprep.subr.bf16.mxu0 %v2645
  %2798 = vmatpush2.bf16.msra.mxu0 %v2644
  %2799 = vmatprep.subr.bf16.mxu0 %v2641
  %2800 = vmatpush2.bf16.msra.mxu0 %v2640
  %2801 = vmatprep.subr.bf16.mxu0 %v2637
  %2802 = vmatpush2.bf16.msra.mxu0 %v2636
  %2803 = vmatprep.mubr.bf16.mxu0 %v2345
  %2804 = vmatmul.mubr.bf16.gmra.mxu0 %v2344
  %v2805 = vpop.f32.mrf.mxu0
  %v2806 = vadd.f32 %v810, %v2805
  %v2807 = vpop.f32.mrf.mxu0
  %v2808 = vadd.f32 %v814, %v2807
  %v2809 = vpop.f32.mrf.mxu0
  %v2810 = vpop.f32.mrf.mxu0
  %2811 = vdwg.mxu0
  %v2812 = vxor.u32 %v2765, 2147483648
  %v2813 = vmul.f32 %v2812, 1.442695
  %v2814 = vpow.pop %v2813
  %v2815 = vadd.f32 %v2814, 1.0
  %v2816 = vrcp.pop %v2815
  %v2817 = vmul.f32 1.0, %v2816
  %v2818 = vxor.u32 %v2767, 2147483648
  %v2819 = vmul.f32 %v2818, 1.442695
  %v2820 = vpow.pop %v2819
  %v2821 = vadd.f32 %v2820, 1.0
  %v2822 = vrcp.pop %v2821
  %v2823 = vmul.f32 1.0, %v2822
  %v2824 = vtanh.pop %v2806
  %v2825 = vxor.u32 %v2808, 2147483648
  %v2826 = vmul.f32 %v2825, 1.442695
  %v2827 = vpow.pop %v2826
  %v2828 = vadd.f32 %v2827, 1.0
  %v2829 = vrcp.pop %v2828
  %v2830 = vmul.f32 1.0, %v2829
  %v2831 = vmul.f32 %v2823, %v2037
  %v2832 = vmul.f32 %v2817, %v2824
  %v2833 = vadd.f32 %v2831, %v2832
  %v2834 = vtanh.pop %v2833
  %v2835 = vmul.f32 %v2830, %v2834
  %s2836 = scalar_lea.vmem %s6, 16
  %2837 = vst [vmem:[%s2836] sm:$0xff] %v2835
  %v2838 = vld [vmem:[%s2] sm:$0xff]
  %v2839 = vld [vmem:[%s2 + $0x8] sm:$0xff]
  %v2840 = vld [vmem:[%s2 + $0x10] sm:$0xff]
  %v2841 = vld [vmem:[%s2 + $0x18] sm:$0xff]
  %v2842 = vld [vmem:[%s2 + $0x20] sm:$0xff]
  %v2843 = vld [vmem:[%s2 + $0x28] sm:$0xff]
  %v2844 = vld [vmem:[%s2 + $0x30] sm:$0xff]
  %v2845 = vld [vmem:[%s2 + $0x38] sm:$0xff]
  %v2846 = vld [vmem:[%s2 + $0x40] sm:$0xff]
  %v2847 = vld [vmem:[%s2 + $0x48] sm:$0xff]
  %v2848 = vld [vmem:[%s2 + $0x50] sm:$0xff]
  %v2849 = vld [vmem:[%s2 + $0x58] sm:$0xff]
  %v2850 = vld [vmem:[%s2 + $0x60] sm:$0xff]
  %v2851 = vld [vmem:[%s2 + $0x68] sm:$0xff]
  %v2852 = vld [vmem:[%s2 + $0x70] sm:$0xff]
  %v2853 = vld [vmem:[%s2 + $0x78] sm:$0xff]
  %v2854 = vld [vmem:[%s2 + $0x80] sm:$0xff]
  %v2855 = vld [vmem:[%s2 + $0x88] sm:$0xff]
  %v2856 = vld [vmem:[%s2 + $0x90] sm:$0xff]
  %v2857 = vld [vmem:[%s2 + $0x98] sm:$0xff]
  %v2858 = vld [vmem:[%s2 + $0xa0] sm:$0xff]
  %v2859 = vld [vmem:[%s2 + $0xa8] sm:$0xff]
  %v2860 = vld [vmem:[%s2 + $0xb0] sm:$0xff]
  %v2861 = vld [vmem:[%s2 + $0xb8] sm:$0xff]
  %v2862 = vld [vmem:[%s2 + $0xc0] sm:$0xff]
  %v2863 = vld [vmem:[%s2 + $0xc8] sm:$0xff]
  %v2864 = vld [vmem:[%s2 + $0xd0] sm:$0xff]
  %v2865 = vld [vmem:[%s2 + $0xd8] sm:$0xff]
  %v2866 = vld [vmem:[%s2 + $0xe0] sm:$0xff]
  %v2867 = vld [vmem:[%s2 + $0xe8] sm:$0xff]
  %v2868 = vld [vmem:[%s2 + $0xf0] sm:$0xff]
  %v2869 = vld [vmem:[%s2 + $0xf8] sm:$0xff]
  %v2902 = vunpack.c.l.b16 %v2838
  %v2903 = vunpack.c.h.b16 %v2838
  %v2904 = vunpack.c.l.b16 %v2839
  %v2905 = vunpack.c.h.b16 %v2839
  %v2906 = vunpack.c.l.b16 %v2840
  %v2907 = vunpack.c.h.b16 %v2840
  %v2908 = vunpack.c.l.b16 %v2841
  %v2909 = vunpack.c.h.b16 %v2841
  %v2910 = vunpack.c.l.b16 %v2842
  %v2911 = vunpack.c.h.b16 %v2842
  %v2912 = vunpack.c.l.b16 %v2843
  %v2913 = vunpack.c.h.b16 %v2843
  %v2914 = vunpack.c.l.b16 %v2844
  %v2915 = vunpack.c.h.b16 %v2844
  %v2916 = vunpack.c.l.b16 %v2845
  %v2917 = vunpack.c.h.b16 %v2845
  %v2918 = vunpack.c.l.b16 %v2846
  %v2919 = vunpack.c.h.b16 %v2846
  %v2920 = vunpack.c.l.b16 %v2847
  %v2921 = vunpack.c.h.b16 %v2847
  %v2922 = vunpack.c.l.b16 %v2848
  %v2923 = vunpack.c.h.b16 %v2848
  %v2924 = vunpack.c.l.b16 %v2849
  %v2925 = vunpack.c.h.b16 %v2849
  %v2926 = vunpack.c.l.b16 %v2850
  %v2927 = vunpack.c.h.b16 %v2850
  %v2928 = vunpack.c.l.b16 %v2851
  %v2929 = vunpack.c.h.b16 %v2851
  %v2930 = vunpack.c.l.b16 %v2852
  %v2931 = vunpack.c.h.b16 %v2852
  %v2932 = vunpack.c.l.b16 %v2853
  %v2933 = vunpack.c.h.b16 %v2853
  %v2934 = vunpack.c.l.b16 %v2854
  %v2935 = vunpack.c.h.b16 %v2854
  %v2936 = vunpack.c.l.b16 %v2855
  %v2937 = vunpack.c.h.b16 %v2855
  %v2938 = vunpack.c.l.b16 %v2856
  %v2939 = vunpack.c.h.b16 %v2856
  %v2940 = vunpack.c.l.b16 %v2857
  %v2941 = vunpack.c.h.b16 %v2857
  %v2942 = vunpack.c.l.b16 %v2858
  %v2943 = vunpack.c.h.b16 %v2858
  %v2944 = vunpack.c.l.b16 %v2859
  %v2945 = vunpack.c.h.b16 %v2859
  %v2946 = vunpack.c.l.b16 %v2860
  %v2947 = vunpack.c.h.b16 %v2860
  %v2948 = vunpack.c.l.b16 %v2861
  %v2949 = vunpack.c.h.b16 %v2861
  %v2950 = vunpack.c.l.b16 %v2862
  %v2951 = vunpack.c.h.b16 %v2862
  %v2952 = vunpack.c.l.b16 %v2863
  %v2953 = vunpack.c.h.b16 %v2863
  %v2954 = vunpack.c.l.b16 %v2864
  %v2955 = vunpack.c.h.b16 %v2864
  %v2956 = vunpack.c.l.b16 %v2865
  %v2957 = vunpack.c.h.b16 %v2865
  %v2958 = vunpack.c.l.b16 %v2866
  %v2959 = vunpack.c.h.b16 %v2866
  %v2960 = vunpack.c.l.b16 %v2867
  %v2961 = vunpack.c.h.b16 %v2867
  %v2962 = vunpack.c.l.b16 %v2868
  %v2963 = vunpack.c.h.b16 %v2868
  %v2964 = vunpack.c.l.b16 %v2869
  %v2965 = vunpack.c.h.b16 %v2869
  %v2966 = vpack.c.b16 %v2906, %v2902
  %v2967 = vpack.c.b16 %v2907, %v2903
  %v2968 = vpack.c.b16 %v2908, %v2904
  %v2969 = vpack.c.b16 %v2909, %v2905
  %v2970 = vpack.c.b16 %v2914, %v2910
  %v2971 = vpack.c.b16 %v2915, %v2911
  %v2972 = vpack.c.b16 %v2916, %v2912
  %v2973 = vpack.c.b16 %v2917, %v2913
  %v2974 = vpack.c.b16 %v2922, %v2918
  %v2975 = vpack.c.b16 %v2923, %v2919
  %v2976 = vpack.c.b16 %v2924, %v2920
  %v2977 = vpack.c.b16 %v2925, %v2921
  %v2978 = vpack.c.b16 %v2930, %v2926
  %v2979 = vpack.c.b16 %v2931, %v2927
  %v2980 = vpack.c.b16 %v2932, %v2928
  %v2981 = vpack.c.b16 %v2933, %v2929
  %v2982 = vpack.c.b16 %v2938, %v2934
  %v2983 = vpack.c.b16 %v2939, %v2935
  %v2984 = vpack.c.b16 %v2940, %v2936
  %v2985 = vpack.c.b16 %v2941, %v2937
  %v2986 = vpack.c.b16 %v2946, %v2942
  %v2987 = vpack.c.b16 %v2947, %v2943
  %v2988 = vpack.c.b16 %v2948, %v2944
  %v2989 = vpack.c.b16 %v2949, %v2945
  %v2990 = vpack.c.b16 %v2954, %v2950
  %v2991 = vpack.c.b16 %v2955, %v2951
  %v2992 = vpack.c.b16 %v2956, %v2952
  %v2993 = vpack.c.b16 %v2957, %v2953
  %v2994 = vpack.c.b16 %v2962, %v2958
  %v2995 = vpack.c.b16 %v2963, %v2959
  %v2996 = vpack.c.b16 %v2964, %v2960
  %v2997 = vpack.c.b16 %v2965, %v2961
  %3030 = vmatprep.subr.bf16.mxu0 %v2995
  %3031 = vmatpush1.bf16.msra.mxu0 %v2994
  %3032 = vmatprep.subr.bf16.mxu0 %v2991
  %3033 = vmatpush1.bf16.msra.mxu0 %v2990
  %3034 = vmatprep.subr.bf16.mxu0 %v2987
  %3035 = vmatpush1.bf16.msra.mxu0 %v2986
  %3036 = vmatprep.subr.bf16.mxu0 %v2983
  %3037 = vmatpush1.bf16.msra.mxu0 %v2982
  %3038 = vmatprep.subr.bf16.mxu0 %v2979
  %3039 = vmatpush1.bf16.msra.mxu0 %v2978
  %3040 = vmatprep.subr.bf16.mxu0 %v2975
  %3041 = vmatpush1.bf16.msra.mxu0 %v2974
  %3042 = vmatprep.subr.bf16.mxu0 %v2971
  %3043 = vmatpush1.bf16.msra.mxu0 %v2970
  %3044 = vmatprep.subr.bf16.mxu0 %v2967
  %3045 = vmatpush1.bf16.msra.mxu0 %v2966
  %3046 = vmatprep.subr.bf16.mxu0 0
  %3047 = vmatpush2.bf16.msra.mxu0 0
  %3048 = vmatprep.subr.bf16.mxu0 0
  %3049 = vmatpush2.bf16.msra.mxu0 0
  %3050 = vmatprep.subr.bf16.mxu0 0
  %3051 = vmatpush2.bf16.msra.mxu0 0
  %3052 = vmatprep.subr.bf16.mxu0 0
  %3053 = vmatpush2.bf16.msra.mxu0 0
  %3054 = vmatprep.subr.bf16.mxu0 0
  %3055 = vmatpush2.bf16.msra.mxu0 0
  %3056 = vmatprep.subr.bf16.mxu0 0
  %3057 = vmatpush2.bf16.msra.mxu0 0
  %3058 = vmatprep.subr.bf16.mxu0 0
  %3059 = vmatpush2.bf16.msra.mxu0 0
  %3060 = vmatprep.subr.bf16.mxu0 0
  %3061 = vmatpush2.bf16.msra.mxu0 0
  %3062 = vmatprep.mubr.bf16.mxu0 0
  %3063 = vmatmul.mubr.bf16.gmra.mxu0 %v2344
  %v3064 = vpop.f32.mrf.mxu0
  %v3065 = vadd.f32 0.0, %v3064
  %v3066 = vpop.f32.mrf.mxu0
  %v3067 = vadd.f32 0.0, %v3066
  %v3068 = vpop.f32.mrf.mxu0
  %v3069 = vpop.f32.mrf.mxu0
  %3070 = vdwg.mxu0
  %3071 = vmatprep.subr.bf16.mxu0 %v2997
  %3072 = vmatpush1.bf16.msra.mxu0 %v2996
  %3073 = vmatprep.subr.bf16.mxu0 %v2993
  %3074 = vmatpush1.bf16.msra.mxu0 %v2992
  %3075 = vmatprep.subr.bf16.mxu0 %v2989
  %3076 = vmatpush1.bf16.msra.mxu0 %v2988
  %3077 = vmatprep.subr.bf16.mxu0 %v2985
  %3078 = vmatpush1.bf16.msra.mxu0 %v2984
  %3079 = vmatprep.subr.bf16.mxu0 %v2981
  %3080 = vmatpush1.bf16.msra.mxu0 %v2980
  %3081 = vmatprep.subr.bf16.mxu0 %v2977
  %3082 = vmatpush1.bf16.msra.mxu0 %v2976
  %3083 = vmatprep.subr.bf16.mxu0 %v2973
  %3084 = vmatpush1.bf16.msra.mxu0 %v2972
  %3085 = vmatprep.subr.bf16.mxu0 %v2969
  %3086 = vmatpush1.bf16.msra.mxu0 %v2968
  %3087 = vmatprep.subr.bf16.mxu0 0
  %3088 = vmatpush2.bf16.msra.mxu0 0
  %3089 = vmatprep.subr.bf16.mxu0 0
  %3090 = vmatpush2.bf16.msra.mxu0 0
  %3091 = vmatprep.subr.bf16.mxu0 0
  %3092 = vmatpush2.bf16.msra.mxu0 0
  %3093 = vmatprep.subr.bf16.mxu0 0
  %3094 = vmatpush2.bf16.msra.mxu0 0
  %3095 = vmatprep.subr.bf16.mxu0 0
  %3096 = vmatpush2.bf16.msra.mxu0 0
  %3097 = vmatprep.subr.bf16.mxu0 0
  %3098 = vmatpush2.bf16.msra.mxu0 0
  %3099 = vmatprep.subr.bf16.mxu0 0
  %3100 = vmatpush2.bf16.msra.mxu0 0
  %3101 = vmatprep.subr.bf16.mxu0 0
  %3102 = vmatpush2.bf16.msra.mxu0 0
  %3103 = vmatprep.mubr.bf16.mxu0 0
  %3104 = vmatmul.mubr.bf16.gmra.mxu0 %v2344
  %v3105 = vpop.f32.mrf.mxu0
  %v3106 = vadd.f32 0.0, %v3105
  %v3107 = vpop.f32.mrf.mxu0
  %v3108 = vadd.f32 0.0, %v3107
  %v3109 = vpop.f32.mrf.mxu0
  %v3110 = vpop.f32.mrf.mxu0
  %3111 = vdwg.mxu0
  %v3112 = vadd.f32 %v327, %v3065
  %v3113 = vadd.f32 %v329, %v3067
  %v3114 = vadd.f32 %v400, %v3106
  %v3115 = vadd.f32 %v402, %v3108
  %v3116 = vxor.u32 %v3112, 2147483648
  %v3117 = vmul.f32 %v3116, 1.442695
  %v3118 = vpow.pop %v3117
  %v3119 = vadd.f32 %v3118, 1.0
  %v3120 = vrcp.pop %v3119
  %v3121 = vmul.f32 1.0, %v3120
  %v3122 = vxor.u32 %v3113, 2147483648
  %v3123 = vmul.f32 %v3122, 1.442695
  %v3124 = vpow.pop %v3123
  %v3125 = vadd.f32 %v3124, 1.0
  %v3126 = vrcp.pop %v3125
  %v3127 = vmul.f32 1.0, %v3126
  %v3128 = vtanh.pop %v3114
  %v3129 = vxor.u32 %v3115, 2147483648
  %v3130 = vmul.f32 %v3129, 1.442695
  %v3131 = vpow.pop %v3130
  %v3132 = vadd.f32 %v3131, 1.0
  %v3133 = vrcp.pop %v3132
  %v3134 = vmul.f32 1.0, %v3133
  %v3135 = vmul.f32 %v3127, %v2341
  %v3136 = vmul.f32 %v3121, %v3128
  %v3137 = vadd.f32 %v3135, %v3136
  %v3138 = vtanh.pop %v3137
  %v3139 = vmul.f32 %v3134, %v3138
  %v3140 = vpack.c.bf16 %v3139, %v3139
  %v3141 = vpack.c.bf16 %v2835, %v2835
  %v3142 = vld [vmem:[%s4] sm:$0xff]
  %v3143 = vld [vmem:[%s4 + $0x8] sm:$0xff]
  %v3144 = vld [vmem:[%s4 + $0x10] sm:$0xff]
  %v3145 = vld [vmem:[%s4 + $0x18] sm:$0xff]
  %v3146 = vld [vmem:[%s4 + $0x20] sm:$0xff]
  %v3147 = vld [vmem:[%s4 + $0x28] sm:$0xff]
  %v3148 = vld [vmem:[%s4 + $0x30] sm:$0xff]
  %v3149 = vld [vmem:[%s4 + $0x38] sm:$0xff]
  %v3150 = vld [vmem:[%s4 + $0x40] sm:$0xff]
  %v3151 = vld [vmem:[%s4 + $0x48] sm:$0xff]
  %v3152 = vld [vmem:[%s4 + $0x50] sm:$0xff]
  %v3153 = vld [vmem:[%s4 + $0x58] sm:$0xff]
  %v3154 = vld [vmem:[%s4 + $0x60] sm:$0xff]
  %v3155 = vld [vmem:[%s4 + $0x68] sm:$0xff]
  %v3156 = vld [vmem:[%s4 + $0x70] sm:$0xff]
  %v3157 = vld [vmem:[%s4 + $0x78] sm:$0xff]
  %v3158 = vld [vmem:[%s4 + $0x80] sm:$0xff]
  %v3159 = vld [vmem:[%s4 + $0x88] sm:$0xff]
  %v3160 = vld [vmem:[%s4 + $0x90] sm:$0xff]
  %v3161 = vld [vmem:[%s4 + $0x98] sm:$0xff]
  %v3162 = vld [vmem:[%s4 + $0xa0] sm:$0xff]
  %v3163 = vld [vmem:[%s4 + $0xa8] sm:$0xff]
  %v3164 = vld [vmem:[%s4 + $0xb0] sm:$0xff]
  %v3165 = vld [vmem:[%s4 + $0xb8] sm:$0xff]
  %v3166 = vld [vmem:[%s4 + $0xc0] sm:$0xff]
  %v3167 = vld [vmem:[%s4 + $0xc8] sm:$0xff]
  %v3168 = vld [vmem:[%s4 + $0xd0] sm:$0xff]
  %v3169 = vld [vmem:[%s4 + $0xd8] sm:$0xff]
  %v3170 = vld [vmem:[%s4 + $0xe0] sm:$0xff]
  %v3171 = vld [vmem:[%s4 + $0xe8] sm:$0xff]
  %v3172 = vld [vmem:[%s4 + $0xf0] sm:$0xff]
  %v3173 = vld [vmem:[%s4 + $0xf8] sm:$0xff]
  %v3174 = vld [vmem:[%s4 + $0x100] sm:$0xff]
  %v3175 = vld [vmem:[%s4 + $0x108] sm:$0xff]
  %v3176 = vld [vmem:[%s4 + $0x110] sm:$0xff]
  %v3177 = vld [vmem:[%s4 + $0x118] sm:$0xff]
  %v3178 = vld [vmem:[%s4 + $0x120] sm:$0xff]
  %v3179 = vld [vmem:[%s4 + $0x128] sm:$0xff]
  %v3180 = vld [vmem:[%s4 + $0x130] sm:$0xff]
  %v3181 = vld [vmem:[%s4 + $0x138] sm:$0xff]
  %v3182 = vld [vmem:[%s4 + $0x140] sm:$0xff]
  %v3183 = vld [vmem:[%s4 + $0x148] sm:$0xff]
  %v3184 = vld [vmem:[%s4 + $0x150] sm:$0xff]
  %v3185 = vld [vmem:[%s4 + $0x158] sm:$0xff]
  %v3186 = vld [vmem:[%s4 + $0x160] sm:$0xff]
  %v3187 = vld [vmem:[%s4 + $0x168] sm:$0xff]
  %v3188 = vld [vmem:[%s4 + $0x170] sm:$0xff]
  %v3189 = vld [vmem:[%s4 + $0x178] sm:$0xff]
  %v3190 = vld [vmem:[%s4 + $0x180] sm:$0xff]
  %v3191 = vld [vmem:[%s4 + $0x188] sm:$0xff]
  %v3192 = vld [vmem:[%s4 + $0x190] sm:$0xff]
  %v3193 = vld [vmem:[%s4 + $0x198] sm:$0xff]
  %v3194 = vld [vmem:[%s4 + $0x1a0] sm:$0xff]
  %v3195 = vld [vmem:[%s4 + $0x1a8] sm:$0xff]
  %v3196 = vld [vmem:[%s4 + $0x1b0] sm:$0xff]
  %v3197 = vld [vmem:[%s4 + $0x1b8] sm:$0xff]
  %v3198 = vld [vmem:[%s4 + $0x1c0] sm:$0xff]
  %v3199 = vld [vmem:[%s4 + $0x1c8] sm:$0xff]
  %v3200 = vld [vmem:[%s4 + $0x1d0] sm:$0xff]
  %v3201 = vld [vmem:[%s4 + $0x1d8] sm:$0xff]
  %v3202 = vld [vmem:[%s4 + $0x1e0] sm:$0xff]
  %v3203 = vld [vmem:[%s4 + $0x1e8] sm:$0xff]
  %v3204 = vld [vmem:[%s4 + $0x1f0] sm:$0xff]
  %v3205 = vld [vmem:[%s4 + $0x1f8] sm:$0xff]
  %v3270 = vunpack.c.l.b16 %v3142
  %v3271 = vunpack.c.h.b16 %v3142
  %v3272 = vunpack.c.l.b16 %v3143
  %v3273 = vunpack.c.h.b16 %v3143
  %v3274 = vunpack.c.l.b16 %v3144
  %v3275 = vunpack.c.h.b16 %v3144
  %v3276 = vunpack.c.l.b16 %v3145
  %v3277 = vunpack.c.h.b16 %v3145
  %v3278 = vunpack.c.l.b16 %v3146
  %v3279 = vunpack.c.h.b16 %v3146
  %v3280 = vunpack.c.l.b16 %v3147
  %v3281 = vunpack.c.h.b16 %v3147
  %v3282 = vunpack.c.l.b16 %v3148
  %v3283 = vunpack.c.h.b16 %v3148
  %v3284 = vunpack.c.l.b16 %v3149
  %v3285 = vunpack.c.h.b16 %v3149
  %v3286 = vunpack.c.l.b16 %v3150
  %v3287 = vunpack.c.h.b16 %v3150
  %v3288 = vunpack.c.l.b16 %v3151
  %v3289 = vunpack.c.h.b16 %v3151
  %v3290 = vunpack.c.l.b16 %v3152
  %v3291 = vunpack.c.h.b16 %v3152
  %v3292 = vunpack.c.l.b16 %v3153
  %v3293 = vunpack.c.h.b16 %v3153
  %v3294 = vunpack.c.l.b16 %v3154
  %v3295 = vunpack.c.h.b16 %v3154
  %v3296 = vunpack.c.l.b16 %v3155
  %v3297 = vunpack.c.h.b16 %v3155
  %v3298 = vunpack.c.l.b16 %v3156
  %v3299 = vunpack.c.h.b16 %v3156
  %v3300 = vunpack.c.l.b16 %v3157
  %v3301 = vunpack.c.h.b16 %v3157
  %v3302 = vunpack.c.l.b16 %v3158
  %v3303 = vunpack.c.h.b16 %v3158
  %v3304 = vunpack.c.l.b16 %v3159
  %v3305 = vunpack.c.h.b16 %v3159
  %v3306 = vunpack.c.l.b16 %v3160
  %v3307 = vunpack.c.h.b16 %v3160
  %v3308 = vunpack.c.l.b16 %v3161
  %v3309 = vunpack.c.h.b16 %v3161
  %v3310 = vunpack.c.l.b16 %v3162
  %v3311 = vunpack.c.h.b16 %v3162
  %v3312 = vunpack.c.l.b16 %v3163
  %v3313 = vunpack.c.h.b16 %v3163
  %v3314 = vunpack.c.l.b16 %v3164
  %v3315 = vunpack.c.h.b16 %v3164
  %v3316 = vunpack.c.l.b16 %v3165
  %v3317 = vunpack.c.h.b16 %v3165
  %v3318 = vunpack.c.l.b16 %v3166
  %v3319 = vunpack.c.h.b16 %v3166
  %v3320 = vunpack.c.l.b16 %v3167
  %v3321 = vunpack.c.h.b16 %v3167
  %v3322 = vunpack.c.l.b16 %v3168
  %v3323 = vunpack.c.h.b16 %v3168
  %v3324 = vunpack.c.l.b16 %v3169
  %v3325 = vunpack.c.h.b16 %v3169
  %v3326 = vunpack.c.l.b16 %v3170
  %v3327 = vunpack.c.h.b16 %v3170
  %v3328 = vunpack.c.l.b16 %v3171
  %v3329 = vunpack.c.h.b16 %v3171
  %v3330 = vunpack.c.l.b16 %v3172
  %v3331 = vunpack.c.h.b16 %v3172
  %v3332 = vunpack.c.l.b16 %v3173
  %v3333 = vunpack.c.h.b16 %v3173
  %v3334 = vunpack.c.l.b16 %v3174
  %v3335 = vunpack.c.h.b16 %v3174
  %v3336 = vunpack.c.l.b16 %v3175
  %v3337 = vunpack.c.h.b16 %v3175
  %v3338 = vunpack.c.l.b16 %v3176
  %v3339 = vunpack.c.h.b16 %v3176
  %v3340 = vunpack.c.l.b16 %v3177
  %v3341 = vunpack.c.h.b16 %v3177
  %v3342 = vunpack.c.l.b16 %v3178
  %v3343 = vunpack.c.h.b16 %v3178
  %v3344 = vunpack.c.l.b16 %v3179
  %v3345 = vunpack.c.h.b16 %v3179
  %v3346 = vunpack.c.l.b16 %v3180
  %v3347 = vunpack.c.h.b16 %v3180
  %v3348 = vunpack.c.l.b16 %v3181
  %v3349 = vunpack.c.h.b16 %v3181
  %v3350 = vunpack.c.l.b16 %v3182
  %v3351 = vunpack.c.h.b16 %v3182
  %v3352 = vunpack.c.l.b16 %v3183
  %v3353 = vunpack.c.h.b16 %v3183
  %v3354 = vunpack.c.l.b16 %v3184
  %v3355 = vunpack.c.h.b16 %v3184
  %v3356 = vunpack.c.l.b16 %v3185
  %v3357 = vunpack.c.h.b16 %v3185
  %v3358 = vunpack.c.l.b16 %v3186
  %v3359 = vunpack.c.h.b16 %v3186
  %v3360 = vunpack.c.l.b16 %v3187
  %v3361 = vunpack.c.h.b16 %v3187
  %v3362 = vunpack.c.l.b16 %v3188
  %v3363 = vunpack.c.h.b16 %v3188
  %v3364 = vunpack.c.l.b16 %v3189
  %v3365 = vunpack.c.h.b16 %v3189
  %v3366 = vunpack.c.l.b16 %v3190
  %v3367 = vunpack.c.h.b16 %v3190
  %v3368 = vunpack.c.l.b16 %v3191
  %v3369 = vunpack.c.h.b16 %v3191
  %v3370 = vunpack.c.l.b16 %v3192
  %v3371 = vunpack.c.h.b16 %v3192
  %v3372 = vunpack.c.l.b16 %v3193
  %v3373 = vunpack.c.h.b16 %v3193
  %v3374 = vunpack.c.l.b16 %v3194
  %v3375 = vunpack.c.h.b16 %v3194
  %v3376 = vunpack.c.l.b16 %v3195
  %v3377 = vunpack.c.h.b16 %v3195
  %v3378 = vunpack.c.l.b16 %v3196
  %v3379 = vunpack.c.h.b16 %v3196
  %v3380 = vunpack.c.l.b16 %v3197
  %v3381 = vunpack.c.h.b16 %v3197
  %v3382 = vunpack.c.l.b16 %v3198
  %v3383 = vunpack.c.h.b16 %v3198
  %v3384 = vunpack.c.l.b16 %v3199
  %v3385 = vunpack.c.h.b16 %v3199
  %v3386 = vunpack.c.l.b16 %v3200
  %v3387 = vunpack.c.h.b16 %v3200
  %v3388 = vunpack.c.l.b16 %v3201
  %v3389 = vunpack.c.h.b16 %v3201
  %v3390 = vunpack.c.l.b16 %v3202
  %v3391 = vunpack.c.h.b16 %v3202
  %v3392 = vunpack.c.l.b16 %v3203
  %v3393 = vunpack.c.h.b16 %v3203
  %v3394 = vunpack.c.l.b16 %v3204
  %v3395 = vunpack.c.h.b16 %v3204
  %v3396 = vunpack.c.l.b16 %v3205
  %v3397 = vunpack.c.h.b16 %v3205
  %v3398 = vpack.c.b16 %v3274, %v3270
  %v3399 = vpack.c.b16 %v3275, %v3271
  %v3400 = vpack.c.b16 %v3276, %v3272
  %v3401 = vpack.c.b16 %v3277, %v3273
  %v3402 = vpack.c.b16 %v3282, %v3278
  %v3403 = vpack.c.b16 %v3283, %v3279
  %v3404 = vpack.c.b16 %v3284, %v3280
  %v3405 = vpack.c.b16 %v3285, %v3281
  %v3406 = vpack.c.b16 %v3290, %v3286
  %v3407 = vpack.c.b16 %v3291, %v3287
  %v3408 = vpack.c.b16 %v3292, %v3288
  %v3409 = vpack.c.b16 %v3293, %v3289
  %v3410 = vpack.c.b16 %v3298, %v3294
  %v3411 = vpack.c.b16 %v3299, %v3295
  %v3412 = vpack.c.b16 %v3300, %v3296
  %v3413 = vpack.c.b16 %v3301, %v3297
  %v3414 = vpack.c.b16 %v3306, %v3302
  %v3415 = vpack.c.b16 %v3307, %v3303
  %v3416 = vpack.c.b16 %v3308, %v3304
  %v3417 = vpack.c.b16 %v3309, %v3305
  %v3418 = vpack.c.b16 %v3314, %v3310
  %v3419 = vpack.c.b16 %v3315, %v3311
  %v3420 = vpack.c.b16 %v3316, %v3312
  %v3421 = vpack.c.b16 %v3317, %v3313
  %v3422 = vpack.c.b16 %v3322, %v3318
  %v3423 = vpack.c.b16 %v3323, %v3319
  %v3424 = vpack.c.b16 %v3324, %v3320
  %v3425 = vpack.c.b16 %v3325, %v3321
  %v3426 = vpack.c.b16 %v3330, %v3326
  %v3427 = vpack.c.b16 %v3331, %v3327
  %v3428 = vpack.c.b16 %v3332, %v3328
  %v3429 = vpack.c.b16 %v3333, %v3329
  %v3430 = vpack.c.b16 %v3338, %v3334
  %v3431 = vpack.c.b16 %v3339, %v3335
  %v3432 = vpack.c.b16 %v3340, %v3336
  %v3433 = vpack.c.b16 %v3341, %v3337
  %v3434 = vpack.c.b16 %v3346, %v3342
  %v3435 = vpack.c.b16 %v3347, %v3343
  %v3436 = vpack.c.b16 %v3348, %v3344
  %v3437 = vpack.c.b16 %v3349, %v3345
  %v3438 = vpack.c.b16 %v3354, %v3350
  %v3439 = vpack.c.b16 %v3355, %v3351
  %v3440 = vpack.c.b16 %v3356, %v3352
  %v3441 = vpack.c.b16 %v3357, %v3353
  %v3442 = vpack.c.b16 %v3362, %v3358
  %v3443 = vpack.c.b16 %v3363, %v3359
  %v3444 = vpack.c.b16 %v3364, %v3360
  %v3445 = vpack.c.b16 %v3365, %v3361
  %v3446 = vpack.c.b16 %v3370, %v3366
  %v3447 = vpack.c.b16 %v3371, %v3367
  %v3448 = vpack.c.b16 %v3372, %v3368
  %v3449 = vpack.c.b16 %v3373, %v3369
  %v3450 = vpack.c.b16 %v3378, %v3374
  %v3451 = vpack.c.b16 %v3379, %v3375
  %v3452 = vpack.c.b16 %v3380, %v3376
  %v3453 = vpack.c.b16 %v3381, %v3377
  %v3454 = vpack.c.b16 %v3386, %v3382
  %v3455 = vpack.c.b16 %v3387, %v3383
  %v3456 = vpack.c.b16 %v3388, %v3384
  %v3457 = vpack.c.b16 %v3389, %v3385
  %v3458 = vpack.c.b16 %v3394, %v3390
  %v3459 = vpack.c.b16 %v3395, %v3391
  %v3460 = vpack.c.b16 %v3396, %v3392
  %v3461 = vpack.c.b16 %v3397, %v3393
  %3526 = vmatprep.subr.bf16.mxu0 %v3427
  %3527 = vmatpush1.bf16.msra.mxu0 %v3426
  %3528 = vmatprep.subr.bf16.mxu0 %v3423
  %3529 = vmatpush1.bf16.msra.mxu0 %v3422
  %3530 = vmatprep.subr.bf16.mxu0 %v3419
  %3531 = vmatpush1.bf16.msra.mxu0 %v3418
  %3532 = vmatprep.subr.bf16.mxu0 %v3415
  %3533 = vmatpush1.bf16.msra.mxu0 %v3414
  %3534 = vmatprep.subr.bf16.mxu0 %v3411
  %3535 = vmatpush1.bf16.msra.mxu0 %v3410
  %3536 = vmatprep.subr.bf16.mxu0 %v3407
  %3537 = vmatpush1.bf16.msra.mxu0 %v3406
  %3538 = vmatprep.subr.bf16.mxu0 %v3403
  %3539 = vmatpush1.bf16.msra.mxu0 %v3402
  %3540 = vmatprep.subr.bf16.mxu0 %v3399
  %3541 = vmatpush1.bf16.msra.mxu0 %v3398
  %3542 = vmatprep.subr.bf16.mxu0 %v3459
  %3543 = vmatpush2.bf16.msra.mxu0 %v3458
  %3544 = vmatprep.subr.bf16.mxu0 %v3455
  %3545 = vmatpush2.bf16.msra.mxu0 %v3454
  %3546 = vmatprep.subr.bf16.mxu0 %v3451
  %3547 = vmatpush2.bf16.msra.mxu0 %v3450
  %3548 = vmatprep.subr.bf16.mxu0 %v3447
  %3549 = vmatpush2.bf16.msra.mxu0 %v3446
  %3550 = vmatprep.subr.bf16.mxu0 %v3443
  %3551 = vmatpush2.bf16.msra.mxu0 %v3442
  %3552 = vmatprep.subr.bf16.mxu0 %v3439
  %3553 = vmatpush2.bf16.msra.mxu0 %v3438
  %3554 = vmatprep.subr.bf16.mxu0 %v3435
  %3555 = vmatpush2.bf16.msra.mxu0 %v3434
  %3556 = vmatprep.subr.bf16.mxu0 %v3431
  %3557 = vmatpush2.bf16.msra.mxu0 %v3430
  %3558 = vmatprep.mubr.bf16.mxu0 %v3141
  %3559 = vmatmul.mubr.bf16.gmra.mxu0 %v3140
  %v3560 = vpop.f32.mrf.mxu0
  %v3561 = vadd.f32 %v802, %v3560
  %v3562 = vpop.f32.mrf.mxu0
  %v3563 = vadd.f32 %v806, %v3562
  %v3564 = vpop.f32.mrf.mxu0
  %v3565 = vpop.f32.mrf.mxu0
  %3566 = vdwg.mxu0
  %3567 = vmatprep.subr.bf16.mxu0 %v3429
  %3568 = vmatpush1.bf16.msra.mxu0 %v3428
  %3569 = vmatprep.subr.bf16.mxu0 %v3425
  %3570 = vmatpush1.bf16.msra.mxu0 %v3424
  %3571 = vmatprep.subr.bf16.mxu0 %v3421
  %3572 = vmatpush1.bf16.msra.mxu0 %v3420
  %3573 = vmatprep.subr.bf16.mxu0 %v3417
  %3574 = vmatpush1.bf16.msra.mxu0 %v3416
  %3575 = vmatprep.subr.bf16.mxu0 %v3413
  %3576 = vmatpush1.bf16.msra.mxu0 %v3412
  %3577 = vmatprep.subr.bf16.mxu0 %v3409
  %3578 = vmatpush1.bf16.msra.mxu0 %v3408
  %3579 = vmatprep.subr.bf16.mxu0 %v3405
  %3580 = vmatpush1.bf16.msra.mxu0 %v3404
  %3581 = vmatprep.subr.bf16.mxu0 %v3401
  %3582 = vmatpush1.bf16.msra.mxu0 %v3400
  %3583 = vmatprep.subr.bf16.mxu0 %v3461
  %3584 = vmatpush2.bf16.msra.mxu0 %v3460
  %3585 = vmatprep.subr.bf16.mxu0 %v3457
  %3586 = vmatpush2.bf16.msra.mxu0 %v3456
  %3587 = vmatprep.subr.bf16.mxu0 %v3453
  %3588 = vmatpush2.bf16.msra.mxu0 %v3452
  %3589 = vmatprep.subr.bf16.mxu0 %v3449
  %3590 = vmatpush2.bf16.msra.mxu0 %v3448
  %3591 = vmatprep.subr.bf16.mxu0 %v3445
  %3592 = vmatpush2.bf16.msra.mxu0 %v3444
  %3593 = vmatprep.subr.bf16.mxu0 %v3441
  %3594 = vmatpush2.bf16.msra.mxu0 %v3440
  %3595 = vmatprep.subr.bf16.mxu0 %v3437
  %3596 = vmatpush2.bf16.msra.mxu0 %v3436
  %3597 = vmatprep.subr.bf16.mxu0 %v3433
  %3598 = vmatpush2.bf16.msra.mxu0 %v3432
  %3599 = vmatprep.mubr.bf16.mxu0 %v3141
  %3600 = vmatmul.mubr.bf16.gmra.mxu0 %v3140
  %v3601 = vpop.f32.mrf.mxu0
  %v3602 = vadd.f32 %v810, %v3601
  %v3603 = vpop.f32.mrf.mxu0
  %v3604 = vadd.f32 %v814, %v3603
  %v3605 = vpop.f32.mrf.mxu0
  %v3606 = vpop.f32.mrf.mxu0
  %3607 = vdwg.mxu0
  %v3608 = vxor.u32 %v3561, 2147483648
  %v3609 = vmul.f32 %v3608, 1.442695
  %v3610 = vpow.pop %v3609
  %v3611 = vadd.f32 %v3610, 1.0
  %v3612 = vrcp.pop %v3611
  %v3613 = vmul.f32 1.0, %v3612
  %v3614 = vxor.u32 %v3563, 2147483648
  %v3615 = vmul.f32 %v3614, 1.442695
  %v3616 = vpow.pop %v3615
  %v3617 = vadd.f32 %v3616, 1.0
  %v3618 = vrcp.pop %v3617
  %v3619 = vmul.f32 1.0, %v3618
  %v3620 = vtanh.pop %v3602
  %v3621 = vxor.u32 %v3604, 2147483648
  %v3622 = vmul.f32 %v3621, 1.442695
  %v3623 = vpow.pop %v3622
  %v3624 = vadd.f32 %v3623, 1.0
  %v3625 = vrcp.pop %v3624
  %v3626 = vmul.f32 1.0, %v3625
  %v3627 = vmul.f32 %v3619, %v2833
  %v3628 = vmul.f32 %v3613, %v3620
  %v3629 = vadd.f32 %v3627, %v3628
  %v3630 = vtanh.pop %v3629
  %v3631 = vmul.f32 %v3626, %v3630
  %s3632 = scalar_lea.vmem %s6, 24
  %3633 = vst [vmem:[%s3632] sm:$0xff] %v3631
  %v3634 = vld [vmem:[%s2] sm:$0xff]
  %v3635 = vld [vmem:[%s2 + $0x8] sm:$0xff]
  %v3636 = vld [vmem:[%s2 + $0x10] sm:$0xff]
  %v3637 = vld [vmem:[%s2 + $0x18] sm:$0xff]
  %v3638 = vld [vmem:[%s2 + $0x20] sm:$0xff]
  %v3639 = vld [vmem:[%s2 + $0x28] sm:$0xff]
  %v3640 = vld [vmem:[%s2 + $0x30] sm:$0xff]
  %v3641 = vld [vmem:[%s2 + $0x38] sm:$0xff]
  %v3642 = vld [vmem:[%s2 + $0x40] sm:$0xff]
  %v3643 = vld [vmem:[%s2 + $0x48] sm:$0xff]
  %v3644 = vld [vmem:[%s2 + $0x50] sm:$0xff]
  %v3645 = vld [vmem:[%s2 + $0x58] sm:$0xff]
  %v3646 = vld [vmem:[%s2 + $0x60] sm:$0xff]
  %v3647 = vld [vmem:[%s2 + $0x68] sm:$0xff]
  %v3648 = vld [vmem:[%s2 + $0x70] sm:$0xff]
  %v3649 = vld [vmem:[%s2 + $0x78] sm:$0xff]
  %v3650 = vld [vmem:[%s2 + $0x80] sm:$0xff]
  %v3651 = vld [vmem:[%s2 + $0x88] sm:$0xff]
  %v3652 = vld [vmem:[%s2 + $0x90] sm:$0xff]
  %v3653 = vld [vmem:[%s2 + $0x98] sm:$0xff]
  %v3654 = vld [vmem:[%s2 + $0xa0] sm:$0xff]
  %v3655 = vld [vmem:[%s2 + $0xa8] sm:$0xff]
  %v3656 = vld [vmem:[%s2 + $0xb0] sm:$0xff]
  %v3657 = vld [vmem:[%s2 + $0xb8] sm:$0xff]
  %v3658 = vld [vmem:[%s2 + $0xc0] sm:$0xff]
  %v3659 = vld [vmem:[%s2 + $0xc8] sm:$0xff]
  %v3660 = vld [vmem:[%s2 + $0xd0] sm:$0xff]
  %v3661 = vld [vmem:[%s2 + $0xd8] sm:$0xff]
  %v3662 = vld [vmem:[%s2 + $0xe0] sm:$0xff]
  %v3663 = vld [vmem:[%s2 + $0xe8] sm:$0xff]
  %v3664 = vld [vmem:[%s2 + $0xf0] sm:$0xff]
  %v3665 = vld [vmem:[%s2 + $0xf8] sm:$0xff]
  %v3698 = vunpack.c.l.b16 %v3634
  %v3699 = vunpack.c.h.b16 %v3634
  %v3700 = vunpack.c.l.b16 %v3635
  %v3701 = vunpack.c.h.b16 %v3635
  %v3702 = vunpack.c.l.b16 %v3636
  %v3703 = vunpack.c.h.b16 %v3636
  %v3704 = vunpack.c.l.b16 %v3637
  %v3705 = vunpack.c.h.b16 %v3637
  %v3706 = vunpack.c.l.b16 %v3638
  %v3707 = vunpack.c.h.b16 %v3638
  %v3708 = vunpack.c.l.b16 %v3639
  %v3709 = vunpack.c.h.b16 %v3639
  %v3710 = vunpack.c.l.b16 %v3640
  %v3711 = vunpack.c.h.b16 %v3640
  %v3712 = vunpack.c.l.b16 %v3641
  %v3713 = vunpack.c.h.b16 %v3641
  %v3714 = vunpack.c.l.b16 %v3642
  %v3715 = vunpack.c.h.b16 %v3642
  %v3716 = vunpack.c.l.b16 %v3643
  %v3717 = vunpack.c.h.b16 %v3643
  %v3718 = vunpack.c.l.b16 %v3644
  %v3719 = vunpack.c.h.b16 %v3644
  %v3720 = vunpack.c.l.b16 %v3645
  %v3721 = vunpack.c.h.b16 %v3645
  %v3722 = vunpack.c.l.b16 %v3646
  %v3723 = vunpack.c.h.b16 %v3646
  %v3724 = vunpack.c.l.b16 %v3647
  %v3725 = vunpack.c.h.b16 %v3647
  %v3726 = vunpack.c.l.b16 %v3648
  %v3727 = vunpack.c.h.b16 %v3648
  %v3728 = vunpack.c.l.b16 %v3649
  %v3729 = vunpack.c.h.b16 %v3649
  %v3730 = vunpack.c.l.b16 %v3650
  %v3731 = vunpack.c.h.b16 %v3650
  %v3732 = vunpack.c.l.b16 %v3651
  %v3733 = vunpack.c.h.b16 %v3651
  %v3734 = vunpack.c.l.b16 %v3652
  %v3735 = vunpack.c.h.b16 %v3652
  %v3736 = vunpack.c.l.b16 %v3653
  %v3737 = vunpack.c.h.b16 %v3653
  %v3738 = vunpack.c.l.b16 %v3654
  %v3739 = vunpack.c.h.b16 %v3654
  %v3740 = vunpack.c.l.b16 %v3655
  %v3741 = vunpack.c.h.b16 %v3655
  %v3742 = vunpack.c.l.b16 %v3656
  %v3743 = vunpack.c.h.b16 %v3656
  %v3744 = vunpack.c.l.b16 %v3657
  %v3745 = vunpack.c.h.b16 %v3657
  %v3746 = vunpack.c.l.b16 %v3658
  %v3747 = vunpack.c.h.b16 %v3658
  %v3748 = vunpack.c.l.b16 %v3659
  %v3749 = vunpack.c.h.b16 %v3659
  %v3750 = vunpack.c.l.b16 %v3660
  %v3751 = vunpack.c.h.b16 %v3660
  %v3752 = vunpack.c.l.b16 %v3661
  %v3753 = vunpack.c.h.b16 %v3661
  %v3754 = vunpack.c.l.b16 %v3662
  %v3755 = vunpack.c.h.b16 %v3662
  %v3756 = vunpack.c.l.b16 %v3663
  %v3757 = vunpack.c.h.b16 %v3663
  %v3758 = vunpack.c.l.b16 %v3664
  %v3759 = vunpack.c.h.b16 %v3664
  %v3760 = vunpack.c.l.b16 %v3665
  %v3761 = vunpack.c.h.b16 %v3665
  %v3762 = vpack.c.b16 %v3702, %v3698
  %v3763 = vpack.c.b16 %v3703, %v3699
  %v3764 = vpack.c.b16 %v3704, %v3700
  %v3765 = vpack.c.b16 %v3705, %v3701
  %v3766 = vpack.c.b16 %v3710, %v3706
  %v3767 = vpack.c.b16 %v3711, %v3707
  %v3768 = vpack.c.b16 %v3712, %v3708
  %v3769 = vpack.c.b16 %v3713, %v3709
  %v3770 = vpack.c.b16 %v3718, %v3714
  %v3771 = vpack.c.b16 %v3719, %v3715
  %v3772 = vpack.c.b16 %v3720, %v3716
  %v3773 = vpack.c.b16 %v3721, %v3717
  %v3774 = vpack.c.b16 %v3726, %v3722
  %v3775 = vpack.c.b16 %v3727, %v3723
  %v3776 = vpack.c.b16 %v3728, %v3724
  %v3777 = vpack.c.b16 %v3729, %v3725
  %v3778 = vpack.c.b16 %v3734, %v3730
  %v3779 = vpack.c.b16 %v3735, %v3731
  %v3780 = vpack.c.b16 %v3736, %v3732
  %v3781 = vpack.c.b16 %v3737, %v3733
  %v3782 = vpack.c.b16 %v3742, %v3738
  %v3783 = vpack.c.b16 %v3743, %v3739
  %v3784 = vpack.c.b16 %v3744, %v3740
  %v3785 = vpack.c.b16 %v3745, %v3741
  %v3786 = vpack.c.b16 %v3750, %v3746
  %v3787 = vpack.c.b16 %v3751, %v3747
  %v3788 = vpack.c.b16 %v3752, %v3748
  %v3789 = vpack.c.b16 %v3753, %v3749
  %v3790 = vpack.c.b16 %v3758, %v3754
  %v3791 = vpack.c.b16 %v3759, %v3755
  %v3792 = vpack.c.b16 %v3760, %v3756
  %v3793 = vpack.c.b16 %v3761, %v3757
  %3826 = vmatprep.subr.bf16.mxu0 %v3791
  %3827 = vmatpush1.bf16.msra.mxu0 %v3790
  %3828 = vmatprep.subr.bf16.mxu0 %v3787
  %3829 = vmatpush1.bf16.msra.mxu0 %v3786
  %3830 = vmatprep.subr.bf16.mxu0 %v3783
  %3831 = vmatpush1.bf16.msra.mxu0 %v3782
  %3832 = vmatprep.subr.bf16.mxu0 %v3779
  %3833 = vmatpush1.bf16.msra.mxu0 %v3778
  %3834 = vmatprep.subr.bf16.mxu0 %v3775
  %3835 = vmatpush1.bf16.msra.mxu0 %v3774
  %3836 = vmatprep.subr.bf16.mxu0 %v3771
  %3837 = vmatpush1.bf16.msra.mxu0 %v3770
  %3838 = vmatprep.subr.bf16.mxu0 %v3767
  %3839 = vmatpush1.bf16.msra.mxu0 %v3766
  %3840 = vmatprep.subr.bf16.mxu0 %v3763
  %3841 = vmatpush1.bf16.msra.mxu0 %v3762
  %3842 = vmatprep.subr.bf16.mxu0 0
  %3843 = vmatpush2.bf16.msra.mxu0 0
  %3844 = vmatprep.subr.bf16.mxu0 0
  %3845 = vmatpush2.bf16.msra.mxu0 0
  %3846 = vmatprep.subr.bf16.mxu0 0
  %3847 = vmatpush2.bf16.msra.mxu0 0
  %3848 = vmatprep.subr.bf16.mxu0 0
  %3849 = vmatpush2.bf16.msra.mxu0 0
  %3850 = vmatprep.subr.bf16.mxu0 0
  %3851 = vmatpush2.bf16.msra.mxu0 0
  %3852 = vmatprep.subr.bf16.mxu0 0
  %3853 = vmatpush2.bf16.msra.mxu0 0
  %3854 = vmatprep.subr.bf16.mxu0 0
  %3855 = vmatpush2.bf16.msra.mxu0 0
  %3856 = vmatprep.subr.bf16.mxu0 0
  %3857 = vmatpush2.bf16.msra.mxu0 0
  %3858 = vmatprep.mubr.bf16.mxu0 0
  %3859 = vmatmul.mubr.bf16.gmra.mxu0 %v3140
  %v3860 = vpop.f32.mrf.mxu0
  %v3861 = vadd.f32 0.0, %v3860
  %v3862 = vpop.f32.mrf.mxu0
  %v3863 = vadd.f32 0.0, %v3862
  %v3864 = vpop.f32.mrf.mxu0
  %v3865 = vpop.f32.mrf.mxu0
  %3866 = vdwg.mxu0
  %3867 = vmatprep.subr.bf16.mxu0 %v3793
  %3868 = vmatpush1.bf16.msra.mxu0 %v3792
  %3869 = vmatprep.subr.bf16.mxu0 %v3789
  %3870 = vmatpush1.bf16.msra.mxu0 %v3788
  %3871 = vmatprep.subr.bf16.mxu0 %v3785
  %3872 = vmatpush1.bf16.msra.mxu0 %v3784
  %3873 = vmatprep.subr.bf16.mxu0 %v3781
  %3874 = vmatpush1.bf16.msra.mxu0 %v3780
  %3875 = vmatprep.subr.bf16.mxu0 %v3777
  %3876 = vmatpush1.bf16.msra.mxu0 %v3776
  %3877 = vmatprep.subr.bf16.mxu0 %v3773
  %3878 = vmatpush1.bf16.msra.mxu0 %v3772
  %3879 = vmatprep.subr.bf16.mxu0 %v3769
  %3880 = vmatpush1.bf16.msra.mxu0 %v3768
  %3881 = vmatprep.subr.bf16.mxu0 %v3765
  %3882 = vmatpush1.bf16.msra.mxu0 %v3764
  %3883 = vmatprep.subr.bf16.mxu0 0
  %3884 = vmatpush2.bf16.msra.mxu0 0
  %3885 = vmatprep.subr.bf16.mxu0 0
  %3886 = vmatpush2.bf16.msra.mxu0 0
  %3887 = vmatprep.subr.bf16.mxu0 0
  %3888 = vmatpush2.bf16.msra.mxu0 0
  %3889 = vmatprep.subr.bf16.mxu0 0
  %3890 = vmatpush2.bf16.msra.mxu0 0
  %3891 = vmatprep.subr.bf16.mxu0 0
  %3892 = vmatpush2.bf16.msra.mxu0 0
  %3893 = vmatprep.subr.bf16.mxu0 0
  %3894 = vmatpush2.bf16.msra.mxu0 0
  %3895 = vmatprep.subr.bf16.mxu0 0
  %3896 = vmatpush2.bf16.msra.mxu0 0
  %3897 = vmatprep.subr.bf16.mxu0 0
  %3898 = vmatpush2.bf16.msra.mxu0 0
  %3899 = vmatprep.mubr.bf16.mxu0 0
  %3900 = vmatmul.mubr.bf16.gmra.mxu0 %v3140
  %v3901 = vpop.f32.mrf.mxu0
  %v3902 = vadd.f32 0.0, %v3901
  %v3903 = vpop.f32.mrf.mxu0
  %v3904 = vadd.f32 0.0, %v3903
  %v3905 = vpop.f32.mrf.mxu0
  %v3906 = vpop.f32.mrf.mxu0
  %3907 = vdwg.mxu0
  %v3908 = vadd.f32 %v333, %v3861
  %v3909 = vadd.f32 %v335, %v3863
  %v3910 = vadd.f32 %v406, %v3902
  %v3911 = vadd.f32 %v408, %v3904
  %v3912 = vxor.u32 %v3908, 2147483648
  %v3913 = vmul.f32 %v3912, 1.442695
  %v3914 = vpow.pop %v3913
  %v3915 = vadd.f32 %v3914, 1.0
  %v3916 = vrcp.pop %v3915
  %v3917 = vmul.f32 1.0, %v3916
  %v3918 = vxor.u32 %v3909, 2147483648
  %v3919 = vmul.f32 %v3918, 1.442695
  %v3920 = vpow.pop %v3919
  %v3921 = vadd.f32 %v3920, 1.0
  %v3922 = vrcp.pop %v3921
  %v3923 = vmul.f32 1.0, %v3922
  %v3924 = vtanh.pop %v3910
  %v3925 = vxor.u32 %v3911, 2147483648
  %v3926 = vmul.f32 %v3925, 1.442695
  %v3927 = vpow.pop %v3926
  %v3928 = vadd.f32 %v3927, 1.0
  %v3929 = vrcp.pop %v3928
  %v3930 = vmul.f32 1.0, %v3929
  %v3931 = vmul.f32 %v3923, %v3137
  %v3932 = vmul.f32 %v3917, %v3924
  %v3933 = vadd.f32 %v3931, %v3932
  %v3934 = vtanh.pop %v3933
  %v3935 = vmul.f32 %v3930, %v3934
  %v3936 = vpack.c.bf16 %v3935, %v3935
  %v3937 = vpack.c.bf16 %v3631, %v3631
  %v3938 = vld [vmem:[%s4] sm:$0xff]
  %v3939 = vld [vmem:[%s4 + $0x8] sm:$0xff]
  %v3940 = vld [vmem:[%s4 + $0x10] sm:$0xff]
  %v3941 = vld [vmem:[%s4 + $0x18] sm:$0xff]
  %v3942 = vld [vmem:[%s4 + $0x20] sm:$0xff]
  %v3943 = vld [vmem:[%s4 + $0x28] sm:$0xff]
  %v3944 = vld [vmem:[%s4 + $0x30] sm:$0xff]
  %v3945 = vld [vmem:[%s4 + $0x38] sm:$0xff]
  %v3946 = vld [vmem:[%s4 + $0x40] sm:$0xff]
  %v3947 = vld [vmem:[%s4 + $0x48] sm:$0xff]
  %v3948 = vld [vmem:[%s4 + $0x50] sm:$0xff]
  %v3949 = vld [vmem:[%s4 + $0x58] sm:$0xff]
  %v3950 = vld [vmem:[%s4 + $0x60] sm:$0xff]
  %v3951 = vld [vmem:[%s4 + $0x68] sm:$0xff]
  %v3952 = vld [vmem:[%s4 + $0x70] sm:$0xff]
  %v3953 = vld [vmem:[%s4 + $0x78] sm:$0xff]
  %v3954 = vld [vmem:[%s4 + $0x80] sm:$0xff]
  %v3955 = vld [vmem:[%s4 + $0x88] sm:$0xff]
  %v3956 = vld [vmem:[%s4 + $0x90] sm:$0xff]
  %v3957 = vld [vmem:[%s4 + $0x98] sm:$0xff]
  %v3958 = vld [vmem:[%s4 + $0xa0] sm:$0xff]
  %v3959 = vld [vmem:[%s4 + $0xa8] sm:$0xff]
  %v3960 = vld [vmem:[%s4 + $0xb0] sm:$0xff]
  %v3961 = vld [vmem:[%s4 + $0xb8] sm:$0xff]
  %v3962 = vld [vmem:[%s4 + $0xc0] sm:$0xff]
  %v3963 = vld [vmem:[%s4 + $0xc8] sm:$0xff]
  %v3964 = vld [vmem:[%s4 + $0xd0] sm:$0xff]
  %v3965 = vld [vmem:[%s4 + $0xd8] sm:$0xff]
  %v3966 = vld [vmem:[%s4 + $0xe0] sm:$0xff]
  %v3967 = vld [vmem:[%s4 + $0xe8] sm:$0xff]
  %v3968 = vld [vmem:[%s4 + $0xf0] sm:$0xff]
  %v3969 = vld [vmem:[%s4 + $0xf8] sm:$0xff]
  %v3970 = vld [vmem:[%s4 + $0x100] sm:$0xff]
  %v3971 = vld [vmem:[%s4 + $0x108] sm:$0xff]
  %v3972 = vld [vmem:[%s4 + $0x110] sm:$0xff]
  %v3973 = vld [vmem:[%s4 + $0x118] sm:$0xff]
  %v3974 = vld [vmem:[%s4 + $0x120] sm:$0xff]
  %v3975 = vld [vmem:[%s4 + $0x128] sm:$0xff]
  %v3976 = vld [vmem:[%s4 + $0x130] sm:$0xff]
  %v3977 = vld [vmem:[%s4 + $0x138] sm:$0xff]
  %v3978 = vld [vmem:[%s4 + $0x140] sm:$0xff]
  %v3979 = vld [vmem:[%s4 + $0x148] sm:$0xff]
  %v3980 = vld [vmem:[%s4 + $0x150] sm:$0xff]
  %v3981 = vld [vmem:[%s4 + $0x158] sm:$0xff]
  %v3982 = vld [vmem:[%s4 + $0x160] sm:$0xff]
  %v3983 = vld [vmem:[%s4 + $0x168] sm:$0xff]
  %v3984 = vld [vmem:[%s4 + $0x170] sm:$0xff]
  %v3985 = vld [vmem:[%s4 + $0x178] sm:$0xff]
  %v3986 = vld [vmem:[%s4 + $0x180] sm:$0xff]
  %v3987 = vld [vmem:[%s4 + $0x188] sm:$0xff]
  %v3988 = vld [vmem:[%s4 + $0x190] sm:$0xff]
  %v3989 = vld [vmem:[%s4 + $0x198] sm:$0xff]
  %v3990 = vld [vmem:[%s4 + $0x1a0] sm:$0xff]
  %v3991 = vld [vmem:[%s4 + $0x1a8] sm:$0xff]
  %v3992 = vld [vmem:[%s4 + $0x1b0] sm:$0xff]
  %v3993 = vld [vmem:[%s4 + $0x1b8] sm:$0xff]
  %v3994 = vld [vmem:[%s4 + $0x1c0] sm:$0xff]
  %v3995 = vld [vmem:[%s4 + $0x1c8] sm:$0xff]
  %v3996 = vld [vmem:[%s4 + $0x1d0] sm:$0xff]
  %v3997 = vld [vmem:[%s4 + $0x1d8] sm:$0xff]
  %v3998 = vld [vmem:[%s4 + $0x1e0] sm:$0xff]
  %v3999 = vld [vmem:[%s4 + $0x1e8] sm:$0xff]
  %v4000 = vld [vmem:[%s4 + $0x1f0] sm:$0xff]
  %v4001 = vld [vmem:[%s4 + $0x1f8] sm:$0xff]
  %v4066 = vunpack.c.l.b16 %v3938
  %v4067 = vunpack.c.h.b16 %v3938
  %v4068 = vunpack.c.l.b16 %v3939
  %v4069 = vunpack.c.h.b16 %v3939
  %v4070 = vunpack.c.l.b16 %v3940
  %v4071 = vunpack.c.h.b16 %v3940
  %v4072 = vunpack.c.l.b16 %v3941
  %v4073 = vunpack.c.h.b16 %v3941
  %v4074 = vunpack.c.l.b16 %v3942
  %v4075 = vunpack.c.h.b16 %v3942
  %v4076 = vunpack.c.l.b16 %v3943
  %v4077 = vunpack.c.h.b16 %v3943
  %v4078 = vunpack.c.l.b16 %v3944
  %v4079 = vunpack.c.h.b16 %v3944
  %v4080 = vunpack.c.l.b16 %v3945
  %v4081 = vunpack.c.h.b16 %v3945
  %v4082 = vunpack.c.l.b16 %v3946
  %v4083 = vunpack.c.h.b16 %v3946
  %v4084 = vunpack.c.l.b16 %v3947
  %v4085 = vunpack.c.h.b16 %v3947
  %v4086 = vunpack.c.l.b16 %v3948
  %v4087 = vunpack.c.h.b16 %v3948
  %v4088 = vunpack.c.l.b16 %v3949
  %v4089 = vunpack.c.h.b16 %v3949
  %v4090 = vunpack.c.l.b16 %v3950
  %v4091 = vunpack.c.h.b16 %v3950
  %v4092 = vunpack.c.l.b16 %v3951
  %v4093 = vunpack.c.h.b16 %v3951
  %v4094 = vunpack.c.l.b16 %v3952
  %v4095 = vunpack.c.h.b16 %v3952
  %v4096 = vunpack.c.l.b16 %v3953
  %v4097 = vunpack.c.h.b16 %v3953
  %v4098 = vunpack.c.l.b16 %v3954
  %v4099 = vunpack.c.h.b16 %v3954
  %v4100 = vunpack.c.l.b16 %v3955
  %v4101 = vunpack.c.h.b16 %v3955
  %v4102 = vunpack.c.l.b16 %v3956
  %v4103 = vunpack.c.h.b16 %v3956
  %v4104 = vunpack.c.l.b16 %v3957
  %v4105 = vunpack.c.h.b16 %v3957
  %v4106 = vunpack.c.l.b16 %v3958
  %v4107 = vunpack.c.h.b16 %v3958
  %v4108 = vunpack.c.l.b16 %v3959
  %v4109 = vunpack.c.h.b16 %v3959
  %v4110 = vunpack.c.l.b16 %v3960
  %v4111 = vunpack.c.h.b16 %v3960
  %v4112 = vunpack.c.l.b16 %v3961
  %v4113 = vunpack.c.h.b16 %v3961
  %v4114 = vunpack.c.l.b16 %v3962
  %v4115 = vunpack.c.h.b16 %v3962
  %v4116 = vunpack.c.l.b16 %v3963
  %v4117 = vunpack.c.h.b16 %v3963
  %v4118 = vunpack.c.l.b16 %v3964
  %v4119 = vunpack.c.h.b16 %v3964
  %v4120 = vunpack.c.l.b16 %v3965
  %v4121 = vunpack.c.h.b16 %v3965
  %v4122 = vunpack.c.l.b16 %v3966
  %v4123 = vunpack.c.h.b16 %v3966
  %v4124 = vunpack.c.l.b16 %v3967
  %v4125 = vunpack.c.h.b16 %v3967
  %v4126 = vunpack.c.l.b16 %v3968
  %v4127 = vunpack.c.h.b16 %v3968
  %v4128 = vunpack.c.l.b16 %v3969
  %v4129 = vunpack.c.h.b16 %v3969
  %v4130 = vunpack.c.l.b16 %v3970
  %v4131 = vunpack.c.h.b16 %v3970
  %v4132 = vunpack.c.l.b16 %v3971
  %v4133 = vunpack.c.h.b16 %v3971
  %v4134 = vunpack.c.l.b16 %v3972
  %v4135 = vunpack.c.h.b16 %v3972
  %v4136 = vunpack.c.l.b16 %v3973
  %v4137 = vunpack.c.h.b16 %v3973
  %v4138 = vunpack.c.l.b16 %v3974
  %v4139 = vunpack.c.h.b16 %v3974
  %v4140 = vunpack.c.l.b16 %v3975
  %v4141 = vunpack.c.h.b16 %v3975
  %v4142 = vunpack.c.l.b16 %v3976
  %v4143 = vunpack.c.h.b16 %v3976
  %v4144 = vunpack.c.l.b16 %v3977
  %v4145 = vunpack.c.h.b16 %v3977
  %v4146 = vunpack.c.l.b16 %v3978
  %v4147 = vunpack.c.h.b16 %v3978
  %v4148 = vunpack.c.l.b16 %v3979
  %v4149 = vunpack.c.h.b16 %v3979
  %v4150 = vunpack.c.l.b16 %v3980
  %v4151 = vunpack.c.h.b16 %v3980
  %v4152 = vunpack.c.l.b16 %v3981
  %v4153 = vunpack.c.h.b16 %v3981
  %v4154 = vunpack.c.l.b16 %v3982
  %v4155 = vunpack.c.h.b16 %v3982
  %v4156 = vunpack.c.l.b16 %v3983
  %v4157 = vunpack.c.h.b16 %v3983
  %v4158 = vunpack.c.l.b16 %v3984
  %v4159 = vunpack.c.h.b16 %v3984
  %v4160 = vunpack.c.l.b16 %v3985
  %v4161 = vunpack.c.h.b16 %v3985
  %v4162 = vunpack.c.l.b16 %v3986
  %v4163 = vunpack.c.h.b16 %v3986
  %v4164 = vunpack.c.l.b16 %v3987
  %v4165 = vunpack.c.h.b16 %v3987
  %v4166 = vunpack.c.l.b16 %v3988
  %v4167 = vunpack.c.h.b16 %v3988
  %v4168 = vunpack.c.l.b16 %v3989
  %v4169 = vunpack.c.h.b16 %v3989
  %v4170 = vunpack.c.l.b16 %v3990
  %v4171 = vunpack.c.h.b16 %v3990
  %v4172 = vunpack.c.l.b16 %v3991
  %v4173 = vunpack.c.h.b16 %v3991
  %v4174 = vunpack.c.l.b16 %v3992
  %v4175 = vunpack.c.h.b16 %v3992
  %v4176 = vunpack.c.l.b16 %v3993
  %v4177 = vunpack.c.h.b16 %v3993
  %v4178 = vunpack.c.l.b16 %v3994
  %v4179 = vunpack.c.h.b16 %v3994
  %v4180 = vunpack.c.l.b16 %v3995
  %v4181 = vunpack.c.h.b16 %v3995
  %v4182 = vunpack.c.l.b16 %v3996
  %v4183 = vunpack.c.h.b16 %v3996
  %v4184 = vunpack.c.l.b16 %v3997
  %v4185 = vunpack.c.h.b16 %v3997
  %v4186 = vunpack.c.l.b16 %v3998
  %v4187 = vunpack.c.h.b16 %v3998
  %v4188 = vunpack.c.l.b16 %v3999
  %v4189 = vunpack.c.h.b16 %v3999
  %v4190 = vunpack.c.l.b16 %v4000
  %v4191 = vunpack.c.h.b16 %v4000
  %v4192 = vunpack.c.l.b16 %v4001
  %v4193 = vunpack.c.h.b16 %v4001
  %v4194 = vpack.c.b16 %v4070, %v4066
  %v4195 = vpack.c.b16 %v4071, %v4067
  %v4196 = vpack.c.b16 %v4072, %v4068
  %v4197 = vpack.c.b16 %v4073, %v4069
  %v4198 = vpack.c.b16 %v4078, %v4074
  %v4199 = vpack.c.b16 %v4079, %v4075
  %v4200 = vpack.c.b16 %v4080, %v4076
  %v4201 = vpack.c.b16 %v4081, %v4077
  %v4202 = vpack.c.b16 %v4086, %v4082
  %v4203 = vpack.c.b16 %v4087, %v4083
  %v4204 = vpack.c.b16 %v4088, %v4084
  %v4205 = vpack.c.b16 %v4089, %v4085
  %v4206 = vpack.c.b16 %v4094, %v4090
  %v4207 = vpack.c.b16 %v4095, %v4091
  %v4208 = vpack.c.b16 %v4096, %v4092
  %v4209 = vpack.c.b16 %v4097, %v4093
  %v4210 = vpack.c.b16 %v4102, %v4098
  %v4211 = vpack.c.b16 %v4103, %v4099
  %v4212 = vpack.c.b16 %v4104, %v4100
  %v4213 = vpack.c.b16 %v4105, %v4101
  %v4214 = vpack.c.b16 %v4110, %v4106
  %v4215 = vpack.c.b16 %v4111, %v4107
  %v4216 = vpack.c.b16 %v4112, %v4108
  %v4217 = vpack.c.b16 %v4113, %v4109
  %v4218 = vpack.c.b16 %v4118, %v4114
  %v4219 = vpack.c.b16 %v4119, %v4115
  %v4220 = vpack.c.b16 %v4120, %v4116
  %v4221 = vpack.c.b16 %v4121, %v4117
  %v4222 = vpack.c.b16 %v4126, %v4122
  %v4223 = vpack.c.b16 %v4127, %v4123
  %v4224 = vpack.c.b16 %v4128, %v4124
  %v4225 = vpack.c.b16 %v4129, %v4125
  %v4226 = vpack.c.b16 %v4134, %v4130
  %v4227 = vpack.c.b16 %v4135, %v4131
  %v4228 = vpack.c.b16 %v4136, %v4132
  %v4229 = vpack.c.b16 %v4137, %v4133
  %v4230 = vpack.c.b16 %v4142, %v4138
  %v4231 = vpack.c.b16 %v4143, %v4139
  %v4232 = vpack.c.b16 %v4144, %v4140
  %v4233 = vpack.c.b16 %v4145, %v4141
  %v4234 = vpack.c.b16 %v4150, %v4146
  %v4235 = vpack.c.b16 %v4151, %v4147
  %v4236 = vpack.c.b16 %v4152, %v4148
  %v4237 = vpack.c.b16 %v4153, %v4149
  %v4238 = vpack.c.b16 %v4158, %v4154
  %v4239 = vpack.c.b16 %v4159, %v4155
  %v4240 = vpack.c.b16 %v4160, %v4156
  %v4241 = vpack.c.b16 %v4161, %v4157
  %v4242 = vpack.c.b16 %v4166, %v4162
  %v4243 = vpack.c.b16 %v4167, %v4163
  %v4244 = vpack.c.b16 %v4168, %v4164
  %v4245 = vpack.c.b16 %v4169, %v4165
  %v4246 = vpack.c.b16 %v4174, %v4170
  %v4247 = vpack.c.b16 %v4175, %v4171
  %v4248 = vpack.c.b16 %v4176, %v4172
  %v4249 = vpack.c.b16 %v4177, %v4173
  %v4250 = vpack.c.b16 %v4182, %v4178
  %v4251 = vpack.c.b16 %v4183, %v4179
  %v4252 = vpack.c.b16 %v4184, %v4180
  %v4253 = vpack.c.b16 %v4185, %v4181
  %v4254 = vpack.c.b16 %v4190, %v4186
  %v4255 = vpack.c.b16 %v4191, %v4187
  %v4256 = vpack.c.b16 %v4192, %v4188
  %v4257 = vpack.c.b16 %v4193, %v4189
  %4322 = vmatprep.subr.bf16.mxu0 %v4223
  %4323 = vmatpush1.bf16.msra.mxu0 %v4222
  %4324 = vmatprep.subr.bf16.mxu0 %v4219
  %4325 = vmatpush1.bf16.msra.mxu0 %v4218
  %4326 = vmatprep.subr.bf16.mxu0 %v4215
  %4327 = vmatpush1.bf16.msra.mxu0 %v4214
  %4328 = vmatprep.subr.bf16.mxu0 %v4211
  %4329 = vmatpush1.bf16.msra.mxu0 %v4210
  %4330 = vmatprep.subr.bf16.mxu0 %v4207
  %4331 = vmatpush1.bf16.msra.mxu0 %v4206
  %4332 = vmatprep.subr.bf16.mxu0 %v4203
  %4333 = vmatpush1.bf16.msra.mxu0 %v4202
  %4334 = vmatprep.subr.bf16.mxu0 %v4199
  %4335 = vmatpush1.bf16.msra.mxu0 %v4198
  %4336 = vmatprep.subr.bf16.mxu0 %v4195
  %4337 = vmatpush1.bf16.msra.mxu0 %v4194
  %4338 = vmatprep.subr.bf16.mxu0 %v4255
  %4339 = vmatpush2.bf16.msra.mxu0 %v4254
  %4340 = vmatprep.subr.bf16.mxu0 %v4251
  %4341 = vmatpush2.bf16.msra.mxu0 %v4250
  %4342 = vmatprep.subr.bf16.mxu0 %v4247
  %4343 = vmatpush2.bf16.msra.mxu0 %v4246
  %4344 = vmatprep.subr.bf16.mxu0 %v4243
  %4345 = vmatpush2.bf16.msra.mxu0 %v4242
  %4346 = vmatprep.subr.bf16.mxu0 %v4239
  %4347 = vmatpush2.bf16.msra.mxu0 %v4238
  %4348 = vmatprep.subr.bf16.mxu0 %v4235
  %4349 = vmatpush2.bf16.msra.mxu0 %v4234
  %4350 = vmatprep.subr.bf16.mxu0 %v4231
  %4351 = vmatpush2.bf16.msra.mxu0 %v4230
  %4352 = vmatprep.subr.bf16.mxu0 %v4227
  %4353 = vmatpush2.bf16.msra.mxu0 %v4226
  %4354 = vmatprep.mubr.bf16.mxu0 %v3937
  %4355 = vmatmul.mubr.bf16.gmra.mxu0 %v3936
  %v4356 = vpop.f32.mrf.mxu0
  %v4357 = vadd.f32 %v802, %v4356
  %v4358 = vpop.f32.mrf.mxu0
  %v4359 = vadd.f32 %v806, %v4358
  %v4360 = vpop.f32.mrf.mxu0
  %v4361 = vpop.f32.mrf.mxu0
  %4362 = vdwg.mxu0
  %4363 = vmatprep.subr.bf16.mxu0 %v4225
  %4364 = vmatpush1.bf16.msra.mxu0 %v4224
  %4365 = vmatprep.subr.bf16.mxu0 %v4221
  %4366 = vmatpush1.bf16.msra.mxu0 %v4220
  %4367 = vmatprep.subr.bf16.mxu0 %v4217
  %4368 = vmatpush1.bf16.msra.mxu0 %v4216
  %4369 = vmatprep.subr.bf16.mxu0 %v4213
  %4370 = vmatpush1.bf16.msra.mxu0 %v4212
  %4371 = vmatprep.subr.bf16.mxu0 %v4209
  %4372 = vmatpush1.bf16.msra.mxu0 %v4208
  %4373 = vmatprep.subr.bf16.mxu0 %v4205
  %4374 = vmatpush1.bf16.msra.mxu0 %v4204
  %4375 = vmatprep.subr.bf16.mxu0 %v4201
  %4376 = vmatpush1.bf16.msra.mxu0 %v4200
  %4377 = vmatprep.subr.bf16.mxu0 %v4197
  %4378 = vmatpush1.bf16.msra.mxu0 %v4196
  %4379 = vmatprep.subr.bf16.mxu0 %v4257
  %4380 = vmatpush2.bf16.msra.mxu0 %v4256
  %4381 = vmatprep.subr.bf16.mxu0 %v4253
  %4382 = vmatpush2.bf16.msra.mxu0 %v4252
  %4383 = vmatprep.subr.bf16.mxu0 %v4249
  %4384 = vmatpush2.bf16.msra.mxu0 %v4248
  %4385 = vmatprep.subr.bf16.mxu0 %v4245
  %4386 = vmatpush2.bf16.msra.mxu0 %v4244
  %4387 = vmatprep.subr.bf16.mxu0 %v4241
  %4388 = vmatpush2.bf16.msra.mxu0 %v4240
  %4389 = vmatprep.subr.bf16.mxu0 %v4237
  %4390 = vmatpush2.bf16.msra.mxu0 %v4236
  %4391 = vmatprep.subr.bf16.mxu0 %v4233
  %4392 = vmatpush2.bf16.msra.mxu0 %v4232
  %4393 = vmatprep.subr.bf16.mxu0 %v4229
  %4394 = vmatpush2.bf16.msra.mxu0 %v4228
  %4395 = vmatprep.mubr.bf16.mxu0 %v3937
  %4396 = vmatmul.mubr.bf16.gmra.mxu0 %v3936
  %v4397 = vpop.f32.mrf.mxu0
  %v4398 = vadd.f32 %v810, %v4397
  %v4399 = vpop.f32.mrf.mxu0
  %v4400 = vadd.f32 %v814, %v4399
  %v4401 = vpop.f32.mrf.mxu0
  %v4402 = vpop.f32.mrf.mxu0
  %4403 = vdwg.mxu0
  %v4404 = vxor.u32 %v4357, 2147483648
  %v4405 = vmul.f32 %v4404, 1.442695
  %v4406 = vpow.pop %v4405
  %v4407 = vadd.f32 %v4406, 1.0
  %v4408 = vrcp.pop %v4407
  %v4409 = vmul.f32 1.0, %v4408
  %v4410 = vxor.u32 %v4359, 2147483648
  %v4411 = vmul.f32 %v4410, 1.442695
  %v4412 = vpow.pop %v4411
  %v4413 = vadd.f32 %v4412, 1.0
  %v4414 = vrcp.pop %v4413
  %v4415 = vmul.f32 1.0, %v4414
  %v4416 = vtanh.pop %v4398
  %v4417 = vxor.u32 %v4400, 2147483648
  %v4418 = vmul.f32 %v4417, 1.442695
  %v4419 = vpow.pop %v4418
  %v4420 = vadd.f32 %v4419, 1.0
  %v4421 = vrcp.pop %v4420
  %v4422 = vmul.f32 1.0, %v4421
  %v4423 = vmul.f32 %v4415, %v3629
  %v4424 = vmul.f32 %v4409, %v4416
  %v4425 = vadd.f32 %v4423, %v4424
  %v4426 = vtanh.pop %v4425
  %v4427 = vmul.f32 %v4422, %v4426
  %s4428 = scalar_lea.vmem %s6, 32
  %4429 = vst [vmem:[%s4428] sm:$0xff] %v4427
  %v4430 = vld [vmem:[%s2] sm:$0xff]
  %v4431 = vld [vmem:[%s2 + $0x8] sm:$0xff]
  %v4432 = vld [vmem:[%s2 + $0x10] sm:$0xff]
  %v4433 = vld [vmem:[%s2 + $0x18] sm:$0xff]
  %v4434 = vld [vmem:[%s2 + $0x20] sm:$0xff]
  %v4435 = vld [vmem:[%s2 + $0x28] sm:$0xff]
  %v4436 = vld [vmem:[%s2 + $0x30] sm:$0xff]
  %v4437 = vld [vmem:[%s2 + $0x38] sm:$0xff]
  %v4438 = vld [vmem:[%s2 + $0x40] sm:$0xff]
  %v4439 = vld [vmem:[%s2 + $0x48] sm:$0xff]
  %v4440 = vld [vmem:[%s2 + $0x50] sm:$0xff]
  %v4441 = vld [vmem:[%s2 + $0x58] sm:$0xff]
  %v4442 = vld [vmem:[%s2 + $0x60] sm:$0xff]
  %v4443 = vld [vmem:[%s2 + $0x68] sm:$0xff]
  %v4444 = vld [vmem:[%s2 + $0x70] sm:$0xff]
  %v4445 = vld [vmem:[%s2 + $0x78] sm:$0xff]
  %v4446 = vld [vmem:[%s2 + $0x80] sm:$0xff]
  %v4447 = vld [vmem:[%s2 + $0x88] sm:$0xff]
  %v4448 = vld [vmem:[%s2 + $0x90] sm:$0xff]
  %v4449 = vld [vmem:[%s2 + $0x98] sm:$0xff]
  %v4450 = vld [vmem:[%s2 + $0xa0] sm:$0xff]
  %v4451 = vld [vmem:[%s2 + $0xa8] sm:$0xff]
  %v4452 = vld [vmem:[%s2 + $0xb0] sm:$0xff]
  %v4453 = vld [vmem:[%s2 + $0xb8] sm:$0xff]
  %v4454 = vld [vmem:[%s2 + $0xc0] sm:$0xff]
  %v4455 = vld [vmem:[%s2 + $0xc8] sm:$0xff]
  %v4456 = vld [vmem:[%s2 + $0xd0] sm:$0xff]
  %v4457 = vld [vmem:[%s2 + $0xd8] sm:$0xff]
  %v4458 = vld [vmem:[%s2 + $0xe0] sm:$0xff]
  %v4459 = vld [vmem:[%s2 + $0xe8] sm:$0xff]
  %v4460 = vld [vmem:[%s2 + $0xf0] sm:$0xff]
  %v4461 = vld [vmem:[%s2 + $0xf8] sm:$0xff]
  %v4494 = vunpack.c.l.b16 %v4430
  %v4495 = vunpack.c.h.b16 %v4430
  %v4496 = vunpack.c.l.b16 %v4431
  %v4497 = vunpack.c.h.b16 %v4431
  %v4498 = vunpack.c.l.b16 %v4432
  %v4499 = vunpack.c.h.b16 %v4432
  %v4500 = vunpack.c.l.b16 %v4433
  %v4501 = vunpack.c.h.b16 %v4433
  %v4502 = vunpack.c.l.b16 %v4434
  %v4503 = vunpack.c.h.b16 %v4434
  %v4504 = vunpack.c.l.b16 %v4435
  %v4505 = vunpack.c.h.b16 %v4435
  %v4506 = vunpack.c.l.b16 %v4436
  %v4507 = vunpack.c.h.b16 %v4436
  %v4508 = vunpack.c.l.b16 %v4437
  %v4509 = vunpack.c.h.b16 %v4437
  %v4510 = vunpack.c.l.b16 %v4438
  %v4511 = vunpack.c.h.b16 %v4438
  %v4512 = vunpack.c.l.b16 %v4439
  %v4513 = vunpack.c.h.b16 %v4439
  %v4514 = vunpack.c.l.b16 %v4440
  %v4515 = vunpack.c.h.b16 %v4440
  %v4516 = vunpack.c.l.b16 %v4441
  %v4517 = vunpack.c.h.b16 %v4441
  %v4518 = vunpack.c.l.b16 %v4442
  %v4519 = vunpack.c.h.b16 %v4442
  %v4520 = vunpack.c.l.b16 %v4443
  %v4521 = vunpack.c.h.b16 %v4443
  %v4522 = vunpack.c.l.b16 %v4444
  %v4523 = vunpack.c.h.b16 %v4444
  %v4524 = vunpack.c.l.b16 %v4445
  %v4525 = vunpack.c.h.b16 %v4445
  %v4526 = vunpack.c.l.b16 %v4446
  %v4527 = vunpack.c.h.b16 %v4446
  %v4528 = vunpack.c.l.b16 %v4447
  %v4529 = vunpack.c.h.b16 %v4447
  %v4530 = vunpack.c.l.b16 %v4448
  %v4531 = vunpack.c.h.b16 %v4448
  %v4532 = vunpack.c.l.b16 %v4449
  %v4533 = vunpack.c.h.b16 %v4449
  %v4534 = vunpack.c.l.b16 %v4450
  %v4535 = vunpack.c.h.b16 %v4450
  %v4536 = vunpack.c.l.b16 %v4451
  %v4537 = vunpack.c.h.b16 %v4451
  %v4538 = vunpack.c.l.b16 %v4452
  %v4539 = vunpack.c.h.b16 %v4452
  %v4540 = vunpack.c.l.b16 %v4453
  %v4541 = vunpack.c.h.b16 %v4453
  %v4542 = vunpack.c.l.b16 %v4454
  %v4543 = vunpack.c.h.b16 %v4454
  %v4544 = vunpack.c.l.b16 %v4455
  %v4545 = vunpack.c.h.b16 %v4455
  %v4546 = vunpack.c.l.b16 %v4456
  %v4547 = vunpack.c.h.b16 %v4456
  %v4548 = vunpack.c.l.b16 %v4457
  %v4549 = vunpack.c.h.b16 %v4457
  %v4550 = vunpack.c.l.b16 %v4458
  %v4551 = vunpack.c.h.b16 %v4458
  %v4552 = vunpack.c.l.b16 %v4459
  %v4553 = vunpack.c.h.b16 %v4459
  %v4554 = vunpack.c.l.b16 %v4460
  %v4555 = vunpack.c.h.b16 %v4460
  %v4556 = vunpack.c.l.b16 %v4461
  %v4557 = vunpack.c.h.b16 %v4461
  %v4558 = vpack.c.b16 %v4498, %v4494
  %v4559 = vpack.c.b16 %v4499, %v4495
  %v4560 = vpack.c.b16 %v4500, %v4496
  %v4561 = vpack.c.b16 %v4501, %v4497
  %v4562 = vpack.c.b16 %v4506, %v4502
  %v4563 = vpack.c.b16 %v4507, %v4503
  %v4564 = vpack.c.b16 %v4508, %v4504
  %v4565 = vpack.c.b16 %v4509, %v4505
  %v4566 = vpack.c.b16 %v4514, %v4510
  %v4567 = vpack.c.b16 %v4515, %v4511
  %v4568 = vpack.c.b16 %v4516, %v4512
  %v4569 = vpack.c.b16 %v4517, %v4513
  %v4570 = vpack.c.b16 %v4522, %v4518
  %v4571 = vpack.c.b16 %v4523, %v4519
  %v4572 = vpack.c.b16 %v4524, %v4520
  %v4573 = vpack.c.b16 %v4525, %v4521
  %v4574 = vpack.c.b16 %v4530, %v4526
  %v4575 = vpack.c.b16 %v4531, %v4527
  %v4576 = vpack.c.b16 %v4532, %v4528
  %v4577 = vpack.c.b16 %v4533, %v4529
  %v4578 = vpack.c.b16 %v4538, %v4534
  %v4579 = vpack.c.b16 %v4539, %v4535
  %v4580 = vpack.c.b16 %v4540, %v4536
  %v4581 = vpack.c.b16 %v4541, %v4537
  %v4582 = vpack.c.b16 %v4546, %v4542
  %v4583 = vpack.c.b16 %v4547, %v4543
  %v4584 = vpack.c.b16 %v4548, %v4544
  %v4585 = vpack.c.b16 %v4549, %v4545
  %v4586 = vpack.c.b16 %v4554, %v4550
  %v4587 = vpack.c.b16 %v4555, %v4551
  %v4588 = vpack.c.b16 %v4556, %v4552
  %v4589 = vpack.c.b16 %v4557, %v4553
  %4622 = vmatprep.subr.bf16.mxu0 %v4587
  %4623 = vmatpush1.bf16.msra.mxu0 %v4586
  %4624 = vmatprep.subr.bf16.mxu0 %v4583
  %4625 = vmatpush1.bf16.msra.mxu0 %v4582
  %4626 = vmatprep.subr.bf16.mxu0 %v4579
  %4627 = vmatpush1.bf16.msra.mxu0 %v4578
  %4628 = vmatprep.subr.bf16.mxu0 %v4575
  %4629 = vmatpush1.bf16.msra.mxu0 %v4574
  %4630 = vmatprep.subr.bf16.mxu0 %v4571
  %4631 = vmatpush1.bf16.msra.mxu0 %v4570
  %4632 = vmatprep.subr.bf16.mxu0 %v4567
  %4633 = vmatpush1.bf16.msra.mxu0 %v4566
  %4634 = vmatprep.subr.bf16.mxu0 %v4563
  %4635 = vmatpush1.bf16.msra.mxu0 %v4562
  %4636 = vmatprep.subr.bf16.mxu0 %v4559
  %4637 = vmatpush1.bf16.msra.mxu0 %v4558
  %4638 = vmatprep.subr.bf16.mxu0 0
  %4639 = vmatpush2.bf16.msra.mxu0 0
  %4640 = vmatprep.subr.bf16.mxu0 0
  %4641 = vmatpush2.bf16.msra.mxu0 0
  %4642 = vmatprep.subr.bf16.mxu0 0
  %4643 = vmatpush2.bf16.msra.mxu0 0
  %4644 = vmatprep.subr.bf16.mxu0 0
  %4645 = vmatpush2.bf16.msra.mxu0 0
  %4646 = vmatprep.subr.bf16.mxu0 0
  %4647 = vmatpush2.bf16.msra.mxu0 0
  %4648 = vmatprep.subr.bf16.mxu0 0
  %4649 = vmatpush2.bf16.msra.mxu0 0
  %4650 = vmatprep.subr.bf16.mxu0 0
  %4651 = vmatpush2.bf16.msra.mxu0 0
  %4652 = vmatprep.subr.bf16.mxu0 0
  %4653 = vmatpush2.bf16.msra.mxu0 0
  %4654 = vmatprep.mubr.bf16.mxu0 0
  %4655 = vmatmul.mubr.bf16.gmra.mxu0 %v3936
  %v4656 = vpop.f32.mrf.mxu0
  %v4657 = vadd.f32 0.0, %v4656
  %v4658 = vpop.f32.mrf.mxu0
  %v4659 = vadd.f32 0.0, %v4658
  %v4660 = vpop.f32.mrf.mxu0
  %v4661 = vpop.f32.mrf.mxu0
  %4662 = vdwg.mxu0
  %4663 = vmatprep.subr.bf16.mxu0 %v4589
  %4664 = vmatpush1.bf16.msra.mxu0 %v4588
  %4665 = vmatprep.subr.bf16.mxu0 %v4585
  %4666 = vmatpush1.bf16.msra.mxu0 %v4584
  %4667 = vmatprep.subr.bf16.mxu0 %v4581
  %4668 = vmatpush1.bf16.msra.mxu0 %v4580
  %4669 = vmatprep.subr.bf16.mxu0 %v4577
  %4670 = vmatpush1.bf16.msra.mxu0 %v4576
  %4671 = vmatprep.subr.bf16.mxu0 %v4573
  %4672 = vmatpush1.bf16.msra.mxu0 %v4572
  %4673 = vmatprep.subr.bf16.mxu0 %v4569
  %4674 = vmatpush1.bf16.msra.mxu0 %v4568
  %4675 = vmatprep.subr.bf16.mxu0 %v4565
  %4676 = vmatpush1.bf16.msra.mxu0 %v4564
  %4677 = vmatprep.subr.bf16.mxu0 %v4561
  %4678 = vmatpush1.bf16.msra.mxu0 %v4560
  %4679 = vmatprep.subr.bf16.mxu0 0
  %4680 = vmatpush2.bf16.msra.mxu0 0
  %4681 = vmatprep.subr.bf16.mxu0 0
  %4682 = vmatpush2.bf16.msra.mxu0 0
  %4683 = vmatprep.subr.bf16.mxu0 0
  %4684 = vmatpush2.bf16.msra.mxu0 0
  %4685 = vmatprep.subr.bf16.mxu0 0
  %4686 = vmatpush2.bf16.msra.mxu0 0
  %4687 = vmatprep.subr.bf16.mxu0 0
  %4688 = vmatpush2.bf16.msra.mxu0 0
  %4689 = vmatprep.subr.bf16.mxu0 0
  %4690 = vmatpush2.bf16.msra.mxu0 0
  %4691 = vmatprep.subr.bf16.mxu0 0
  %4692 = vmatpush2.bf16.msra.mxu0 0
  %4693 = vmatprep.subr.bf16.mxu0 0
  %4694 = vmatpush2.bf16.msra.mxu0 0
  %4695 = vmatprep.mubr.bf16.mxu0 0
  %4696 = vmatmul.mubr.bf16.gmra.mxu0 %v3936
  %v4697 = vpop.f32.mrf.mxu0
  %v4698 = vadd.f32 0.0, %v4697
  %v4699 = vpop.f32.mrf.mxu0
  %v4700 = vadd.f32 0.0, %v4699
  %v4701 = vpop.f32.mrf.mxu0
  %v4702 = vpop.f32.mrf.mxu0
  %4703 = vdwg.mxu0
  %v4704 = vadd.f32 %v337, %v4657
  %v4705 = vadd.f32 %v339, %v4659
  %v4706 = vadd.f32 %v410, %v4698
  %v4707 = vadd.f32 %v412, %v4700
  %v4708 = vxor.u32 %v4704, 2147483648
  %v4709 = vmul.f32 %v4708, 1.442695
  %v4710 = vpow.pop %v4709
  %v4711 = vadd.f32 %v4710, 1.0
  %v4712 = vrcp.pop %v4711
  %v4713 = vmul.f32 1.0, %v4712
  %v4714 = vxor.u32 %v4705, 2147483648
  %v4715 = vmul.f32 %v4714, 1.442695
  %v4716 = vpow.pop %v4715
  %v4717 = vadd.f32 %v4716, 1.0
  %v4718 = vrcp.pop %v4717
  %v4719 = vmul.f32 1.0, %v4718
  %v4720 = vtanh.pop %v4706
  %v4721 = vxor.u32 %v4707, 2147483648
  %v4722 = vmul.f32 %v4721, 1.442695
  %v4723 = vpow.pop %v4722
  %v4724 = vadd.f32 %v4723, 1.0
  %v4725 = vrcp.pop %v4724
  %v4726 = vmul.f32 1.0, %v4725
  %v4727 = vmul.f32 %v4719, %v3933
  %v4728 = vmul.f32 %v4713, %v4720
  %v4729 = vadd.f32 %v4727, %v4728
  %v4730 = vtanh.pop %v4729
  %v4731 = vmul.f32 %v4726, %v4730
  %v4732 = vpack.c.bf16 %v4731, %v4731
  %v4733 = vpack.c.bf16 %v4427, %v4427
  %v4734 = vld [vmem:[%s4] sm:$0xff]
  %v4735 = vld [vmem:[%s4 + $0x8] sm:$0xff]
  %v4736 = vld [vmem:[%s4 + $0x10] sm:$0xff]
  %v4737 = vld [vmem:[%s4 + $0x18] sm:$0xff]
  %v4738 = vld [vmem:[%s4 + $0x20] sm:$0xff]
  %v4739 = vld [vmem:[%s4 + $0x28] sm:$0xff]
  %v4740 = vld [vmem:[%s4 + $0x30] sm:$0xff]
  %v4741 = vld [vmem:[%s4 + $0x38] sm:$0xff]
  %v4742 = vld [vmem:[%s4 + $0x40] sm:$0xff]
  %v4743 = vld [vmem:[%s4 + $0x48] sm:$0xff]
  %v4744 = vld [vmem:[%s4 + $0x50] sm:$0xff]
  %v4745 = vld [vmem:[%s4 + $0x58] sm:$0xff]
  %v4746 = vld [vmem:[%s4 + $0x60] sm:$0xff]
  %v4747 = vld [vmem:[%s4 + $0x68] sm:$0xff]
  %v4748 = vld [vmem:[%s4 + $0x70] sm:$0xff]
  %v4749 = vld [vmem:[%s4 + $0x78] sm:$0xff]
  %v4750 = vld [vmem:[%s4 + $0x80] sm:$0xff]
  %v4751 = vld [vmem:[%s4 + $0x88] sm:$0xff]
  %v4752 = vld [vmem:[%s4 + $0x90] sm:$0xff]
  %v4753 = vld [vmem:[%s4 + $0x98] sm:$0xff]
  %v4754 = vld [vmem:[%s4 + $0xa0] sm:$0xff]
  %v4755 = vld [vmem:[%s4 + $0xa8] sm:$0xff]
  %v4756 = vld [vmem:[%s4 + $0xb0] sm:$0xff]
  %v4757 = vld [vmem:[%s4 + $0xb8] sm:$0xff]
  %v4758 = vld [vmem:[%s4 + $0xc0] sm:$0xff]
  %v4759 = vld [vmem:[%s4 + $0xc8] sm:$0xff]
  %v4760 = vld [vmem:[%s4 + $0xd0] sm:$0xff]
  %v4761 = vld [vmem:[%s4 + $0xd8] sm:$0xff]
  %v4762 = vld [vmem:[%s4 + $0xe0] sm:$0xff]
  %v4763 = vld [vmem:[%s4 + $0xe8] sm:$0xff]
  %v4764 = vld [vmem:[%s4 + $0xf0] sm:$0xff]
  %v4765 = vld [vmem:[%s4 + $0xf8] sm:$0xff]
  %v4766 = vld [vmem:[%s4 + $0x100] sm:$0xff]
  %v4767 = vld [vmem:[%s4 + $0x108] sm:$0xff]
  %v4768 = vld [vmem:[%s4 + $0x110] sm:$0xff]
  %v4769 = vld [vmem:[%s4 + $0x118] sm:$0xff]
  %v4770 = vld [vmem:[%s4 + $0x120] sm:$0xff]
  %v4771 = vld [vmem:[%s4 + $0x128] sm:$0xff]
  %v4772 = vld [vmem:[%s4 + $0x130] sm:$0xff]
  %v4773 = vld [vmem:[%s4 + $0x138] sm:$0xff]
  %v4774 = vld [vmem:[%s4 + $0x140] sm:$0xff]
  %v4775 = vld [vmem:[%s4 + $0x148] sm:$0xff]
  %v4776 = vld [vmem:[%s4 + $0x150] sm:$0xff]
  %v4777 = vld [vmem:[%s4 + $0x158] sm:$0xff]
  %v4778 = vld [vmem:[%s4 + $0x160] sm:$0xff]
  %v4779 = vld [vmem:[%s4 + $0x168] sm:$0xff]
  %v4780 = vld [vmem:[%s4 + $0x170] sm:$0xff]
  %v4781 = vld [vmem:[%s4 + $0x178] sm:$0xff]
  %v4782 = vld [vmem:[%s4 + $0x180] sm:$0xff]
  %v4783 = vld [vmem:[%s4 + $0x188] sm:$0xff]
  %v4784 = vld [vmem:[%s4 + $0x190] sm:$0xff]
  %v4785 = vld [vmem:[%s4 + $0x198] sm:$0xff]
  %v4786 = vld [vmem:[%s4 + $0x1a0] sm:$0xff]
  %v4787 = vld [vmem:[%s4 + $0x1a8] sm:$0xff]
  %v4788 = vld [vmem:[%s4 + $0x1b0] sm:$0xff]
  %v4789 = vld [vmem:[%s4 + $0x1b8] sm:$0xff]
  %v4790 = vld [vmem:[%s4 + $0x1c0] sm:$0xff]
  %v4791 = vld [vmem:[%s4 + $0x1c8] sm:$0xff]
  %v4792 = vld [vmem:[%s4 + $0x1d0] sm:$0xff]
  %v4793 = vld [vmem:[%s4 + $0x1d8] sm:$0xff]
  %v4794 = vld [vmem:[%s4 + $0x1e0] sm:$0xff]
  %v4795 = vld [vmem:[%s4 + $0x1e8] sm:$0xff]
  %v4796 = vld [vmem:[%s4 + $0x1f0] sm:$0xff]
  %v4797 = vld [vmem:[%s4 + $0x1f8] sm:$0xff]
  %v4862 = vunpack.c.l.b16 %v4734
  %v4863 = vunpack.c.h.b16 %v4734
  %v4864 = vunpack.c.l.b16 %v4735
  %v4865 = vunpack.c.h.b16 %v4735
  %v4866 = vunpack.c.l.b16 %v4736
  %v4867 = vunpack.c.h.b16 %v4736
  %v4868 = vunpack.c.l.b16 %v4737
  %v4869 = vunpack.c.h.b16 %v4737
  %v4870 = vunpack.c.l.b16 %v4738
  %v4871 = vunpack.c.h.b16 %v4738
  %v4872 = vunpack.c.l.b16 %v4739
  %v4873 = vunpack.c.h.b16 %v4739
  %v4874 = vunpack.c.l.b16 %v4740
  %v4875 = vunpack.c.h.b16 %v4740
  %v4876 = vunpack.c.l.b16 %v4741
  %v4877 = vunpack.c.h.b16 %v4741
  %v4878 = vunpack.c.l.b16 %v4742
  %v4879 = vunpack.c.h.b16 %v4742
  %v4880 = vunpack.c.l.b16 %v4743
  %v4881 = vunpack.c.h.b16 %v4743
  %v4882 = vunpack.c.l.b16 %v4744
  %v4883 = vunpack.c.h.b16 %v4744
  %v4884 = vunpack.c.l.b16 %v4745
  %v4885 = vunpack.c.h.b16 %v4745
  %v4886 = vunpack.c.l.b16 %v4746
  %v4887 = vunpack.c.h.b16 %v4746
  %v4888 = vunpack.c.l.b16 %v4747
  %v4889 = vunpack.c.h.b16 %v4747
  %v4890 = vunpack.c.l.b16 %v4748
  %v4891 = vunpack.c.h.b16 %v4748
  %v4892 = vunpack.c.l.b16 %v4749
  %v4893 = vunpack.c.h.b16 %v4749
  %v4894 = vunpack.c.l.b16 %v4750
  %v4895 = vunpack.c.h.b16 %v4750
  %v4896 = vunpack.c.l.b16 %v4751
  %v4897 = vunpack.c.h.b16 %v4751
  %v4898 = vunpack.c.l.b16 %v4752
  %v4899 = vunpack.c.h.b16 %v4752
  %v4900 = vunpack.c.l.b16 %v4753
  %v4901 = vunpack.c.h.b16 %v4753
  %v4902 = vunpack.c.l.b16 %v4754
  %v4903 = vunpack.c.h.b16 %v4754
  %v4904 = vunpack.c.l.b16 %v4755
  %v4905 = vunpack.c.h.b16 %v4755
  %v4906 = vunpack.c.l.b16 %v4756
  %v4907 = vunpack.c.h.b16 %v4756
  %v4908 = vunpack.c.l.b16 %v4757
  %v4909 = vunpack.c.h.b16 %v4757
  %v4910 = vunpack.c.l.b16 %v4758
  %v4911 = vunpack.c.h.b16 %v4758
  %v4912 = vunpack.c.l.b16 %v4759
  %v4913 = vunpack.c.h.b16 %v4759
  %v4914 = vunpack.c.l.b16 %v4760
  %v4915 = vunpack.c.h.b16 %v4760
  %v4916 = vunpack.c.l.b16 %v4761
  %v4917 = vunpack.c.h.b16 %v4761
  %v4918 = vunpack.c.l.b16 %v4762
  %v4919 = vunpack.c.h.b16 %v4762
  %v4920 = vunpack.c.l.b16 %v4763
  %v4921 = vunpack.c.h.b16 %v4763
  %v4922 = vunpack.c.l.b16 %v4764
  %v4923 = vunpack.c.h.b16 %v4764
  %v4924 = vunpack.c.l.b16 %v4765
  %v4925 = vunpack.c.h.b16 %v4765
  %v4926 = vunpack.c.l.b16 %v4766
  %v4927 = vunpack.c.h.b16 %v4766
  %v4928 = vunpack.c.l.b16 %v4767
  %v4929 = vunpack.c.h.b16 %v4767
  %v4930 = vunpack.c.l.b16 %v4768
  %v4931 = vunpack.c.h.b16 %v4768
  %v4932 = vunpack.c.l.b16 %v4769
  %v4933 = vunpack.c.h.b16 %v4769
  %v4934 = vunpack.c.l.b16 %v4770
  %v4935 = vunpack.c.h.b16 %v4770
  %v4936 = vunpack.c.l.b16 %v4771
  %v4937 = vunpack.c.h.b16 %v4771
  %v4938 = vunpack.c.l.b16 %v4772
  %v4939 = vunpack.c.h.b16 %v4772
  %v4940 = vunpack.c.l.b16 %v4773
  %v4941 = vunpack.c.h.b16 %v4773
  %v4942 = vunpack.c.l.b16 %v4774
  %v4943 = vunpack.c.h.b16 %v4774
  %v4944 = vunpack.c.l.b16 %v4775
  %v4945 = vunpack.c.h.b16 %v4775
  %v4946 = vunpack.c.l.b16 %v4776
  %v4947 = vunpack.c.h.b16 %v4776
  %v4948 = vunpack.c.l.b16 %v4777
  %v4949 = vunpack.c.h.b16 %v4777
  %v4950 = vunpack.c.l.b16 %v4778
  %v4951 = vunpack.c.h.b16 %v4778
  %v4952 = vunpack.c.l.b16 %v4779
  %v4953 = vunpack.c.h.b16 %v4779
  %v4954 = vunpack.c.l.b16 %v4780
  %v4955 = vunpack.c.h.b16 %v4780
  %v4956 = vunpack.c.l.b16 %v4781
  %v4957 = vunpack.c.h.b16 %v4781
  %v4958 = vunpack.c.l.b16 %v4782
  %v4959 = vunpack.c.h.b16 %v4782
  %v4960 = vunpack.c.l.b16 %v4783
  %v4961 = vunpack.c.h.b16 %v4783
  %v4962 = vunpack.c.l.b16 %v4784
  %v4963 = vunpack.c.h.b16 %v4784
  %v4964 = vunpack.c.l.b16 %v4785
  %v4965 = vunpack.c.h.b16 %v4785
  %v4966 = vunpack.c.l.b16 %v4786
  %v4967 = vunpack.c.h.b16 %v4786
  %v4968 = vunpack.c.l.b16 %v4787
  %v4969 = vunpack.c.h.b16 %v4787
  %v4970 = vunpack.c.l.b16 %v4788
  %v4971 = vunpack.c.h.b16 %v4788
  %v4972 = vunpack.c.l.b16 %v4789
  %v4973 = vunpack.c.h.b16 %v4789
  %v4974 = vunpack.c.l.b16 %v4790
  %v4975 = vunpack.c.h.b16 %v4790
  %v4976 = vunpack.c.l.b16 %v4791
  %v4977 = vunpack.c.h.b16 %v4791
  %v4978 = vunpack.c.l.b16 %v4792
  %v4979 = vunpack.c.h.b16 %v4792
  %v4980 = vunpack.c.l.b16 %v4793
  %v4981 = vunpack.c.h.b16 %v4793
  %v4982 = vunpack.c.l.b16 %v4794
  %v4983 = vunpack.c.h.b16 %v4794
  %v4984 = vunpack.c.l.b16 %v4795
  %v4985 = vunpack.c.h.b16 %v4795
  %v4986 = vunpack.c.l.b16 %v4796
  %v4987 = vunpack.c.h.b16 %v4796
  %v4988 = vunpack.c.l.b16 %v4797
  %v4989 = vunpack.c.h.b16 %v4797
  %v4990 = vpack.c.b16 %v4866, %v4862
  %v4991 = vpack.c.b16 %v4867, %v4863
  %v4992 = vpack.c.b16 %v4868, %v4864
  %v4993 = vpack.c.b16 %v4869, %v4865
  %v4994 = vpack.c.b16 %v4874, %v4870
  %v4995 = vpack.c.b16 %v4875, %v4871
  %v4996 = vpack.c.b16 %v4876, %v4872
  %v4997 = vpack.c.b16 %v4877, %v4873
  %v4998 = vpack.c.b16 %v4882, %v4878
  %v4999 = vpack.c.b16 %v4883, %v4879
  %v5000 = vpack.c.b16 %v4884, %v4880
  %v5001 = vpack.c.b16 %v4885, %v4881
  %v5002 = vpack.c.b16 %v4890, %v4886
  %v5003 = vpack.c.b16 %v4891, %v4887
  %v5004 = vpack.c.b16 %v4892, %v4888
  %v5005 = vpack.c.b16 %v4893, %v4889
  %v5006 = vpack.c.b16 %v4898, %v4894
  %v5007 = vpack.c.b16 %v4899, %v4895
  %v5008 = vpack.c.b16 %v4900, %v4896
  %v5009 = vpack.c.b16 %v4901, %v4897
  %v5010 = vpack.c.b16 %v4906, %v4902
  %v5011 = vpack.c.b16 %v4907, %v4903
  %v5012 = vpack.c.b16 %v4908, %v4904
  %v5013 = vpack.c.b16 %v4909, %v4905
  %v5014 = vpack.c.b16 %v4914, %v4910
  %v5015 = vpack.c.b16 %v4915, %v4911
  %v5016 = vpack.c.b16 %v4916, %v4912
  %v5017 = vpack.c.b16 %v4917, %v4913
  %v5018 = vpack.c.b16 %v4922, %v4918
  %v5019 = vpack.c.b16 %v4923, %v4919
  %v5020 = vpack.c.b16 %v4924, %v4920
  %v5021 = vpack.c.b16 %v4925, %v4921
  %v5022 = vpack.c.b16 %v4930, %v4926
  %v5023 = vpack.c.b16 %v4931, %v4927
  %v5024 = vpack.c.b16 %v4932, %v4928
  %v5025 = vpack.c.b16 %v4933, %v4929
  %v5026 = vpack.c.b16 %v4938, %v4934
  %v5027 = vpack.c.b16 %v4939, %v4935
  %v5028 = vpack.c.b16 %v4940, %v4936
  %v5029 = vpack.c.b16 %v4941, %v4937
  %v5030 = vpack.c.b16 %v4946, %v4942
  %v5031 = vpack.c.b16 %v4947, %v4943
  %v5032 = vpack.c.b16 %v4948, %v4944
  %v5033 = vpack.c.b16 %v4949, %v4945
  %v5034 = vpack.c.b16 %v4954, %v4950
  %v5035 = vpack.c.b16 %v4955, %v4951
  %v5036 = vpack.c.b16 %v4956, %v4952
  %v5037 = vpack.c.b16 %v4957, %v4953
  %v5038 = vpack.c.b16 %v4962, %v4958
  %v5039 = vpack.c.b16 %v4963, %v4959
  %v5040 = vpack.c.b16 %v4964, %v4960
  %v5041 = vpack.c.b16 %v4965, %v4961
  %v5042 = vpack.c.b16 %v4970, %v4966
  %v5043 = vpack.c.b16 %v4971, %v4967
  %v5044 = vpack.c.b16 %v4972, %v4968
  %v5045 = vpack.c.b16 %v4973, %v4969
  %v5046 = vpack.c.b16 %v4978, %v4974
  %v5047 = vpack.c.b16 %v4979, %v4975
  %v5048 = vpack.c.b16 %v4980, %v4976
  %v5049 = vpack.c.b16 %v4981, %v4977
  %v5050 = vpack.c.b16 %v4986, %v4982
  %v5051 = vpack.c.b16 %v4987, %v4983
  %v5052 = vpack.c.b16 %v4988, %v4984
  %v5053 = vpack.c.b16 %v4989, %v4985
  %5118 = vmatprep.subr.bf16.mxu0 %v5019
  %5119 = vmatpush1.bf16.msra.mxu0 %v5018
  %5120 = vmatprep.subr.bf16.mxu0 %v5015
  %5121 = vmatpush1.bf16.msra.mxu0 %v5014
  %5122 = vmatprep.subr.bf16.mxu0 %v5011
  %5123 = vmatpush1.bf16.msra.mxu0 %v5010
  %5124 = vmatprep.subr.bf16.mxu0 %v5007
  %5125 = vmatpush1.bf16.msra.mxu0 %v5006
  %5126 = vmatprep.subr.bf16.mxu0 %v5003
  %5127 = vmatpush1.bf16.msra.mxu0 %v5002
  %5128 = vmatprep.subr.bf16.mxu0 %v4999
  %5129 = vmatpush1.bf16.msra.mxu0 %v4998
  %5130 = vmatprep.subr.bf16.mxu0 %v4995
  %5131 = vmatpush1.bf16.msra.mxu0 %v4994
  %5132 = vmatprep.subr.bf16.mxu0 %v4991
  %5133 = vmatpush1.bf16.msra.mxu0 %v4990
  %5134 = vmatprep.subr.bf16.mxu0 %v5051
  %5135 = vmatpush2.bf16.msra.mxu0 %v5050
  %5136 = vmatprep.subr.bf16.mxu0 %v5047
  %5137 = vmatpush2.bf16.msra.mxu0 %v5046
  %5138 = vmatprep.subr.bf16.mxu0 %v5043
  %5139 = vmatpush2.bf16.msra.mxu0 %v5042
  %5140 = vmatprep.subr.bf16.mxu0 %v5039
  %5141 = vmatpush2.bf16.msra.mxu0 %v5038
  %5142 = vmatprep.subr.bf16.mxu0 %v5035
  %5143 = vmatpush2.bf16.msra.mxu0 %v5034
  %5144 = vmatprep.subr.bf16.mxu0 %v5031
  %5145 = vmatpush2.bf16.msra.mxu0 %v5030
  %5146 = vmatprep.subr.bf16.mxu0 %v5027
  %5147 = vmatpush2.bf16.msra.mxu0 %v5026
  %5148 = vmatprep.subr.bf16.mxu0 %v5023
  %5149 = vmatpush2.bf16.msra.mxu0 %v5022
  %5150 = vmatprep.mubr.bf16.mxu0 %v4733
  %5151 = vmatmul.mubr.bf16.gmra.mxu0 %v4732
  %v5152 = vpop.f32.mrf.mxu0
  %v5153 = vadd.f32 %v802, %v5152
  %v5154 = vpop.f32.mrf.mxu0
  %v5155 = vadd.f32 %v806, %v5154
  %v5156 = vpop.f32.mrf.mxu0
  %v5157 = vpop.f32.mrf.mxu0
  %5158 = vdwg.mxu0
  %5159 = vmatprep.subr.bf16.mxu0 %v5021
  %5160 = vmatpush1.bf16.msra.mxu0 %v5020
  %5161 = vmatprep.subr.bf16.mxu0 %v5017
  %5162 = vmatpush1.bf16.msra.mxu0 %v5016
  %5163 = vmatprep.subr.bf16.mxu0 %v5013
  %5164 = vmatpush1.bf16.msra.mxu0 %v5012
  %5165 = vmatprep.subr.bf16.mxu0 %v5009
  %5166 = vmatpush1.bf16.msra.mxu0 %v5008
  %5167 = vmatprep.subr.bf16.mxu0 %v5005
  %5168 = vmatpush1.bf16.msra.mxu0 %v5004
  %5169 = vmatprep.subr.bf16.mxu0 %v5001
  %5170 = vmatpush1.bf16.msra.mxu0 %v5000
  %5171 = vmatprep.subr.bf16.mxu0 %v4997
  %5172 = vmatpush1.bf16.msra.mxu0 %v4996
  %5173 = vmatprep.subr.bf16.mxu0 %v4993
  %5174 = vmatpush1.bf16.msra.mxu0 %v4992
  %5175 = vmatprep.subr.bf16.mxu0 %v5053
  %5176 = vmatpush2.bf16.msra.mxu0 %v5052
  %5177 = vmatprep.subr.bf16.mxu0 %v5049
  %5178 = vmatpush2.bf16.msra.mxu0 %v5048
  %5179 = vmatprep.subr.bf16.mxu0 %v5045
  %5180 = vmatpush2.bf16.msra.mxu0 %v5044
  %5181 = vmatprep.subr.bf16.mxu0 %v5041
  %5182 = vmatpush2.bf16.msra.mxu0 %v5040
  %5183 = vmatprep.subr.bf16.mxu0 %v5037
  %5184 = vmatpush2.bf16.msra.mxu0 %v5036
  %5185 = vmatprep.subr.bf16.mxu0 %v5033
  %5186 = vmatpush2.bf16.msra.mxu0 %v5032
  %5187 = vmatprep.subr.bf16.mxu0 %v5029
  %5188 = vmatpush2.bf16.msra.mxu0 %v5028
  %5189 = vmatprep.subr.bf16.mxu0 %v5025
  %5190 = vmatpush2.bf16.msra.mxu0 %v5024
  %5191 = vmatprep.mubr.bf16.mxu0 %v4733
  %5192 = vmatmul.mubr.bf16.gmra.mxu0 %v4732
  %v5193 = vpop.f32.mrf.mxu0
  %v5194 = vadd.f32 %v810, %v5193
  %v5195 = vpop.f32.mrf.mxu0
  %v5196 = vadd.f32 %v814, %v5195
  %v5197 = vpop.f32.mrf.mxu0
  %v5198 = vpop.f32.mrf.mxu0
  %5199 = vdwg.mxu0
  %v5200 = vxor.u32 %v5153, 2147483648
  %v5201 = vmul.f32 %v5200, 1.442695
  %v5202 = vpow.pop %v5201
  %v5203 = vadd.f32 %v5202, 1.0
  %v5204 = vrcp.pop %v5203
  %v5205 = vmul.f32 1.0, %v5204
  %v5206 = vxor.u32 %v5155, 2147483648
  %v5207 = vmul.f32 %v5206, 1.442695
  %v5208 = vpow.pop %v5207
  %v5209 = vadd.f32 %v5208, 1.0
  %v5210 = vrcp.pop %v5209
  %v5211 = vmul.f32 1.0, %v5210
  %v5212 = vtanh.pop %v5194
  %v5213 = vxor.u32 %v5196, 2147483648
  %v5214 = vmul.f32 %v5213, 1.442695
  %v5215 = vpow.pop %v5214
  %v5216 = vadd.f32 %v5215, 1.0
  %v5217 = vrcp.pop %v5216
  %v5218 = vmul.f32 1.0, %v5217
  %v5219 = vmul.f32 %v5211, %v4425
  %v5220 = vmul.f32 %v5205, %v5212
  %v5221 = vadd.f32 %v5219, %v5220
  %v5222 = vtanh.pop %v5221
  %v5223 = vmul.f32 %v5218, %v5222
  %s5224 = scalar_lea.vmem %s6, 40
  %5225 = vst [vmem:[%s5224] sm:$0xff] %v5223
  %v5226 = vld [vmem:[%s2] sm:$0xff]
  %v5227 = vld [vmem:[%s2 + $0x8] sm:$0xff]
  %v5228 = vld [vmem:[%s2 + $0x10] sm:$0xff]
  %v5229 = vld [vmem:[%s2 + $0x18] sm:$0xff]
  %v5230 = vld [vmem:[%s2 + $0x20] sm:$0xff]
  %v5231 = vld [vmem:[%s2 + $0x28] sm:$0xff]
  %v5232 = vld [vmem:[%s2 + $0x30] sm:$0xff]
  %v5233 = vld [vmem:[%s2 + $0x38] sm:$0xff]
  %v5234 = vld [vmem:[%s2 + $0x40] sm:$0xff]
  %v5235 = vld [vmem:[%s2 + $0x48] sm:$0xff]
  %v5236 = vld [vmem:[%s2 + $0x50] sm:$0xff]
  %v5237 = vld [vmem:[%s2 + $0x58] sm:$0xff]
  %v5238 = vld [vmem:[%s2 + $0x60] sm:$0xff]
  %v5239 = vld [vmem:[%s2 + $0x68] sm:$0xff]
  %v5240 = vld [vmem:[%s2 + $0x70] sm:$0xff]
  %v5241 = vld [vmem:[%s2 + $0x78] sm:$0xff]
  %v5242 = vld [vmem:[%s2 + $0x80] sm:$0xff]
  %v5243 = vld [vmem:[%s2 + $0x88] sm:$0xff]
  %v5244 = vld [vmem:[%s2 + $0x90] sm:$0xff]
  %v5245 = vld [vmem:[%s2 + $0x98] sm:$0xff]
  %v5246 = vld [vmem:[%s2 + $0xa0] sm:$0xff]
  %v5247 = vld [vmem:[%s2 + $0xa8] sm:$0xff]
  %v5248 = vld [vmem:[%s2 + $0xb0] sm:$0xff]
  %v5249 = vld [vmem:[%s2 + $0xb8] sm:$0xff]
  %v5250 = vld [vmem:[%s2 + $0xc0] sm:$0xff]
  %v5251 = vld [vmem:[%s2 + $0xc8] sm:$0xff]
  %v5252 = vld [vmem:[%s2 + $0xd0] sm:$0xff]
  %v5253 = vld [vmem:[%s2 + $0xd8] sm:$0xff]
  %v5254 = vld [vmem:[%s2 + $0xe0] sm:$0xff]
  %v5255 = vld [vmem:[%s2 + $0xe8] sm:$0xff]
  %v5256 = vld [vmem:[%s2 + $0xf0] sm:$0xff]
  %v5257 = vld [vmem:[%s2 + $0xf8] sm:$0xff]
  %v5290 = vunpack.c.l.b16 %v5226
  %v5291 = vunpack.c.h.b16 %v5226
  %v5292 = vunpack.c.l.b16 %v5227
  %v5293 = vunpack.c.h.b16 %v5227
  %v5294 = vunpack.c.l.b16 %v5228
  %v5295 = vunpack.c.h.b16 %v5228
  %v5296 = vunpack.c.l.b16 %v5229
  %v5297 = vunpack.c.h.b16 %v5229
  %v5298 = vunpack.c.l.b16 %v5230
  %v5299 = vunpack.c.h.b16 %v5230
  %v5300 = vunpack.c.l.b16 %v5231
  %v5301 = vunpack.c.h.b16 %v5231
  %v5302 = vunpack.c.l.b16 %v5232
  %v5303 = vunpack.c.h.b16 %v5232
  %v5304 = vunpack.c.l.b16 %v5233
  %v5305 = vunpack.c.h.b16 %v5233
  %v5306 = vunpack.c.l.b16 %v5234
  %v5307 = vunpack.c.h.b16 %v5234
  %v5308 = vunpack.c.l.b16 %v5235
  %v5309 = vunpack.c.h.b16 %v5235
  %v5310 = vunpack.c.l.b16 %v5236
  %v5311 = vunpack.c.h.b16 %v5236
  %v5312 = vunpack.c.l.b16 %v5237
  %v5313 = vunpack.c.h.b16 %v5237
  %v5314 = vunpack.c.l.b16 %v5238
  %v5315 = vunpack.c.h.b16 %v5238
  %v5316 = vunpack.c.l.b16 %v5239
  %v5317 = vunpack.c.h.b16 %v5239
  %v5318 = vunpack.c.l.b16 %v5240
  %v5319 = vunpack.c.h.b16 %v5240
  %v5320 = vunpack.c.l.b16 %v5241
  %v5321 = vunpack.c.h.b16 %v5241
  %v5322 = vunpack.c.l.b16 %v5242
  %v5323 = vunpack.c.h.b16 %v5242
  %v5324 = vunpack.c.l.b16 %v5243
  %v5325 = vunpack.c.h.b16 %v5243
  %v5326 = vunpack.c.l.b16 %v5244
  %v5327 = vunpack.c.h.b16 %v5244
  %v5328 = vunpack.c.l.b16 %v5245
  %v5329 = vunpack.c.h.b16 %v5245
  %v5330 = vunpack.c.l.b16 %v5246
  %v5331 = vunpack.c.h.b16 %v5246
  %v5332 = vunpack.c.l.b16 %v5247
  %v5333 = vunpack.c.h.b16 %v5247
  %v5334 = vunpack.c.l.b16 %v5248
  %v5335 = vunpack.c.h.b16 %v5248
  %v5336 = vunpack.c.l.b16 %v5249
  %v5337 = vunpack.c.h.b16 %v5249
  %v5338 = vunpack.c.l.b16 %v5250
  %v5339 = vunpack.c.h.b16 %v5250
  %v5340 = vunpack.c.l.b16 %v5251
  %v5341 = vunpack.c.h.b16 %v5251
  %v5342 = vunpack.c.l.b16 %v5252
  %v5343 = vunpack.c.h.b16 %v5252
  %v5344 = vunpack.c.l.b16 %v5253
  %v5345 = vunpack.c.h.b16 %v5253
  %v5346 = vunpack.c.l.b16 %v5254
  %v5347 = vunpack.c.h.b16 %v5254
  %v5348 = vunpack.c.l.b16 %v5255
  %v5349 = vunpack.c.h.b16 %v5255
  %v5350 = vunpack.c.l.b16 %v5256
  %v5351 = vunpack.c.h.b16 %v5256
  %v5352 = vunpack.c.l.b16 %v5257
  %v5353 = vunpack.c.h.b16 %v5257
  %v5354 = vpack.c.b16 %v5294, %v5290
  %v5355 = vpack.c.b16 %v5295, %v5291
  %v5356 = vpack.c.b16 %v5296, %v5292
  %v5357 = vpack.c.b16 %v5297, %v5293
  %v5358 = vpack.c.b16 %v5302, %v5298
  %v5359 = vpack.c.b16 %v5303, %v5299
  %v5360 = vpack.c.b16 %v5304, %v5300
  %v5361 = vpack.c.b16 %v5305, %v5301
  %v5362 = vpack.c.b16 %v5310, %v5306
  %v5363 = vpack.c.b16 %v5311, %v5307
  %v5364 = vpack.c.b16 %v5312, %v5308
  %v5365 = vpack.c.b16 %v5313, %v5309
  %v5366 = vpack.c.b16 %v5318, %v5314
  %v5367 = vpack.c.b16 %v5319, %v5315
  %v5368 = vpack.c.b16 %v5320, %v5316
  %v5369 = vpack.c.b16 %v5321, %v5317
  %v5370 = vpack.c.b16 %v5326, %v5322
  %v5371 = vpack.c.b16 %v5327, %v5323
  %v5372 = vpack.c.b16 %v5328, %v5324
  %v5373 = vpack.c.b16 %v5329, %v5325
  %v5374 = vpack.c.b16 %v5334, %v5330
  %v5375 = vpack.c.b16 %v5335, %v5331
  %v5376 = vpack.c.b16 %v5336, %v5332
  %v5377 = vpack.c.b16 %v5337, %v5333
  %v5378 = vpack.c.b16 %v5342, %v5338
  %v5379 = vpack.c.b16 %v5343, %v5339
  %v5380 = vpack.c.b16 %v5344, %v5340
  %v5381 = vpack.c.b16 %v5345, %v5341
  %v5382 = vpack.c.b16 %v5350, %v5346
  %v5383 = vpack.c.b16 %v5351, %v5347
  %v5384 = vpack.c.b16 %v5352, %v5348
  %v5385 = vpack.c.b16 %v5353, %v5349
  %5418 = vmatprep.subr.bf16.mxu0 %v5383
  %5419 = vmatpush1.bf16.msra.mxu0 %v5382
  %5420 = vmatprep.subr.bf16.mxu0 %v5379
  %5421 = vmatpush1.bf16.msra.mxu0 %v5378
  %5422 = vmatprep.subr.bf16.mxu0 %v5375
  %5423 = vmatpush1.bf16.msra.mxu0 %v5374
  %5424 = vmatprep.subr.bf16.mxu0 %v5371
  %5425 = vmatpush1.bf16.msra.mxu0 %v5370
  %5426 = vmatprep.subr.bf16.mxu0 %v5367
  %5427 = vmatpush1.bf16.msra.mxu0 %v5366
  %5428 = vmatprep.subr.bf16.mxu0 %v5363
  %5429 = vmatpush1.bf16.msra.mxu0 %v5362
  %5430 = vmatprep.subr.bf16.mxu0 %v5359
  %5431 = vmatpush1.bf16.msra.mxu0 %v5358
  %5432 = vmatprep.subr.bf16.mxu0 %v5355
  %5433 = vmatpush1.bf16.msra.mxu0 %v5354
  %5434 = vmatprep.subr.bf16.mxu0 0
  %5435 = vmatpush2.bf16.msra.mxu0 0
  %5436 = vmatprep.subr.bf16.mxu0 0
  %5437 = vmatpush2.bf16.msra.mxu0 0
  %5438 = vmatprep.subr.bf16.mxu0 0
  %5439 = vmatpush2.bf16.msra.mxu0 0
  %5440 = vmatprep.subr.bf16.mxu0 0
  %5441 = vmatpush2.bf16.msra.mxu0 0
  %5442 = vmatprep.subr.bf16.mxu0 0
  %5443 = vmatpush2.bf16.msra.mxu0 0
  %5444 = vmatprep.subr.bf16.mxu0 0
  %5445 = vmatpush2.bf16.msra.mxu0 0
  %5446 = vmatprep.subr.bf16.mxu0 0
  %5447 = vmatpush2.bf16.msra.mxu0 0
  %5448 = vmatprep.subr.bf16.mxu0 0
  %5449 = vmatpush2.bf16.msra.mxu0 0
  %5450 = vmatprep.mubr.bf16.mxu0 0
  %5451 = vmatmul.mubr.bf16.gmra.mxu0 %v4732
  %v5452 = vpop.f32.mrf.mxu0
  %v5453 = vadd.f32 0.0, %v5452
  %v5454 = vpop.f32.mrf.mxu0
  %v5455 = vadd.f32 0.0, %v5454
  %v5456 = vpop.f32.mrf.mxu0
  %v5457 = vpop.f32.mrf.mxu0
  %5458 = vdwg.mxu0
  %5459 = vmatprep.subr.bf16.mxu0 %v5385
  %5460 = vmatpush1.bf16.msra.mxu0 %v5384
  %5461 = vmatprep.subr.bf16.mxu0 %v5381
  %5462 = vmatpush1.bf16.msra.mxu0 %v5380
  %5463 = vmatprep.subr.bf16.mxu0 %v5377
  %5464 = vmatpush1.bf16.msra.mxu0 %v5376
  %5465 = vmatprep.subr.bf16.mxu0 %v5373
  %5466 = vmatpush1.bf16.msra.mxu0 %v5372
  %5467 = vmatprep.subr.bf16.mxu0 %v5369
  %5468 = vmatpush1.bf16.msra.mxu0 %v5368
  %5469 = vmatprep.subr.bf16.mxu0 %v5365
  %5470 = vmatpush1.bf16.msra.mxu0 %v5364
  %5471 = vmatprep.subr.bf16.mxu0 %v5361
  %5472 = vmatpush1.bf16.msra.mxu0 %v5360
  %5473 = vmatprep.subr.bf16.mxu0 %v5357
  %5474 = vmatpush1.bf16.msra.mxu0 %v5356
  %5475 = vmatprep.subr.bf16.mxu0 0
  %5476 = vmatpush2.bf16.msra.mxu0 0
  %5477 = vmatprep.subr.bf16.mxu0 0
  %5478 = vmatpush2.bf16.msra.mxu0 0
  %5479 = vmatprep.subr.bf16.mxu0 0
  %5480 = vmatpush2.bf16.msra.mxu0 0
  %5481 = vmatprep.subr.bf16.mxu0 0
  %5482 = vmatpush2.bf16.msra.mxu0 0
  %5483 = vmatprep.subr.bf16.mxu0 0
  %5484 = vmatpush2.bf16.msra.mxu0 0
  %5485 = vmatprep.subr.bf16.mxu0 0
  %5486 = vmatpush2.bf16.msra.mxu0 0
  %5487 = vmatprep.subr.bf16.mxu0 0
  %5488 = vmatpush2.bf16.msra.mxu0 0
  %5489 = vmatprep.subr.bf16.mxu0 0
  %5490 = vmatpush2.bf16.msra.mxu0 0
  %5491 = vmatprep.mubr.bf16.mxu0 0
  %5492 = vmatmul.mubr.bf16.gmra.mxu0 %v4732
  %v5493 = vpop.f32.mrf.mxu0
  %v5494 = vadd.f32 0.0, %v5493
  %v5495 = vpop.f32.mrf.mxu0
  %v5496 = vadd.f32 0.0, %v5495
  %v5497 = vpop.f32.mrf.mxu0
  %v5498 = vpop.f32.mrf.mxu0
  %5499 = vdwg.mxu0
  %v5500 = vadd.f32 %v343, %v5453
  %v5501 = vadd.f32 %v345, %v5455
  %v5502 = vadd.f32 %v416, %v5494
  %v5503 = vadd.f32 %v418, %v5496
  %v5504 = vxor.u32 %v5500, 2147483648
  %v5505 = vmul.f32 %v5504, 1.442695
  %v5506 = vpow.pop %v5505
  %v5507 = vadd.f32 %v5506, 1.0
  %v5508 = vrcp.pop %v5507
  %v5509 = vmul.f32 1.0, %v5508
  %v5510 = vxor.u32 %v5501, 2147483648
  %v5511 = vmul.f32 %v5510, 1.442695
  %v5512 = vpow.pop %v5511
  %v5513 = vadd.f32 %v5512, 1.0
  %v5514 = vrcp.pop %v5513
  %v5515 = vmul.f32 1.0, %v5514
  %v5516 = vtanh.pop %v5502
  %v5517 = vxor.u32 %v5503, 2147483648
  %v5518 = vmul.f32 %v5517, 1.442695
  %v5519 = vpow.pop %v5518
  %v5520 = vadd.f32 %v5519, 1.0
  %v5521 = vrcp.pop %v5520
  %v5522 = vmul.f32 1.0, %v5521
  %v5523 = vmul.f32 %v5515, %v4729
  %v5524 = vmul.f32 %v5509, %v5516
  %v5525 = vadd.f32 %v5523, %v5524
  %v5526 = vtanh.pop %v5525
  %v5527 = vmul.f32 %v5522, %v5526
  %v5528 = vpack.c.bf16 %v5527, %v5527
  %v5529 = vpack.c.bf16 %v5223, %v5223
  %v5530 = vld [vmem:[%s4] sm:$0xff]
  %v5531 = vld [vmem:[%s4 + $0x8] sm:$0xff]
  %v5532 = vld [vmem:[%s4 + $0x10] sm:$0xff]
  %v5533 = vld [vmem:[%s4 + $0x18] sm:$0xff]
  %v5534 = vld [vmem:[%s4 + $0x20] sm:$0xff]
  %v5535 = vld [vmem:[%s4 + $0x28] sm:$0xff]
  %v5536 = vld [vmem:[%s4 + $0x30] sm:$0xff]
  %v5537 = vld [vmem:[%s4 + $0x38] sm:$0xff]
  %v5538 = vld [vmem:[%s4 + $0x40] sm:$0xff]
  %v5539 = vld [vmem:[%s4 + $0x48] sm:$0xff]
  %v5540 = vld [vmem:[%s4 + $0x50] sm:$0xff]
  %v5541 = vld [vmem:[%s4 + $0x58] sm:$0xff]
  %v5542 = vld [vmem:[%s4 + $0x60] sm:$0xff]
  %v5543 = vld [vmem:[%s4 + $0x68] sm:$0xff]
  %v5544 = vld [vmem:[%s4 + $0x70] sm:$0xff]
  %v5545 = vld [vmem:[%s4 + $0x78] sm:$0xff]
  %v5546 = vld [vmem:[%s4 + $0x80] sm:$0xff]
  %v5547 = vld [vmem:[%s4 + $0x88] sm:$0xff]
  %v5548 = vld [vmem:[%s4 + $0x90] sm:$0xff]
  %v5549 = vld [vmem:[%s4 + $0x98] sm:$0xff]
  %v5550 = vld [vmem:[%s4 + $0xa0] sm:$0xff]
  %v5551 = vld [vmem:[%s4 + $0xa8] sm:$0xff]
  %v5552 = vld [vmem:[%s4 + $0xb0] sm:$0xff]
  %v5553 = vld [vmem:[%s4 + $0xb8] sm:$0xff]
  %v5554 = vld [vmem:[%s4 + $0xc0] sm:$0xff]
  %v5555 = vld [vmem:[%s4 + $0xc8] sm:$0xff]
  %v5556 = vld [vmem:[%s4 + $0xd0] sm:$0xff]
  %v5557 = vld [vmem:[%s4 + $0xd8] sm:$0xff]
  %v5558 = vld [vmem:[%s4 + $0xe0] sm:$0xff]
  %v5559 = vld [vmem:[%s4 + $0xe8] sm:$0xff]
  %v5560 = vld [vmem:[%s4 + $0xf0] sm:$0xff]
  %v5561 = vld [vmem:[%s4 + $0xf8] sm:$0xff]
  %v5562 = vld [vmem:[%s4 + $0x100] sm:$0xff]
  %v5563 = vld [vmem:[%s4 + $0x108] sm:$0xff]
  %v5564 = vld [vmem:[%s4 + $0x110] sm:$0xff]
  %v5565 = vld [vmem:[%s4 + $0x118] sm:$0xff]
  %v5566 = vld [vmem:[%s4 + $0x120] sm:$0xff]
  %v5567 = vld [vmem:[%s4 + $0x128] sm:$0xff]
  %v5568 = vld [vmem:[%s4 + $0x130] sm:$0xff]
  %v5569 = vld [vmem:[%s4 + $0x138] sm:$0xff]
  %v5570 = vld [vmem:[%s4 + $0x140] sm:$0xff]
  %v5571 = vld [vmem:[%s4 + $0x148] sm:$0xff]
  %v5572 = vld [vmem:[%s4 + $0x150] sm:$0xff]
  %v5573 = vld [vmem:[%s4 + $0x158] sm:$0xff]
  %v5574 = vld [vmem:[%s4 + $0x160] sm:$0xff]
  %v5575 = vld [vmem:[%s4 + $0x168] sm:$0xff]
  %v5576 = vld [vmem:[%s4 + $0x170] sm:$0xff]
  %v5577 = vld [vmem:[%s4 + $0x178] sm:$0xff]
  %v5578 = vld [vmem:[%s4 + $0x180] sm:$0xff]
  %v5579 = vld [vmem:[%s4 + $0x188] sm:$0xff]
  %v5580 = vld [vmem:[%s4 + $0x190] sm:$0xff]
  %v5581 = vld [vmem:[%s4 + $0x198] sm:$0xff]
  %v5582 = vld [vmem:[%s4 + $0x1a0] sm:$0xff]
  %v5583 = vld [vmem:[%s4 + $0x1a8] sm:$0xff]
  %v5584 = vld [vmem:[%s4 + $0x1b0] sm:$0xff]
  %v5585 = vld [vmem:[%s4 + $0x1b8] sm:$0xff]
  %v5586 = vld [vmem:[%s4 + $0x1c0] sm:$0xff]
  %v5587 = vld [vmem:[%s4 + $0x1c8] sm:$0xff]
  %v5588 = vld [vmem:[%s4 + $0x1d0] sm:$0xff]
  %v5589 = vld [vmem:[%s4 + $0x1d8] sm:$0xff]
  %v5590 = vld [vmem:[%s4 + $0x1e0] sm:$0xff]
  %v5591 = vld [vmem:[%s4 + $0x1e8] sm:$0xff]
  %v5592 = vld [vmem:[%s4 + $0x1f0] sm:$0xff]
  %v5593 = vld [vmem:[%s4 + $0x1f8] sm:$0xff]
  %v5658 = vunpack.c.l.b16 %v5530
  %v5659 = vunpack.c.h.b16 %v5530
  %v5660 = vunpack.c.l.b16 %v5531
  %v5661 = vunpack.c.h.b16 %v5531
  %v5662 = vunpack.c.l.b16 %v5532
  %v5663 = vunpack.c.h.b16 %v5532
  %v5664 = vunpack.c.l.b16 %v5533
  %v5665 = vunpack.c.h.b16 %v5533
  %v5666 = vunpack.c.l.b16 %v5534
  %v5667 = vunpack.c.h.b16 %v5534
  %v5668 = vunpack.c.l.b16 %v5535
  %v5669 = vunpack.c.h.b16 %v5535
  %v5670 = vunpack.c.l.b16 %v5536
  %v5671 = vunpack.c.h.b16 %v5536
  %v5672 = vunpack.c.l.b16 %v5537
  %v5673 = vunpack.c.h.b16 %v5537
  %v5674 = vunpack.c.l.b16 %v5538
  %v5675 = vunpack.c.h.b16 %v5538
  %v5676 = vunpack.c.l.b16 %v5539
  %v5677 = vunpack.c.h.b16 %v5539
  %v5678 = vunpack.c.l.b16 %v5540
  %v5679 = vunpack.c.h.b16 %v5540
  %v5680 = vunpack.c.l.b16 %v5541
  %v5681 = vunpack.c.h.b16 %v5541
  %v5682 = vunpack.c.l.b16 %v5542
  %v5683 = vunpack.c.h.b16 %v5542
  %v5684 = vunpack.c.l.b16 %v5543
  %v5685 = vunpack.c.h.b16 %v5543
  %v5686 = vunpack.c.l.b16 %v5544
  %v5687 = vunpack.c.h.b16 %v5544
  %v5688 = vunpack.c.l.b16 %v5545
  %v5689 = vunpack.c.h.b16 %v5545
  %v5690 = vunpack.c.l.b16 %v5546
  %v5691 = vunpack.c.h.b16 %v5546
  %v5692 = vunpack.c.l.b16 %v5547
  %v5693 = vunpack.c.h.b16 %v5547
  %v5694 = vunpack.c.l.b16 %v5548
  %v5695 = vunpack.c.h.b16 %v5548
  %v5696 = vunpack.c.l.b16 %v5549
  %v5697 = vunpack.c.h.b16 %v5549
  %v5698 = vunpack.c.l.b16 %v5550
  %v5699 = vunpack.c.h.b16 %v5550
  %v5700 = vunpack.c.l.b16 %v5551
  %v5701 = vunpack.c.h.b16 %v5551
  %v5702 = vunpack.c.l.b16 %v5552
  %v5703 = vunpack.c.h.b16 %v5552
  %v5704 = vunpack.c.l.b16 %v5553
  %v5705 = vunpack.c.h.b16 %v5553
  %v5706 = vunpack.c.l.b16 %v5554
  %v5707 = vunpack.c.h.b16 %v5554
  %v5708 = vunpack.c.l.b16 %v5555
  %v5709 = vunpack.c.h.b16 %v5555
  %v5710 = vunpack.c.l.b16 %v5556
  %v5711 = vunpack.c.h.b16 %v5556
  %v5712 = vunpack.c.l.b16 %v5557
  %v5713 = vunpack.c.h.b16 %v5557
  %v5714 = vunpack.c.l.b16 %v5558
  %v5715 = vunpack.c.h.b16 %v5558
  %v5716 = vunpack.c.l.b16 %v5559
  %v5717 = vunpack.c.h.b16 %v5559
  %v5718 = vunpack.c.l.b16 %v5560
  %v5719 = vunpack.c.h.b16 %v5560
  %v5720 = vunpack.c.l.b16 %v5561
  %v5721 = vunpack.c.h.b16 %v5561
  %v5722 = vunpack.c.l.b16 %v5562
  %v5723 = vunpack.c.h.b16 %v5562
  %v5724 = vunpack.c.l.b16 %v5563
  %v5725 = vunpack.c.h.b16 %v5563
  %v5726 = vunpack.c.l.b16 %v5564
  %v5727 = vunpack.c.h.b16 %v5564
  %v5728 = vunpack.c.l.b16 %v5565
  %v5729 = vunpack.c.h.b16 %v5565
  %v5730 = vunpack.c.l.b16 %v5566
  %v5731 = vunpack.c.h.b16 %v5566
  %v5732 = vunpack.c.l.b16 %v5567
  %v5733 = vunpack.c.h.b16 %v5567
  %v5734 = vunpack.c.l.b16 %v5568
  %v5735 = vunpack.c.h.b16 %v5568
  %v5736 = vunpack.c.l.b16 %v5569
  %v5737 = vunpack.c.h.b16 %v5569
  %v5738 = vunpack.c.l.b16 %v5570
  %v5739 = vunpack.c.h.b16 %v5570
  %v5740 = vunpack.c.l.b16 %v5571
  %v5741 = vunpack.c.h.b16 %v5571
  %v5742 = vunpack.c.l.b16 %v5572
  %v5743 = vunpack.c.h.b16 %v5572
  %v5744 = vunpack.c.l.b16 %v5573
  %v5745 = vunpack.c.h.b16 %v5573
  %v5746 = vunpack.c.l.b16 %v5574
  %v5747 = vunpack.c.h.b16 %v5574
  %v5748 = vunpack.c.l.b16 %v5575
  %v5749 = vunpack.c.h.b16 %v5575
  %v5750 = vunpack.c.l.b16 %v5576
  %v5751 = vunpack.c.h.b16 %v5576
  %v5752 = vunpack.c.l.b16 %v5577
  %v5753 = vunpack.c.h.b16 %v5577
  %v5754 = vunpack.c.l.b16 %v5578
  %v5755 = vunpack.c.h.b16 %v5578
  %v5756 = vunpack.c.l.b16 %v5579
  %v5757 = vunpack.c.h.b16 %v5579
  %v5758 = vunpack.c.l.b16 %v5580
  %v5759 = vunpack.c.h.b16 %v5580
  %v5760 = vunpack.c.l.b16 %v5581
  %v5761 = vunpack.c.h.b16 %v5581
  %v5762 = vunpack.c.l.b16 %v5582
  %v5763 = vunpack.c.h.b16 %v5582
  %v5764 = vunpack.c.l.b16 %v5583
  %v5765 = vunpack.c.h.b16 %v5583
  %v5766 = vunpack.c.l.b16 %v5584
  %v5767 = vunpack.c.h.b16 %v5584
  %v5768 = vunpack.c.l.b16 %v5585
  %v5769 = vunpack.c.h.b16 %v5585
  %v5770 = vunpack.c.l.b16 %v5586
  %v5771 = vunpack.c.h.b16 %v5586
  %v5772 = vunpack.c.l.b16 %v5587
  %v5773 = vunpack.c.h.b16 %v5587
  %v5774 = vunpack.c.l.b16 %v5588
  %v5775 = vunpack.c.h.b16 %v5588
  %v5776 = vunpack.c.l.b16 %v5589
  %v5777 = vunpack.c.h.b16 %v5589
  %v5778 = vunpack.c.l.b16 %v5590
  %v5779 = vunpack.c.h.b16 %v5590
  %v5780 = vunpack.c.l.b16 %v5591
  %v5781 = vunpack.c.h.b16 %v5591
  %v5782 = vunpack.c.l.b16 %v5592
  %v5783 = vunpack.c.h.b16 %v5592
  %v5784 = vunpack.c.l.b16 %v5593
  %v5785 = vunpack.c.h.b16 %v5593
  %v5786 = vpack.c.b16 %v5662, %v5658
  %v5787 = vpack.c.b16 %v5663, %v5659
  %v5788 = vpack.c.b16 %v5664, %v5660
  %v5789 = vpack.c.b16 %v5665, %v5661
  %v5790 = vpack.c.b16 %v5670, %v5666
  %v5791 = vpack.c.b16 %v5671, %v5667
  %v5792 = vpack.c.b16 %v5672, %v5668
  %v5793 = vpack.c.b16 %v5673, %v5669
  %v5794 = vpack.c.b16 %v5678, %v5674
  %v5795 = vpack.c.b16 %v5679, %v5675
  %v5796 = vpack.c.b16 %v5680, %v5676
  %v5797 = vpack.c.b16 %v5681, %v5677
  %v5798 = vpack.c.b16 %v5686, %v5682
  %v5799 = vpack.c.b16 %v5687, %v5683
  %v5800 = vpack.c.b16 %v5688, %v5684
  %v5801 = vpack.c.b16 %v5689, %v5685
  %v5802 = vpack.c.b16 %v5694, %v5690
  %v5803 = vpack.c.b16 %v5695, %v5691
  %v5804 = vpack.c.b16 %v5696, %v5692
  %v5805 = vpack.c.b16 %v5697, %v5693
  %v5806 = vpack.c.b16 %v5702, %v5698
  %v5807 = vpack.c.b16 %v5703, %v5699
  %v5808 = vpack.c.b16 %v5704, %v5700
  %v5809 = vpack.c.b16 %v5705, %v5701
  %v5810 = vpack.c.b16 %v5710, %v5706
  %v5811 = vpack.c.b16 %v5711, %v5707
  %v5812 = vpack.c.b16 %v5712, %v5708
  %v5813 = vpack.c.b16 %v5713, %v5709
  %v5814 = vpack.c.b16 %v5718, %v5714
  %v5815 = vpack.c.b16 %v5719, %v5715
  %v5816 = vpack.c.b16 %v5720, %v5716
  %v5817 = vpack.c.b16 %v5721, %v5717
  %v5818 = vpack.c.b16 %v5726, %v5722
  %v5819 = vpack.c.b16 %v5727, %v5723
  %v5820 = vpack.c.b16 %v5728, %v5724
  %v5821 = vpack.c.b16 %v5729, %v5725
  %v5822 = vpack.c.b16 %v5734, %v5730
  %v5823 = vpack.c.b16 %v5735, %v5731
  %v5824 = vpack.c.b16 %v5736, %v5732
  %v5825 = vpack.c.b16 %v5737, %v5733
  %v5826 = vpack.c.b16 %v5742, %v5738
  %v5827 = vpack.c.b16 %v5743, %v5739
  %v5828 = vpack.c.b16 %v5744, %v5740
  %v5829 = vpack.c.b16 %v5745, %v5741
  %v5830 = vpack.c.b16 %v5750, %v5746
  %v5831 = vpack.c.b16 %v5751, %v5747
  %v5832 = vpack.c.b16 %v5752, %v5748
  %v5833 = vpack.c.b16 %v5753, %v5749
  %v5834 = vpack.c.b16 %v5758, %v5754
  %v5835 = vpack.c.b16 %v5759, %v5755
  %v5836 = vpack.c.b16 %v5760, %v5756
  %v5837 = vpack.c.b16 %v5761, %v5757
  %v5838 = vpack.c.b16 %v5766, %v5762
  %v5839 = vpack.c.b16 %v5767, %v5763
  %v5840 = vpack.c.b16 %v5768, %v5764
  %v5841 = vpack.c.b16 %v5769, %v5765
  %v5842 = vpack.c.b16 %v5774, %v5770
  %v5843 = vpack.c.b16 %v5775, %v5771
  %v5844 = vpack.c.b16 %v5776, %v5772
  %v5845 = vpack.c.b16 %v5777, %v5773
  %v5846 = vpack.c.b16 %v5782, %v5778
  %v5847 = vpack.c.b16 %v5783, %v5779
  %v5848 = vpack.c.b16 %v5784, %v5780
  %v5849 = vpack.c.b16 %v5785, %v5781
  %5914 = vmatprep.subr.bf16.mxu0 %v5815
  %5915 = vmatpush1.bf16.msra.mxu0 %v5814
  %5916 = vmatprep.subr.bf16.mxu0 %v5811
  %5917 = vmatpush1.bf16.msra.mxu0 %v5810
  %5918 = vmatprep.subr.bf16.mxu0 %v5807
  %5919 = vmatpush1.bf16.msra.mxu0 %v5806
  %5920 = vmatprep.subr.bf16.mxu0 %v5803
  %5921 = vmatpush1.bf16.msra.mxu0 %v5802
  %5922 = vmatprep.subr.bf16.mxu0 %v5799
  %5923 = vmatpush1.bf16.msra.mxu0 %v5798
  %5924 = vmatprep.subr.bf16.mxu0 %v5795
  %5925 = vmatpush1.bf16.msra.mxu0 %v5794
  %5926 = vmatprep.subr.bf16.mxu0 %v5791
  %5927 = vmatpush1.bf16.msra.mxu0 %v5790
  %5928 = vmatprep.subr.bf16.mxu0 %v5787
  %5929 = vmatpush1.bf16.msra.mxu0 %v5786
  %5930 = vmatprep.subr.bf16.mxu0 %v5847
  %5931 = vmatpush2.bf16.msra.mxu0 %v5846
  %5932 = vmatprep.subr.bf16.mxu0 %v5843
  %5933 = vmatpush2.bf16.msra.mxu0 %v5842
  %5934 = vmatprep.subr.bf16.mxu0 %v5839
  %5935 = vmatpush2.bf16.msra.mxu0 %v5838
  %5936 = vmatprep.subr.bf16.mxu0 %v5835
  %5937 = vmatpush2.bf16.msra.mxu0 %v5834
  %5938 = vmatprep.subr.bf16.mxu0 %v5831
  %5939 = vmatpush2.bf16.msra.mxu0 %v5830
  %5940 = vmatprep.subr.bf16.mxu0 %v5827
  %5941 = vmatpush2.bf16.msra.mxu0 %v5826
  %5942 = vmatprep.subr.bf16.mxu0 %v5823
  %5943 = vmatpush2.bf16.msra.mxu0 %v5822
  %5944 = vmatprep.subr.bf16.mxu0 %v5819
  %5945 = vmatpush2.bf16.msra.mxu0 %v5818
  %5946 = vmatprep.mubr.bf16.mxu0 %v5529
  %5947 = vmatmul.mubr.bf16.gmra.mxu0 %v5528
  %v5948 = vpop.f32.mrf.mxu0
  %v5949 = vadd.f32 %v802, %v5948
  %v5950 = vpop.f32.mrf.mxu0
  %v5951 = vadd.f32 %v806, %v5950
  %v5952 = vpop.f32.mrf.mxu0
  %v5953 = vpop.f32.mrf.mxu0
  %5954 = vdwg.mxu0
  %5955 = vmatprep.subr.bf16.mxu0 %v5817
  %5956 = vmatpush1.bf16.msra.mxu0 %v5816
  %5957 = vmatprep.subr.bf16.mxu0 %v5813
  %5958 = vmatpush1.bf16.msra.mxu0 %v5812
  %5959 = vmatprep.subr.bf16.mxu0 %v5809
  %5960 = vmatpush1.bf16.msra.mxu0 %v5808
  %5961 = vmatprep.subr.bf16.mxu0 %v5805
  %5962 = vmatpush1.bf16.msra.mxu0 %v5804
  %5963 = vmatprep.subr.bf16.mxu0 %v5801
  %5964 = vmatpush1.bf16.msra.mxu0 %v5800
  %5965 = vmatprep.subr.bf16.mxu0 %v5797
  %5966 = vmatpush1.bf16.msra.mxu0 %v5796
  %5967 = vmatprep.subr.bf16.mxu0 %v5793
  %5968 = vmatpush1.bf16.msra.mxu0 %v5792
  %5969 = vmatprep.subr.bf16.mxu0 %v5789
  %5970 = vmatpush1.bf16.msra.mxu0 %v5788
  %5971 = vmatprep.subr.bf16.mxu0 %v5849
  %5972 = vmatpush2.bf16.msra.mxu0 %v5848
  %5973 = vmatprep.subr.bf16.mxu0 %v5845
  %5974 = vmatpush2.bf16.msra.mxu0 %v5844
  %5975 = vmatprep.subr.bf16.mxu0 %v5841
  %5976 = vmatpush2.bf16.msra.mxu0 %v5840
  %5977 = vmatprep.subr.bf16.mxu0 %v5837
  %5978 = vmatpush2.bf16.msra.mxu0 %v5836
  %5979 = vmatprep.subr.bf16.mxu0 %v5833
  %5980 = vmatpush2.bf16.msra.mxu0 %v5832
  %5981 = vmatprep.subr.bf16.mxu0 %v5829
  %5982 = vmatpush2.bf16.msra.mxu0 %v5828
  %5983 = vmatprep.subr.bf16.mxu0 %v5825
  %5984 = vmatpush2.bf16.msra.mxu0 %v5824
  %5985 = vmatprep.subr.bf16.mxu0 %v5821
  %5986 = vmatpush2.bf16.msra.mxu0 %v5820
  %5987 = vmatprep.mubr.bf16.mxu0 %v5529
  %5988 = vmatmul.mubr.bf16.gmra.mxu0 %v5528
  %v5989 = vpop.f32.mrf.mxu0
  %v5990 = vadd.f32 %v810, %v5989
  %v5991 = vpop.f32.mrf.mxu0
  %v5992 = vadd.f32 %v814, %v5991
  %v5993 = vpop.f32.mrf.mxu0
  %v5994 = vpop.f32.mrf.mxu0
  %5995 = vdwg.mxu0
  %v5996 = vxor.u32 %v5949, 2147483648
  %v5997 = vmul.f32 %v5996, 1.442695
  %v5998 = vpow.pop %v5997
  %v5999 = vadd.f32 %v5998, 1.0
  %v6000 = vrcp.pop %v5999
  %v6001 = vmul.f32 1.0, %v6000
  %v6002 = vxor.u32 %v5951, 2147483648
  %v6003 = vmul.f32 %v6002, 1.442695
  %v6004 = vpow.pop %v6003
  %v6005 = vadd.f32 %v6004, 1.0
  %v6006 = vrcp.pop %v6005
  %v6007 = vmul.f32 1.0, %v6006
  %v6008 = vtanh.pop %v5990
  %v6009 = vxor.u32 %v5992, 2147483648
  %v6010 = vmul.f32 %v6009, 1.442695
  %v6011 = vpow.pop %v6010
  %v6012 = vadd.f32 %v6011, 1.0
  %v6013 = vrcp.pop %v6012
  %v6014 = vmul.f32 1.0, %v6013
  %v6015 = vmul.f32 %v6007, %v5221
  %v6016 = vmul.f32 %v6001, %v6008
  %v6017 = vadd.f32 %v6015, %v6016
  %v6018 = vtanh.pop %v6017
  %v6019 = vmul.f32 %v6014, %v6018
  %s6020 = scalar_lea.vmem %s6, 48
  %6021 = vst [vmem:[%s6020] sm:$0xff] %v6019
  %v6022 = vld [vmem:[%s2] sm:$0xff]
  %v6023 = vld [vmem:[%s2 + $0x8] sm:$0xff]
  %v6024 = vld [vmem:[%s2 + $0x10] sm:$0xff]
  %v6025 = vld [vmem:[%s2 + $0x18] sm:$0xff]
  %v6026 = vld [vmem:[%s2 + $0x20] sm:$0xff]
  %v6027 = vld [vmem:[%s2 + $0x28] sm:$0xff]
  %v6028 = vld [vmem:[%s2 + $0x30] sm:$0xff]
  %v6029 = vld [vmem:[%s2 + $0x38] sm:$0xff]
  %v6030 = vld [vmem:[%s2 + $0x40] sm:$0xff]
  %v6031 = vld [vmem:[%s2 + $0x48] sm:$0xff]
  %v6032 = vld [vmem:[%s2 + $0x50] sm:$0xff]
  %v6033 = vld [vmem:[%s2 + $0x58] sm:$0xff]
  %v6034 = vld [vmem:[%s2 + $0x60] sm:$0xff]
  %v6035 = vld [vmem:[%s2 + $0x68] sm:$0xff]
  %v6036 = vld [vmem:[%s2 + $0x70] sm:$0xff]
  %v6037 = vld [vmem:[%s2 + $0x78] sm:$0xff]
  %v6038 = vld [vmem:[%s2 + $0x80] sm:$0xff]
  %v6039 = vld [vmem:[%s2 + $0x88] sm:$0xff]
  %v6040 = vld [vmem:[%s2 + $0x90] sm:$0xff]
  %v6041 = vld [vmem:[%s2 + $0x98] sm:$0xff]
  %v6042 = vld [vmem:[%s2 + $0xa0] sm:$0xff]
  %v6043 = vld [vmem:[%s2 + $0xa8] sm:$0xff]
  %v6044 = vld [vmem:[%s2 + $0xb0] sm:$0xff]
  %v6045 = vld [vmem:[%s2 + $0xb8] sm:$0xff]
  %v6046 = vld [vmem:[%s2 + $0xc0] sm:$0xff]
  %v6047 = vld [vmem:[%s2 + $0xc8] sm:$0xff]
  %v6048 = vld [vmem:[%s2 + $0xd0] sm:$0xff]
  %v6049 = vld [vmem:[%s2 + $0xd8] sm:$0xff]
  %v6050 = vld [vmem:[%s2 + $0xe0] sm:$0xff]
  %v6051 = vld [vmem:[%s2 + $0xe8] sm:$0xff]
  %v6052 = vld [vmem:[%s2 + $0xf0] sm:$0xff]
  %v6053 = vld [vmem:[%s2 + $0xf8] sm:$0xff]
  %v6086 = vunpack.c.l.b16 %v6022
  %v6087 = vunpack.c.h.b16 %v6022
  %v6088 = vunpack.c.l.b16 %v6023
  %v6089 = vunpack.c.h.b16 %v6023
  %v6090 = vunpack.c.l.b16 %v6024
  %v6091 = vunpack.c.h.b16 %v6024
  %v6092 = vunpack.c.l.b16 %v6025
  %v6093 = vunpack.c.h.b16 %v6025
  %v6094 = vunpack.c.l.b16 %v6026
  %v6095 = vunpack.c.h.b16 %v6026
  %v6096 = vunpack.c.l.b16 %v6027
  %v6097 = vunpack.c.h.b16 %v6027
  %v6098 = vunpack.c.l.b16 %v6028
  %v6099 = vunpack.c.h.b16 %v6028
  %v6100 = vunpack.c.l.b16 %v6029
  %v6101 = vunpack.c.h.b16 %v6029
  %v6102 = vunpack.c.l.b16 %v6030
  %v6103 = vunpack.c.h.b16 %v6030
  %v6104 = vunpack.c.l.b16 %v6031
  %v6105 = vunpack.c.h.b16 %v6031
  %v6106 = vunpack.c.l.b16 %v6032
  %v6107 = vunpack.c.h.b16 %v6032
  %v6108 = vunpack.c.l.b16 %v6033
  %v6109 = vunpack.c.h.b16 %v6033
  %v6110 = vunpack.c.l.b16 %v6034
  %v6111 = vunpack.c.h.b16 %v6034
  %v6112 = vunpack.c.l.b16 %v6035
  %v6113 = vunpack.c.h.b16 %v6035
  %v6114 = vunpack.c.l.b16 %v6036
  %v6115 = vunpack.c.h.b16 %v6036
  %v6116 = vunpack.c.l.b16 %v6037
  %v6117 = vunpack.c.h.b16 %v6037
  %v6118 = vunpack.c.l.b16 %v6038
  %v6119 = vunpack.c.h.b16 %v6038
  %v6120 = vunpack.c.l.b16 %v6039
  %v6121 = vunpack.c.h.b16 %v6039
  %v6122 = vunpack.c.l.b16 %v6040
  %v6123 = vunpack.c.h.b16 %v6040
  %v6124 = vunpack.c.l.b16 %v6041
  %v6125 = vunpack.c.h.b16 %v6041
  %v6126 = vunpack.c.l.b16 %v6042
  %v6127 = vunpack.c.h.b16 %v6042
  %v6128 = vunpack.c.l.b16 %v6043
  %v6129 = vunpack.c.h.b16 %v6043
  %v6130 = vunpack.c.l.b16 %v6044
  %v6131 = vunpack.c.h.b16 %v6044
  %v6132 = vunpack.c.l.b16 %v6045
  %v6133 = vunpack.c.h.b16 %v6045
  %v6134 = vunpack.c.l.b16 %v6046
  %v6135 = vunpack.c.h.b16 %v6046
  %v6136 = vunpack.c.l.b16 %v6047
  %v6137 = vunpack.c.h.b16 %v6047
  %v6138 = vunpack.c.l.b16 %v6048
  %v6139 = vunpack.c.h.b16 %v6048
  %v6140 = vunpack.c.l.b16 %v6049
  %v6141 = vunpack.c.h.b16 %v6049
  %v6142 = vunpack.c.l.b16 %v6050
  %v6143 = vunpack.c.h.b16 %v6050
  %v6144 = vunpack.c.l.b16 %v6051
  %v6145 = vunpack.c.h.b16 %v6051
  %v6146 = vunpack.c.l.b16 %v6052
  %v6147 = vunpack.c.h.b16 %v6052
  %v6148 = vunpack.c.l.b16 %v6053
  %v6149 = vunpack.c.h.b16 %v6053
  %v6150 = vpack.c.b16 %v6090, %v6086
  %v6151 = vpack.c.b16 %v6091, %v6087
  %v6152 = vpack.c.b16 %v6092, %v6088
  %v6153 = vpack.c.b16 %v6093, %v6089
  %v6154 = vpack.c.b16 %v6098, %v6094
  %v6155 = vpack.c.b16 %v6099, %v6095
  %v6156 = vpack.c.b16 %v6100, %v6096
  %v6157 = vpack.c.b16 %v6101, %v6097
  %v6158 = vpack.c.b16 %v6106, %v6102
  %v6159 = vpack.c.b16 %v6107, %v6103
  %v6160 = vpack.c.b16 %v6108, %v6104
  %v6161 = vpack.c.b16 %v6109, %v6105
  %v6162 = vpack.c.b16 %v6114, %v6110
  %v6163 = vpack.c.b16 %v6115, %v6111
  %v6164 = vpack.c.b16 %v6116, %v6112
  %v6165 = vpack.c.b16 %v6117, %v6113
  %v6166 = vpack.c.b16 %v6122, %v6118
  %v6167 = vpack.c.b16 %v6123, %v6119
  %v6168 = vpack.c.b16 %v6124, %v6120
  %v6169 = vpack.c.b16 %v6125, %v6121
  %v6170 = vpack.c.b16 %v6130, %v6126
  %v6171 = vpack.c.b16 %v6131, %v6127
  %v6172 = vpack.c.b16 %v6132, %v6128
  %v6173 = vpack.c.b16 %v6133, %v6129
  %v6174 = vpack.c.b16 %v6138, %v6134
  %v6175 = vpack.c.b16 %v6139, %v6135
  %v6176 = vpack.c.b16 %v6140, %v6136
  %v6177 = vpack.c.b16 %v6141, %v6137
  %v6178 = vpack.c.b16 %v6146, %v6142
  %v6179 = vpack.c.b16 %v6147, %v6143
  %v6180 = vpack.c.b16 %v6148, %v6144
  %v6181 = vpack.c.b16 %v6149, %v6145
  %6214 = vmatprep.subr.bf16.mxu0 %v6179
  %6215 = vmatpush1.bf16.msra.mxu0 %v6178
  %6216 = vmatprep.subr.bf16.mxu0 %v6175
  %6217 = vmatpush1.bf16.msra.mxu0 %v6174
  %6218 = vmatprep.subr.bf16.mxu0 %v6171
  %6219 = vmatpush1.bf16.msra.mxu0 %v6170
  %6220 = vmatprep.subr.bf16.mxu0 %v6167
  %6221 = vmatpush1.bf16.msra.mxu0 %v6166
  %6222 = vmatprep.subr.bf16.mxu0 %v6163
  %6223 = vmatpush1.bf16.msra.mxu0 %v6162
  %6224 = vmatprep.subr.bf16.mxu0 %v6159
  %6225 = vmatpush1.bf16.msra.mxu0 %v6158
  %6226 = vmatprep.subr.bf16.mxu0 %v6155
  %6227 = vmatpush1.bf16.msra.mxu0 %v6154
  %6228 = vmatprep.subr.bf16.mxu0 %v6151
  %6229 = vmatpush1.bf16.msra.mxu0 %v6150
  %6230 = vmatprep.subr.bf16.mxu0 0
  %6231 = vmatpush2.bf16.msra.mxu0 0
  %6232 = vmatprep.subr.bf16.mxu0 0
  %6233 = vmatpush2.bf16.msra.mxu0 0
  %6234 = vmatprep.subr.bf16.mxu0 0
  %6235 = vmatpush2.bf16.msra.mxu0 0
  %6236 = vmatprep.subr.bf16.mxu0 0
  %6237 = vmatpush2.bf16.msra.mxu0 0
  %6238 = vmatprep.subr.bf16.mxu0 0
  %6239 = vmatpush2.bf16.msra.mxu0 0
  %6240 = vmatprep.subr.bf16.mxu0 0
  %6241 = vmatpush2.bf16.msra.mxu0 0
  %6242 = vmatprep.subr.bf16.mxu0 0
  %6243 = vmatpush2.bf16.msra.mxu0 0
  %6244 = vmatprep.subr.bf16.mxu0 0
  %6245 = vmatpush2.bf16.msra.mxu0 0
  %6246 = vmatprep.mubr.bf16.mxu0 0
  %6247 = vmatmul.mubr.bf16.gmra.mxu0 %v5528
  %v6248 = vpop.f32.mrf.mxu0
  %v6249 = vadd.f32 0.0, %v6248
  %v6250 = vpop.f32.mrf.mxu0
  %v6251 = vadd.f32 0.0, %v6250
  %v6252 = vpop.f32.mrf.mxu0
  %v6253 = vpop.f32.mrf.mxu0
  %6254 = vdwg.mxu0
  %6255 = vmatprep.subr.bf16.mxu0 %v6181
  %6256 = vmatpush1.bf16.msra.mxu0 %v6180
  %6257 = vmatprep.subr.bf16.mxu0 %v6177
  %6258 = vmatpush1.bf16.msra.mxu0 %v6176
  %6259 = vmatprep.subr.bf16.mxu0 %v6173
  %6260 = vmatpush1.bf16.msra.mxu0 %v6172
  %6261 = vmatprep.subr.bf16.mxu0 %v6169
  %6262 = vmatpush1.bf16.msra.mxu0 %v6168
  %6263 = vmatprep.subr.bf16.mxu0 %v6165
  %6264 = vmatpush1.bf16.msra.mxu0 %v6164
  %6265 = vmatprep.subr.bf16.mxu0 %v6161
  %6266 = vmatpush1.bf16.msra.mxu0 %v6160
  %6267 = vmatprep.subr.bf16.mxu0 %v6157
  %6268 = vmatpush1.bf16.msra.mxu0 %v6156
  %6269 = vmatprep.subr.bf16.mxu0 %v6153
  %6270 = vmatpush1.bf16.msra.mxu0 %v6152
  %6271 = vmatprep.subr.bf16.mxu0 0
  %6272 = vmatpush2.bf16.msra.mxu0 0
  %6273 = vmatprep.subr.bf16.mxu0 0
  %6274 = vmatpush2.bf16.msra.mxu0 0
  %6275 = vmatprep.subr.bf16.mxu0 0
  %6276 = vmatpush2.bf16.msra.mxu0 0
  %6277 = vmatprep.subr.bf16.mxu0 0
  %6278 = vmatpush2.bf16.msra.mxu0 0
  %6279 = vmatprep.subr.bf16.mxu0 0
  %6280 = vmatpush2.bf16.msra.mxu0 0
  %6281 = vmatprep.subr.bf16.mxu0 0
  %6282 = vmatpush2.bf16.msra.mxu0 0
  %6283 = vmatprep.subr.bf16.mxu0 0
  %6284 = vmatpush2.bf16.msra.mxu0 0
  %6285 = vmatprep.subr.bf16.mxu0 0
  %6286 = vmatpush2.bf16.msra.mxu0 0
  %6287 = vmatprep.mubr.bf16.mxu0 0
  %6288 = vmatmul.mubr.bf16.gmra.mxu0 %v5528
  %v6289 = vpop.f32.mrf.mxu0
  %v6290 = vadd.f32 0.0, %v6289
  %v6291 = vpop.f32.mrf.mxu0
  %v6292 = vadd.f32 0.0, %v6291
  %v6293 = vpop.f32.mrf.mxu0
  %v6294 = vpop.f32.mrf.mxu0
  %6295 = vdwg.mxu0
  %v6296 = vadd.f32 %v347, %v6249
  %v6297 = vadd.f32 %v349, %v6251
  %v6298 = vadd.f32 %v420, %v6290
  %v6299 = vadd.f32 %v422, %v6292
  %v6300 = vxor.u32 %v6296, 2147483648
  %v6301 = vmul.f32 %v6300, 1.442695
  %v6302 = vpow.pop %v6301
  %v6303 = vadd.f32 %v6302, 1.0
  %v6304 = vrcp.pop %v6303
  %v6305 = vmul.f32 1.0, %v6304
  %v6306 = vxor.u32 %v6297, 2147483648
  %v6307 = vmul.f32 %v6306, 1.442695
  %v6308 = vpow.pop %v6307
  %v6309 = vadd.f32 %v6308, 1.0
  %v6310 = vrcp.pop %v6309
  %v6311 = vmul.f32 1.0, %v6310
  %v6312 = vtanh.pop %v6298
  %v6313 = vxor.u32 %v6299, 2147483648
  %v6314 = vmul.f32 %v6313, 1.442695
  %v6315 = vpow.pop %v6314
  %v6316 = vadd.f32 %v6315, 1.0
  %v6317 = vrcp.pop %v6316
  %v6318 = vmul.f32 1.0, %v6317
  %v6319 = vmul.f32 %v6311, %v5525
  %v6320 = vmul.f32 %v6305, %v6312
  %v6321 = vadd.f32 %v6319, %v6320
  %v6322 = vtanh.pop %v6321
  %v6323 = vmul.f32 %v6318, %v6322
  %v6324 = vpack.c.bf16 %v6323, %v6323
  %v6325 = vpack.c.bf16 %v6019, %v6019
  %v6326 = vld [vmem:[%s4] sm:$0xff]
  %v6327 = vld [vmem:[%s4 + $0x8] sm:$0xff]
  %v6328 = vld [vmem:[%s4 + $0x10] sm:$0xff]
  %v6329 = vld [vmem:[%s4 + $0x18] sm:$0xff]
  %v6330 = vld [vmem:[%s4 + $0x20] sm:$0xff]
  %v6331 = vld [vmem:[%s4 + $0x28] sm:$0xff]
  %v6332 = vld [vmem:[%s4 + $0x30] sm:$0xff]
  %v6333 = vld [vmem:[%s4 + $0x38] sm:$0xff]
  %v6334 = vld [vmem:[%s4 + $0x40] sm:$0xff]
  %v6335 = vld [vmem:[%s4 + $0x48] sm:$0xff]
  %v6336 = vld [vmem:[%s4 + $0x50] sm:$0xff]
  %v6337 = vld [vmem:[%s4 + $0x58] sm:$0xff]
  %v6338 = vld [vmem:[%s4 + $0x60] sm:$0xff]
  %v6339 = vld [vmem:[%s4 + $0x68] sm:$0xff]
  %v6340 = vld [vmem:[%s4 + $0x70] sm:$0xff]
  %v6341 = vld [vmem:[%s4 + $0x78] sm:$0xff]
  %v6342 = vld [vmem:[%s4 + $0x80] sm:$0xff]
  %v6343 = vld [vmem:[%s4 + $0x88] sm:$0xff]
  %v6344 = vld [vmem:[%s4 + $0x90] sm:$0xff]
  %v6345 = vld [vmem:[%s4 + $0x98] sm:$0xff]
  %v6346 = vld [vmem:[%s4 + $0xa0] sm:$0xff]
  %v6347 = vld [vmem:[%s4 + $0xa8] sm:$0xff]
  %v6348 = vld [vmem:[%s4 + $0xb0] sm:$0xff]
  %v6349 = vld [vmem:[%s4 + $0xb8] sm:$0xff]
  %v6350 = vld [vmem:[%s4 + $0xc0] sm:$0xff]
  %v6351 = vld [vmem:[%s4 + $0xc8] sm:$0xff]
  %v6352 = vld [vmem:[%s4 + $0xd0] sm:$0xff]
  %v6353 = vld [vmem:[%s4 + $0xd8] sm:$0xff]
  %v6354 = vld [vmem:[%s4 + $0xe0] sm:$0xff]
  %v6355 = vld [vmem:[%s4 + $0xe8] sm:$0xff]
  %v6356 = vld [vmem:[%s4 + $0xf0] sm:$0xff]
  %v6357 = vld [vmem:[%s4 + $0xf8] sm:$0xff]
  %v6358 = vld [vmem:[%s4 + $0x100] sm:$0xff]
  %v6359 = vld [vmem:[%s4 + $0x108] sm:$0xff]
  %v6360 = vld [vmem:[%s4 + $0x110] sm:$0xff]
  %v6361 = vld [vmem:[%s4 + $0x118] sm:$0xff]
  %v6362 = vld [vmem:[%s4 + $0x120] sm:$0xff]
  %v6363 = vld [vmem:[%s4 + $0x128] sm:$0xff]
  %v6364 = vld [vmem:[%s4 + $0x130] sm:$0xff]
  %v6365 = vld [vmem:[%s4 + $0x138] sm:$0xff]
  %v6366 = vld [vmem:[%s4 + $0x140] sm:$0xff]
  %v6367 = vld [vmem:[%s4 + $0x148] sm:$0xff]
  %v6368 = vld [vmem:[%s4 + $0x150] sm:$0xff]
  %v6369 = vld [vmem:[%s4 + $0x158] sm:$0xff]
  %v6370 = vld [vmem:[%s4 + $0x160] sm:$0xff]
  %v6371 = vld [vmem:[%s4 + $0x168] sm:$0xff]
  %v6372 = vld [vmem:[%s4 + $0x170] sm:$0xff]
  %v6373 = vld [vmem:[%s4 + $0x178] sm:$0xff]
  %v6374 = vld [vmem:[%s4 + $0x180] sm:$0xff]
  %v6375 = vld [vmem:[%s4 + $0x188] sm:$0xff]
  %v6376 = vld [vmem:[%s4 + $0x190] sm:$0xff]
  %v6377 = vld [vmem:[%s4 + $0x198] sm:$0xff]
  %v6378 = vld [vmem:[%s4 + $0x1a0] sm:$0xff]
  %v6379 = vld [vmem:[%s4 + $0x1a8] sm:$0xff]
  %v6380 = vld [vmem:[%s4 + $0x1b0] sm:$0xff]
  %v6381 = vld [vmem:[%s4 + $0x1b8] sm:$0xff]
  %v6382 = vld [vmem:[%s4 + $0x1c0] sm:$0xff]
  %v6383 = vld [vmem:[%s4 + $0x1c8] sm:$0xff]
  %v6384 = vld [vmem:[%s4 + $0x1d0] sm:$0xff]
  %v6385 = vld [vmem:[%s4 + $0x1d8] sm:$0xff]
  %v6386 = vld [vmem:[%s4 + $0x1e0] sm:$0xff]
  %v6387 = vld [vmem:[%s4 + $0x1e8] sm:$0xff]
  %v6388 = vld [vmem:[%s4 + $0x1f0] sm:$0xff]
  %v6389 = vld [vmem:[%s4 + $0x1f8] sm:$0xff]
  %v6454 = vunpack.c.l.b16 %v6326
  %v6455 = vunpack.c.h.b16 %v6326
  %v6456 = vunpack.c.l.b16 %v6327
  %v6457 = vunpack.c.h.b16 %v6327
  %v6458 = vunpack.c.l.b16 %v6328
  %v6459 = vunpack.c.h.b16 %v6328
  %v6460 = vunpack.c.l.b16 %v6329
  %v6461 = vunpack.c.h.b16 %v6329
  %v6462 = vunpack.c.l.b16 %v6330
  %v6463 = vunpack.c.h.b16 %v6330
  %v6464 = vunpack.c.l.b16 %v6331
  %v6465 = vunpack.c.h.b16 %v6331
  %v6466 = vunpack.c.l.b16 %v6332
  %v6467 = vunpack.c.h.b16 %v6332
  %v6468 = vunpack.c.l.b16 %v6333
  %v6469 = vunpack.c.h.b16 %v6333
  %v6470 = vunpack.c.l.b16 %v6334
  %v6471 = vunpack.c.h.b16 %v6334
  %v6472 = vunpack.c.l.b16 %v6335
  %v6473 = vunpack.c.h.b16 %v6335
  %v6474 = vunpack.c.l.b16 %v6336
  %v6475 = vunpack.c.h.b16 %v6336
  %v6476 = vunpack.c.l.b16 %v6337
  %v6477 = vunpack.c.h.b16 %v6337
  %v6478 = vunpack.c.l.b16 %v6338
  %v6479 = vunpack.c.h.b16 %v6338
  %v6480 = vunpack.c.l.b16 %v6339
  %v6481 = vunpack.c.h.b16 %v6339
  %v6482 = vunpack.c.l.b16 %v6340
  %v6483 = vunpack.c.h.b16 %v6340
  %v6484 = vunpack.c.l.b16 %v6341
  %v6485 = vunpack.c.h.b16 %v6341
  %v6486 = vunpack.c.l.b16 %v6342
  %v6487 = vunpack.c.h.b16 %v6342
  %v6488 = vunpack.c.l.b16 %v6343
  %v6489 = vunpack.c.h.b16 %v6343
  %v6490 = vunpack.c.l.b16 %v6344
  %v6491 = vunpack.c.h.b16 %v6344
  %v6492 = vunpack.c.l.b16 %v6345
  %v6493 = vunpack.c.h.b16 %v6345
  %v6494 = vunpack.c.l.b16 %v6346
  %v6495 = vunpack.c.h.b16 %v6346
  %v6496 = vunpack.c.l.b16 %v6347
  %v6497 = vunpack.c.h.b16 %v6347
  %v6498 = vunpack.c.l.b16 %v6348
  %v6499 = vunpack.c.h.b16 %v6348
  %v6500 = vunpack.c.l.b16 %v6349
  %v6501 = vunpack.c.h.b16 %v6349
  %v6502 = vunpack.c.l.b16 %v6350
  %v6503 = vunpack.c.h.b16 %v6350
  %v6504 = vunpack.c.l.b16 %v6351
  %v6505 = vunpack.c.h.b16 %v6351
  %v6506 = vunpack.c.l.b16 %v6352
  %v6507 = vunpack.c.h.b16 %v6352
  %v6508 = vunpack.c.l.b16 %v6353
  %v6509 = vunpack.c.h.b16 %v6353
  %v6510 = vunpack.c.l.b16 %v6354
  %v6511 = vunpack.c.h.b16 %v6354
  %v6512 = vunpack.c.l.b16 %v6355
  %v6513 = vunpack.c.h.b16 %v6355
  %v6514 = vunpack.c.l.b16 %v6356
  %v6515 = vunpack.c.h.b16 %v6356
  %v6516 = vunpack.c.l.b16 %v6357
  %v6517 = vunpack.c.h.b16 %v6357
  %v6518 = vunpack.c.l.b16 %v6358
  %v6519 = vunpack.c.h.b16 %v6358
  %v6520 = vunpack.c.l.b16 %v6359
  %v6521 = vunpack.c.h.b16 %v6359
  %v6522 = vunpack.c.l.b16 %v6360
  %v6523 = vunpack.c.h.b16 %v6360
  %v6524 = vunpack.c.l.b16 %v6361
  %v6525 = vunpack.c.h.b16 %v6361
  %v6526 = vunpack.c.l.b16 %v6362
  %v6527 = vunpack.c.h.b16 %v6362
  %v6528 = vunpack.c.l.b16 %v6363
  %v6529 = vunpack.c.h.b16 %v6363
  %v6530 = vunpack.c.l.b16 %v6364
  %v6531 = vunpack.c.h.b16 %v6364
  %v6532 = vunpack.c.l.b16 %v6365
  %v6533 = vunpack.c.h.b16 %v6365
  %v6534 = vunpack.c.l.b16 %v6366
  %v6535 = vunpack.c.h.b16 %v6366
  %v6536 = vunpack.c.l.b16 %v6367
  %v6537 = vunpack.c.h.b16 %v6367
  %v6538 = vunpack.c.l.b16 %v6368
  %v6539 = vunpack.c.h.b16 %v6368
  %v6540 = vunpack.c.l.b16 %v6369
  %v6541 = vunpack.c.h.b16 %v6369
  %v6542 = vunpack.c.l.b16 %v6370
  %v6543 = vunpack.c.h.b16 %v6370
  %v6544 = vunpack.c.l.b16 %v6371
  %v6545 = vunpack.c.h.b16 %v6371
  %v6546 = vunpack.c.l.b16 %v6372
  %v6547 = vunpack.c.h.b16 %v6372
  %v6548 = vunpack.c.l.b16 %v6373
  %v6549 = vunpack.c.h.b16 %v6373
  %v6550 = vunpack.c.l.b16 %v6374
  %v6551 = vunpack.c.h.b16 %v6374
  %v6552 = vunpack.c.l.b16 %v6375
  %v6553 = vunpack.c.h.b16 %v6375
  %v6554 = vunpack.c.l.b16 %v6376
  %v6555 = vunpack.c.h.b16 %v6376
  %v6556 = vunpack.c.l.b16 %v6377
  %v6557 = vunpack.c.h.b16 %v6377
  %v6558 = vunpack.c.l.b16 %v6378
  %v6559 = vunpack.c.h.b16 %v6378
  %v6560 = vunpack.c.l.b16 %v6379
  %v6561 = vunpack.c.h.b16 %v6379
  %v6562 = vunpack.c.l.b16 %v6380
  %v6563 = vunpack.c.h.b16 %v6380
  %v6564 = vunpack.c.l.b16 %v6381
  %v6565 = vunpack.c.h.b16 %v6381
  %v6566 = vunpack.c.l.b16 %v6382
  %v6567 = vunpack.c.h.b16 %v6382
  %v6568 = vunpack.c.l.b16 %v6383
  %v6569 = vunpack.c.h.b16 %v6383
  %v6570 = vunpack.c.l.b16 %v6384
  %v6571 = vunpack.c.h.b16 %v6384
  %v6572 = vunpack.c.l.b16 %v6385
  %v6573 = vunpack.c.h.b16 %v6385
  %v6574 = vunpack.c.l.b16 %v6386
  %v6575 = vunpack.c.h.b16 %v6386
  %v6576 = vunpack.c.l.b16 %v6387
  %v6577 = vunpack.c.h.b16 %v6387
  %v6578 = vunpack.c.l.b16 %v6388
  %v6579 = vunpack.c.h.b16 %v6388
  %v6580 = vunpack.c.l.b16 %v6389
  %v6581 = vunpack.c.h.b16 %v6389
  %v6582 = vpack.c.b16 %v6458, %v6454
  %v6583 = vpack.c.b16 %v6459, %v6455
  %v6584 = vpack.c.b16 %v6460, %v6456
  %v6585 = vpack.c.b16 %v6461, %v6457
  %v6586 = vpack.c.b16 %v6466, %v6462
  %v6587 = vpack.c.b16 %v6467, %v6463
  %v6588 = vpack.c.b16 %v6468, %v6464
  %v6589 = vpack.c.b16 %v6469, %v6465
  %v6590 = vpack.c.b16 %v6474, %v6470
  %v6591 = vpack.c.b16 %v6475, %v6471
  %v6592 = vpack.c.b16 %v6476, %v6472
  %v6593 = vpack.c.b16 %v6477, %v6473
  %v6594 = vpack.c.b16 %v6482, %v6478
  %v6595 = vpack.c.b16 %v6483, %v6479
  %v6596 = vpack.c.b16 %v6484, %v6480
  %v6597 = vpack.c.b16 %v6485, %v6481
  %v6598 = vpack.c.b16 %v6490, %v6486
  %v6599 = vpack.c.b16 %v6491, %v6487
  %v6600 = vpack.c.b16 %v6492, %v6488
  %v6601 = vpack.c.b16 %v6493, %v6489
  %v6602 = vpack.c.b16 %v6498, %v6494
  %v6603 = vpack.c.b16 %v6499, %v6495
  %v6604 = vpack.c.b16 %v6500, %v6496
  %v6605 = vpack.c.b16 %v6501, %v6497
  %v6606 = vpack.c.b16 %v6506, %v6502
  %v6607 = vpack.c.b16 %v6507, %v6503
  %v6608 = vpack.c.b16 %v6508, %v6504
  %v6609 = vpack.c.b16 %v6509, %v6505
  %v6610 = vpack.c.b16 %v6514, %v6510
  %v6611 = vpack.c.b16 %v6515, %v6511
  %v6612 = vpack.c.b16 %v6516, %v6512
  %v6613 = vpack.c.b16 %v6517, %v6513
  %v6614 = vpack.c.b16 %v6522, %v6518
  %v6615 = vpack.c.b16 %v6523, %v6519
  %v6616 = vpack.c.b16 %v6524, %v6520
  %v6617 = vpack.c.b16 %v6525, %v6521
  %v6618 = vpack.c.b16 %v6530, %v6526
  %v6619 = vpack.c.b16 %v6531, %v6527
  %v6620 = vpack.c.b16 %v6532, %v6528
  %v6621 = vpack.c.b16 %v6533, %v6529
  %v6622 = vpack.c.b16 %v6538, %v6534
  %v6623 = vpack.c.b16 %v6539, %v6535
  %v6624 = vpack.c.b16 %v6540, %v6536
  %v6625 = vpack.c.b16 %v6541, %v6537
  %v6626 = vpack.c.b16 %v6546, %v6542
  %v6627 = vpack.c.b16 %v6547, %v6543
  %v6628 = vpack.c.b16 %v6548, %v6544
  %v6629 = vpack.c.b16 %v6549, %v6545
  %v6630 = vpack.c.b16 %v6554, %v6550
  %v6631 = vpack.c.b16 %v6555, %v6551
  %v6632 = vpack.c.b16 %v6556, %v6552
  %v6633 = vpack.c.b16 %v6557, %v6553
  %v6634 = vpack.c.b16 %v6562, %v6558
  %v6635 = vpack.c.b16 %v6563, %v6559
  %v6636 = vpack.c.b16 %v6564, %v6560
  %v6637 = vpack.c.b16 %v6565, %v6561
  %v6638 = vpack.c.b16 %v6570, %v6566
  %v6639 = vpack.c.b16 %v6571, %v6567
  %v6640 = vpack.c.b16 %v6572, %v6568
  %v6641 = vpack.c.b16 %v6573, %v6569
  %v6642 = vpack.c.b16 %v6578, %v6574
  %v6643 = vpack.c.b16 %v6579, %v6575
  %v6644 = vpack.c.b16 %v6580, %v6576
  %v6645 = vpack.c.b16 %v6581, %v6577
  %6710 = vmatprep.subr.bf16.mxu0 %v6611
  %6711 = vmatpush1.bf16.msra.mxu0 %v6610
  %6712 = vmatprep.subr.bf16.mxu0 %v6607
  %6713 = vmatpush1.bf16.msra.mxu0 %v6606
  %6714 = vmatprep.subr.bf16.mxu0 %v6603
  %6715 = vmatpush1.bf16.msra.mxu0 %v6602
  %6716 = vmatprep.subr.bf16.mxu0 %v6599
  %6717 = vmatpush1.bf16.msra.mxu0 %v6598
  %6718 = vmatprep.subr.bf16.mxu0 %v6595
  %6719 = vmatpush1.bf16.msra.mxu0 %v6594
  %6720 = vmatprep.subr.bf16.mxu0 %v6591
  %6721 = vmatpush1.bf16.msra.mxu0 %v6590
  %6722 = vmatprep.subr.bf16.mxu0 %v6587
  %6723 = vmatpush1.bf16.msra.mxu0 %v6586
  %6724 = vmatprep.subr.bf16.mxu0 %v6583
  %6725 = vmatpush1.bf16.msra.mxu0 %v6582
  %6726 = vmatprep.subr.bf16.mxu0 %v6643
  %6727 = vmatpush2.bf16.msra.mxu0 %v6642
  %6728 = vmatprep.subr.bf16.mxu0 %v6639
  %6729 = vmatpush2.bf16.msra.mxu0 %v6638
  %6730 = vmatprep.subr.bf16.mxu0 %v6635
  %6731 = vmatpush2.bf16.msra.mxu0 %v6634
  %6732 = vmatprep.subr.bf16.mxu0 %v6631
  %6733 = vmatpush2.bf16.msra.mxu0 %v6630
  %6734 = vmatprep.subr.bf16.mxu0 %v6627
  %6735 = vmatpush2.bf16.msra.mxu0 %v6626
  %6736 = vmatprep.subr.bf16.mxu0 %v6623
  %6737 = vmatpush2.bf16.msra.mxu0 %v6622
  %6738 = vmatprep.subr.bf16.mxu0 %v6619
  %6739 = vmatpush2.bf16.msra.mxu0 %v6618
  %6740 = vmatprep.subr.bf16.mxu0 %v6615
  %6741 = vmatpush2.bf16.msra.mxu0 %v6614
  %6742 = vmatprep.mubr.bf16.mxu0 %v6325
  %6743 = vmatmul.mubr.bf16.gmra.mxu0 %v6324
  %v6744 = vpop.f32.mrf.mxu0
  %v6745 = vadd.f32 %v802, %v6744
  %v6746 = vpop.f32.mrf.mxu0
  %v6747 = vadd.f32 %v806, %v6746
  %v6748 = vpop.f32.mrf.mxu0
  %v6749 = vpop.f32.mrf.mxu0
  %6750 = vdwg.mxu0
  %6751 = vmatprep.subr.bf16.mxu0 %v6613
  %6752 = vmatpush1.bf16.msra.mxu0 %v6612
  %6753 = vmatprep.subr.bf16.mxu0 %v6609
  %6754 = vmatpush1.bf16.msra.mxu0 %v6608
  %6755 = vmatprep.subr.bf16.mxu0 %v6605
  %6756 = vmatpush1.bf16.msra.mxu0 %v6604
  %6757 = vmatprep.subr.bf16.mxu0 %v6601
  %6758 = vmatpush1.bf16.msra.mxu0 %v6600
  %6759 = vmatprep.subr.bf16.mxu0 %v6597
  %6760 = vmatpush1.bf16.msra.mxu0 %v6596
  %6761 = vmatprep.subr.bf16.mxu0 %v6593
  %6762 = vmatpush1.bf16.msra.mxu0 %v6592
  %6763 = vmatprep.subr.bf16.mxu0 %v6589
  %6764 = vmatpush1.bf16.msra.mxu0 %v6588
  %6765 = vmatprep.subr.bf16.mxu0 %v6585
  %6766 = vmatpush1.bf16.msra.mxu0 %v6584
  %6767 = vmatprep.subr.bf16.mxu0 %v6645
  %6768 = vmatpush2.bf16.msra.mxu0 %v6644
  %6769 = vmatprep.subr.bf16.mxu0 %v6641
  %6770 = vmatpush2.bf16.msra.mxu0 %v6640
  %6771 = vmatprep.subr.bf16.mxu0 %v6637
  %6772 = vmatpush2.bf16.msra.mxu0 %v6636
  %6773 = vmatprep.subr.bf16.mxu0 %v6633
  %6774 = vmatpush2.bf16.msra.mxu0 %v6632
  %6775 = vmatprep.subr.bf16.mxu0 %v6629
  %6776 = vmatpush2.bf16.msra.mxu0 %v6628
  %6777 = vmatprep.subr.bf16.mxu0 %v6625
  %6778 = vmatpush2.bf16.msra.mxu0 %v6624
  %6779 = vmatprep.subr.bf16.mxu0 %v6621
  %6780 = vmatpush2.bf16.msra.mxu0 %v6620
  %6781 = vmatprep.subr.bf16.mxu0 %v6617
  %6782 = vmatpush2.bf16.msra.mxu0 %v6616
  %6783 = vmatprep.mubr.bf16.mxu0 %v6325
  %6784 = vmatmul.mubr.bf16.gmra.mxu0 %v6324
  %v6785 = vpop.f32.mrf.mxu0
  %v6786 = vadd.f32 %v810, %v6785
  %v6787 = vpop.f32.mrf.mxu0
  %v6788 = vadd.f32 %v814, %v6787
  %v6789 = vpop.f32.mrf.mxu0
  %v6790 = vpop.f32.mrf.mxu0
  %6791 = vdwg.mxu0
  %v6792 = vxor.u32 %v6745, 2147483648
  %v6793 = vmul.f32 %v6792, 1.442695
  %v6794 = vpow.pop %v6793
  %v6795 = vadd.f32 %v6794, 1.0
  %v6796 = vrcp.pop %v6795
  %v6797 = vmul.f32 1.0, %v6796
  %v6798 = vxor.u32 %v6747, 2147483648
  %v6799 = vmul.f32 %v6798, 1.442695
  %v6800 = vpow.pop %v6799
  %v6801 = vadd.f32 %v6800, 1.0
  %v6802 = vrcp.pop %v6801
  %v6803 = vmul.f32 1.0, %v6802
  %v6804 = vtanh.pop %v6786
  %v6805 = vxor.u32 %v6788, 2147483648
  %v6806 = vmul.f32 %v6805, 1.442695
  %v6807 = vpow.pop %v6806
  %v6808 = vadd.f32 %v6807, 1.0
  %v6809 = vrcp.pop %v6808
  %v6810 = vmul.f32 1.0, %v6809
  %v6811 = vmul.f32 %v6803, %v6017
  %v6812 = vmul.f32 %v6797, %v6804
  %v6813 = vadd.f32 %v6811, %v6812
  %v6814 = vtanh.pop %v6813
  %v6815 = vmul.f32 %v6810, %v6814
  %s6816 = scalar_lea.vmem %s6, 56
  %6817 = vst [vmem:[%s6816] sm:$0xff] %v6815
  %6818 = vst [vmem:[#allocation2] sm:$0xff] %v6323
  %6819 = vst [vmem:[#allocation3] sm:$0xff] %v6321
  %6820 = vst [vmem:[#allocation4] sm:$0xff] %v6815
  %6821 = vst [vmem:[#allocation5] sm:$0xff] %v6813
  // Predicated region
  $region30: #{autoencoder_forward.1} parent=0 // pred_check
    _
  $region31: #{autoencoder_forward.1} parent=0 // pred_check_branch
    %6823 = sbr.rel (0) target = $region33
  $region32: #{autoencoder_forward.1} parent=0 // pred_region
    _
  $region33: #{autoencoder_forward.1} parent=0 // pred_fallthru
    _
  // Predicated region
  $region34: #{autoencoder_forward.1} parent=0 // pred_check
    _
  $region35: #{autoencoder_forward.1} parent=0 // pred_check_branch
    %6825 = sbr.rel (0) target = $region37
  $region36: #{autoencoder_forward.1} parent=0 // pred_region
    _
  $region37: #{autoencoder_forward.1} parent=0 // pred_fallthru
    _

</llo_original>
